<compile_context>
chip_gen: v7x
topology: tpu7x:2x2x1
jax: 0.10.0
libtpu: 0.0.40
codegen_flags: <defaults>
</compile_context>

<pallas_src>
import functools

import jax
import jax.numpy as jnp
from jax.experimental import pallas as pl
from jax.experimental.pallas import tpu as pltpu


def _round_up(x, m):
    return (x + m - 1) // m * m


_COMPILER_PARAMS = pltpu.CompilerParams(
    dimension_semantics=("parallel",),      # M-row grid -> both TCs on v7x
    vmem_limit_bytes=32 * 1024 * 1024,
)

_BLOCK_ROWS = 256   # M tile when the row count is large (training batches)


# ----------------------------- Pallas kernels ------------------------------ #

def _matmul_bias_kernel(x_ref, w_ref, b_ref, o_ref, *, relu):
    """o = x @ w + b (optional ReLU). bf16 operands, f32 MXU accumulation."""
    acc = jnp.dot(x_ref[...], w_ref[...], preferred_element_type=jnp.float32)
    acc = acc + b_ref[...]
    if relu:
        acc = jnp.maximum(acc, 0.0)
    o_ref[...] = acc.astype(o_ref.dtype)


def _head_duel_kernel(h_ref, w_ref, b_ref, o_ref, *, n_act):
    """Fused second FC of both heads + dueling combine.

    w packs the advantage head in columns [0, n_act) (rows [0, 512)) and the
    value head in column n_act (rows [512, 1024)), so one matmul yields
    y = [adv | val | 0...]. Epilogue: out = val + y - mean(adv)."""
    y = jnp.dot(h_ref[...], w_ref[...], preferred_element_type=jnp.float32)
    y = y + b_ref[...]
    col = jax.lax.broadcasted_iota(jnp.int32, y.shape, 1)
    adv_sum = jnp.sum(jnp.where(col < n_act, y, 0.0), axis=1, keepdims=True)
    val = jnp.sum(jnp.where(col == n_act, y, 0.0), axis=1, keepdims=True)
    o_ref[...] = val + y - adv_sum * (1.0 / n_act)   # cols >= n_act sliced off outside


# ------------------------------ Pallas wrappers ----------------------------- #

def _padded_rows(m, block_rows):
    mp = _round_up(m, 8)
    if mp <= block_rows:
        return mp, mp                      # single full-row block
    return _round_up(mp, block_rows), block_rows


def _row_tiled_call(kernel, x, w, b, out_dtype, block_rows=_BLOCK_ROWS):
    """Row(M)-tiled matmul-style pallas_call; weight/bias blocks are grid-constant."""
    m, k = x.shape
    kw_, n = w.shape
    if k != kw_:                            # weight was K-padded to a lane multiple
        x = jnp.pad(x, ((0, 0), (0, kw_ - k)))
        k = kw_
    mp, tm = _padded_rows(m, block_rows)
    if mp != m:
        x = jnp.pad(x, ((0, mp - m), (0, 0)))
    return pl.pallas_call(
        kernel,
        out_shape=jax.ShapeDtypeStruct((mp, n), out_dtype),
        grid=(mp // tm,),
        in_specs=[
            pl.BlockSpec((tm, k), lambda i: (i, 0)),
            pl.BlockSpec((k, n), lambda i: (0, 0)),   # weight resident across grid
            pl.BlockSpec((1, n), lambda i: (0, 0)),
        ],
        out_specs=pl.BlockSpec((tm, n), lambda i: (i, 0)),
        compiler_params=_COMPILER_PARAMS,
    )(x, w, b)


def pallas_linear(x, w, b, *, relu, out_dtype=jnp.bfloat16, trim=True):
    m = x.shape[0]
    out = _row_tiled_call(functools.partial(_matmul_bias_kernel, relu=relu),
                          x, w, b, out_dtype)
    return out[:m] if (trim and out.shape[0] != m) else out


def pallas_head_duel(h, w, b, *, n_act):
    return _row_tiled_call(functools.partial(_head_duel_kernel, n_act=n_act),
                           h, w, b, jnp.float32)


def conv_relu(x_nhwc, w_mat, b_row, *, ksize, stride):
    """Valid conv + ReLU. x:(N,H,W,C) bf16, w_mat:(KH*KW*C, O) bf16 -> (N,OH,OW,O) bf16."""
    n, h, w, c = x_nhwc.shape
    oh = (h - ksize) // stride + 1
    ow = (w - ksize) // stride + 1
    # TODO(synk): pull this window extraction (im2col) inside the Pallas kernel as a
    # (kh,kw) grid reduction; strided in-kernel window slicing is the current blocker.
    cols = []
    for kh in range(ksize):
        for kw in range(ksize):
            cols.append(x_nhwc[:, kh:kh + stride * oh:stride,
                               kw:kw + stride * ow:stride, :])
    patches = jnp.stack(cols, axis=3).reshape(n * oh * ow, ksize * ksize * c)
    y = pallas_linear(patches, w_mat, b_row, relu=True)          # (n*oh*ow, O) bf16
    return y.reshape(n, oh, ow, w_mat.shape[1])


# --------------------------- Parameters (PyTorch layout) -------------------- #

def init_params(key, input_dim, output_dim):
    """Parameters in PyTorch layout (Conv2d OIHW, Linear (out_features, in_features))."""
    c, _, _ = input_dim
    ks = jax.random.split(key, 7)
    s = 0.05
    nrm = lambda k, shape: jax.random.normal(k, shape, jnp.float32) * s
    return {
        "c1_w": nrm(ks[0], (64, c, 8, 8)), "c1_b": jnp.zeros((64,), jnp.float32),
        "c2_w": nrm(ks[1], (64, 64, 4, 4)), "c2_b": jnp.zeros((64,), jnp.float32),
        "c3_w": nrm(ks[2], (64, 64, 3, 3)), "c3_b": jnp.zeros((64,), jnp.float32),
        "a1_w": nrm(ks[3], (512, 3136)), "a1_b": jnp.zeros((512,), jnp.float32),
        "a2_w": nrm(ks[4], (output_dim, 512)), "a2_b": jnp.zeros((output_dim,), jnp.float32),
        "v1_w": nrm(ks[5], (512, 3136)), "v1_b": jnp.zeros((512,), jnp.float32),
        "v2_w": nrm(ks[6], (1, 512)), "v2_b": jnp.zeros((1,), jnp.float32),
    }


def prepare_params(params, output_dim):
    """One-time weight relayout (do NOT call per forward):
    - conv kernels -> (KH*KW*C, O) matmul form, bf16
    - head FC1s fused -> (3136(->3200), 1024) with rows permuted from PyTorch's
      NCHW-flatten order (c*49+sp) to our NHWC-flatten order ((sp)*64+c)
    - head FC2s fused -> lane-padded (1024, 128): cols [0,A)=advantage, col A=value
    Biases kept f32 as (1, N) rows."""
    prep = {}
    for name in ("c1", "c2", "c3"):
        w = params[name + "_w"]                           # (O, C, KH, KW)
        o, c, kh, kw = w.shape
        wm = jnp.transpose(w, (2, 3, 1, 0)).reshape(kh * kw * c, o)
        kp = _round_up(wm.shape[0], 128)
        if kp != wm.shape[0]:                             # zero K-pad once (conv3: 576->640)
            wm = jnp.pad(wm, ((0, kp - wm.shape[0]), (0, 0)))
        prep[name + "_w"] = wm.astype(jnp.bfloat16)
        prep[name + "_b"] = params[name + "_b"].reshape(1, o).astype(jnp.float32)

    # conv trunk output is (N, 7, 7, 64) NHWC; PyTorch flattens NCHW.
    n_ch, n_sp = 64, 49
    g = jnp.arange(n_ch * n_sp)
    perm = (g % n_ch) * n_sp + (g // n_ch)                # NHWC-flat idx -> NCHW-flat idx
    w1 = jnp.concatenate([params["a1_w"].T, params["v1_w"].T], axis=1)[perm]  # (3136, 1024)
    w1 = jnp.pad(w1, ((0, _round_up(3136, 128) - 3136), (0, 0)))              # 3136 -> 3200
    prep["h1_w"] = w1.astype(jnp.bfloat16)
    prep["h1_b"] = jnp.concatenate(
        [params["a1_b"], params["v1_b"]]).reshape(1, -1).astype(jnp.float32)

    a = output_dim
    npad = max(128, _round_up(a + 1, 128))
    w2 = jnp.zeros((1024, npad), jnp.float32)
    w2 = w2.at[:512, :a].set(params["a2_w"].T)            # advantage head
    w2 = w2.at[512:, a].set(params["v2_w"][0])            # value head -> column a
    b2 = jnp.zeros((1, npad), jnp.float32)
    b2 = b2.at[0, :a].set(params["a2_b"]).at[0, a].set(params["v2_b"][0])
    prep["h2_w"] = w2.astype(jnp.bfloat16)
    prep["h2_b"] = b2
    return prep


# ------------------------------ Network (forward) --------------------------- #

def network_forward(prep, x, output_dim):
    b = x.shape[0]
    xh = jnp.transpose(x, (0, 2, 3, 1)).astype(jnp.bfloat16)          # NCHW -> NHWC, bf16
    xh = conv_relu(xh, prep["c1_w"], prep["c1_b"], ksize=8, stride=4)  # (B,20,20,64)
    xh = conv_relu(xh, prep["c2_w"], prep["c2_b"], ksize=4, stride=2)  # (B, 9, 9,64)
    xh = conv_relu(xh, prep["c3_w"], prep["c3_b"], ksize=3, stride=1)  # (B, 7, 7,64)
    flat = xh.reshape(b, -1)                                           # (B, 3136) NHWC-flatten

    # fused heads: one FC1 matmul (h_a || h_v), one FC2 matmul + dueling epilogue
    h = pallas_linear(flat, prep["h1_w"], prep["h1_b"], relu=True, trim=False)
    duel = pallas_head_duel(h, prep["h2_w"], prep["h2_b"], n_act=output_dim)
    return duel[:b, :output_dim]


if __name__ == "__main__":
    # fc_1 = 3136 hard-codes the conv spatial math: (84-8)/4+1=20, (20-4)/2+1=9,
    # (9-3)/1+1=7 -> 64*7*7 = 3136, so the input must be (c, 84, 84).
    batch, c, hgt, wid = 2, 4, 84, 84
    output_dim = 6

    key = jax.random.PRNGKey(0)
    k_x, k_p = jax.random.split(key)
    x = jax.random.normal(k_x, (batch, c, hgt, wid), jnp.float32)

    params = init_params(k_p, (c, hgt, wid), output_dim)
    prep = prepare_params(params, output_dim)              # one-time weight relayout

    fwd = jax.jit(functools.partial(network_forward, output_dim=output_dim))
    out = fwd(prep, x)
    out = jax.block_until_ready(out)
    assert out.shape == (batch, output_dim), out.shape
    print("KERNEL_OK")
</pallas_src>

<mosaic_0001>
module attributes {stable_mosaic.version = 11 : i64} {
  func.func @_matmul_bias_kernel(%arg0: i32, %arg1: memref<256x256xbf16, #tpu.memory_space<vmem>>, %arg2: memref<256x64xbf16, #tpu.memory_space<vmem>>, %arg3: memref<1x64xf32, #tpu.memory_space<vmem>>, %arg4: memref<256x64xbf16, #tpu.memory_space<vmem>>) attributes {dimension_semantics = [#tpu.dimension_semantics<parallel>], iteration_bounds = array<i64: 4>, scalar_prefetch = 0 : i64, scratch_operands = 0 : i64, tpu.core_type = #tpu.core_type<tc>, window_params = [{transform_indices = @transform_0, window_bounds = array<i64: 256, 256>}, {pipeline_mode = #tpu.pipeline_mode<synchronous>, transform_indices = @transform_1, window_bounds = array<i64: 256, 64>}, {pipeline_mode = #tpu.pipeline_mode<synchronous>, transform_indices = @transform_2, window_bounds = array<i64: 1, 64>}, {transform_indices = @transform_3, window_bounds = array<i64: 256, 64>}]} {
    %c0 = arith.constant 0 : index
    %c0_0 = arith.constant 0 : index
    %0 = vector.load %arg1[%c0, %c0_0] : memref<256x256xbf16, #tpu.memory_space<vmem>>, vector<256x256xbf16>
    %c0_1 = arith.constant 0 : index
    %c0_2 = arith.constant 0 : index
    %1 = vector.load %arg2[%c0_1, %c0_2] : memref<256x64xbf16, #tpu.memory_space<vmem>>, vector<256x64xbf16>
    %cst = arith.constant dense<0.000000e+00> : vector<256x64xf32>
    %2 = tpu.matmul %0, %1, %cst {dimension_numbers = #tpu.dot_dimension_numbers<[1], [0], [0], [1], [0, 0, 1, 1], [], []>} : vector<256x256xbf16>, vector<256x64xbf16>, vector<256x64xf32> -> vector<256x64xf32>
    %c0_3 = arith.constant 0 : index
    %c0_4 = arith.constant 0 : index
    %3 = vector.load %arg3[%c0_3, %c0_4] : memref<1x64xf32, #tpu.memory_space<vmem>>, vector<1x64xf32>
    %4 = vector.broadcast %3 : vector<1x64xf32> to vector<256x64xf32>
    %5 = arith.addf %2, %4 : vector<256x64xf32>
    %cst_5 = arith.constant 0.000000e+00 : f32
    %6 = vector.broadcast %cst_5 : f32 to vector<256x64xf32>
    %7 = arith.maximumf %5, %6 : vector<256x64xf32>
    %8 = arith.truncf %7 : vector<256x64xf32> to vector<256x64xbf16>
    %c0_6 = arith.constant 0 : index
    %c0_7 = arith.constant 0 : index
    %9 = vector.load %arg4[%c0_6, %c0_7] : memref<256x64xbf16, #tpu.memory_space<vmem>>, vector<256x64xbf16>
    tpu.vector_store %arg4[%c0_6, %c0_7], %8 {strides = array<i32>} : memref<256x64xbf16, #tpu.memory_space<vmem>>, vector<256x64xbf16>,
    return
  }
  func.func @transform_0(%arg0: i32) -> (i32, i32) {
    %c0_i32 = arith.constant 0 : i32
    %c0_i32_0 = arith.constant 0 : i32
    return %arg0, %c0_i32 : i32, i32
  }
  func.func @transform_1(%arg0: i32) -> (i32, i32) {
    %c0_i32 = arith.constant 0 : i32
    %c0_i32_0 = arith.constant 0 : i32
    %c0_i32_1 = arith.constant 0 : i32
    return %c0_i32, %c0_i32_0 : i32, i32
  }
  func.func @transform_2(%arg0: i32) -> (i32, i32) {
    %c0_i32 = arith.constant 0 : i32
    %c0_i32_0 = arith.constant 0 : i32
    %c0_i32_1 = arith.constant 0 : i32
    return %c0_i32, %c0_i32_0 : i32, i32
  }
  func.func @transform_3(%arg0: i32) -> (i32, i32) {
    %c0_i32 = arith.constant 0 : i32
    %c0_i32_0 = arith.constant 0 : i32
    return %arg0, %c0_i32 : i32, i32
  }
}

module attributes {stable_mosaic.version = 11 : i64} {
  func.func @_matmul_bias_kernel(%arg0: i32, %arg1: memref<168x1024xbf16, #tpu.memory_space<vmem>>, %arg2: memref<1024x64xbf16, #tpu.memory_space<vmem>>, %arg3: memref<1x64xf32, #tpu.memory_space<vmem>>, %arg4: memref<168x64xbf16, #tpu.memory_space<vmem>>) attributes {dimension_semantics = [#tpu.dimension_semantics<parallel>], iteration_bounds = array<i64: 1>, scalar_prefetch = 0 : i64, scratch_operands = 0 : i64, tpu.core_type = #tpu.core_type<tc>, window_params = [{transform_indices = @transform_0, window_bounds = array<i64: 168, 1024>}, {pipeline_mode = #tpu.pipeline_mode<synchronous>, transform_indices = @transform_1, window_bounds = array<i64: 1024, 64>}, {pipeline_mode = #tpu.pipeline_mode<synchronous>, transform_indices = @transform_2, window_bounds = array<i64: 1, 64>}, {transform_indices = @transform_3, window_bounds = array<i64: 168, 64>}]} {
    %c0 = arith.constant 0 : index
    %c0_0 = arith.constant 0 : index
    %0 = vector.load %arg1[%c0, %c0_0] : memref<168x1024xbf16, #tpu.memory_space<vmem>>, vector<168x1024xbf16>
    %c0_1 = arith.constant 0 : index
    %c0_2 = arith.constant 0 : index
    %1 = vector.load %arg2[%c0_1, %c0_2] : memref<1024x64xbf16, #tpu.memory_space<vmem>>, vector<1024x64xbf16>
    %cst = arith.constant dense<0.000000e+00> : vector<168x64xf32>
    %2 = tpu.matmul %0, %1, %cst {dimension_numbers = #tpu.dot_dimension_numbers<[1], [0], [0], [1], [0, 0, 1, 1], [], []>} : vector<168x1024xbf16>, vector<1024x64xbf16>, vector<168x64xf32> -> vector<168x64xf32>
    %c0_3 = arith.constant 0 : index
    %c0_4 = arith.constant 0 : index
    %3 = vector.load %arg3[%c0_3, %c0_4] : memref<1x64xf32, #tpu.memory_space<vmem>>, vector<1x64xf32>
    %4 = vector.broadcast %3 : vector<1x64xf32> to vector<168x64xf32>
    %5 = arith.addf %2, %4 : vector<168x64xf32>
    %cst_5 = arith.constant 0.000000e+00 : f32
    %6 = vector.broadcast %cst_5 : f32 to vector<168x64xf32>
    %7 = arith.maximumf %5, %6 : vector<168x64xf32>
    %8 = arith.truncf %7 : vector<168x64xf32> to vector<168x64xbf16>
    %c0_6 = arith.constant 0 : index
    %c0_7 = arith.constant 0 : index
    %9 = vector.load %arg4[%c0_6, %c0_7] : memref<168x64xbf16, #tpu.memory_space<vmem>>, vector<168x64xbf16>
    tpu.vector_store %arg4[%c0_6, %c0_7], %8 {strides = array<i32>} : memref<168x64xbf16, #tpu.memory_space<vmem>>, vector<168x64xbf16>,
    return
  }
  func.func @transform_0(%arg0: i32) -> (i32, i32) {
    %c0_i32 = arith.constant 0 : i32
    %c0_i32_0 = arith.constant 0 : i32
    return %arg0, %c0_i32 : i32, i32
  }
  func.func @transform_1(%arg0: i32) -> (i32, i32) {
    %c0_i32 = arith.constant 0 : i32
    %c0_i32_0 = arith.constant 0 : i32
    %c0_i32_1 = arith.constant 0 : i32
    return %c0_i32, %c0_i32_0 : i32, i32
  }
  func.func @transform_2(%arg0: i32) -> (i32, i32) {
    %c0_i32 = arith.constant 0 : i32
    %c0_i32_0 = arith.constant 0 : i32
    %c0_i32_1 = arith.constant 0 : i32
    return %c0_i32, %c0_i32_0 : i32, i32
  }
  func.func @transform_3(%arg0: i32) -> (i32, i32) {
    %c0_i32 = arith.constant 0 : i32
    %c0_i32_0 = arith.constant 0 : i32
    return %arg0, %c0_i32 : i32, i32
  }
}

module attributes {stable_mosaic.version = 11 : i64} {
  func.func @_matmul_bias_kernel(%arg0: i32, %arg1: memref<104x640xbf16, #tpu.memory_space<vmem>>, %arg2: memref<640x64xbf16, #tpu.memory_space<vmem>>, %arg3: memref<1x64xf32, #tpu.memory_space<vmem>>, %arg4: memref<104x64xbf16, #tpu.memory_space<vmem>>) attributes {dimension_semantics = [#tpu.dimension_semantics<parallel>], iteration_bounds = array<i64: 1>, scalar_prefetch = 0 : i64, scratch_operands = 0 : i64, tpu.core_type = #tpu.core_type<tc>, window_params = [{transform_indices = @transform_0, window_bounds = array<i64: 104, 640>}, {pipeline_mode = #tpu.pipeline_mode<synchronous>, transform_indices = @transform_1, window_bounds = array<i64: 640, 64>}, {pipeline_mode = #tpu.pipeline_mode<synchronous>, transform_indices = @transform_2, window_bounds = array<i64: 1, 64>}, {transform_indices = @transform_3, window_bounds = array<i64: 104, 64>}]} {
    %c0 = arith.constant 0 : index
    %c0_0 = arith.constant 0 : index
    %0 = vector.load %arg1[%c0, %c0_0] : memref<104x640xbf16, #tpu.memory_space<vmem>>, vector<104x640xbf16>
    %c0_1 = arith.constant 0 : index
    %c0_2 = arith.constant 0 : index
    %1 = vector.load %arg2[%c0_1, %c0_2] : memref<640x64xbf16, #tpu.memory_space<vmem>>, vector<640x64xbf16>
    %cst = arith.constant dense<0.000000e+00> : vector<104x64xf32>
    %2 = tpu.matmul %0, %1, %cst {dimension_numbers = #tpu.dot_dimension_numbers<[1], [0], [0], [1], [0, 0, 1, 1], [], []>} : vector<104x640xbf16>, vector<640x64xbf16>, vector<104x64xf32> -> vector<104x64xf32>
    %c0_3 = arith.constant 0 : index
    %c0_4 = arith.constant 0 : index
    %3 = vector.load %arg3[%c0_3, %c0_4] : memref<1x64xf32, #tpu.memory_space<vmem>>, vector<1x64xf32>
    %4 = vector.broadcast %3 : vector<1x64xf32> to vector<104x64xf32>
    %5 = arith.addf %2, %4 : vector<104x64xf32>
    %cst_5 = arith.constant 0.000000e+00 : f32
    %6 = vector.broadcast %cst_5 : f32 to vector<104x64xf32>
    %7 = arith.maximumf %5, %6 : vector<104x64xf32>
    %8 = arith.truncf %7 : vector<104x64xf32> to vector<104x64xbf16>
    %c0_6 = arith.constant 0 : index
    %c0_7 = arith.constant 0 : index
    %9 = vector.load %arg4[%c0_6, %c0_7] : memref<104x64xbf16, #tpu.memory_space<vmem>>, vector<104x64xbf16>
    tpu.vector_store %arg4[%c0_6, %c0_7], %8 {strides = array<i32>} : memref<104x64xbf16, #tpu.memory_space<vmem>>, vector<104x64xbf16>,
    return
  }
  func.func @transform_0(%arg0: i32) -> (i32, i32) {
    %c0_i32 = arith.constant 0 : i32
    %c0_i32_0 = arith.constant 0 : i32
    return %arg0, %c0_i32 : i32, i32
  }
  func.func @transform_1(%arg0: i32) -> (i32, i32) {
    %c0_i32 = arith.constant 0 : i32
    %c0_i32_0 = arith.constant 0 : i32
    %c0_i32_1 = arith.constant 0 : i32
    return %c0_i32, %c0_i32_0 : i32, i32
  }
  func.func @transform_2(%arg0: i32) -> (i32, i32) {
    %c0_i32 = arith.constant 0 : i32
    %c0_i32_0 = arith.constant 0 : i32
    %c0_i32_1 = arith.constant 0 : i32
    return %c0_i32, %c0_i32_0 : i32, i32
  }
  func.func @transform_3(%arg0: i32) -> (i32, i32) {
    %c0_i32 = arith.constant 0 : i32
    %c0_i32_0 = arith.constant 0 : i32
    return %arg0, %c0_i32 : i32, i32
  }
}

module attributes {stable_mosaic.version = 11 : i64} {
  func.func @_matmul_bias_kernel(%arg0: i32, %arg1: memref<8x3200xbf16, #tpu.memory_space<vmem>>, %arg2: memref<3200x1024xbf16, #tpu.memory_space<vmem>>, %arg3: memref<1x1024xf32, #tpu.memory_space<vmem>>, %arg4: memref<8x1024xbf16, #tpu.memory_space<vmem>>) attributes {dimension_semantics = [#tpu.dimension_semantics<parallel>], iteration_bounds = array<i64: 1>, scalar_prefetch = 0 : i64, scratch_operands = 0 : i64, tpu.core_type = #tpu.core_type<tc>, window_params = [{transform_indices = @transform_0, window_bounds = array<i64: 8, 3200>}, {pipeline_mode = #tpu.pipeline_mode<synchronous>, transform_indices = @transform_1, window_bounds = array<i64: 3200, 1024>}, {pipeline_mode = #tpu.pipeline_mode<synchronous>, transform_indices = @transform_2, window_bounds = array<i64: 1, 1024>}, {transform_indices = @transform_3, window_bounds = array<i64: 8, 1024>}]} {
    %c0 = arith.constant 0 : index
    %c0_0 = arith.constant 0 : index
    %0 = vector.load %arg1[%c0, %c0_0] : memref<8x3200xbf16, #tpu.memory_space<vmem>>, vector<8x3200xbf16>
    %c0_1 = arith.constant 0 : index
    %c0_2 = arith.constant 0 : index
    %1 = vector.load %arg2[%c0_1, %c0_2] : memref<3200x1024xbf16, #tpu.memory_space<vmem>>, vector<3200x1024xbf16>
    %cst = arith.constant dense<0.000000e+00> : vector<8x1024xf32>
    %2 = tpu.matmul %0, %1, %cst {dimension_numbers = #tpu.dot_dimension_numbers<[1], [0], [0], [1], [0, 0, 1, 1], [], []>} : vector<8x3200xbf16>, vector<3200x1024xbf16>, vector<8x1024xf32> -> vector<8x1024xf32>
    %c0_3 = arith.constant 0 : index
    %c0_4 = arith.constant 0 : index
    %3 = vector.load %arg3[%c0_3, %c0_4] : memref<1x1024xf32, #tpu.memory_space<vmem>>, vector<1x1024xf32>
    %4 = vector.broadcast %3 : vector<1x1024xf32> to vector<8x1024xf32>
    %5 = arith.addf %2, %4 : vector<8x1024xf32>
    %cst_5 = arith.constant 0.000000e+00 : f32
    %6 = vector.broadcast %cst_5 : f32 to vector<8x1024xf32>
    %7 = arith.maximumf %5, %6 : vector<8x1024xf32>
    %8 = arith.truncf %7 : vector<8x1024xf32> to vector<8x1024xbf16>
    %c0_6 = arith.constant 0 : index
    %c0_7 = arith.constant 0 : index
    %9 = vector.load %arg4[%c0_6, %c0_7] : memref<8x1024xbf16, #tpu.memory_space<vmem>>, vector<8x1024xbf16>
    tpu.vector_store %arg4[%c0_6, %c0_7], %8 {strides = array<i32>} : memref<8x1024xbf16, #tpu.memory_space<vmem>>, vector<8x1024xbf16>,
    return
  }
  func.func @transform_0(%arg0: i32) -> (i32, i32) {
    %c0_i32 = arith.constant 0 : i32
    %c0_i32_0 = arith.constant 0 : i32
    return %arg0, %c0_i32 : i32, i32
  }
  func.func @transform_1(%arg0: i32) -> (i32, i32) {
    %c0_i32 = arith.constant 0 : i32
    %c0_i32_0 = arith.constant 0 : i32
    %c0_i32_1 = arith.constant 0 : i32
    return %c0_i32, %c0_i32_0 : i32, i32
  }
  func.func @transform_2(%arg0: i32) -> (i32, i32) {
    %c0_i32 = arith.constant 0 : i32
    %c0_i32_0 = arith.constant 0 : i32
    %c0_i32_1 = arith.constant 0 : i32
    return %c0_i32, %c0_i32_0 : i32, i32
  }
  func.func @transform_3(%arg0: i32) -> (i32, i32) {
    %c0_i32 = arith.constant 0 : i32
    %c0_i32_0 = arith.constant 0 : i32
    return %arg0, %c0_i32 : i32, i32
  }
}

module attributes {stable_mosaic.version = 11 : i64} {
  func.func @_head_duel_kernel(%arg0: i32, %arg1: memref<8x1024xbf16, #tpu.memory_space<vmem>>, %arg2: memref<1024x128xbf16, #tpu.memory_space<vmem>>, %arg3: memref<1x128xf32, #tpu.memory_space<vmem>>, %arg4: memref<8x128xf32, #tpu.memory_space<vmem>>) attributes {dimension_semantics = [#tpu.dimension_semantics<parallel>], iteration_bounds = array<i64: 1>, scalar_prefetch = 0 : i64, scratch_operands = 0 : i64, tpu.core_type = #tpu.core_type<tc>, window_params = [{transform_indices = @transform_0, window_bounds = array<i64: 8, 1024>}, {pipeline_mode = #tpu.pipeline_mode<synchronous>, transform_indices = @transform_1, window_bounds = array<i64: 1024, 128>}, {pipeline_mode = #tpu.pipeline_mode<synchronous>, transform_indices = @transform_2, window_bounds = array<i64: 1, 128>}, {transform_indices = @transform_3, window_bounds = array<i64: 8, 128>}]} {
    %c0 = arith.constant 0 : index
    %c0_0 = arith.constant 0 : index
    %0 = vector.load %arg1[%c0, %c0_0] : memref<8x1024xbf16, #tpu.memory_space<vmem>>, vector<8x1024xbf16>
    %c0_1 = arith.constant 0 : index
    %c0_2 = arith.constant 0 : index
    %1 = vector.load %arg2[%c0_1, %c0_2] : memref<1024x128xbf16, #tpu.memory_space<vmem>>, vector<1024x128xbf16>
    %cst = arith.constant dense<0.000000e+00> : vector<8x128xf32>
    %2 = tpu.matmul %0, %1, %cst {dimension_numbers = #tpu.dot_dimension_numbers<[1], [0], [0], [1], [0, 0, 1, 1], [], []>} : vector<8x1024xbf16>, vector<1024x128xbf16>, vector<8x128xf32> -> vector<8x128xf32>
    %c0_3 = arith.constant 0 : index
    %c0_4 = arith.constant 0 : index
    %3 = vector.load %arg3[%c0_3, %c0_4] : memref<1x128xf32, #tpu.memory_space<vmem>>, vector<1x128xf32>
    %4 = vector.broadcast %3 : vector<1x128xf32> to vector<8x128xf32>
    %5 = arith.addf %2, %4 : vector<8x128xf32>
    %6 = tpu.iota {dimensions = array<i32: 1>} : vector<8x128xi32>
    %c6_i32 = arith.constant 6 : i32
    %7 = vector.broadcast %c6_i32 : i32 to vector<8x128xi32>
    %8 = arith.cmpi slt, %6, %7 : vector<8x128xi32>
    %cst_5 = arith.constant 0.000000e+00 : f32
    %9 = vector.broadcast %cst_5 : f32 to vector<8x128xf32>
    %10 = arith.select %8, %5, %9 : vector<8x128xi1>, vector<8x128xf32>
    %cst_6 = arith.constant dense<0.000000e+00> : vector<8xf32>
    %11 = vector.multi_reduction <add>, %10, %cst_6 [1] : vector<8x128xf32> to vector<8xf32>
    %12 = vector.shape_cast %11 : vector<8xf32> to vector<8x1xf32>
    %c6_i32_7 = arith.constant 6 : i32
    %13 = vector.broadcast %c6_i32_7 : i32 to vector<8x128xi32>
    %14 = arith.cmpi eq, %6, %13 : vector<8x128xi32>
    %cst_8 = arith.constant 0.000000e+00 : f32
    %15 = vector.broadcast %cst_8 : f32 to vector<8x128xf32>
    %16 = arith.select %14, %5, %15 : vector<8x128xi1>, vector<8x128xf32>
    %cst_9 = arith.constant dense<0.000000e+00> : vector<8xf32>
    %17 = vector.multi_reduction <add>, %16, %cst_9 [1] : vector<8x128xf32> to vector<8xf32>
    %18 = vector.shape_cast %17 : vector<8xf32> to vector<8x1xf32>
    %19 = vector.broadcast %18 : vector<8x1xf32> to vector<8x128xf32>
    %20 = arith.addf %19, %5 : vector<8x128xf32>
    %cst_10 = arith.constant 0.166666672 : f32
    %21 = vector.broadcast %cst_10 : f32 to vector<8x1xf32>
    %22 = arith.mulf %12, %21 : vector<8x1xf32>
    %23 = vector.broadcast %22 : vector<8x1xf32> to vector<8x128xf32>
    %24 = arith.subf %20, %23 : vector<8x128xf32>
    %c0_11 = arith.constant 0 : index
    %c0_12 = arith.constant 0 : index
    %25 = vector.load %arg4[%c0_11, %c0_12] : memref<8x128xf32, #tpu.memory_space<vmem>>, vector<8x128xf32>
    tpu.vector_store %arg4[%c0_11, %c0_12], %24 {strides = array<i32>} : memref<8x128xf32, #tpu.memory_space<vmem>>, vector<8x128xf32>,
    return
  }
  func.func @transform_0(%arg0: i32) -> (i32, i32) {
    %c0_i32 = arith.constant 0 : i32
    %c0_i32_0 = arith.constant 0 : i32
    return %arg0, %c0_i32 : i32, i32
  }
  func.func @transform_1(%arg0: i32) -> (i32, i32) {
    %c0_i32 = arith.constant 0 : i32
    %c0_i32_0 = arith.constant 0 : i32
    %c0_i32_1 = arith.constant 0 : i32
    return %c0_i32, %c0_i32_0 : i32, i32
  }
  func.func @transform_2(%arg0: i32) -> (i32, i32) {
    %c0_i32 = arith.constant 0 : i32
    %c0_i32_0 = arith.constant 0 : i32
    %c0_i32_1 = arith.constant 0 : i32
    return %c0_i32, %c0_i32_0 : i32, i32
  }
  func.func @transform_3(%arg0: i32) -> (i32, i32) {
    %c0_i32 = arith.constant 0 : i32
    %c0_i32_0 = arith.constant 0 : i32
    return %arg0, %c0_i32 : i32, i32
  }
}

</mosaic_0001>

<llo_original>
// kernel: network_forward.5
$region0: #{network_forward.5}
  #allocation0 [shape = 'u32[]', space=smem, size = 0x4, offset = 0x4, fixed_abs, tag = 'smem constant byte address 0x4 - core index']
  #allocation1 [shape = 'u32[144,128]{1,0:T(1,128)}', space=vmem, size = 0x12000, scoped, tag = 'internal scratch']
  %s0 = inlined_call_operand.vmem [shape: bf16[1024,256], index: 0, kind: input, shape index: {}]
  %s1 = inlined_call_operand.vmem [shape: bf16[256,64], index: 1, kind: input, shape index: {}]
  %s2 = inlined_call_operand.vmem [shape: f32[1,64], index: 2, kind: input, shape index: {}]
  %s3 = inlined_call_operand.vmem [shape: bf16[1024,64], index: 3, kind: output, shape index: {}]
  %s4 = sld [smem:[#allocation0]]
  $region45: #{network_forward.5} parent=0
    _
  %s6 = ssub.s32 1, %s4
  %s7 = scalar_select 0, %s6, %s4
  loop: start=0, step=1, limit=6
  $region2: #{network_forward.5} parent=0 // loop_pre_header
    _
  $region3: #{network_forward.5} parent=0 // loop_header
    %s9 = sphi 0, %s13
    %p10 = scmp.ge.s32.totalorder %s9, 6
    %s19 = sphi 0, %s21
    %s22 = sphi 0, %s19
    %s23 = sphi 0, %s22
    %s39 = sphi 0, %s23
    %s43 = sphi 0, %s43
    %s45 = sphi 0, %s43
    %s46 = sphi 0, %s45
    %s60 = sphi 0, %s46
    %s64 = sphi 0, %s64
    %s66 = sphi 0, %s64
    %s67 = sphi 0, %s66
    %s81 = sphi 0, %s67
    %s87 = sphi 0, %s89
    %s90 = sphi 0, %s87
    %s91 = sphi 0, %s90
    %s107 = sphi 0, %s91
  $region4: #{network_forward.5} parent=0 // loop_header_branch
    %12 = sbr.rel (%p10) target = $region8
  $region5: #{network_forward.5} parent=0 // loop_body
    %s14 = ssub.s32 %s9, 1
    %s15 = ssub.s32 %s9, 2
    %s16 = sadd.s32 %s9, 1
    %s17 = ssub.s32 %s9, %s16
    %p18 = scmp.eq.s32.totalorder %s17, 0
    %s20 = sadd.s32 %s19, 1
    %s21 = scalar_select %p18, %s19, %s20
    %p24 = pneg %p18
    %p25 = scmp.eq.s32.totalorder %s9, 3
    %p26 = por %p24, %p25
    %p27 = scmp.ne.s32.totalorder %s19, %s22
    %p28 = scmp.eq.s32.totalorder %s9, 0
    %p29 = por %p27, %p28
    %p30 = scmp.ne.s32.totalorder %s19, %s22
    %p31 = scmp.eq.s32.totalorder %s14, 3
    %p32 = por %p30, %p31
    %p33 = scmp.ne.s32.totalorder %s22, %s23
    %p34 = scmp.eq.s32.totalorder %s14, 0
    %p35 = por %p33, %p34
    %p36 = scmp.ne.s32.totalorder %s22, %s23
    %p37 = scmp.eq.s32.totalorder %s15, 3
    %p38 = por %p36, %p37
    %p40 = scmp.ne.s32.totalorder %s23, %s39
    %p41 = scmp.eq.s32.totalorder %s15, 0
    %p42 = por %p40, %p41
    %s44 = sadd.s32 %s43, 1
    %p47 = scmp.eq.s32.totalorder %s9, 3
    %p48 = scmp.ne.s32.totalorder %s43, %s45
    %p49 = scmp.eq.s32.totalorder %s9, 0
    %p50 = por %p48, %p49
    %p51 = scmp.ne.s32.totalorder %s43, %s45
    %p52 = scmp.eq.s32.totalorder %s14, 3
    %p53 = por %p51, %p52
    %p54 = scmp.ne.s32.totalorder %s45, %s46
    %p55 = scmp.eq.s32.totalorder %s14, 0
    %p56 = por %p54, %p55
    %p57 = scmp.ne.s32.totalorder %s45, %s46
    %p58 = scmp.eq.s32.totalorder %s15, 3
    %p59 = por %p57, %p58
    %p61 = scmp.ne.s32.totalorder %s46, %s60
    %p62 = scmp.eq.s32.totalorder %s15, 0
    %p63 = por %p61, %p62
    %s65 = sadd.s32 %s64, 1
    %p68 = scmp.eq.s32.totalorder %s9, 3
    %p69 = scmp.ne.s32.totalorder %s64, %s66
    %p70 = scmp.eq.s32.totalorder %s9, 0
    %p71 = por %p69, %p70
    %p72 = scmp.ne.s32.totalorder %s64, %s66
    %p73 = scmp.eq.s32.totalorder %s14, 3
    %p74 = por %p72, %p73
    %p75 = scmp.ne.s32.totalorder %s66, %s67
    %p76 = scmp.eq.s32.totalorder %s14, 0
    %p77 = por %p75, %p76
    %p78 = scmp.ne.s32.totalorder %s66, %s67
    %p79 = scmp.eq.s32.totalorder %s15, 3
    %p80 = por %p78, %p79
    %p82 = scmp.ne.s32.totalorder %s67, %s81
    %p83 = scmp.eq.s32.totalorder %s15, 0
    %p84 = por %p82, %p83
    %s85 = ssub.s32 %s9, %s16
    %p86 = scmp.eq.s32.totalorder %s85, 0
    %s88 = sadd.s32 %s87, 1
    %s89 = scalar_select %p86, %s87, %s88
    %p92 = pneg %p86
    %p93 = scmp.eq.s32.totalorder %s9, 3
    %p94 = por %p92, %p93
    %p95 = scmp.ne.s32.totalorder %s87, %s90
    %p96 = scmp.eq.s32.totalorder %s9, 0
    %p97 = por %p95, %p96
    %p98 = scmp.ne.s32.totalorder %s87, %s90
    %p99 = scmp.eq.s32.totalorder %s14, 3
    %p100 = por %p98, %p99
    %p101 = scmp.ne.s32.totalorder %s90, %s91
    %p102 = scmp.eq.s32.totalorder %s14, 0
    %p103 = por %p101, %p102
    %p104 = scmp.ne.s32.totalorder %s90, %s91
    %p105 = scmp.eq.s32.totalorder %s15, 3
    %p106 = por %p104, %p105
    %p108 = scmp.ne.s32.totalorder %s91, %s107
    %p109 = scmp.eq.s32.totalorder %s15, 0
    %p110 = por %p108, %p109
    %p111 = scmp.le.s32.totalorder 1, %s9
    %p112 = scmp.lt.s32.totalorder %s9, 5
    %p113 = pnand %p111, %p112
    %p114 = pneg %p113
    // Predicated region
    $region9: #{network_forward.5} parent=5 // pred_check
      _
    $region10: #{network_forward.5} parent=5 // pred_check_branch
      %116 = sbr.rel (%p113) target = $region12
    $region11: #{network_forward.5} parent=5 // pred_region
      %s117 = ssub.s32 %s9, 1
      // Predicated region
      $region13: #{network_forward.5} parent=11 // pred_check
        %p118 = pneg %p56
      $region14: #{network_forward.5} parent=11 // pred_check_branch
        %120 = sbr.rel (%p118) target = $region16
      $region15: #{network_forward.5} parent=11 // pred_region
        _
      $region16: #{network_forward.5} parent=11 // pred_fallthru
        _
      // Predicated region
      $region17: #{network_forward.5} parent=11 // pred_check
        %p121 = pneg %p77
      $region18: #{network_forward.5} parent=11 // pred_check_branch
        %123 = sbr.rel (%p121) target = $region20
      $region19: #{network_forward.5} parent=11 // pred_region
        _
      $region20: #{network_forward.5} parent=11 // pred_fallthru
        _
    $region12: #{network_forward.5} parent=5 // pred_fallthru
      _
    %p124 = scmp.lt.s32.totalorder %s9, 4
    // Predicated region
    $region21: #{network_forward.5} parent=5 // pred_check
      %p125 = pneg %p124
    $region22: #{network_forward.5} parent=5 // pred_check_branch
      %127 = sbr.rel (%p125) target = $region24
    $region23: #{network_forward.5} parent=5 // pred_region
      // Predicated region
      $region25: #{network_forward.5} parent=23 // pred_check
        %p128 = pneg %p29
      $region26: #{network_forward.5} parent=23 // pred_check_branch
        %130 = sbr.rel (%p128) target = $region28
      $region27: #{network_forward.5} parent=23 // pred_region
        %s131 = smul.u32 32, %s9
        %p132 = scmp.lt.s32.totalorder %s131, 127
        %s133 = scalar_select %p132, %s131, 127
        %s134 = smul.addr %s133, 2
        %s135 = smul.addr %s134, 4
        %s136 = scalar_lea.vmem %s0, %s135
        %s137 = smul.u32 32, %s9
      $region28: #{network_forward.5} parent=23 // pred_fallthru
        _
    $region24: #{network_forward.5} parent=5 // pred_fallthru
      _
    %p138 = scmp.le.s32.totalorder 1, %s9
    %p139 = scmp.lt.s32.totalorder %s9, 5
    %p140 = pnand %p138, %p139
    %p141 = pneg %p140
    // Predicated region
    $region29: #{network_forward.5} parent=5 // pred_check
      _
    $region30: #{network_forward.5} parent=5 // pred_check_branch
      %143 = sbr.rel (%p140) target = $region32
    $region31: #{network_forward.5} parent=5 // pred_region
      %s144 = ssub.s32 %s9, 1
      %s145 = smul.u32 32, %s14
      %p146 = scmp.lt.s32.totalorder %s145, 127
      %s147 = scalar_select %p146, %s145, 127
      %s148 = smul.addr %s147, 2
      %s149 = smul.addr %s148, 4
      %s150 = scalar_lea.vmem %s0, %s149
      %p151 = pneg %p35
      %p152 = pneg %p32
      %p153 = pneg %p56
      %p154 = pneg %p53
      %p155 = pneg %p77
      %p156 = pneg %p74
      %p157 = pneg %p103
      %p158 = pneg %p100
      %s159 = smul.u32 32, %s14
      %p160 = scmp.lt.s32.totalorder %s159, 127
      %s161 = scalar_select %p160, %s159, 127
      %s162 = smul.addr %s161, 4
      %s163 = scalar_lea.vmem %s3, %s162
      %s164 = smul.u32 32, %s14
      %p165 = scmp.lt.s32.totalorder %s164, 127
      %s166 = scalar_select %p165, %s164, 127
      %s167 = smul.addr %s166, 2
      %s168 = smul.addr %s167, 4
      %s169 = scalar_lea.vmem %s0, %s168
      %s170 = smul.u32 32, %s14
      %s171 = smul.u32 32, %s14
      %p172 = scmp.lt.s32.totalorder %s171, 127
      %s173 = scalar_select %p172, %s171, 127
      %s174 = smul.addr %s173, 4
      %s175 = scalar_lea.vmem %s3, %s174
      %s176 = smul.u32 32, %s14
      %v178 = vld [vmem:[%s169] sm:$0xff]
      %v179 = vld [vmem:[%s169 + $0x8] sm:$0xff]
      %v180 = vld [vmem:[%s169 + $0x10] sm:$0xff]
      %v181 = vld [vmem:[%s169 + $0x18] sm:$0xff]
      %v182 = vld [vmem:[%s169 + $0x20] sm:$0xff]
      %v183 = vld [vmem:[%s169 + $0x28] sm:$0xff]
      %v184 = vld [vmem:[%s169 + $0x30] sm:$0xff]
      %v185 = vld [vmem:[%s169 + $0x38] sm:$0xff]
      %v186 = vld [vmem:[%s169 + $0x40] sm:$0xff]
      %v187 = vld [vmem:[%s169 + $0x48] sm:$0xff]
      %v188 = vld [vmem:[%s169 + $0x50] sm:$0xff]
      %v189 = vld [vmem:[%s169 + $0x58] sm:$0xff]
      %v190 = vld [vmem:[%s169 + $0x60] sm:$0xff]
      %v191 = vld [vmem:[%s169 + $0x68] sm:$0xff]
      %v192 = vld [vmem:[%s169 + $0x70] sm:$0xff]
      %v193 = vld [vmem:[%s169 + $0x78] sm:$0xff]
      %v194 = vld [vmem:[%s169 + $0x80] sm:$0xff]
      %v195 = vld [vmem:[%s169 + $0x88] sm:$0xff]
      %v196 = vld [vmem:[%s169 + $0x90] sm:$0xff]
      %v197 = vld [vmem:[%s169 + $0x98] sm:$0xff]
      %v198 = vld [vmem:[%s169 + $0xa0] sm:$0xff]
      %v199 = vld [vmem:[%s169 + $0xa8] sm:$0xff]
      %v200 = vld [vmem:[%s169 + $0xb0] sm:$0xff]
      %v201 = vld [vmem:[%s169 + $0xb8] sm:$0xff]
      %v202 = vld [vmem:[%s169 + $0xc0] sm:$0xff]
      %v203 = vld [vmem:[%s169 + $0xc8] sm:$0xff]
      %v204 = vld [vmem:[%s169 + $0xd0] sm:$0xff]
      %v205 = vld [vmem:[%s169 + $0xd8] sm:$0xff]
      %v206 = vld [vmem:[%s169 + $0xe0] sm:$0xff]
      %v207 = vld [vmem:[%s169 + $0xe8] sm:$0xff]
      %v208 = vld [vmem:[%s169 + $0xf0] sm:$0xff]
      %v209 = vld [vmem:[%s169 + $0xf8] sm:$0xff]
      %v210 = vld [vmem:[%s1] sm:$0xf]
      %v211 = vld [vmem:[%s1 + $0x4] sm:$0xf]
      %v212 = vld [vmem:[%s1 + $0x8] sm:$0xf]
      %v213 = vld [vmem:[%s1 + $0xc] sm:$0xf]
      %v214 = vld [vmem:[%s1 + $0x10] sm:$0xf]
      %v215 = vld [vmem:[%s1 + $0x14] sm:$0xf]
      %v216 = vld [vmem:[%s1 + $0x18] sm:$0xf]
      %v217 = vld [vmem:[%s1 + $0x1c] sm:$0xf]
      %v218 = vld [vmem:[%s1 + $0x20] sm:$0xf]
      %v219 = vld [vmem:[%s1 + $0x24] sm:$0xf]
      %v220 = vld [vmem:[%s1 + $0x28] sm:$0xf]
      %v221 = vld [vmem:[%s1 + $0x2c] sm:$0xf]
      %v222 = vld [vmem:[%s1 + $0x30] sm:$0xf]
      %v223 = vld [vmem:[%s1 + $0x34] sm:$0xf]
      %v224 = vld [vmem:[%s1 + $0x38] sm:$0xf]
      %v225 = vld [vmem:[%s1 + $0x3c] sm:$0xf]
      %v226 = vld [vmem:[%s1 + $0x40] sm:$0xf]
      %v227 = vld [vmem:[%s1 + $0x44] sm:$0xf]
      %v228 = vld [vmem:[%s1 + $0x48] sm:$0xf]
      %v229 = vld [vmem:[%s1 + $0x4c] sm:$0xf]
      %v230 = vld [vmem:[%s1 + $0x50] sm:$0xf]
      %v231 = vld [vmem:[%s1 + $0x54] sm:$0xf]
      %v232 = vld [vmem:[%s1 + $0x58] sm:$0xf]
      %v233 = vld [vmem:[%s1 + $0x5c] sm:$0xf]
      %v234 = vld [vmem:[%s1 + $0x60] sm:$0xf]
      %v235 = vld [vmem:[%s1 + $0x64] sm:$0xf]
      %v236 = vld [vmem:[%s1 + $0x68] sm:$0xf]
      %v237 = vld [vmem:[%s1 + $0x6c] sm:$0xf]
      %v238 = vld [vmem:[%s1 + $0x70] sm:$0xf]
      %v239 = vld [vmem:[%s1 + $0x74] sm:$0xf]
      %v240 = vld [vmem:[%s1 + $0x78] sm:$0xf]
      %v241 = vld [vmem:[%s1 + $0x7c] sm:$0xf]
      %v242 = vld [vmem:[%s2] sm:$0x1]
      %v244 = vlaneseq
      %v245 = vshrl.u32 %v244, 7
      %v246 = vsub.s32 0, %v245
      %v247 = vrot.slane %v242, %v246
      %v281 = vunpack.c.l.b16 %v178
      %v282 = vunpack.c.h.b16 %v178
      %v283 = vunpack.c.l.b16 %v179
      %v284 = vunpack.c.h.b16 %v179
      %v285 = vunpack.c.l.b16 %v180
      %v286 = vunpack.c.h.b16 %v180
      %v287 = vunpack.c.l.b16 %v181
      %v288 = vunpack.c.h.b16 %v181
      %v289 = vunpack.c.l.b16 %v182
      %v290 = vunpack.c.h.b16 %v182
      %v291 = vunpack.c.l.b16 %v183
      %v292 = vunpack.c.h.b16 %v183
      %v293 = vunpack.c.l.b16 %v184
      %v294 = vunpack.c.h.b16 %v184
      %v295 = vunpack.c.l.b16 %v185
      %v296 = vunpack.c.h.b16 %v185
      %v297 = vunpack.c.l.b16 %v186
      %v298 = vunpack.c.h.b16 %v186
      %v299 = vunpack.c.l.b16 %v187
      %v300 = vunpack.c.h.b16 %v187
      %v301 = vunpack.c.l.b16 %v188
      %v302 = vunpack.c.h.b16 %v188
      %v303 = vunpack.c.l.b16 %v189
      %v304 = vunpack.c.h.b16 %v189
      %v305 = vunpack.c.l.b16 %v190
      %v306 = vunpack.c.h.b16 %v190
      %v307 = vunpack.c.l.b16 %v191
      %v308 = vunpack.c.h.b16 %v191
      %v309 = vunpack.c.l.b16 %v192
      %v310 = vunpack.c.h.b16 %v192
      %v311 = vunpack.c.l.b16 %v193
      %v312 = vunpack.c.h.b16 %v193
      %v313 = vunpack.c.l.b16 %v194
      %v314 = vunpack.c.h.b16 %v194
      %v315 = vunpack.c.l.b16 %v195
      %v316 = vunpack.c.h.b16 %v195
      %v317 = vunpack.c.l.b16 %v196
      %v318 = vunpack.c.h.b16 %v196
      %v319 = vunpack.c.l.b16 %v197
      %v320 = vunpack.c.h.b16 %v197
      %v321 = vunpack.c.l.b16 %v198
      %v322 = vunpack.c.h.b16 %v198
      %v323 = vunpack.c.l.b16 %v199
      %v324 = vunpack.c.h.b16 %v199
      %v325 = vunpack.c.l.b16 %v200
      %v326 = vunpack.c.h.b16 %v200
      %v327 = vunpack.c.l.b16 %v201
      %v328 = vunpack.c.h.b16 %v201
      %v329 = vunpack.c.l.b16 %v202
      %v330 = vunpack.c.h.b16 %v202
      %v331 = vunpack.c.l.b16 %v203
      %v332 = vunpack.c.h.b16 %v203
      %v333 = vunpack.c.l.b16 %v204
      %v334 = vunpack.c.h.b16 %v204
      %v335 = vunpack.c.l.b16 %v205
      %v336 = vunpack.c.h.b16 %v205
      %v337 = vunpack.c.l.b16 %v206
      %v338 = vunpack.c.h.b16 %v206
      %v339 = vunpack.c.l.b16 %v207
      %v340 = vunpack.c.h.b16 %v207
      %v341 = vunpack.c.l.b16 %v208
      %v342 = vunpack.c.h.b16 %v208
      %v343 = vunpack.c.l.b16 %v209
      %v344 = vunpack.c.h.b16 %v209
      %v345 = vpack.c.b16 %v283, %v281
      %v346 = vpack.c.b16 %v284, %v282
      %v347 = vpack.c.b16 %v287, %v285
      %v348 = vpack.c.b16 %v288, %v286
      %v349 = vpack.c.b16 %v291, %v289
      %v350 = vpack.c.b16 %v292, %v290
      %v351 = vpack.c.b16 %v295, %v293
      %v352 = vpack.c.b16 %v296, %v294
      %v353 = vpack.c.b16 %v299, %v297
      %v354 = vpack.c.b16 %v300, %v298
      %v355 = vpack.c.b16 %v303, %v301
      %v356 = vpack.c.b16 %v304, %v302
      %v357 = vpack.c.b16 %v307, %v305
      %v358 = vpack.c.b16 %v308, %v306
      %v359 = vpack.c.b16 %v311, %v309
      %v360 = vpack.c.b16 %v312, %v310
      %v361 = vpack.c.b16 %v315, %v313
      %v362 = vpack.c.b16 %v316, %v314
      %v363 = vpack.c.b16 %v319, %v317
      %v364 = vpack.c.b16 %v320, %v318
      %v365 = vpack.c.b16 %v323, %v321
      %v366 = vpack.c.b16 %v324, %v322
      %v367 = vpack.c.b16 %v327, %v325
      %v368 = vpack.c.b16 %v328, %v326
      %v369 = vpack.c.b16 %v331, %v329
      %v370 = vpack.c.b16 %v332, %v330
      %v371 = vpack.c.b16 %v335, %v333
      %v372 = vpack.c.b16 %v336, %v334
      %v373 = vpack.c.b16 %v339, %v337
      %v374 = vpack.c.b16 %v340, %v338
      %v375 = vpack.c.b16 %v343, %v341
      %v376 = vpack.c.b16 %v344, %v342
      %v441 = vunpack.c.l.b16 %v210
      %v442 = vunpack.c.l.b16 %v211
      %v443 = vunpack.c.l.b16 %v212
      %v444 = vunpack.c.l.b16 %v213
      %v445 = vunpack.c.l.b16 %v214
      %v446 = vunpack.c.l.b16 %v215
      %v447 = vunpack.c.l.b16 %v216
      %v448 = vunpack.c.l.b16 %v217
      %v449 = vunpack.c.l.b16 %v218
      %v450 = vunpack.c.l.b16 %v219
      %v451 = vunpack.c.l.b16 %v220
      %v452 = vunpack.c.l.b16 %v221
      %v453 = vunpack.c.l.b16 %v222
      %v454 = vunpack.c.l.b16 %v223
      %v455 = vunpack.c.l.b16 %v224
      %v456 = vunpack.c.l.b16 %v225
      %v457 = vunpack.c.l.b16 %v226
      %v458 = vunpack.c.l.b16 %v227
      %v459 = vunpack.c.l.b16 %v228
      %v460 = vunpack.c.l.b16 %v229
      %v461 = vunpack.c.l.b16 %v230
      %v462 = vunpack.c.l.b16 %v231
      %v463 = vunpack.c.l.b16 %v232
      %v464 = vunpack.c.l.b16 %v233
      %v465 = vunpack.c.l.b16 %v234
      %v466 = vunpack.c.l.b16 %v235
      %v467 = vunpack.c.l.b16 %v236
      %v468 = vunpack.c.l.b16 %v237
      %v469 = vunpack.c.l.b16 %v238
      %v470 = vunpack.c.l.b16 %v239
      %v471 = vunpack.c.l.b16 %v240
      %v472 = vunpack.c.l.b16 %v241
      %v473 = vpack.c.b16 %v442, %v441
      %v474 = vpack.c.b16 %v444, %v443
      %v475 = vpack.c.b16 %v446, %v445
      %v476 = vpack.c.b16 %v448, %v447
      %v477 = vpack.c.b16 %v450, %v449
      %v478 = vpack.c.b16 %v452, %v451
      %v479 = vpack.c.b16 %v454, %v453
      %v480 = vpack.c.b16 %v456, %v455
      %v481 = vpack.c.b16 %v458, %v457
      %v482 = vpack.c.b16 %v460, %v459
      %v483 = vpack.c.b16 %v462, %v461
      %v484 = vpack.c.b16 %v464, %v463
      %v485 = vpack.c.b16 %v466, %v465
      %v486 = vpack.c.b16 %v468, %v467
      %v487 = vpack.c.b16 %v470, %v469
      %v488 = vpack.c.b16 %v472, %v471
      %505 = vmatprep.subr.bf16.mxu0 0
      %506 = vmatpush1.bf16.msra.mxu0 %v473
      %507 = vmatprep.subr.bf16.mxu0 0
      %508 = vmatpush1.bf16.msra.mxu0 %v474
      %509 = vmatprep.subr.bf16.mxu0 0
      %510 = vmatpush1.bf16.msra.mxu0 %v475
      %511 = vmatprep.subr.bf16.mxu0 0
      %512 = vmatpush1.bf16.msra.mxu0 %v476
      %513 = vmatprep.subr.bf16.mxu0 0
      %514 = vmatpush1.bf16.msra.mxu0 %v477
      %515 = vmatprep.subr.bf16.mxu0 0
      %516 = vmatpush1.bf16.msra.mxu0 %v478
      %517 = vmatprep.subr.bf16.mxu0 0
      %518 = vmatpush1.bf16.msra.mxu0 %v479
      %519 = vmatprep.subr.bf16.mxu0 0
      %520 = vmatpush1.bf16.msra.mxu0 %v480
      %521 = vmatprep.subr.bf16.mxu0 0
      %522 = vmatpush1.bf16.msra.mxu0 %v481
      %523 = vmatprep.subr.bf16.mxu0 0
      %524 = vmatpush1.bf16.msra.mxu0 %v482
      %525 = vmatprep.subr.bf16.mxu0 0
      %526 = vmatpush1.bf16.msra.mxu0 %v483
      %527 = vmatprep.subr.bf16.mxu0 0
      %528 = vmatpush1.bf16.msra.mxu0 %v484
      %529 = vmatprep.subr.bf16.mxu0 0
      %530 = vmatpush1.bf16.msra.mxu0 %v485
      %531 = vmatprep.subr.bf16.mxu0 0
      %532 = vmatpush1.bf16.msra.mxu0 %v486
      %533 = vmatprep.subr.bf16.mxu0 0
      %534 = vmatpush1.bf16.msra.mxu0 %v487
      %535 = vmatprep.subr.bf16.mxu0 0
      %536 = vmatpush1.bf16.msra.mxu0 %v488
      %537 = vmatprep.mubr.bf16.mxu0 %v346
      %538 = vmatmul.mubr.bf16.gmra.mrb[0].mxu0 %v345
      %v539 = vpop.f32.mrb[0].mxu0
      %v540 = vadd.f32 %v247, %v539
      %v541 = vpop.f32.mrb[0].mxu0
      %v542 = vpop.f32.mrb[0].mxu0
      %v543 = vadd.f32 %v247, %v542
      %v544 = vpop.f32.mrb[0].mxu0
      %545 = vmatprep.mubr.bf16.mxu0 %v348
      %546 = vmatmul.mubr.bf16.gmra.mrb[0].mxu0 %v347
      %v547 = vpop.f32.mrb[0].mxu0
      %v548 = vadd.f32 %v247, %v547
      %v549 = vpop.f32.mrb[0].mxu0
      %v550 = vpop.f32.mrb[0].mxu0
      %v551 = vadd.f32 %v247, %v550
      %v552 = vpop.f32.mrb[0].mxu0
      %553 = vmatprep.mubr.bf16.mxu0 %v350
      %554 = vmatmul.mubr.bf16.gmra.mrb[0].mxu0 %v349
      %v555 = vpop.f32.mrb[0].mxu0
      %v556 = vadd.f32 %v247, %v555
      %v557 = vpop.f32.mrb[0].mxu0
      %v558 = vpop.f32.mrb[0].mxu0
      %v559 = vadd.f32 %v247, %v558
      %v560 = vpop.f32.mrb[0].mxu0
      %561 = vmatprep.mubr.bf16.mxu0 %v352
      %562 = vmatmul.mubr.bf16.gmra.mrb[0].mxu0 %v351
      %v563 = vpop.f32.mrb[0].mxu0
      %v564 = vadd.f32 %v247, %v563
      %v565 = vpop.f32.mrb[0].mxu0
      %v566 = vpop.f32.mrb[0].mxu0
      %v567 = vadd.f32 %v247, %v566
      %v568 = vpop.f32.mrb[0].mxu0
      %569 = vmatprep.mubr.bf16.mxu0 %v354
      %570 = vmatmul.mubr.bf16.gmra.mrb[0].mxu0 %v353
      %v571 = vpop.f32.mrb[0].mxu0
      %v572 = vadd.f32 %v247, %v571
      %v573 = vpop.f32.mrb[0].mxu0
      %v574 = vpop.f32.mrb[0].mxu0
      %v575 = vadd.f32 %v247, %v574
      %v576 = vpop.f32.mrb[0].mxu0
      %577 = vmatprep.mubr.bf16.mxu0 %v356
      %578 = vmatmul.mubr.bf16.gmra.mrb[0].mxu0 %v355
      %v579 = vpop.f32.mrb[0].mxu0
      %v580 = vadd.f32 %v247, %v579
      %v581 = vpop.f32.mrb[0].mxu0
      %v582 = vpop.f32.mrb[0].mxu0
      %v583 = vadd.f32 %v247, %v582
      %v584 = vpop.f32.mrb[0].mxu0
      %585 = vmatprep.mubr.bf16.mxu0 %v358
      %586 = vmatmul.mubr.bf16.gmra.mrb[0].mxu0 %v357
      %v587 = vpop.f32.mrb[0].mxu0
      %v588 = vadd.f32 %v247, %v587
      %v589 = vpop.f32.mrb[0].mxu0
      %v590 = vpop.f32.mrb[0].mxu0
      %v591 = vadd.f32 %v247, %v590
      %v592 = vpop.f32.mrb[0].mxu0
      %593 = vmatprep.mubr.bf16.mxu0 %v360
      %594 = vmatmul.mubr.bf16.gmra.mrb[0].mxu0 %v359
      %v595 = vpop.f32.mrb[0].mxu0
      %v596 = vadd.f32 %v247, %v595
      %v597 = vpop.f32.mrb[0].mxu0
      %v598 = vpop.f32.mrb[0].mxu0
      %v599 = vadd.f32 %v247, %v598
      %v600 = vpop.f32.mrb[0].mxu0
      %601 = vmatprep.mubr.bf16.mxu0 %v362
      %602 = vmatmul.mubr.bf16.gmra.mrb[0].mxu0 %v361
      %v603 = vpop.f32.mrb[0].mxu0
      %v604 = vadd.f32 %v247, %v603
      %v605 = vpop.f32.mrb[0].mxu0
      %v606 = vpop.f32.mrb[0].mxu0
      %v607 = vadd.f32 %v247, %v606
      %v608 = vpop.f32.mrb[0].mxu0
      %609 = vmatprep.mubr.bf16.mxu0 %v364
      %610 = vmatmul.mubr.bf16.gmra.mrb[0].mxu0 %v363
      %v611 = vpop.f32.mrb[0].mxu0
      %v612 = vadd.f32 %v247, %v611
      %v613 = vpop.f32.mrb[0].mxu0
      %v614 = vpop.f32.mrb[0].mxu0
      %v615 = vadd.f32 %v247, %v614
      %v616 = vpop.f32.mrb[0].mxu0
      %617 = vmatprep.mubr.bf16.mxu0 %v366
      %618 = vmatmul.mubr.bf16.gmra.mrb[0].mxu0 %v365
      %v619 = vpop.f32.mrb[0].mxu0
      %v620 = vadd.f32 %v247, %v619
      %v621 = vpop.f32.mrb[0].mxu0
      %v622 = vpop.f32.mrb[0].mxu0
      %v623 = vadd.f32 %v247, %v622
      %v624 = vpop.f32.mrb[0].mxu0
      %625 = vmatprep.mubr.bf16.mxu0 %v368
      %626 = vmatmul.mubr.bf16.gmra.mrb[0].mxu0 %v367
      %v627 = vpop.f32.mrb[0].mxu0
      %v628 = vadd.f32 %v247, %v627
      %v629 = vpop.f32.mrb[0].mxu0
      %v630 = vpop.f32.mrb[0].mxu0
      %v631 = vadd.f32 %v247, %v630
      %v632 = vpop.f32.mrb[0].mxu0
      %633 = vmatprep.mubr.bf16.mxu0 %v370
      %634 = vmatmul.mubr.bf16.gmra.mrb[0].mxu0 %v369
      %v635 = vpop.f32.mrb[0].mxu0
      %v636 = vadd.f32 %v247, %v635
      %v637 = vpop.f32.mrb[0].mxu0
      %v638 = vpop.f32.mrb[0].mxu0
      %v639 = vadd.f32 %v247, %v638
      %v640 = vpop.f32.mrb[0].mxu0
      %641 = vmatprep.mubr.bf16.mxu0 %v372
      %642 = vmatmul.mubr.bf16.gmra.mrb[0].mxu0 %v371
      %v643 = vpop.f32.mrb[0].mxu0
      %v644 = vadd.f32 %v247, %v643
      %v645 = vpop.f32.mrb[0].mxu0
      %v646 = vpop.f32.mrb[0].mxu0
      %v647 = vadd.f32 %v247, %v646
      %v648 = vpop.f32.mrb[0].mxu0
      %649 = vmatprep.mubr.bf16.mxu0 %v374
      %650 = vmatmul.mubr.bf16.gmra.mrb[0].mxu0 %v373
      %v651 = vpop.f32.mrb[0].mxu0
      %v652 = vadd.f32 %v247, %v651
      %v653 = vpop.f32.mrb[0].mxu0
      %v654 = vpop.f32.mrb[0].mxu0
      %v655 = vadd.f32 %v247, %v654
      %v656 = vpop.f32.mrb[0].mxu0
      %657 = vmatprep.mubr.bf16.mxu0 %v376
      %658 = vmatmul.mubr.bf16.gmra.mrb[0].mxu0 %v375
      %v659 = vpop.f32.mrb[0].mxu0
      %v660 = vadd.f32 %v247, %v659
      %v661 = vpop.f32.mrb[0].mxu0
      %v662 = vpop.f32.mrb[0].mxu0
      %v663 = vadd.f32 %v247, %v662
      %v664 = vpop.f32.mrb[0].mxu0
      %665 = vdwg.mxu0
      %v666 = vmax.f32 %v540, 0.0
      %v667 = vmax.f32 %v543, 0.0
      %v668 = vmax.f32 %v548, 0.0
      %v669 = vmax.f32 %v551, 0.0
      %v670 = vmax.f32 %v556, 0.0
      %v671 = vmax.f32 %v559, 0.0
      %v672 = vmax.f32 %v564, 0.0
      %v673 = vmax.f32 %v567, 0.0
      %v674 = vmax.f32 %v572, 0.0
      %v675 = vmax.f32 %v575, 0.0
      %v676 = vmax.f32 %v580, 0.0
      %v677 = vmax.f32 %v583, 0.0
      %v678 = vmax.f32 %v588, 0.0
      %v679 = vmax.f32 %v591, 0.0
      %v680 = vmax.f32 %v596, 0.0
      %v681 = vmax.f32 %v599, 0.0
      %v682 = vmax.f32 %v604, 0.0
      %v683 = vmax.f32 %v607, 0.0
      %v684 = vmax.f32 %v612, 0.0
      %v685 = vmax.f32 %v615, 0.0
      %v686 = vmax.f32 %v620, 0.0
      %v687 = vmax.f32 %v623, 0.0
      %v688 = vmax.f32 %v628, 0.0
      %v689 = vmax.f32 %v631, 0.0
      %v690 = vmax.f32 %v636, 0.0
      %v691 = vmax.f32 %v639, 0.0
      %v692 = vmax.f32 %v644, 0.0
      %v693 = vmax.f32 %v647, 0.0
      %v694 = vmax.f32 %v652, 0.0
      %v695 = vmax.f32 %v655, 0.0
      %v696 = vmax.f32 %v660, 0.0
      %v697 = vmax.f32 %v663, 0.0
      %v698 = vpack.c.bf16 %v667, %v666
      %v699 = vpack.c.bf16 %v669, %v668
      %v700 = vpack.c.bf16 %v671, %v670
      %v701 = vpack.c.bf16 %v673, %v672
      %v702 = vpack.c.bf16 %v675, %v674
      %v703 = vpack.c.bf16 %v677, %v676
      %v704 = vpack.c.bf16 %v679, %v678
      %v705 = vpack.c.bf16 %v681, %v680
      %v706 = vpack.c.bf16 %v683, %v682
      %v707 = vpack.c.bf16 %v685, %v684
      %v708 = vpack.c.bf16 %v687, %v686
      %v709 = vpack.c.bf16 %v689, %v688
      %v710 = vpack.c.bf16 %v691, %v690
      %v711 = vpack.c.bf16 %v693, %v692
      %v712 = vpack.c.bf16 %v695, %v694
      %v713 = vpack.c.bf16 %v697, %v696
      %v730 = vunpack.c.l.b16 %v698
      %v731 = vunpack.c.h.b16 %v698
      %v732 = vunpack.c.l.b16 %v699
      %v733 = vunpack.c.h.b16 %v699
      %v734 = vunpack.c.l.b16 %v700
      %v735 = vunpack.c.h.b16 %v700
      %v736 = vunpack.c.l.b16 %v701
      %v737 = vunpack.c.h.b16 %v701
      %v738 = vunpack.c.l.b16 %v702
      %v739 = vunpack.c.h.b16 %v702
      %v740 = vunpack.c.l.b16 %v703
      %v741 = vunpack.c.h.b16 %v703
      %v742 = vunpack.c.l.b16 %v704
      %v743 = vunpack.c.h.b16 %v704
      %v744 = vunpack.c.l.b16 %v705
      %v745 = vunpack.c.h.b16 %v705
      %v746 = vunpack.c.l.b16 %v706
      %v747 = vunpack.c.h.b16 %v706
      %v748 = vunpack.c.l.b16 %v707
      %v749 = vunpack.c.h.b16 %v707
      %v750 = vunpack.c.l.b16 %v708
      %v751 = vunpack.c.h.b16 %v708
      %v752 = vunpack.c.l.b16 %v709
      %v753 = vunpack.c.h.b16 %v709
      %v754 = vunpack.c.l.b16 %v710
      %v755 = vunpack.c.h.b16 %v710
      %v756 = vunpack.c.l.b16 %v711
      %v757 = vunpack.c.h.b16 %v711
      %v758 = vunpack.c.l.b16 %v712
      %v759 = vunpack.c.h.b16 %v712
      %v760 = vunpack.c.l.b16 %v713
      %v761 = vunpack.c.h.b16 %v713
      %v762 = vpack.c.b16 %v730, %v730
      %v763 = vpack.c.b16 %v731, %v731
      %v764 = vpack.c.b16 %v732, %v732
      %v765 = vpack.c.b16 %v733, %v733
      %v766 = vpack.c.b16 %v734, %v734
      %v767 = vpack.c.b16 %v735, %v735
      %v768 = vpack.c.b16 %v736, %v736
      %v769 = vpack.c.b16 %v737, %v737
      %v770 = vpack.c.b16 %v738, %v738
      %v771 = vpack.c.b16 %v739, %v739
      %v772 = vpack.c.b16 %v740, %v740
      %v773 = vpack.c.b16 %v741, %v741
      %v774 = vpack.c.b16 %v742, %v742
      %v775 = vpack.c.b16 %v743, %v743
      %v776 = vpack.c.b16 %v744, %v744
      %v777 = vpack.c.b16 %v745, %v745
      %v778 = vpack.c.b16 %v746, %v746
      %v779 = vpack.c.b16 %v747, %v747
      %v780 = vpack.c.b16 %v748, %v748
      %v781 = vpack.c.b16 %v749, %v749
      %v782 = vpack.c.b16 %v750, %v750
      %v783 = vpack.c.b16 %v751, %v751
      %v784 = vpack.c.b16 %v752, %v752
      %v785 = vpack.c.b16 %v753, %v753
      %v786 = vpack.c.b16 %v754, %v754
      %v787 = vpack.c.b16 %v755, %v755
      %v788 = vpack.c.b16 %v756, %v756
      %v789 = vpack.c.b16 %v757, %v757
      %v790 = vpack.c.b16 %v758, %v758
      %v791 = vpack.c.b16 %v759, %v759
      %v792 = vpack.c.b16 %v760, %v760
      %v793 = vpack.c.b16 %v761, %v761
      %vm826 = vcmask 519168
      %827 = vst.msk [vmem:[%s175] sm:$0xf] %vm826, %v762
      %828 = vst.msk [vmem:[%s175 + $0x4] sm:$0xf] %vm826, %v763
      %829 = vst.msk [vmem:[%s175 + $0x8] sm:$0xf] %vm826, %v764
      %830 = vst.msk [vmem:[%s175 + $0xc] sm:$0xf] %vm826, %v765
      %831 = vst.msk [vmem:[%s175 + $0x10] sm:$0xf] %vm826, %v766
      %832 = vst.msk [vmem:[%s175 + $0x14] sm:$0xf] %vm826, %v767
      %833 = vst.msk [vmem:[%s175 + $0x18] sm:$0xf] %vm826, %v768
      %834 = vst.msk [vmem:[%s175 + $0x1c] sm:$0xf] %vm826, %v769
      %835 = vst.msk [vmem:[%s175 + $0x20] sm:$0xf] %vm826, %v770
      %836 = vst.msk [vmem:[%s175 + $0x24] sm:$0xf] %vm826, %v771
      %837 = vst.msk [vmem:[%s175 + $0x28] sm:$0xf] %vm826, %v772
      %838 = vst.msk [vmem:[%s175 + $0x2c] sm:$0xf] %vm826, %v773
      %839 = vst.msk [vmem:[%s175 + $0x30] sm:$0xf] %vm826, %v774
      %840 = vst.msk [vmem:[%s175 + $0x34] sm:$0xf] %vm826, %v775
      %841 = vst.msk [vmem:[%s175 + $0x38] sm:$0xf] %vm826, %v776
      %842 = vst.msk [vmem:[%s175 + $0x3c] sm:$0xf] %vm826, %v777
      %843 = vst.msk [vmem:[%s175 + $0x40] sm:$0xf] %vm826, %v778
      %844 = vst.msk [vmem:[%s175 + $0x44] sm:$0xf] %vm826, %v779
      %845 = vst.msk [vmem:[%s175 + $0x48] sm:$0xf] %vm826, %v780
      %846 = vst.msk [vmem:[%s175 + $0x4c] sm:$0xf] %vm826, %v781
      %847 = vst.msk [vmem:[%s175 + $0x50] sm:$0xf] %vm826, %v782
      %848 = vst.msk [vmem:[%s175 + $0x54] sm:$0xf] %vm826, %v783
      %849 = vst.msk [vmem:[%s175 + $0x58] sm:$0xf] %vm826, %v784
      %850 = vst.msk [vmem:[%s175 + $0x5c] sm:$0xf] %vm826, %v785
      %851 = vst.msk [vmem:[%s175 + $0x60] sm:$0xf] %vm826, %v786
      %852 = vst.msk [vmem:[%s175 + $0x64] sm:$0xf] %vm826, %v787
      %853 = vst.msk [vmem:[%s175 + $0x68] sm:$0xf] %vm826, %v788
      %854 = vst.msk [vmem:[%s175 + $0x6c] sm:$0xf] %vm826, %v789
      %855 = vst.msk [vmem:[%s175 + $0x70] sm:$0xf] %vm826, %v790
      %856 = vst.msk [vmem:[%s175 + $0x74] sm:$0xf] %vm826, %v791
      %857 = vst.msk [vmem:[%s175 + $0x78] sm:$0xf] %vm826, %v792
      %858 = vst.msk [vmem:[%s175 + $0x7c] sm:$0xf] %vm826, %v793
      %s859 = smul.u32 32, %s14
      %p860 = scmp.lt.s32.totalorder %s859, 127
      %s861 = scalar_select %p860, %s859, 127
      %s862 = smul.addr %s861, 4
      %s863 = scalar_lea.vmem %s3, %s862
      // Predicated region
      $region33: #{network_forward.5} parent=31 // pred_check
        %p864 = pneg %p100
      $region34: #{network_forward.5} parent=31 // pred_check_branch
        %866 = sbr.rel (%p864) target = $region36
      $region35: #{network_forward.5} parent=31 // pred_region
        %s867 = smul.u32 32, %s14
      $region36: #{network_forward.5} parent=31 // pred_fallthru
        _
    $region32: #{network_forward.5} parent=5 // pred_fallthru
      _
    %p868 = scmp.le.s32.totalorder 2, %s9
    // Predicated region
    $region37: #{network_forward.5} parent=5 // pred_check
      %p869 = pneg %p868
    $region38: #{network_forward.5} parent=5 // pred_check_branch
      %871 = sbr.rel (%p869) target = $region40
    $region39: #{network_forward.5} parent=5 // pred_region
      %s872 = ssub.s32 %s9, 2
      // Predicated region
      $region41: #{network_forward.5} parent=39 // pred_check
        %p873 = pneg %p106
      $region42: #{network_forward.5} parent=39 // pred_check_branch
        %875 = sbr.rel (%p873) target = $region44
      $region43: #{network_forward.5} parent=39 // pred_region
        %s876 = smul.u32 32, %s15
        %p877 = scmp.lt.s32.totalorder %s876, 127
        %s878 = scalar_select %p877, %s876, 127
        %s879 = smul.addr %s878, 4
        %s880 = scalar_lea.vmem %s3, %s879
      $region44: #{network_forward.5} parent=39 // pred_fallthru
        _
    $region40: #{network_forward.5} parent=5 // pred_fallthru
      _
  $region6: #{network_forward.5} parent=0 // loop_footer
    %s13 = sadd.s32 1, %s9
  $region7: #{network_forward.5} parent=0 // loop_footer_branch
    %8 = sbr.rel target = $region3
  $region8: #{network_forward.5} parent=0 // loop_exit
    _

// kernel: network_forward.6
$region0: #{network_forward.6}
  #allocation0 [shape = 'u32[]', space=smem, size = 0x4, offset = 0x4, fixed_abs, tag = 'smem constant byte address 0x4 - core index']
  #allocation1 [shape = 'u32[144,128]{1,0:T(1,128)}', space=vmem, size = 0x12000, scoped, tag = 'internal scratch']
  %s0 = inlined_call_operand.vmem [shape: bf16[168,1024], index: 0, kind: input, shape index: {}]
  %s1 = inlined_call_operand.vmem [shape: bf16[1024,64], index: 1, kind: input, shape index: {}]
  %s2 = inlined_call_operand.vmem [shape: f32[1,64], index: 2, kind: input, shape index: {}]
  %s3 = inlined_call_operand.vmem [shape: bf16[168,64], index: 3, kind: output, shape index: {}]
  %s4 = sld [smem:[#allocation0]]
  $region22: #{network_forward.6} parent=0
    _
  %s6 = ssub.s32 1, %s4
  %s7 = scalar_select 0, %s6, %s4
  // Predicated region
  $region2: #{network_forward.6} parent=0 // pred_check
    _
  $region3: #{network_forward.6} parent=0 // pred_check_branch
    %9 = sbr.rel (0) target = $region5
  $region4: #{network_forward.6} parent=0 // pred_region
    _
  $region5: #{network_forward.6} parent=0 // pred_fallthru
    _
  // Predicated region
  $region6: #{network_forward.6} parent=0 // pred_check
    _
  $region7: #{network_forward.6} parent=0 // pred_check_branch
    %11 = sbr.rel (0) target = $region9
  $region8: #{network_forward.6} parent=0 // pred_region
    _
  $region9: #{network_forward.6} parent=0 // pred_fallthru
    _
  // Predicated region
  $region10: #{network_forward.6} parent=0 // pred_check
    _
  $region11: #{network_forward.6} parent=0 // pred_check_branch
    %13 = sbr.rel (0) target = $region13
  $region12: #{network_forward.6} parent=0 // pred_region
    _
  $region13: #{network_forward.6} parent=0 // pred_fallthru
    _
  %v15 = vld [vmem:[%s0] sm:$0xff]
  %v16 = vld [vmem:[%s0 + $0x8] sm:$0xff]
  %v17 = vld [vmem:[%s0 + $0x10] sm:$0xff]
  %v18 = vld [vmem:[%s0 + $0x18] sm:$0xff]
  %v19 = vld [vmem:[%s0 + $0x20] sm:$0xff]
  %v20 = vld [vmem:[%s0 + $0x28] sm:$0xff]
  %v21 = vld [vmem:[%s0 + $0x30] sm:$0xff]
  %v22 = vld [vmem:[%s0 + $0x38] sm:$0xff]
  %v23 = vld [vmem:[%s0 + $0x40] sm:$0xff]
  %v24 = vld [vmem:[%s0 + $0x48] sm:$0xff]
  %v25 = vld [vmem:[%s0 + $0x50] sm:$0xff]
  %v26 = vld [vmem:[%s0 + $0x58] sm:$0xff]
  %v27 = vld [vmem:[%s0 + $0x60] sm:$0xff]
  %v28 = vld [vmem:[%s0 + $0x68] sm:$0xff]
  %v29 = vld [vmem:[%s0 + $0x70] sm:$0xff]
  %v30 = vld [vmem:[%s0 + $0x78] sm:$0xff]
  %v31 = vld [vmem:[%s0 + $0x80] sm:$0xff]
  %v32 = vld [vmem:[%s0 + $0x88] sm:$0xff]
  %v33 = vld [vmem:[%s0 + $0x90] sm:$0xff]
  %v34 = vld [vmem:[%s0 + $0x98] sm:$0xff]
  %v35 = vld [vmem:[%s0 + $0xa0] sm:$0xff]
  %v36 = vld [vmem:[%s0 + $0xa8] sm:$0xff]
  %v37 = vld [vmem:[%s0 + $0xb0] sm:$0xff]
  %v38 = vld [vmem:[%s0 + $0xb8] sm:$0xff]
  %v39 = vld [vmem:[%s0 + $0xc0] sm:$0xff]
  %v40 = vld [vmem:[%s0 + $0xc8] sm:$0xff]
  %v41 = vld [vmem:[%s0 + $0xd0] sm:$0xff]
  %v42 = vld [vmem:[%s0 + $0xd8] sm:$0xff]
  %v43 = vld [vmem:[%s0 + $0xe0] sm:$0xff]
  %v44 = vld [vmem:[%s0 + $0xe8] sm:$0xff]
  %v45 = vld [vmem:[%s0 + $0xf0] sm:$0xff]
  %v46 = vld [vmem:[%s0 + $0xf8] sm:$0xff]
  %v47 = vld [vmem:[%s0 + $0x100] sm:$0xff]
  %v48 = vld [vmem:[%s0 + $0x108] sm:$0xff]
  %v49 = vld [vmem:[%s0 + $0x110] sm:$0xff]
  %v50 = vld [vmem:[%s0 + $0x118] sm:$0xff]
  %v51 = vld [vmem:[%s0 + $0x120] sm:$0xff]
  %v52 = vld [vmem:[%s0 + $0x128] sm:$0xff]
  %v53 = vld [vmem:[%s0 + $0x130] sm:$0xff]
  %v54 = vld [vmem:[%s0 + $0x138] sm:$0xff]
  %v55 = vld [vmem:[%s0 + $0x140] sm:$0xff]
  %v56 = vld [vmem:[%s0 + $0x148] sm:$0xff]
  %v57 = vld [vmem:[%s0 + $0x150] sm:$0xff]
  %v58 = vld [vmem:[%s0 + $0x158] sm:$0xff]
  %v59 = vld [vmem:[%s0 + $0x160] sm:$0xff]
  %v60 = vld [vmem:[%s0 + $0x168] sm:$0xff]
  %v61 = vld [vmem:[%s0 + $0x170] sm:$0xff]
  %v62 = vld [vmem:[%s0 + $0x178] sm:$0xff]
  %v63 = vld [vmem:[%s0 + $0x180] sm:$0xff]
  %v64 = vld [vmem:[%s0 + $0x188] sm:$0xff]
  %v65 = vld [vmem:[%s0 + $0x190] sm:$0xff]
  %v66 = vld [vmem:[%s0 + $0x198] sm:$0xff]
  %v67 = vld [vmem:[%s0 + $0x1a0] sm:$0xff]
  %v68 = vld [vmem:[%s0 + $0x1a8] sm:$0xff]
  %v69 = vld [vmem:[%s0 + $0x1b0] sm:$0xff]
  %v70 = vld [vmem:[%s0 + $0x1b8] sm:$0xff]
  %v71 = vld [vmem:[%s0 + $0x1c0] sm:$0xff]
  %v72 = vld [vmem:[%s0 + $0x1c8] sm:$0xff]
  %v73 = vld [vmem:[%s0 + $0x1d0] sm:$0xff]
  %v74 = vld [vmem:[%s0 + $0x1d8] sm:$0xff]
  %v75 = vld [vmem:[%s0 + $0x1e0] sm:$0xff]
  %v76 = vld [vmem:[%s0 + $0x1e8] sm:$0xff]
  %v77 = vld [vmem:[%s0 + $0x1f0] sm:$0xff]
  %v78 = vld [vmem:[%s0 + $0x1f8] sm:$0xff]
  %v79 = vld [vmem:[%s0 + $0x200] sm:$0xff]
  %v80 = vld [vmem:[%s0 + $0x208] sm:$0xff]
  %v81 = vld [vmem:[%s0 + $0x210] sm:$0xff]
  %v82 = vld [vmem:[%s0 + $0x218] sm:$0xff]
  %v83 = vld [vmem:[%s0 + $0x220] sm:$0xff]
  %v84 = vld [vmem:[%s0 + $0x228] sm:$0xff]
  %v85 = vld [vmem:[%s0 + $0x230] sm:$0xff]
  %v86 = vld [vmem:[%s0 + $0x238] sm:$0xff]
  %v87 = vld [vmem:[%s0 + $0x240] sm:$0xff]
  %v88 = vld [vmem:[%s0 + $0x248] sm:$0xff]
  %v89 = vld [vmem:[%s0 + $0x250] sm:$0xff]
  %v90 = vld [vmem:[%s0 + $0x258] sm:$0xff]
  %v91 = vld [vmem:[%s0 + $0x260] sm:$0xff]
  %v92 = vld [vmem:[%s0 + $0x268] sm:$0xff]
  %v93 = vld [vmem:[%s0 + $0x270] sm:$0xff]
  %v94 = vld [vmem:[%s0 + $0x278] sm:$0xff]
  %v95 = vld [vmem:[%s0 + $0x280] sm:$0xff]
  %v96 = vld [vmem:[%s0 + $0x288] sm:$0xff]
  %v97 = vld [vmem:[%s0 + $0x290] sm:$0xff]
  %v98 = vld [vmem:[%s0 + $0x298] sm:$0xff]
  %v99 = vld [vmem:[%s1] sm:$0xf]
  %v100 = vld [vmem:[%s1 + $0x4] sm:$0xf]
  %v101 = vld [vmem:[%s1 + $0x8] sm:$0xf]
  %v102 = vld [vmem:[%s1 + $0xc] sm:$0xf]
  %v103 = vld [vmem:[%s1 + $0x10] sm:$0xf]
  %v104 = vld [vmem:[%s1 + $0x14] sm:$0xf]
  %v105 = vld [vmem:[%s1 + $0x18] sm:$0xf]
  %v106 = vld [vmem:[%s1 + $0x1c] sm:$0xf]
  %v107 = vld [vmem:[%s1 + $0x20] sm:$0xf]
  %v108 = vld [vmem:[%s1 + $0x24] sm:$0xf]
  %v109 = vld [vmem:[%s1 + $0x28] sm:$0xf]
  %v110 = vld [vmem:[%s1 + $0x2c] sm:$0xf]
  %v111 = vld [vmem:[%s1 + $0x30] sm:$0xf]
  %v112 = vld [vmem:[%s1 + $0x34] sm:$0xf]
  %v113 = vld [vmem:[%s1 + $0x38] sm:$0xf]
  %v114 = vld [vmem:[%s1 + $0x3c] sm:$0xf]
  %v115 = vld [vmem:[%s1 + $0x40] sm:$0xf]
  %v116 = vld [vmem:[%s1 + $0x44] sm:$0xf]
  %v117 = vld [vmem:[%s1 + $0x48] sm:$0xf]
  %v118 = vld [vmem:[%s1 + $0x4c] sm:$0xf]
  %v119 = vld [vmem:[%s1 + $0x50] sm:$0xf]
  %v120 = vld [vmem:[%s1 + $0x54] sm:$0xf]
  %v121 = vld [vmem:[%s1 + $0x58] sm:$0xf]
  %v122 = vld [vmem:[%s1 + $0x5c] sm:$0xf]
  %v123 = vld [vmem:[%s1 + $0x60] sm:$0xf]
  %v124 = vld [vmem:[%s1 + $0x64] sm:$0xf]
  %v125 = vld [vmem:[%s1 + $0x68] sm:$0xf]
  %v126 = vld [vmem:[%s1 + $0x6c] sm:$0xf]
  %v127 = vld [vmem:[%s1 + $0x70] sm:$0xf]
  %v128 = vld [vmem:[%s1 + $0x74] sm:$0xf]
  %v129 = vld [vmem:[%s1 + $0x78] sm:$0xf]
  %v130 = vld [vmem:[%s1 + $0x7c] sm:$0xf]
  %v131 = vld [vmem:[%s1 + $0x80] sm:$0xf]
  %v132 = vld [vmem:[%s1 + $0x84] sm:$0xf]
  %v133 = vld [vmem:[%s1 + $0x88] sm:$0xf]
  %v134 = vld [vmem:[%s1 + $0x8c] sm:$0xf]
  %v135 = vld [vmem:[%s1 + $0x90] sm:$0xf]
  %v136 = vld [vmem:[%s1 + $0x94] sm:$0xf]
  %v137 = vld [vmem:[%s1 + $0x98] sm:$0xf]
  %v138 = vld [vmem:[%s1 + $0x9c] sm:$0xf]
  %v139 = vld [vmem:[%s1 + $0xa0] sm:$0xf]
  %v140 = vld [vmem:[%s1 + $0xa4] sm:$0xf]
  %v141 = vld [vmem:[%s1 + $0xa8] sm:$0xf]
  %v142 = vld [vmem:[%s1 + $0xac] sm:$0xf]
  %v143 = vld [vmem:[%s1 + $0xb0] sm:$0xf]
  %v144 = vld [vmem:[%s1 + $0xb4] sm:$0xf]
  %v145 = vld [vmem:[%s1 + $0xb8] sm:$0xf]
  %v146 = vld [vmem:[%s1 + $0xbc] sm:$0xf]
  %v147 = vld [vmem:[%s1 + $0xc0] sm:$0xf]
  %v148 = vld [vmem:[%s1 + $0xc4] sm:$0xf]
  %v149 = vld [vmem:[%s1 + $0xc8] sm:$0xf]
  %v150 = vld [vmem:[%s1 + $0xcc] sm:$0xf]
  %v151 = vld [vmem:[%s1 + $0xd0] sm:$0xf]
  %v152 = vld [vmem:[%s1 + $0xd4] sm:$0xf]
  %v153 = vld [vmem:[%s1 + $0xd8] sm:$0xf]
  %v154 = vld [vmem:[%s1 + $0xdc] sm:$0xf]
  %v155 = vld [vmem:[%s1 + $0xe0] sm:$0xf]
  %v156 = vld [vmem:[%s1 + $0xe4] sm:$0xf]
  %v157 = vld [vmem:[%s1 + $0xe8] sm:$0xf]
  %v158 = vld [vmem:[%s1 + $0xec] sm:$0xf]
  %v159 = vld [vmem:[%s1 + $0xf0] sm:$0xf]
  %v160 = vld [vmem:[%s1 + $0xf4] sm:$0xf]
  %v161 = vld [vmem:[%s1 + $0xf8] sm:$0xf]
  %v162 = vld [vmem:[%s1 + $0xfc] sm:$0xf]
  %v163 = vld [vmem:[%s1 + $0x100] sm:$0xf]
  %v164 = vld [vmem:[%s1 + $0x104] sm:$0xf]
  %v165 = vld [vmem:[%s1 + $0x108] sm:$0xf]
  %v166 = vld [vmem:[%s1 + $0x10c] sm:$0xf]
  %v167 = vld [vmem:[%s1 + $0x110] sm:$0xf]
  %v168 = vld [vmem:[%s1 + $0x114] sm:$0xf]
  %v169 = vld [vmem:[%s1 + $0x118] sm:$0xf]
  %v170 = vld [vmem:[%s1 + $0x11c] sm:$0xf]
  %v171 = vld [vmem:[%s1 + $0x120] sm:$0xf]
  %v172 = vld [vmem:[%s1 + $0x124] sm:$0xf]
  %v173 = vld [vmem:[%s1 + $0x128] sm:$0xf]
  %v174 = vld [vmem:[%s1 + $0x12c] sm:$0xf]
  %v175 = vld [vmem:[%s1 + $0x130] sm:$0xf]
  %v176 = vld [vmem:[%s1 + $0x134] sm:$0xf]
  %v177 = vld [vmem:[%s1 + $0x138] sm:$0xf]
  %v178 = vld [vmem:[%s1 + $0x13c] sm:$0xf]
  %v179 = vld [vmem:[%s1 + $0x140] sm:$0xf]
  %v180 = vld [vmem:[%s1 + $0x144] sm:$0xf]
  %v181 = vld [vmem:[%s1 + $0x148] sm:$0xf]
  %v182 = vld [vmem:[%s1 + $0x14c] sm:$0xf]
  %v183 = vld [vmem:[%s1 + $0x150] sm:$0xf]
  %v184 = vld [vmem:[%s1 + $0x154] sm:$0xf]
  %v185 = vld [vmem:[%s1 + $0x158] sm:$0xf]
  %v186 = vld [vmem:[%s1 + $0x15c] sm:$0xf]
  %v187 = vld [vmem:[%s1 + $0x160] sm:$0xf]
  %v188 = vld [vmem:[%s1 + $0x164] sm:$0xf]
  %v189 = vld [vmem:[%s1 + $0x168] sm:$0xf]
  %v190 = vld [vmem:[%s1 + $0x16c] sm:$0xf]
  %v191 = vld [vmem:[%s1 + $0x170] sm:$0xf]
  %v192 = vld [vmem:[%s1 + $0x174] sm:$0xf]
  %v193 = vld [vmem:[%s1 + $0x178] sm:$0xf]
  %v194 = vld [vmem:[%s1 + $0x17c] sm:$0xf]
  %v195 = vld [vmem:[%s1 + $0x180] sm:$0xf]
  %v196 = vld [vmem:[%s1 + $0x184] sm:$0xf]
  %v197 = vld [vmem:[%s1 + $0x188] sm:$0xf]
  %v198 = vld [vmem:[%s1 + $0x18c] sm:$0xf]
  %v199 = vld [vmem:[%s1 + $0x190] sm:$0xf]
  %v200 = vld [vmem:[%s1 + $0x194] sm:$0xf]
  %v201 = vld [vmem:[%s1 + $0x198] sm:$0xf]
  %v202 = vld [vmem:[%s1 + $0x19c] sm:$0xf]
  %v203 = vld [vmem:[%s1 + $0x1a0] sm:$0xf]
  %v204 = vld [vmem:[%s1 + $0x1a4] sm:$0xf]
  %v205 = vld [vmem:[%s1 + $0x1a8] sm:$0xf]
  %v206 = vld [vmem:[%s1 + $0x1ac] sm:$0xf]
  %v207 = vld [vmem:[%s1 + $0x1b0] sm:$0xf]
  %v208 = vld [vmem:[%s1 + $0x1b4] sm:$0xf]
  %v209 = vld [vmem:[%s1 + $0x1b8] sm:$0xf]
  %v210 = vld [vmem:[%s1 + $0x1bc] sm:$0xf]
  %v211 = vld [vmem:[%s1 + $0x1c0] sm:$0xf]
  %v212 = vld [vmem:[%s1 + $0x1c4] sm:$0xf]
  %v213 = vld [vmem:[%s1 + $0x1c8] sm:$0xf]
  %v214 = vld [vmem:[%s1 + $0x1cc] sm:$0xf]
  %v215 = vld [vmem:[%s1 + $0x1d0] sm:$0xf]
  %v216 = vld [vmem:[%s1 + $0x1d4] sm:$0xf]
  %v217 = vld [vmem:[%s1 + $0x1d8] sm:$0xf]
  %v218 = vld [vmem:[%s1 + $0x1dc] sm:$0xf]
  %v219 = vld [vmem:[%s1 + $0x1e0] sm:$0xf]
  %v220 = vld [vmem:[%s1 + $0x1e4] sm:$0xf]
  %v221 = vld [vmem:[%s1 + $0x1e8] sm:$0xf]
  %v222 = vld [vmem:[%s1 + $0x1ec] sm:$0xf]
  %v223 = vld [vmem:[%s1 + $0x1f0] sm:$0xf]
  %v224 = vld [vmem:[%s1 + $0x1f4] sm:$0xf]
  %v225 = vld [vmem:[%s1 + $0x1f8] sm:$0xf]
  %v226 = vld [vmem:[%s1 + $0x1fc] sm:$0xf]
  %v227 = vld [vmem:[%s2] sm:$0x1]
  %v229 = vlaneseq
  %v230 = vshrl.u32 %v229, 7
  %v231 = vsub.s32 0, %v230
  %v232 = vrot.slane %v227, %v231
  %v318 = vunpack.c.l.b16 %v15
  %v319 = vunpack.c.h.b16 %v15
  %v320 = vunpack.c.l.b16 %v16
  %v321 = vunpack.c.h.b16 %v16
  %v322 = vunpack.c.l.b16 %v17
  %v323 = vunpack.c.h.b16 %v17
  %v324 = vunpack.c.l.b16 %v18
  %v325 = vunpack.c.h.b16 %v18
  %v326 = vunpack.c.l.b16 %v19
  %v327 = vunpack.c.h.b16 %v19
  %v328 = vunpack.c.l.b16 %v20
  %v329 = vunpack.c.h.b16 %v20
  %v330 = vunpack.c.l.b16 %v21
  %v331 = vunpack.c.h.b16 %v21
  %v332 = vunpack.c.l.b16 %v22
  %v333 = vunpack.c.h.b16 %v22
  %v334 = vunpack.c.l.b16 %v23
  %v335 = vunpack.c.h.b16 %v23
  %v336 = vunpack.c.l.b16 %v24
  %v337 = vunpack.c.h.b16 %v24
  %v338 = vunpack.c.l.b16 %v25
  %v339 = vunpack.c.h.b16 %v25
  %v340 = vunpack.c.l.b16 %v26
  %v341 = vunpack.c.h.b16 %v26
  %v342 = vunpack.c.l.b16 %v27
  %v343 = vunpack.c.h.b16 %v27
  %v344 = vunpack.c.l.b16 %v28
  %v345 = vunpack.c.h.b16 %v28
  %v346 = vunpack.c.l.b16 %v29
  %v347 = vunpack.c.h.b16 %v29
  %v348 = vunpack.c.l.b16 %v30
  %v349 = vunpack.c.h.b16 %v30
  %v350 = vunpack.c.l.b16 %v31
  %v351 = vunpack.c.h.b16 %v31
  %v352 = vunpack.c.l.b16 %v32
  %v353 = vunpack.c.h.b16 %v32
  %v354 = vunpack.c.l.b16 %v33
  %v355 = vunpack.c.h.b16 %v33
  %v356 = vunpack.c.l.b16 %v34
  %v357 = vunpack.c.h.b16 %v34
  %v358 = vunpack.c.l.b16 %v35
  %v359 = vunpack.c.h.b16 %v35
  %v360 = vunpack.c.l.b16 %v36
  %v361 = vunpack.c.h.b16 %v36
  %v362 = vunpack.c.l.b16 %v37
  %v363 = vunpack.c.h.b16 %v37
  %v364 = vunpack.c.l.b16 %v38
  %v365 = vunpack.c.h.b16 %v38
  %v366 = vunpack.c.l.b16 %v39
  %v367 = vunpack.c.h.b16 %v39
  %v368 = vunpack.c.l.b16 %v40
  %v369 = vunpack.c.h.b16 %v40
  %v370 = vunpack.c.l.b16 %v41
  %v371 = vunpack.c.h.b16 %v41
  %v372 = vunpack.c.l.b16 %v42
  %v373 = vunpack.c.h.b16 %v42
  %v374 = vunpack.c.l.b16 %v43
  %v375 = vunpack.c.h.b16 %v43
  %v376 = vunpack.c.l.b16 %v44
  %v377 = vunpack.c.h.b16 %v44
  %v378 = vunpack.c.l.b16 %v45
  %v379 = vunpack.c.h.b16 %v45
  %v380 = vunpack.c.l.b16 %v46
  %v381 = vunpack.c.h.b16 %v46
  %v382 = vunpack.c.l.b16 %v47
  %v383 = vunpack.c.h.b16 %v47
  %v384 = vunpack.c.l.b16 %v48
  %v385 = vunpack.c.h.b16 %v48
  %v386 = vunpack.c.l.b16 %v49
  %v387 = vunpack.c.h.b16 %v49
  %v388 = vunpack.c.l.b16 %v50
  %v389 = vunpack.c.h.b16 %v50
  %v390 = vunpack.c.l.b16 %v51
  %v391 = vunpack.c.h.b16 %v51
  %v392 = vunpack.c.l.b16 %v52
  %v393 = vunpack.c.h.b16 %v52
  %v394 = vunpack.c.l.b16 %v53
  %v395 = vunpack.c.h.b16 %v53
  %v396 = vunpack.c.l.b16 %v54
  %v397 = vunpack.c.h.b16 %v54
  %v398 = vunpack.c.l.b16 %v55
  %v399 = vunpack.c.h.b16 %v55
  %v400 = vunpack.c.l.b16 %v56
  %v401 = vunpack.c.h.b16 %v56
  %v402 = vunpack.c.l.b16 %v57
  %v403 = vunpack.c.h.b16 %v57
  %v404 = vunpack.c.l.b16 %v58
  %v405 = vunpack.c.h.b16 %v58
  %v406 = vunpack.c.l.b16 %v59
  %v407 = vunpack.c.h.b16 %v59
  %v408 = vunpack.c.l.b16 %v60
  %v409 = vunpack.c.h.b16 %v60
  %v410 = vunpack.c.l.b16 %v61
  %v411 = vunpack.c.h.b16 %v61
  %v412 = vunpack.c.l.b16 %v62
  %v413 = vunpack.c.h.b16 %v62
  %v414 = vunpack.c.l.b16 %v63
  %v415 = vunpack.c.h.b16 %v63
  %v416 = vunpack.c.l.b16 %v64
  %v417 = vunpack.c.h.b16 %v64
  %v418 = vunpack.c.l.b16 %v65
  %v419 = vunpack.c.h.b16 %v65
  %v420 = vunpack.c.l.b16 %v66
  %v421 = vunpack.c.h.b16 %v66
  %v422 = vunpack.c.l.b16 %v67
  %v423 = vunpack.c.h.b16 %v67
  %v424 = vunpack.c.l.b16 %v68
  %v425 = vunpack.c.h.b16 %v68
  %v426 = vunpack.c.l.b16 %v69
  %v427 = vunpack.c.h.b16 %v69
  %v428 = vunpack.c.l.b16 %v70
  %v429 = vunpack.c.h.b16 %v70
  %v430 = vunpack.c.l.b16 %v71
  %v431 = vunpack.c.h.b16 %v71
  %v432 = vunpack.c.l.b16 %v72
  %v433 = vunpack.c.h.b16 %v72
  %v434 = vunpack.c.l.b16 %v73
  %v435 = vunpack.c.h.b16 %v73
  %v436 = vunpack.c.l.b16 %v74
  %v437 = vunpack.c.h.b16 %v74
  %v438 = vunpack.c.l.b16 %v75
  %v439 = vunpack.c.h.b16 %v75
  %v440 = vunpack.c.l.b16 %v76
  %v441 = vunpack.c.h.b16 %v76
  %v442 = vunpack.c.l.b16 %v77
  %v443 = vunpack.c.h.b16 %v77
  %v444 = vunpack.c.l.b16 %v78
  %v445 = vunpack.c.h.b16 %v78
  %v446 = vunpack.c.l.b16 %v79
  %v447 = vunpack.c.h.b16 %v79
  %v448 = vunpack.c.l.b16 %v80
  %v449 = vunpack.c.h.b16 %v80
  %v450 = vunpack.c.l.b16 %v81
  %v451 = vunpack.c.h.b16 %v81
  %v452 = vunpack.c.l.b16 %v82
  %v453 = vunpack.c.h.b16 %v82
  %v454 = vunpack.c.l.b16 %v83
  %v455 = vunpack.c.h.b16 %v83
  %v456 = vunpack.c.l.b16 %v84
  %v457 = vunpack.c.h.b16 %v84
  %v458 = vunpack.c.l.b16 %v85
  %v459 = vunpack.c.h.b16 %v85
  %v460 = vunpack.c.l.b16 %v86
  %v461 = vunpack.c.h.b16 %v86
  %v462 = vunpack.c.l.b16 %v87
  %v463 = vunpack.c.h.b16 %v87
  %v464 = vunpack.c.l.b16 %v88
  %v465 = vunpack.c.h.b16 %v88
  %v466 = vunpack.c.l.b16 %v89
  %v467 = vunpack.c.h.b16 %v89
  %v468 = vunpack.c.l.b16 %v90
  %v469 = vunpack.c.h.b16 %v90
  %v470 = vunpack.c.l.b16 %v91
  %v471 = vunpack.c.h.b16 %v91
  %v472 = vunpack.c.l.b16 %v92
  %v473 = vunpack.c.h.b16 %v92
  %v474 = vunpack.c.l.b16 %v93
  %v475 = vunpack.c.h.b16 %v93
  %v476 = vunpack.c.l.b16 %v94
  %v477 = vunpack.c.h.b16 %v94
  %v478 = vunpack.c.l.b16 %v95
  %v479 = vunpack.c.h.b16 %v95
  %v480 = vunpack.c.l.b16 %v96
  %v481 = vunpack.c.h.b16 %v96
  %v482 = vunpack.c.l.b16 %v97
  %v483 = vunpack.c.h.b16 %v97
  %v484 = vunpack.c.l.b16 %v98
  %v485 = vunpack.c.h.b16 %v98
  %v486 = vpack.c.b16 %v326, %v318
  %v487 = vpack.c.b16 %v327, %v319
  %v488 = vpack.c.b16 %v328, %v320
  %v489 = vpack.c.b16 %v329, %v321
  %v490 = vpack.c.b16 %v330, %v322
  %v491 = vpack.c.b16 %v331, %v323
  %v492 = vpack.c.b16 %v332, %v324
  %v493 = vpack.c.b16 %v333, %v325
  %v494 = vpack.c.b16 %v342, %v334
  %v495 = vpack.c.b16 %v343, %v335
  %v496 = vpack.c.b16 %v344, %v336
  %v497 = vpack.c.b16 %v345, %v337
  %v498 = vpack.c.b16 %v346, %v338
  %v499 = vpack.c.b16 %v347, %v339
  %v500 = vpack.c.b16 %v348, %v340
  %v501 = vpack.c.b16 %v349, %v341
  %v502 = vpack.c.b16 %v358, %v350
  %v503 = vpack.c.b16 %v359, %v351
  %v504 = vpack.c.b16 %v360, %v352
  %v505 = vpack.c.b16 %v361, %v353
  %v506 = vpack.c.b16 %v362, %v354
  %v507 = vpack.c.b16 %v363, %v355
  %v508 = vpack.c.b16 %v364, %v356
  %v509 = vpack.c.b16 %v365, %v357
  %v510 = vpack.c.b16 %v374, %v366
  %v511 = vpack.c.b16 %v375, %v367
  %v512 = vpack.c.b16 %v376, %v368
  %v513 = vpack.c.b16 %v377, %v369
  %v514 = vpack.c.b16 %v378, %v370
  %v515 = vpack.c.b16 %v379, %v371
  %v516 = vpack.c.b16 %v380, %v372
  %v517 = vpack.c.b16 %v381, %v373
  %v518 = vpack.c.b16 %v390, %v382
  %v519 = vpack.c.b16 %v391, %v383
  %v520 = vpack.c.b16 %v392, %v384
  %v521 = vpack.c.b16 %v393, %v385
  %v522 = vpack.c.b16 %v394, %v386
  %v523 = vpack.c.b16 %v395, %v387
  %v524 = vpack.c.b16 %v396, %v388
  %v525 = vpack.c.b16 %v397, %v389
  %v526 = vpack.c.b16 %v406, %v398
  %v527 = vpack.c.b16 %v407, %v399
  %v528 = vpack.c.b16 %v408, %v400
  %v529 = vpack.c.b16 %v409, %v401
  %v530 = vpack.c.b16 %v410, %v402
  %v531 = vpack.c.b16 %v411, %v403
  %v532 = vpack.c.b16 %v412, %v404
  %v533 = vpack.c.b16 %v413, %v405
  %v534 = vpack.c.b16 %v422, %v414
  %v535 = vpack.c.b16 %v423, %v415
  %v536 = vpack.c.b16 %v424, %v416
  %v537 = vpack.c.b16 %v425, %v417
  %v538 = vpack.c.b16 %v426, %v418
  %v539 = vpack.c.b16 %v427, %v419
  %v540 = vpack.c.b16 %v428, %v420
  %v541 = vpack.c.b16 %v429, %v421
  %v542 = vpack.c.b16 %v438, %v430
  %v543 = vpack.c.b16 %v439, %v431
  %v544 = vpack.c.b16 %v440, %v432
  %v545 = vpack.c.b16 %v441, %v433
  %v546 = vpack.c.b16 %v442, %v434
  %v547 = vpack.c.b16 %v443, %v435
  %v548 = vpack.c.b16 %v444, %v436
  %v549 = vpack.c.b16 %v445, %v437
  %v550 = vpack.c.b16 %v454, %v446
  %v551 = vpack.c.b16 %v455, %v447
  %v552 = vpack.c.b16 %v456, %v448
  %v553 = vpack.c.b16 %v457, %v449
  %v554 = vpack.c.b16 %v458, %v450
  %v555 = vpack.c.b16 %v459, %v451
  %v556 = vpack.c.b16 %v460, %v452
  %v557 = vpack.c.b16 %v461, %v453
  %v558 = vpack.c.b16 %v470, %v462
  %v559 = vpack.c.b16 %v471, %v463
  %v560 = vpack.c.b16 %v472, %v464
  %v561 = vpack.c.b16 %v473, %v465
  %v562 = vpack.c.b16 %v474, %v466
  %v563 = vpack.c.b16 %v475, %v467
  %v564 = vpack.c.b16 %v476, %v468
  %v565 = vpack.c.b16 %v477, %v469
  %v566 = vpack.c.b16 %v478, %v478
  %v567 = vpack.c.b16 %v479, %v479
  %v568 = vpack.c.b16 %v480, %v480
  %v569 = vpack.c.b16 %v481, %v481
  %v570 = vpack.c.b16 %v482, %v482
  %v571 = vpack.c.b16 %v483, %v483
  %v572 = vpack.c.b16 %v484, %v484
  %v573 = vpack.c.b16 %v485, %v485
  %v790 = vunpack.c.l.b16 %v99
  %v791 = vunpack.c.l.b16 %v100
  %v792 = vunpack.c.l.b16 %v101
  %v793 = vunpack.c.l.b16 %v102
  %v794 = vunpack.c.l.b16 %v103
  %v795 = vunpack.c.l.b16 %v104
  %v796 = vunpack.c.l.b16 %v105
  %v797 = vunpack.c.l.b16 %v106
  %v798 = vunpack.c.l.b16 %v107
  %v799 = vunpack.c.l.b16 %v108
  %v800 = vunpack.c.l.b16 %v109
  %v801 = vunpack.c.l.b16 %v110
  %v802 = vunpack.c.l.b16 %v111
  %v803 = vunpack.c.l.b16 %v112
  %v804 = vunpack.c.l.b16 %v113
  %v805 = vunpack.c.l.b16 %v114
  %v806 = vunpack.c.l.b16 %v115
  %v807 = vunpack.c.l.b16 %v116
  %v808 = vunpack.c.l.b16 %v117
  %v809 = vunpack.c.l.b16 %v118
  %v810 = vunpack.c.l.b16 %v119
  %v811 = vunpack.c.l.b16 %v120
  %v812 = vunpack.c.l.b16 %v121
  %v813 = vunpack.c.l.b16 %v122
  %v814 = vunpack.c.l.b16 %v123
  %v815 = vunpack.c.l.b16 %v124
  %v816 = vunpack.c.l.b16 %v125
  %v817 = vunpack.c.l.b16 %v126
  %v818 = vunpack.c.l.b16 %v127
  %v819 = vunpack.c.l.b16 %v128
  %v820 = vunpack.c.l.b16 %v129
  %v821 = vunpack.c.l.b16 %v130
  %v822 = vunpack.c.l.b16 %v131
  %v823 = vunpack.c.l.b16 %v132
  %v824 = vunpack.c.l.b16 %v133
  %v825 = vunpack.c.l.b16 %v134
  %v826 = vunpack.c.l.b16 %v135
  %v827 = vunpack.c.l.b16 %v136
  %v828 = vunpack.c.l.b16 %v137
  %v829 = vunpack.c.l.b16 %v138
  %v830 = vunpack.c.l.b16 %v139
  %v831 = vunpack.c.l.b16 %v140
  %v832 = vunpack.c.l.b16 %v141
  %v833 = vunpack.c.l.b16 %v142
  %v834 = vunpack.c.l.b16 %v143
  %v835 = vunpack.c.l.b16 %v144
  %v836 = vunpack.c.l.b16 %v145
  %v837 = vunpack.c.l.b16 %v146
  %v838 = vunpack.c.l.b16 %v147
  %v839 = vunpack.c.l.b16 %v148
  %v840 = vunpack.c.l.b16 %v149
  %v841 = vunpack.c.l.b16 %v150
  %v842 = vunpack.c.l.b16 %v151
  %v843 = vunpack.c.l.b16 %v152
  %v844 = vunpack.c.l.b16 %v153
  %v845 = vunpack.c.l.b16 %v154
  %v846 = vunpack.c.l.b16 %v155
  %v847 = vunpack.c.l.b16 %v156
  %v848 = vunpack.c.l.b16 %v157
  %v849 = vunpack.c.l.b16 %v158
  %v850 = vunpack.c.l.b16 %v159
  %v851 = vunpack.c.l.b16 %v160
  %v852 = vunpack.c.l.b16 %v161
  %v853 = vunpack.c.l.b16 %v162
  %v854 = vunpack.c.l.b16 %v163
  %v855 = vunpack.c.l.b16 %v164
  %v856 = vunpack.c.l.b16 %v165
  %v857 = vunpack.c.l.b16 %v166
  %v858 = vunpack.c.l.b16 %v167
  %v859 = vunpack.c.l.b16 %v168
  %v860 = vunpack.c.l.b16 %v169
  %v861 = vunpack.c.l.b16 %v170
  %v862 = vunpack.c.l.b16 %v171
  %v863 = vunpack.c.l.b16 %v172
  %v864 = vunpack.c.l.b16 %v173
  %v865 = vunpack.c.l.b16 %v174
  %v866 = vunpack.c.l.b16 %v175
  %v867 = vunpack.c.l.b16 %v176
  %v868 = vunpack.c.l.b16 %v177
  %v869 = vunpack.c.l.b16 %v178
  %v870 = vunpack.c.l.b16 %v179
  %v871 = vunpack.c.l.b16 %v180
  %v872 = vunpack.c.l.b16 %v181
  %v873 = vunpack.c.l.b16 %v182
  %v874 = vunpack.c.l.b16 %v183
  %v875 = vunpack.c.l.b16 %v184
  %v876 = vunpack.c.l.b16 %v185
  %v877 = vunpack.c.l.b16 %v186
  %v878 = vunpack.c.l.b16 %v187
  %v879 = vunpack.c.l.b16 %v188
  %v880 = vunpack.c.l.b16 %v189
  %v881 = vunpack.c.l.b16 %v190
  %v882 = vunpack.c.l.b16 %v191
  %v883 = vunpack.c.l.b16 %v192
  %v884 = vunpack.c.l.b16 %v193
  %v885 = vunpack.c.l.b16 %v194
  %v886 = vunpack.c.l.b16 %v195
  %v887 = vunpack.c.l.b16 %v196
  %v888 = vunpack.c.l.b16 %v197
  %v889 = vunpack.c.l.b16 %v198
  %v890 = vunpack.c.l.b16 %v199
  %v891 = vunpack.c.l.b16 %v200
  %v892 = vunpack.c.l.b16 %v201
  %v893 = vunpack.c.l.b16 %v202
  %v894 = vunpack.c.l.b16 %v203
  %v895 = vunpack.c.l.b16 %v204
  %v896 = vunpack.c.l.b16 %v205
  %v897 = vunpack.c.l.b16 %v206
  %v898 = vunpack.c.l.b16 %v207
  %v899 = vunpack.c.l.b16 %v208
  %v900 = vunpack.c.l.b16 %v209
  %v901 = vunpack.c.l.b16 %v210
  %v902 = vunpack.c.l.b16 %v211
  %v903 = vunpack.c.l.b16 %v212
  %v904 = vunpack.c.l.b16 %v213
  %v905 = vunpack.c.l.b16 %v214
  %v906 = vunpack.c.l.b16 %v215
  %v907 = vunpack.c.l.b16 %v216
  %v908 = vunpack.c.l.b16 %v217
  %v909 = vunpack.c.l.b16 %v218
  %v910 = vunpack.c.l.b16 %v219
  %v911 = vunpack.c.l.b16 %v220
  %v912 = vunpack.c.l.b16 %v221
  %v913 = vunpack.c.l.b16 %v222
  %v914 = vunpack.c.l.b16 %v223
  %v915 = vunpack.c.l.b16 %v224
  %v916 = vunpack.c.l.b16 %v225
  %v917 = vunpack.c.l.b16 %v226
  %v918 = vpack.c.b16 %v791, %v790
  %v919 = vpack.c.b16 %v793, %v792
  %v920 = vpack.c.b16 %v795, %v794
  %v921 = vpack.c.b16 %v797, %v796
  %v922 = vpack.c.b16 %v799, %v798
  %v923 = vpack.c.b16 %v801, %v800
  %v924 = vpack.c.b16 %v803, %v802
  %v925 = vpack.c.b16 %v805, %v804
  %v926 = vpack.c.b16 %v807, %v806
  %v927 = vpack.c.b16 %v809, %v808
  %v928 = vpack.c.b16 %v811, %v810
  %v929 = vpack.c.b16 %v813, %v812
  %v930 = vpack.c.b16 %v815, %v814
  %v931 = vpack.c.b16 %v817, %v816
  %v932 = vpack.c.b16 %v819, %v818
  %v933 = vpack.c.b16 %v821, %v820
  %v934 = vpack.c.b16 %v823, %v822
  %v935 = vpack.c.b16 %v825, %v824
  %v936 = vpack.c.b16 %v827, %v826
  %v937 = vpack.c.b16 %v829, %v828
  %v938 = vpack.c.b16 %v831, %v830
  %v939 = vpack.c.b16 %v833, %v832
  %v940 = vpack.c.b16 %v835, %v834
  %v941 = vpack.c.b16 %v837, %v836
  %v942 = vpack.c.b16 %v839, %v838
  %v943 = vpack.c.b16 %v841, %v840
  %v944 = vpack.c.b16 %v843, %v842
  %v945 = vpack.c.b16 %v845, %v844
  %v946 = vpack.c.b16 %v847, %v846
  %v947 = vpack.c.b16 %v849, %v848
  %v948 = vpack.c.b16 %v851, %v850
  %v949 = vpack.c.b16 %v853, %v852
  %v950 = vpack.c.b16 %v855, %v854
  %v951 = vpack.c.b16 %v857, %v856
  %v952 = vpack.c.b16 %v859, %v858
  %v953 = vpack.c.b16 %v861, %v860
  %v954 = vpack.c.b16 %v863, %v862
  %v955 = vpack.c.b16 %v865, %v864
  %v956 = vpack.c.b16 %v867, %v866
  %v957 = vpack.c.b16 %v869, %v868
  %v958 = vpack.c.b16 %v871, %v870
  %v959 = vpack.c.b16 %v873, %v872
  %v960 = vpack.c.b16 %v875, %v874
  %v961 = vpack.c.b16 %v877, %v876
  %v962 = vpack.c.b16 %v879, %v878
  %v963 = vpack.c.b16 %v881, %v880
  %v964 = vpack.c.b16 %v883, %v882
  %v965 = vpack.c.b16 %v885, %v884
  %v966 = vpack.c.b16 %v887, %v886
  %v967 = vpack.c.b16 %v889, %v888
  %v968 = vpack.c.b16 %v891, %v890
  %v969 = vpack.c.b16 %v893, %v892
  %v970 = vpack.c.b16 %v895, %v894
  %v971 = vpack.c.b16 %v897, %v896
  %v972 = vpack.c.b16 %v899, %v898
  %v973 = vpack.c.b16 %v901, %v900
  %v974 = vpack.c.b16 %v903, %v902
  %v975 = vpack.c.b16 %v905, %v904
  %v976 = vpack.c.b16 %v907, %v906
  %v977 = vpack.c.b16 %v909, %v908
  %v978 = vpack.c.b16 %v911, %v910
  %v979 = vpack.c.b16 %v913, %v912
  %v980 = vpack.c.b16 %v915, %v914
  %v981 = vpack.c.b16 %v917, %v916
  %1046 = vmatprep.subr.bf16.mxu0 0
  %1047 = vmatpush1.bf16.msra.mxu0 %v918
  %1048 = vmatprep.subr.bf16.mxu0 0
  %1049 = vmatpush1.bf16.msra.mxu0 %v919
  %1050 = vmatprep.subr.bf16.mxu0 0
  %1051 = vmatpush1.bf16.msra.mxu0 %v920
  %1052 = vmatprep.subr.bf16.mxu0 0
  %1053 = vmatpush1.bf16.msra.mxu0 %v921
  %1054 = vmatprep.subr.bf16.mxu0 0
  %1055 = vmatpush1.bf16.msra.mxu0 %v922
  %1056 = vmatprep.subr.bf16.mxu0 0
  %1057 = vmatpush1.bf16.msra.mxu0 %v923
  %1058 = vmatprep.subr.bf16.mxu0 0
  %1059 = vmatpush1.bf16.msra.mxu0 %v924
  %1060 = vmatprep.subr.bf16.mxu0 0
  %1061 = vmatpush1.bf16.msra.mxu0 %v925
  %1062 = vmatprep.subr.bf16.mxu0 0
  %1063 = vmatpush1.bf16.msra.mxu0 %v926
  %1064 = vmatprep.subr.bf16.mxu0 0
  %1065 = vmatpush1.bf16.msra.mxu0 %v927
  %1066 = vmatprep.subr.bf16.mxu0 0
  %1067 = vmatpush1.bf16.msra.mxu0 %v928
  %1068 = vmatprep.subr.bf16.mxu0 0
  %1069 = vmatpush1.bf16.msra.mxu0 %v929
  %1070 = vmatprep.subr.bf16.mxu0 0
  %1071 = vmatpush1.bf16.msra.mxu0 %v930
  %1072 = vmatprep.subr.bf16.mxu0 0
  %1073 = vmatpush1.bf16.msra.mxu0 %v931
  %1074 = vmatprep.subr.bf16.mxu0 0
  %1075 = vmatpush1.bf16.msra.mxu0 %v932
  %1076 = vmatprep.subr.bf16.mxu0 0
  %1077 = vmatpush1.bf16.msra.mxu0 %v933
  %1078 = vmatprep.mubr.bf16.mxu0 %v487
  %1079 = vmatmul.mubr.bf16.gmra.mrb[0].mxu0 %v486
  %v1080 = vpop.f32.mrb[0].mxu0
  %v1081 = vadd.f32 %v232, %v1080
  %v1082 = vpop.f32.mrb[0].mxu0
  %v1083 = vpop.f32.mrb[0].mxu0
  %v1084 = vadd.f32 %v232, %v1083
  %v1085 = vpop.f32.mrb[0].mxu0
  %1086 = vmatprep.mubr.bf16.mxu0 %v495
  %1087 = vmatmul.mubr.bf16.gmra.mrb[0].mxu0 %v494
  %v1088 = vpop.f32.mrb[0].mxu0
  %v1089 = vadd.f32 %v232, %v1088
  %v1090 = vpop.f32.mrb[0].mxu0
  %v1091 = vpop.f32.mrb[0].mxu0
  %v1092 = vadd.f32 %v232, %v1091
  %v1093 = vpop.f32.mrb[0].mxu0
  %1094 = vmatprep.mubr.bf16.mxu0 %v503
  %1095 = vmatmul.mubr.bf16.gmra.mrb[0].mxu0 %v502
  %v1096 = vpop.f32.mrb[0].mxu0
  %v1097 = vadd.f32 %v232, %v1096
  %v1098 = vpop.f32.mrb[0].mxu0
  %v1099 = vpop.f32.mrb[0].mxu0
  %v1100 = vadd.f32 %v232, %v1099
  %v1101 = vpop.f32.mrb[0].mxu0
  %1102 = vmatprep.mubr.bf16.mxu0 %v511
  %1103 = vmatmul.mubr.bf16.gmra.mrb[0].mxu0 %v510
  %v1104 = vpop.f32.mrb[0].mxu0
  %v1105 = vadd.f32 %v232, %v1104
  %v1106 = vpop.f32.mrb[0].mxu0
  %v1107 = vpop.f32.mrb[0].mxu0
  %v1108 = vadd.f32 %v232, %v1107
  %v1109 = vpop.f32.mrb[0].mxu0
  %1110 = vmatprep.mubr.bf16.mxu0 %v519
  %1111 = vmatmul.mubr.bf16.gmra.mrb[0].mxu0 %v518
  %v1112 = vpop.f32.mrb[0].mxu0
  %v1113 = vadd.f32 %v232, %v1112
  %v1114 = vpop.f32.mrb[0].mxu0
  %v1115 = vpop.f32.mrb[0].mxu0
  %v1116 = vadd.f32 %v232, %v1115
  %v1117 = vpop.f32.mrb[0].mxu0
  %1118 = vmatprep.mubr.bf16.mxu0 %v527
  %1119 = vmatmul.mubr.bf16.gmra.mrb[0].mxu0 %v526
  %v1120 = vpop.f32.mrb[0].mxu0
  %v1121 = vadd.f32 %v232, %v1120
  %v1122 = vpop.f32.mrb[0].mxu0
  %v1123 = vpop.f32.mrb[0].mxu0
  %v1124 = vadd.f32 %v232, %v1123
  %v1125 = vpop.f32.mrb[0].mxu0
  %1126 = vmatprep.mubr.bf16.mxu0 %v535
  %1127 = vmatmul.mubr.bf16.gmra.mrb[0].mxu0 %v534
  %v1128 = vpop.f32.mrb[0].mxu0
  %v1129 = vadd.f32 %v232, %v1128
  %v1130 = vpop.f32.mrb[0].mxu0
  %v1131 = vpop.f32.mrb[0].mxu0
  %v1132 = vadd.f32 %v232, %v1131
  %v1133 = vpop.f32.mrb[0].mxu0
  %1134 = vmatprep.mubr.bf16.mxu0 %v543
  %1135 = vmatmul.mubr.bf16.gmra.mrb[0].mxu0 %v542
  %v1136 = vpop.f32.mrb[0].mxu0
  %v1137 = vadd.f32 %v232, %v1136
  %v1138 = vpop.f32.mrb[0].mxu0
  %v1139 = vpop.f32.mrb[0].mxu0
  %v1140 = vadd.f32 %v232, %v1139
  %v1141 = vpop.f32.mrb[0].mxu0
  %1142 = vmatprep.mubr.bf16.mxu0 %v551
  %1143 = vmatmul.mubr.bf16.gmra.mrb[0].mxu0 %v550
  %v1144 = vpop.f32.mrb[0].mxu0
  %v1145 = vadd.f32 %v232, %v1144
  %v1146 = vpop.f32.mrb[0].mxu0
  %v1147 = vpop.f32.mrb[0].mxu0
  %v1148 = vadd.f32 %v232, %v1147
  %v1149 = vpop.f32.mrb[0].mxu0
  %1150 = vmatprep.mubr.bf16.mxu0 %v559
  %1151 = vmatmul.mubr.bf16.gmra.mrb[0].mxu0 %v558
  %v1152 = vpop.f32.mrb[0].mxu0
  %v1153 = vadd.f32 %v232, %v1152
  %v1154 = vpop.f32.mrb[0].mxu0
  %v1155 = vpop.f32.mrb[0].mxu0
  %v1156 = vadd.f32 %v232, %v1155
  %v1157 = vpop.f32.mrb[0].mxu0
  %1158 = vmatprep.mubr.bf16.mxu0 %v567
  %1159 = vmatmul.mubr.bf16.gmra.mrb[0].mxu0 %v566
  %v1160 = vpop.f32.mrb[0].mxu0
  %v1161 = vadd.f32 %v232, %v1160
  %v1162 = vpop.f32.mrb[0].mxu0
  %v1163 = vpop.f32.mrb[0].mxu0
  %v1164 = vpop.f32.mrb[0].mxu0
  %1165 = vdwg.mxu0
  %1166 = vmatprep.subr.bf16.mxu0 0
  %1167 = vmatpush1.bf16.msra.mxu0 %v934
  %1168 = vmatprep.subr.bf16.mxu0 0
  %1169 = vmatpush1.bf16.msra.mxu0 %v935
  %1170 = vmatprep.subr.bf16.mxu0 0
  %1171 = vmatpush1.bf16.msra.mxu0 %v936
  %1172 = vmatprep.subr.bf16.mxu0 0
  %1173 = vmatpush1.bf16.msra.mxu0 %v937
  %1174 = vmatprep.subr.bf16.mxu0 0
  %1175 = vmatpush1.bf16.msra.mxu0 %v938
  %1176 = vmatprep.subr.bf16.mxu0 0
  %1177 = vmatpush1.bf16.msra.mxu0 %v939
  %1178 = vmatprep.subr.bf16.mxu0 0
  %1179 = vmatpush1.bf16.msra.mxu0 %v940
  %1180 = vmatprep.subr.bf16.mxu0 0
  %1181 = vmatpush1.bf16.msra.mxu0 %v941
  %1182 = vmatprep.subr.bf16.mxu0 0
  %1183 = vmatpush1.bf16.msra.mxu0 %v942
  %1184 = vmatprep.subr.bf16.mxu0 0
  %1185 = vmatpush1.bf16.msra.mxu0 %v943
  %1186 = vmatprep.subr.bf16.mxu0 0
  %1187 = vmatpush1.bf16.msra.mxu0 %v944
  %1188 = vmatprep.subr.bf16.mxu0 0
  %1189 = vmatpush1.bf16.msra.mxu0 %v945
  %1190 = vmatprep.subr.bf16.mxu0 0
  %1191 = vmatpush1.bf16.msra.mxu0 %v946
  %1192 = vmatprep.subr.bf16.mxu0 0
  %1193 = vmatpush1.bf16.msra.mxu0 %v947
  %1194 = vmatprep.subr.bf16.mxu0 0
  %1195 = vmatpush1.bf16.msra.mxu0 %v948
  %1196 = vmatprep.subr.bf16.mxu0 0
  %1197 = vmatpush1.bf16.msra.mxu0 %v949
  %1198 = vmatprep.mubr.bf16.mxu0 %v489
  %1199 = vmatmul.mubr.bf16.gmra.mrb[0].mxu0 %v488
  %v1200 = vpop.f32.mrb[0].mxu0
  %v1201 = vadd.f32 %v1081, %v1200
  %v1202 = vpop.f32.mrb[0].mxu0
  %v1203 = vpop.f32.mrb[0].mxu0
  %v1204 = vadd.f32 %v1084, %v1203
  %v1205 = vpop.f32.mrb[0].mxu0
  %1206 = vmatprep.mubr.bf16.mxu0 %v497
  %1207 = vmatmul.mubr.bf16.gmra.mrb[0].mxu0 %v496
  %v1208 = vpop.f32.mrb[0].mxu0
  %v1209 = vadd.f32 %v1089, %v1208
  %v1210 = vpop.f32.mrb[0].mxu0
  %v1211 = vpop.f32.mrb[0].mxu0
  %v1212 = vadd.f32 %v1092, %v1211
  %v1213 = vpop.f32.mrb[0].mxu0
  %1214 = vmatprep.mubr.bf16.mxu0 %v505
  %1215 = vmatmul.mubr.bf16.gmra.mrb[0].mxu0 %v504
  %v1216 = vpop.f32.mrb[0].mxu0
  %v1217 = vadd.f32 %v1097, %v1216
  %v1218 = vpop.f32.mrb[0].mxu0
  %v1219 = vpop.f32.mrb[0].mxu0
  %v1220 = vadd.f32 %v1100, %v1219
  %v1221 = vpop.f32.mrb[0].mxu0
  %1222 = vmatprep.mubr.bf16.mxu0 %v513
  %1223 = vmatmul.mubr.bf16.gmra.mrb[0].mxu0 %v512
  %v1224 = vpop.f32.mrb[0].mxu0
  %v1225 = vadd.f32 %v1105, %v1224
  %v1226 = vpop.f32.mrb[0].mxu0
  %v1227 = vpop.f32.mrb[0].mxu0
  %v1228 = vadd.f32 %v1108, %v1227
  %v1229 = vpop.f32.mrb[0].mxu0
  %1230 = vmatprep.mubr.bf16.mxu0 %v521
  %1231 = vmatmul.mubr.bf16.gmra.mrb[0].mxu0 %v520
  %v1232 = vpop.f32.mrb[0].mxu0
  %v1233 = vadd.f32 %v1113, %v1232
  %v1234 = vpop.f32.mrb[0].mxu0
  %v1235 = vpop.f32.mrb[0].mxu0
  %v1236 = vadd.f32 %v1116, %v1235
  %v1237 = vpop.f32.mrb[0].mxu0
  %1238 = vmatprep.mubr.bf16.mxu0 %v529
  %1239 = vmatmul.mubr.bf16.gmra.mrb[0].mxu0 %v528
  %v1240 = vpop.f32.mrb[0].mxu0
  %v1241 = vadd.f32 %v1121, %v1240
  %v1242 = vpop.f32.mrb[0].mxu0
  %v1243 = vpop.f32.mrb[0].mxu0
  %v1244 = vadd.f32 %v1124, %v1243
  %v1245 = vpop.f32.mrb[0].mxu0
  %1246 = vmatprep.mubr.bf16.mxu0 %v537
  %1247 = vmatmul.mubr.bf16.gmra.mrb[0].mxu0 %v536
  %v1248 = vpop.f32.mrb[0].mxu0
  %v1249 = vadd.f32 %v1129, %v1248
  %v1250 = vpop.f32.mrb[0].mxu0
  %v1251 = vpop.f32.mrb[0].mxu0
  %v1252 = vadd.f32 %v1132, %v1251
  %v1253 = vpop.f32.mrb[0].mxu0
  %1254 = vmatprep.mubr.bf16.mxu0 %v545
  %1255 = vmatmul.mubr.bf16.gmra.mrb[0].mxu0 %v544
  %v1256 = vpop.f32.mrb[0].mxu0
  %v1257 = vadd.f32 %v1137, %v1256
  %v1258 = vpop.f32.mrb[0].mxu0
  %v1259 = vpop.f32.mrb[0].mxu0
  %v1260 = vadd.f32 %v1140, %v1259
  %v1261 = vpop.f32.mrb[0].mxu0
  %1262 = vmatprep.mubr.bf16.mxu0 %v553
  %1263 = vmatmul.mubr.bf16.gmra.mrb[0].mxu0 %v552
  %v1264 = vpop.f32.mrb[0].mxu0
  %v1265 = vadd.f32 %v1145, %v1264
  %v1266 = vpop.f32.mrb[0].mxu0
  %v1267 = vpop.f32.mrb[0].mxu0
  %v1268 = vadd.f32 %v1148, %v1267
  %v1269 = vpop.f32.mrb[0].mxu0
  %1270 = vmatprep.mubr.bf16.mxu0 %v561
  %1271 = vmatmul.mubr.bf16.gmra.mrb[0].mxu0 %v560
  %v1272 = vpop.f32.mrb[0].mxu0
  %v1273 = vadd.f32 %v1153, %v1272
  %v1274 = vpop.f32.mrb[0].mxu0
  %v1275 = vpop.f32.mrb[0].mxu0
  %v1276 = vadd.f32 %v1156, %v1275
  %v1277 = vpop.f32.mrb[0].mxu0
  %1278 = vmatprep.mubr.bf16.mxu0 %v569
  %1279 = vmatmul.mubr.bf16.gmra.mrb[0].mxu0 %v568
  %v1280 = vpop.f32.mrb[0].mxu0
  %v1281 = vadd.f32 %v1161, %v1280
  %v1282 = vpop.f32.mrb[0].mxu0
  %v1283 = vpop.f32.mrb[0].mxu0
  %v1284 = vpop.f32.mrb[0].mxu0
  %1285 = vdwg.mxu0
  %1286 = vmatprep.subr.bf16.mxu0 0
  %1287 = vmatpush1.bf16.msra.mxu0 %v950
  %1288 = vmatprep.subr.bf16.mxu0 0
  %1289 = vmatpush1.bf16.msra.mxu0 %v951
  %1290 = vmatprep.subr.bf16.mxu0 0
  %1291 = vmatpush1.bf16.msra.mxu0 %v952
  %1292 = vmatprep.subr.bf16.mxu0 0
  %1293 = vmatpush1.bf16.msra.mxu0 %v953
  %1294 = vmatprep.subr.bf16.mxu0 0
  %1295 = vmatpush1.bf16.msra.mxu0 %v954
  %1296 = vmatprep.subr.bf16.mxu0 0
  %1297 = vmatpush1.bf16.msra.mxu0 %v955
  %1298 = vmatprep.subr.bf16.mxu0 0
  %1299 = vmatpush1.bf16.msra.mxu0 %v956
  %1300 = vmatprep.subr.bf16.mxu0 0
  %1301 = vmatpush1.bf16.msra.mxu0 %v957
  %1302 = vmatprep.subr.bf16.mxu0 0
  %1303 = vmatpush1.bf16.msra.mxu0 %v958
  %1304 = vmatprep.subr.bf16.mxu0 0
  %1305 = vmatpush1.bf16.msra.mxu0 %v959
  %1306 = vmatprep.subr.bf16.mxu0 0
  %1307 = vmatpush1.bf16.msra.mxu0 %v960
  %1308 = vmatprep.subr.bf16.mxu0 0
  %1309 = vmatpush1.bf16.msra.mxu0 %v961
  %1310 = vmatprep.subr.bf16.mxu0 0
  %1311 = vmatpush1.bf16.msra.mxu0 %v962
  %1312 = vmatprep.subr.bf16.mxu0 0
  %1313 = vmatpush1.bf16.msra.mxu0 %v963
  %1314 = vmatprep.subr.bf16.mxu0 0
  %1315 = vmatpush1.bf16.msra.mxu0 %v964
  %1316 = vmatprep.subr.bf16.mxu0 0
  %1317 = vmatpush1.bf16.msra.mxu0 %v965
  %1318 = vmatprep.mubr.bf16.mxu0 %v491
  %1319 = vmatmul.mubr.bf16.gmra.mrb[0].mxu0 %v490
  %v1320 = vpop.f32.mrb[0].mxu0
  %v1321 = vadd.f32 %v1201, %v1320
  %v1322 = vpop.f32.mrb[0].mxu0
  %v1323 = vpop.f32.mrb[0].mxu0
  %v1324 = vadd.f32 %v1204, %v1323
  %v1325 = vpop.f32.mrb[0].mxu0
  %1326 = vmatprep.mubr.bf16.mxu0 %v499
  %1327 = vmatmul.mubr.bf16.gmra.mrb[0].mxu0 %v498
  %v1328 = vpop.f32.mrb[0].mxu0
  %v1329 = vadd.f32 %v1209, %v1328
  %v1330 = vpop.f32.mrb[0].mxu0
  %v1331 = vpop.f32.mrb[0].mxu0
  %v1332 = vadd.f32 %v1212, %v1331
  %v1333 = vpop.f32.mrb[0].mxu0
  %1334 = vmatprep.mubr.bf16.mxu0 %v507
  %1335 = vmatmul.mubr.bf16.gmra.mrb[0].mxu0 %v506
  %v1336 = vpop.f32.mrb[0].mxu0
  %v1337 = vadd.f32 %v1217, %v1336
  %v1338 = vpop.f32.mrb[0].mxu0
  %v1339 = vpop.f32.mrb[0].mxu0
  %v1340 = vadd.f32 %v1220, %v1339
  %v1341 = vpop.f32.mrb[0].mxu0
  %1342 = vmatprep.mubr.bf16.mxu0 %v515
  %1343 = vmatmul.mubr.bf16.gmra.mrb[0].mxu0 %v514
  %v1344 = vpop.f32.mrb[0].mxu0
  %v1345 = vadd.f32 %v1225, %v1344
  %v1346 = vpop.f32.mrb[0].mxu0
  %v1347 = vpop.f32.mrb[0].mxu0
  %v1348 = vadd.f32 %v1228, %v1347
  %v1349 = vpop.f32.mrb[0].mxu0
  %1350 = vmatprep.mubr.bf16.mxu0 %v523
  %1351 = vmatmul.mubr.bf16.gmra.mrb[0].mxu0 %v522
  %v1352 = vpop.f32.mrb[0].mxu0
  %v1353 = vadd.f32 %v1233, %v1352
  %v1354 = vpop.f32.mrb[0].mxu0
  %v1355 = vpop.f32.mrb[0].mxu0
  %v1356 = vadd.f32 %v1236, %v1355
  %v1357 = vpop.f32.mrb[0].mxu0
  %1358 = vmatprep.mubr.bf16.mxu0 %v531
  %1359 = vmatmul.mubr.bf16.gmra.mrb[0].mxu0 %v530
  %v1360 = vpop.f32.mrb[0].mxu0
  %v1361 = vadd.f32 %v1241, %v1360
  %v1362 = vpop.f32.mrb[0].mxu0
  %v1363 = vpop.f32.mrb[0].mxu0
  %v1364 = vadd.f32 %v1244, %v1363
  %v1365 = vpop.f32.mrb[0].mxu0
  %1366 = vmatprep.mubr.bf16.mxu0 %v539
  %1367 = vmatmul.mubr.bf16.gmra.mrb[0].mxu0 %v538
  %v1368 = vpop.f32.mrb[0].mxu0
  %v1369 = vadd.f32 %v1249, %v1368
  %v1370 = vpop.f32.mrb[0].mxu0
  %v1371 = vpop.f32.mrb[0].mxu0
  %v1372 = vadd.f32 %v1252, %v1371
  %v1373 = vpop.f32.mrb[0].mxu0
  %1374 = vmatprep.mubr.bf16.mxu0 %v547
  %1375 = vmatmul.mubr.bf16.gmra.mrb[0].mxu0 %v546
  %v1376 = vpop.f32.mrb[0].mxu0
  %v1377 = vadd.f32 %v1257, %v1376
  %v1378 = vpop.f32.mrb[0].mxu0
  %v1379 = vpop.f32.mrb[0].mxu0
  %v1380 = vadd.f32 %v1260, %v1379
  %v1381 = vpop.f32.mrb[0].mxu0
  %1382 = vmatprep.mubr.bf16.mxu0 %v555
  %1383 = vmatmul.mubr.bf16.gmra.mrb[0].mxu0 %v554
  %v1384 = vpop.f32.mrb[0].mxu0
  %v1385 = vadd.f32 %v1265, %v1384
  %v1386 = vpop.f32.mrb[0].mxu0
  %v1387 = vpop.f32.mrb[0].mxu0
  %v1388 = vadd.f32 %v1268, %v1387
  %v1389 = vpop.f32.mrb[0].mxu0
  %1390 = vmatprep.mubr.bf16.mxu0 %v563
  %1391 = vmatmul.mubr.bf16.gmra.mrb[0].mxu0 %v562
  %v1392 = vpop.f32.mrb[0].mxu0
  %v1393 = vadd.f32 %v1273, %v1392
  %v1394 = vpop.f32.mrb[0].mxu0
  %v1395 = vpop.f32.mrb[0].mxu0
  %v1396 = vadd.f32 %v1276, %v1395
  %v1397 = vpop.f32.mrb[0].mxu0
  %1398 = vmatprep.mubr.bf16.mxu0 %v571
  %1399 = vmatmul.mubr.bf16.gmra.mrb[0].mxu0 %v570
  %v1400 = vpop.f32.mrb[0].mxu0
  %v1401 = vadd.f32 %v1281, %v1400
  %v1402 = vpop.f32.mrb[0].mxu0
  %v1403 = vpop.f32.mrb[0].mxu0
  %v1404 = vpop.f32.mrb[0].mxu0
  %1405 = vdwg.mxu0
  %1406 = vmatprep.subr.bf16.mxu0 0
  %1407 = vmatpush1.bf16.msra.mxu0 %v966
  %1408 = vmatprep.subr.bf16.mxu0 0
  %1409 = vmatpush1.bf16.msra.mxu0 %v967
  %1410 = vmatprep.subr.bf16.mxu0 0
  %1411 = vmatpush1.bf16.msra.mxu0 %v968
  %1412 = vmatprep.subr.bf16.mxu0 0
  %1413 = vmatpush1.bf16.msra.mxu0 %v969
  %1414 = vmatprep.subr.bf16.mxu0 0
  %1415 = vmatpush1.bf16.msra.mxu0 %v970
  %1416 = vmatprep.subr.bf16.mxu0 0
  %1417 = vmatpush1.bf16.msra.mxu0 %v971
  %1418 = vmatprep.subr.bf16.mxu0 0
  %1419 = vmatpush1.bf16.msra.mxu0 %v972
  %1420 = vmatprep.subr.bf16.mxu0 0
  %1421 = vmatpush1.bf16.msra.mxu0 %v973
  %1422 = vmatprep.subr.bf16.mxu0 0
  %1423 = vmatpush1.bf16.msra.mxu0 %v974
  %1424 = vmatprep.subr.bf16.mxu0 0
  %1425 = vmatpush1.bf16.msra.mxu0 %v975
  %1426 = vmatprep.subr.bf16.mxu0 0
  %1427 = vmatpush1.bf16.msra.mxu0 %v976
  %1428 = vmatprep.subr.bf16.mxu0 0
  %1429 = vmatpush1.bf16.msra.mxu0 %v977
  %1430 = vmatprep.subr.bf16.mxu0 0
  %1431 = vmatpush1.bf16.msra.mxu0 %v978
  %1432 = vmatprep.subr.bf16.mxu0 0
  %1433 = vmatpush1.bf16.msra.mxu0 %v979
  %1434 = vmatprep.subr.bf16.mxu0 0
  %1435 = vmatpush1.bf16.msra.mxu0 %v980
  %1436 = vmatprep.subr.bf16.mxu0 0
  %1437 = vmatpush1.bf16.msra.mxu0 %v981
  %1438 = vmatprep.mubr.bf16.mxu0 %v493
  %1439 = vmatmul.mubr.bf16.gmra.mrb[0].mxu0 %v492
  %v1440 = vpop.f32.mrb[0].mxu0
  %v1441 = vadd.f32 %v1321, %v1440
  %v1442 = vpop.f32.mrb[0].mxu0
  %v1443 = vpop.f32.mrb[0].mxu0
  %v1444 = vadd.f32 %v1324, %v1443
  %v1445 = vpop.f32.mrb[0].mxu0
  %1446 = vmatprep.mubr.bf16.mxu0 %v501
  %1447 = vmatmul.mubr.bf16.gmra.mrb[0].mxu0 %v500
  %v1448 = vpop.f32.mrb[0].mxu0
  %v1449 = vadd.f32 %v1329, %v1448
  %v1450 = vpop.f32.mrb[0].mxu0
  %v1451 = vpop.f32.mrb[0].mxu0
  %v1452 = vadd.f32 %v1332, %v1451
  %v1453 = vpop.f32.mrb[0].mxu0
  %1454 = vmatprep.mubr.bf16.mxu0 %v509
  %1455 = vmatmul.mubr.bf16.gmra.mrb[0].mxu0 %v508
  %v1456 = vpop.f32.mrb[0].mxu0
  %v1457 = vadd.f32 %v1337, %v1456
  %v1458 = vpop.f32.mrb[0].mxu0
  %v1459 = vpop.f32.mrb[0].mxu0
  %v1460 = vadd.f32 %v1340, %v1459
  %v1461 = vpop.f32.mrb[0].mxu0
  %1462 = vmatprep.mubr.bf16.mxu0 %v517
  %1463 = vmatmul.mubr.bf16.gmra.mrb[0].mxu0 %v516
  %v1464 = vpop.f32.mrb[0].mxu0
  %v1465 = vadd.f32 %v1345, %v1464
  %v1466 = vpop.f32.mrb[0].mxu0
  %v1467 = vpop.f32.mrb[0].mxu0
  %v1468 = vadd.f32 %v1348, %v1467
  %v1469 = vpop.f32.mrb[0].mxu0
  %1470 = vmatprep.mubr.bf16.mxu0 %v525
  %1471 = vmatmul.mubr.bf16.gmra.mrb[0].mxu0 %v524
  %v1472 = vpop.f32.mrb[0].mxu0
  %v1473 = vadd.f32 %v1353, %v1472
  %v1474 = vpop.f32.mrb[0].mxu0
  %v1475 = vpop.f32.mrb[0].mxu0
  %v1476 = vadd.f32 %v1356, %v1475
  %v1477 = vpop.f32.mrb[0].mxu0
  %1478 = vmatprep.mubr.bf16.mxu0 %v533
  %1479 = vmatmul.mubr.bf16.gmra.mrb[0].mxu0 %v532
  %v1480 = vpop.f32.mrb[0].mxu0
  %v1481 = vadd.f32 %v1361, %v1480
  %v1482 = vpop.f32.mrb[0].mxu0
  %v1483 = vpop.f32.mrb[0].mxu0
  %v1484 = vadd.f32 %v1364, %v1483
  %v1485 = vpop.f32.mrb[0].mxu0
  %1486 = vmatprep.mubr.bf16.mxu0 %v541
  %1487 = vmatmul.mubr.bf16.gmra.mrb[0].mxu0 %v540
  %v1488 = vpop.f32.mrb[0].mxu0
  %v1489 = vadd.f32 %v1369, %v1488
  %v1490 = vpop.f32.mrb[0].mxu0
  %v1491 = vpop.f32.mrb[0].mxu0
  %v1492 = vadd.f32 %v1372, %v1491
  %v1493 = vpop.f32.mrb[0].mxu0
  %1494 = vmatprep.mubr.bf16.mxu0 %v549
  %1495 = vmatmul.mubr.bf16.gmra.mrb[0].mxu0 %v548
  %v1496 = vpop.f32.mrb[0].mxu0
  %v1497 = vadd.f32 %v1377, %v1496
  %v1498 = vpop.f32.mrb[0].mxu0
  %v1499 = vpop.f32.mrb[0].mxu0
  %v1500 = vadd.f32 %v1380, %v1499
  %v1501 = vpop.f32.mrb[0].mxu0
  %1502 = vmatprep.mubr.bf16.mxu0 %v557
  %1503 = vmatmul.mubr.bf16.gmra.mrb[0].mxu0 %v556
  %v1504 = vpop.f32.mrb[0].mxu0
  %v1505 = vadd.f32 %v1385, %v1504
  %v1506 = vpop.f32.mrb[0].mxu0
  %v1507 = vpop.f32.mrb[0].mxu0
  %v1508 = vadd.f32 %v1388, %v1507
  %v1509 = vpop.f32.mrb[0].mxu0
  %1510 = vmatprep.mubr.bf16.mxu0 %v565
  %1511 = vmatmul.mubr.bf16.gmra.mrb[0].mxu0 %v564
  %v1512 = vpop.f32.mrb[0].mxu0
  %v1513 = vadd.f32 %v1393, %v1512
  %v1514 = vpop.f32.mrb[0].mxu0
  %v1515 = vpop.f32.mrb[0].mxu0
  %v1516 = vadd.f32 %v1396, %v1515
  %v1517 = vpop.f32.mrb[0].mxu0
  %1518 = vmatprep.mubr.bf16.mxu0 %v573
  %1519 = vmatmul.mubr.bf16.gmra.mrb[0].mxu0 %v572
  %v1520 = vpop.f32.mrb[0].mxu0
  %v1521 = vadd.f32 %v1401, %v1520
  %v1522 = vpop.f32.mrb[0].mxu0
  %v1523 = vpop.f32.mrb[0].mxu0
  %v1524 = vpop.f32.mrb[0].mxu0
  %1525 = vdwg.mxu0
  %v1526 = vmax.f32 %v1441, 0.0
  %v1527 = vmax.f32 %v1444, 0.0
  %v1528 = vmax.f32 %v1449, 0.0
  %v1529 = vmax.f32 %v1452, 0.0
  %v1530 = vmax.f32 %v1457, 0.0
  %v1531 = vmax.f32 %v1460, 0.0
  %v1532 = vmax.f32 %v1465, 0.0
  %v1533 = vmax.f32 %v1468, 0.0
  %v1534 = vmax.f32 %v1473, 0.0
  %v1535 = vmax.f32 %v1476, 0.0
  %v1536 = vmax.f32 %v1481, 0.0
  %v1537 = vmax.f32 %v1484, 0.0
  %v1538 = vmax.f32 %v1489, 0.0
  %v1539 = vmax.f32 %v1492, 0.0
  %v1540 = vmax.f32 %v1497, 0.0
  %v1541 = vmax.f32 %v1500, 0.0
  %v1542 = vmax.f32 %v1505, 0.0
  %v1543 = vmax.f32 %v1508, 0.0
  %v1544 = vmax.f32 %v1513, 0.0
  %v1545 = vmax.f32 %v1516, 0.0
  %v1546 = vmax.f32 %v1521, 0.0
  %v1547 = vpack.c.bf16 %v1527, %v1526
  %v1548 = vpack.c.bf16 %v1529, %v1528
  %v1549 = vpack.c.bf16 %v1531, %v1530
  %v1550 = vpack.c.bf16 %v1533, %v1532
  %v1551 = vpack.c.bf16 %v1535, %v1534
  %v1552 = vpack.c.bf16 %v1537, %v1536
  %v1553 = vpack.c.bf16 %v1539, %v1538
  %v1554 = vpack.c.bf16 %v1541, %v1540
  %v1555 = vpack.c.bf16 %v1543, %v1542
  %v1556 = vpack.c.bf16 %v1545, %v1544
  %v1557 = vpack.c.bf16 %v1546, %v1546
  %v1569 = vunpack.c.l.b16 %v1547
  %v1570 = vunpack.c.h.b16 %v1547
  %v1571 = vunpack.c.l.b16 %v1548
  %v1572 = vunpack.c.h.b16 %v1548
  %v1573 = vunpack.c.l.b16 %v1549
  %v1574 = vunpack.c.h.b16 %v1549
  %v1575 = vunpack.c.l.b16 %v1550
  %v1576 = vunpack.c.h.b16 %v1550
  %v1577 = vunpack.c.l.b16 %v1551
  %v1578 = vunpack.c.h.b16 %v1551
  %v1579 = vunpack.c.l.b16 %v1552
  %v1580 = vunpack.c.h.b16 %v1552
  %v1581 = vunpack.c.l.b16 %v1553
  %v1582 = vunpack.c.h.b16 %v1553
  %v1583 = vunpack.c.l.b16 %v1554
  %v1584 = vunpack.c.h.b16 %v1554
  %v1585 = vunpack.c.l.b16 %v1555
  %v1586 = vunpack.c.h.b16 %v1555
  %v1587 = vunpack.c.l.b16 %v1556
  %v1588 = vunpack.c.h.b16 %v1556
  %v1589 = vunpack.c.l.b16 %v1557
  %v1590 = vpack.c.b16 %v1569, %v1569
  %v1591 = vpack.c.b16 %v1570, %v1570
  %v1592 = vpack.c.b16 %v1571, %v1571
  %v1593 = vpack.c.b16 %v1572, %v1572
  %v1594 = vpack.c.b16 %v1573, %v1573
  %v1595 = vpack.c.b16 %v1574, %v1574
  %v1596 = vpack.c.b16 %v1575, %v1575
  %v1597 = vpack.c.b16 %v1576, %v1576
  %v1598 = vpack.c.b16 %v1577, %v1577
  %v1599 = vpack.c.b16 %v1578, %v1578
  %v1600 = vpack.c.b16 %v1579, %v1579
  %v1601 = vpack.c.b16 %v1580, %v1580
  %v1602 = vpack.c.b16 %v1581, %v1581
  %v1603 = vpack.c.b16 %v1582, %v1582
  %v1604 = vpack.c.b16 %v1583, %v1583
  %v1605 = vpack.c.b16 %v1584, %v1584
  %v1606 = vpack.c.b16 %v1585, %v1585
  %v1607 = vpack.c.b16 %v1586, %v1586
  %v1608 = vpack.c.b16 %v1587, %v1587
  %v1609 = vpack.c.b16 %v1588, %v1588
  %v1610 = vpack.c.b16 %v1589, %v1589
  %vm1632 = vcmask 519168
  %1633 = vst.msk [vmem:[%s3] sm:$0xf] %vm1632, %v1590
  %1634 = vst.msk [vmem:[%s3 + $0x4] sm:$0xf] %vm1632, %v1591
  %1635 = vst.msk [vmem:[%s3 + $0x8] sm:$0xf] %vm1632, %v1592
  %1636 = vst.msk [vmem:[%s3 + $0xc] sm:$0xf] %vm1632, %v1593
  %1637 = vst.msk [vmem:[%s3 + $0x10] sm:$0xf] %vm1632, %v1594
  %1638 = vst.msk [vmem:[%s3 + $0x14] sm:$0xf] %vm1632, %v1595
  %1639 = vst.msk [vmem:[%s3 + $0x18] sm:$0xf] %vm1632, %v1596
  %1640 = vst.msk [vmem:[%s3 + $0x1c] sm:$0xf] %vm1632, %v1597
  %1641 = vst.msk [vmem:[%s3 + $0x20] sm:$0xf] %vm1632, %v1598
  %1642 = vst.msk [vmem:[%s3 + $0x24] sm:$0xf] %vm1632, %v1599
  %1643 = vst.msk [vmem:[%s3 + $0x28] sm:$0xf] %vm1632, %v1600
  %1644 = vst.msk [vmem:[%s3 + $0x2c] sm:$0xf] %vm1632, %v1601
  %1645 = vst.msk [vmem:[%s3 + $0x30] sm:$0xf] %vm1632, %v1602
  %1646 = vst.msk [vmem:[%s3 + $0x34] sm:$0xf] %vm1632, %v1603
  %1647 = vst.msk [vmem:[%s3 + $0x38] sm:$0xf] %vm1632, %v1604
  %1648 = vst.msk [vmem:[%s3 + $0x3c] sm:$0xf] %vm1632, %v1605
  %1649 = vst.msk [vmem:[%s3 + $0x40] sm:$0xf] %vm1632, %v1606
  %1650 = vst.msk [vmem:[%s3 + $0x44] sm:$0xf] %vm1632, %v1607
  %1651 = vst.msk [vmem:[%s3 + $0x48] sm:$0xf] %vm1632, %v1608
  %1652 = vst.msk [vmem:[%s3 + $0x4c] sm:$0xf] %vm1632, %v1609
  %1653 = vst.msk [vmem:[%s3 + $0x50] sm:$0xf] %vm1632, %v1610
  // Predicated region
  $region14: #{network_forward.6} parent=0 // pred_check
    _
  $region15: #{network_forward.6} parent=0 // pred_check_branch
    %1655 = sbr.rel (0) target = $region17
  $region16: #{network_forward.6} parent=0 // pred_region
    _
  $region17: #{network_forward.6} parent=0 // pred_fallthru
    _
  // Predicated region
  $region18: #{network_forward.6} parent=0 // pred_check
    _
  $region19: #{network_forward.6} parent=0 // pred_check_branch
    %1657 = sbr.rel (0) target = $region21
  $region20: #{network_forward.6} parent=0 // pred_region
    _
  $region21: #{network_forward.6} parent=0 // pred_fallthru
    _

// kernel: network_forward.7
$region0: #{network_forward.7}
  #allocation0 [shape = 'u32[]', space=smem, size = 0x4, offset = 0x4, fixed_abs, tag = 'smem constant byte address 0x4 - core index']
  #allocation1 [shape = 'u32[144,128]{1,0:T(1,128)}', space=vmem, size = 0x12000, scoped, tag = 'internal scratch']
  %s0 = inlined_call_operand.vmem [shape: bf16[104,640], index: 0, kind: input, shape index: {}]
  %s1 = inlined_call_operand.vmem [shape: bf16[640,64], index: 1, kind: input, shape index: {}]
  %s2 = inlined_call_operand.vmem [shape: f32[1,64], index: 2, kind: input, shape index: {}]
  %s3 = inlined_call_operand.vmem [shape: bf16[104,64], index: 3, kind: output, shape index: {}]
  %s4 = sld [smem:[#allocation0]]
  $region22: #{network_forward.7} parent=0
    _
  %s6 = ssub.s32 1, %s4
  %s7 = scalar_select 0, %s6, %s4
  // Predicated region
  $region2: #{network_forward.7} parent=0 // pred_check
    _
  $region3: #{network_forward.7} parent=0 // pred_check_branch
    %9 = sbr.rel (0) target = $region5
  $region4: #{network_forward.7} parent=0 // pred_region
    _
  $region5: #{network_forward.7} parent=0 // pred_fallthru
    _
  // Predicated region
  $region6: #{network_forward.7} parent=0 // pred_check
    _
  $region7: #{network_forward.7} parent=0 // pred_check_branch
    %11 = sbr.rel (0) target = $region9
  $region8: #{network_forward.7} parent=0 // pred_region
    _
  $region9: #{network_forward.7} parent=0 // pred_fallthru
    _
  // Predicated region
  $region10: #{network_forward.7} parent=0 // pred_check
    _
  $region11: #{network_forward.7} parent=0 // pred_check_branch
    %13 = sbr.rel (0) target = $region13
  $region12: #{network_forward.7} parent=0 // pred_region
    _
  $region13: #{network_forward.7} parent=0 // pred_fallthru
    _
  %v15 = vld [vmem:[%s0] sm:$0xff]
  %v16 = vld [vmem:[%s0 + $0x8] sm:$0xff]
  %v17 = vld [vmem:[%s0 + $0x10] sm:$0xf]
  %v18 = vld [vmem:[%s0 + $0x14] sm:$0xff]
  %v19 = vld [vmem:[%s0 + $0x1c] sm:$0xff]
  %v20 = vld [vmem:[%s0 + $0x24] sm:$0xf]
  %v21 = vld [vmem:[%s0 + $0x28] sm:$0xff]
  %v22 = vld [vmem:[%s0 + $0x30] sm:$0xff]
  %v23 = vld [vmem:[%s0 + $0x38] sm:$0xf]
  %v24 = vld [vmem:[%s0 + $0x3c] sm:$0xff]
  %v25 = vld [vmem:[%s0 + $0x44] sm:$0xff]
  %v26 = vld [vmem:[%s0 + $0x4c] sm:$0xf]
  %v27 = vld [vmem:[%s0 + $0x50] sm:$0xff]
  %v28 = vld [vmem:[%s0 + $0x58] sm:$0xff]
  %v29 = vld [vmem:[%s0 + $0x60] sm:$0xf]
  %v30 = vld [vmem:[%s0 + $0x64] sm:$0xff]
  %v31 = vld [vmem:[%s0 + $0x6c] sm:$0xff]
  %v32 = vld [vmem:[%s0 + $0x74] sm:$0xf]
  %v33 = vld [vmem:[%s0 + $0x78] sm:$0xff]
  %v34 = vld [vmem:[%s0 + $0x80] sm:$0xff]
  %v35 = vld [vmem:[%s0 + $0x88] sm:$0xf]
  %v36 = vld [vmem:[%s0 + $0x8c] sm:$0xff]
  %v37 = vld [vmem:[%s0 + $0x94] sm:$0xff]
  %v38 = vld [vmem:[%s0 + $0x9c] sm:$0xf]
  %v39 = vld [vmem:[%s0 + $0xa0] sm:$0xff]
  %v40 = vld [vmem:[%s0 + $0xa8] sm:$0xff]
  %v41 = vld [vmem:[%s0 + $0xb0] sm:$0xf]
  %v42 = vld [vmem:[%s0 + $0xb4] sm:$0xff]
  %v43 = vld [vmem:[%s0 + $0xbc] sm:$0xff]
  %v44 = vld [vmem:[%s0 + $0xc4] sm:$0xf]
  %v45 = vld [vmem:[%s0 + $0xc8] sm:$0xff]
  %v46 = vld [vmem:[%s0 + $0xd0] sm:$0xff]
  %v47 = vld [vmem:[%s0 + $0xd8] sm:$0xf]
  %v48 = vld [vmem:[%s0 + $0xdc] sm:$0xff]
  %v49 = vld [vmem:[%s0 + $0xe4] sm:$0xff]
  %v50 = vld [vmem:[%s0 + $0xec] sm:$0xf]
  %v51 = vld [vmem:[%s0 + $0xf0] sm:$0xff]
  %v52 = vld [vmem:[%s0 + $0xf8] sm:$0xff]
  %v53 = vld [vmem:[%s0 + $0x100] sm:$0xf]
  %v54 = vld [vmem:[%s1] sm:$0xf]
  %v55 = vld [vmem:[%s1 + $0x4] sm:$0xf]
  %v56 = vld [vmem:[%s1 + $0x8] sm:$0xf]
  %v57 = vld [vmem:[%s1 + $0xc] sm:$0xf]
  %v58 = vld [vmem:[%s1 + $0x10] sm:$0xf]
  %v59 = vld [vmem:[%s1 + $0x14] sm:$0xf]
  %v60 = vld [vmem:[%s1 + $0x18] sm:$0xf]
  %v61 = vld [vmem:[%s1 + $0x1c] sm:$0xf]
  %v62 = vld [vmem:[%s1 + $0x20] sm:$0xf]
  %v63 = vld [vmem:[%s1 + $0x24] sm:$0xf]
  %v64 = vld [vmem:[%s1 + $0x28] sm:$0xf]
  %v65 = vld [vmem:[%s1 + $0x2c] sm:$0xf]
  %v66 = vld [vmem:[%s1 + $0x30] sm:$0xf]
  %v67 = vld [vmem:[%s1 + $0x34] sm:$0xf]
  %v68 = vld [vmem:[%s1 + $0x38] sm:$0xf]
  %v69 = vld [vmem:[%s1 + $0x3c] sm:$0xf]
  %v70 = vld [vmem:[%s1 + $0x40] sm:$0xf]
  %v71 = vld [vmem:[%s1 + $0x44] sm:$0xf]
  %v72 = vld [vmem:[%s1 + $0x48] sm:$0xf]
  %v73 = vld [vmem:[%s1 + $0x4c] sm:$0xf]
  %v74 = vld [vmem:[%s1 + $0x50] sm:$0xf]
  %v75 = vld [vmem:[%s1 + $0x54] sm:$0xf]
  %v76 = vld [vmem:[%s1 + $0x58] sm:$0xf]
  %v77 = vld [vmem:[%s1 + $0x5c] sm:$0xf]
  %v78 = vld [vmem:[%s1 + $0x60] sm:$0xf]
  %v79 = vld [vmem:[%s1 + $0x64] sm:$0xf]
  %v80 = vld [vmem:[%s1 + $0x68] sm:$0xf]
  %v81 = vld [vmem:[%s1 + $0x6c] sm:$0xf]
  %v82 = vld [vmem:[%s1 + $0x70] sm:$0xf]
  %v83 = vld [vmem:[%s1 + $0x74] sm:$0xf]
  %v84 = vld [vmem:[%s1 + $0x78] sm:$0xf]
  %v85 = vld [vmem:[%s1 + $0x7c] sm:$0xf]
  %v86 = vld [vmem:[%s1 + $0x80] sm:$0xf]
  %v87 = vld [vmem:[%s1 + $0x84] sm:$0xf]
  %v88 = vld [vmem:[%s1 + $0x88] sm:$0xf]
  %v89 = vld [vmem:[%s1 + $0x8c] sm:$0xf]
  %v90 = vld [vmem:[%s1 + $0x90] sm:$0xf]
  %v91 = vld [vmem:[%s1 + $0x94] sm:$0xf]
  %v92 = vld [vmem:[%s1 + $0x98] sm:$0xf]
  %v93 = vld [vmem:[%s1 + $0x9c] sm:$0xf]
  %v94 = vld [vmem:[%s1 + $0xa0] sm:$0xf]
  %v95 = vld [vmem:[%s1 + $0xa4] sm:$0xf]
  %v96 = vld [vmem:[%s1 + $0xa8] sm:$0xf]
  %v97 = vld [vmem:[%s1 + $0xac] sm:$0xf]
  %v98 = vld [vmem:[%s1 + $0xb0] sm:$0xf]
  %v99 = vld [vmem:[%s1 + $0xb4] sm:$0xf]
  %v100 = vld [vmem:[%s1 + $0xb8] sm:$0xf]
  %v101 = vld [vmem:[%s1 + $0xbc] sm:$0xf]
  %v102 = vld [vmem:[%s1 + $0xc0] sm:$0xf]
  %v103 = vld [vmem:[%s1 + $0xc4] sm:$0xf]
  %v104 = vld [vmem:[%s1 + $0xc8] sm:$0xf]
  %v105 = vld [vmem:[%s1 + $0xcc] sm:$0xf]
  %v106 = vld [vmem:[%s1 + $0xd0] sm:$0xf]
  %v107 = vld [vmem:[%s1 + $0xd4] sm:$0xf]
  %v108 = vld [vmem:[%s1 + $0xd8] sm:$0xf]
  %v109 = vld [vmem:[%s1 + $0xdc] sm:$0xf]
  %v110 = vld [vmem:[%s1 + $0xe0] sm:$0xf]
  %v111 = vld [vmem:[%s1 + $0xe4] sm:$0xf]
  %v112 = vld [vmem:[%s1 + $0xe8] sm:$0xf]
  %v113 = vld [vmem:[%s1 + $0xec] sm:$0xf]
  %v114 = vld [vmem:[%s1 + $0xf0] sm:$0xf]
  %v115 = vld [vmem:[%s1 + $0xf4] sm:$0xf]
  %v116 = vld [vmem:[%s1 + $0xf8] sm:$0xf]
  %v117 = vld [vmem:[%s1 + $0xfc] sm:$0xf]
  %v118 = vld [vmem:[%s1 + $0x100] sm:$0xf]
  %v119 = vld [vmem:[%s1 + $0x104] sm:$0xf]
  %v120 = vld [vmem:[%s1 + $0x108] sm:$0xf]
  %v121 = vld [vmem:[%s1 + $0x10c] sm:$0xf]
  %v122 = vld [vmem:[%s1 + $0x110] sm:$0xf]
  %v123 = vld [vmem:[%s1 + $0x114] sm:$0xf]
  %v124 = vld [vmem:[%s1 + $0x118] sm:$0xf]
  %v125 = vld [vmem:[%s1 + $0x11c] sm:$0xf]
  %v126 = vld [vmem:[%s1 + $0x120] sm:$0xf]
  %v127 = vld [vmem:[%s1 + $0x124] sm:$0xf]
  %v128 = vld [vmem:[%s1 + $0x128] sm:$0xf]
  %v129 = vld [vmem:[%s1 + $0x12c] sm:$0xf]
  %v130 = vld [vmem:[%s1 + $0x130] sm:$0xf]
  %v131 = vld [vmem:[%s1 + $0x134] sm:$0xf]
  %v132 = vld [vmem:[%s1 + $0x138] sm:$0xf]
  %v133 = vld [vmem:[%s1 + $0x13c] sm:$0xf]
  %v134 = vld [vmem:[%s2] sm:$0x1]
  %v136 = vlaneseq
  %v137 = vshrl.u32 %v136, 7
  %v138 = vsub.s32 0, %v137
  %v139 = vrot.slane %v134, %v138
  %v180 = vunpack.c.l.b16 %v15
  %v181 = vunpack.c.h.b16 %v15
  %v182 = vunpack.c.l.b16 %v16
  %v183 = vunpack.c.h.b16 %v16
  %v184 = vunpack.c.l.b16 %v17
  %v185 = vunpack.c.l.b16 %v18
  %v186 = vunpack.c.h.b16 %v18
  %v187 = vunpack.c.l.b16 %v19
  %v188 = vunpack.c.h.b16 %v19
  %v189 = vunpack.c.l.b16 %v20
  %v190 = vunpack.c.l.b16 %v21
  %v191 = vunpack.c.h.b16 %v21
  %v192 = vunpack.c.l.b16 %v22
  %v193 = vunpack.c.h.b16 %v22
  %v194 = vunpack.c.l.b16 %v23
  %v195 = vunpack.c.l.b16 %v24
  %v196 = vunpack.c.h.b16 %v24
  %v197 = vunpack.c.l.b16 %v25
  %v198 = vunpack.c.h.b16 %v25
  %v199 = vunpack.c.l.b16 %v26
  %v200 = vunpack.c.l.b16 %v27
  %v201 = vunpack.c.h.b16 %v27
  %v202 = vunpack.c.l.b16 %v28
  %v203 = vunpack.c.h.b16 %v28
  %v204 = vunpack.c.l.b16 %v29
  %v205 = vunpack.c.l.b16 %v30
  %v206 = vunpack.c.h.b16 %v30
  %v207 = vunpack.c.l.b16 %v31
  %v208 = vunpack.c.h.b16 %v31
  %v209 = vunpack.c.l.b16 %v32
  %v210 = vunpack.c.l.b16 %v33
  %v211 = vunpack.c.h.b16 %v33
  %v212 = vunpack.c.l.b16 %v34
  %v213 = vunpack.c.h.b16 %v34
  %v214 = vunpack.c.l.b16 %v35
  %v215 = vunpack.c.l.b16 %v36
  %v216 = vunpack.c.h.b16 %v36
  %v217 = vunpack.c.l.b16 %v37
  %v218 = vunpack.c.h.b16 %v37
  %v219 = vunpack.c.l.b16 %v38
  %v220 = vunpack.c.l.b16 %v39
  %v221 = vunpack.c.h.b16 %v39
  %v222 = vunpack.c.l.b16 %v40
  %v223 = vunpack.c.h.b16 %v40
  %v224 = vunpack.c.l.b16 %v41
  %v225 = vunpack.c.l.b16 %v42
  %v226 = vunpack.c.h.b16 %v42
  %v227 = vunpack.c.l.b16 %v43
  %v228 = vunpack.c.h.b16 %v43
  %v229 = vunpack.c.l.b16 %v44
  %v230 = vunpack.c.l.b16 %v45
  %v231 = vunpack.c.h.b16 %v45
  %v232 = vunpack.c.l.b16 %v46
  %v233 = vunpack.c.h.b16 %v46
  %v234 = vunpack.c.l.b16 %v47
  %v235 = vunpack.c.l.b16 %v48
  %v236 = vunpack.c.h.b16 %v48
  %v237 = vunpack.c.l.b16 %v49
  %v238 = vunpack.c.h.b16 %v49
  %v239 = vunpack.c.l.b16 %v50
  %v240 = vunpack.c.l.b16 %v51
  %v241 = vunpack.c.h.b16 %v51
  %v242 = vunpack.c.l.b16 %v52
  %v243 = vunpack.c.h.b16 %v52
  %v244 = vunpack.c.l.b16 %v53
  %v245 = vpack.c.b16 %v185, %v180
  %v246 = vpack.c.b16 %v186, %v181
  %v247 = vpack.c.b16 %v187, %v182
  %v248 = vpack.c.b16 %v188, %v183
  %v249 = vpack.c.b16 %v189, %v184
  %v250 = vpack.c.b16 %v195, %v190
  %v251 = vpack.c.b16 %v196, %v191
  %v252 = vpack.c.b16 %v197, %v192
  %v253 = vpack.c.b16 %v198, %v193
  %v254 = vpack.c.b16 %v199, %v194
  %v255 = vpack.c.b16 %v205, %v200
  %v256 = vpack.c.b16 %v206, %v201
  %v257 = vpack.c.b16 %v207, %v202
  %v258 = vpack.c.b16 %v208, %v203
  %v259 = vpack.c.b16 %v209, %v204
  %v260 = vpack.c.b16 %v215, %v210
  %v261 = vpack.c.b16 %v216, %v211
  %v262 = vpack.c.b16 %v217, %v212
  %v263 = vpack.c.b16 %v218, %v213
  %v264 = vpack.c.b16 %v219, %v214
  %v265 = vpack.c.b16 %v225, %v220
  %v266 = vpack.c.b16 %v226, %v221
  %v267 = vpack.c.b16 %v227, %v222
  %v268 = vpack.c.b16 %v228, %v223
  %v269 = vpack.c.b16 %v229, %v224
  %v270 = vpack.c.b16 %v235, %v230
  %v271 = vpack.c.b16 %v236, %v231
  %v272 = vpack.c.b16 %v237, %v232
  %v273 = vpack.c.b16 %v238, %v233
  %v274 = vpack.c.b16 %v239, %v234
  %v275 = vpack.c.b16 %v240, %v240
  %v276 = vpack.c.b16 %v241, %v241
  %v277 = vpack.c.b16 %v242, %v242
  %v278 = vpack.c.b16 %v243, %v243
  %v279 = vpack.c.b16 %v244, %v244
  %v395 = vunpack.c.l.b16 %v54
  %v396 = vunpack.c.l.b16 %v55
  %v397 = vunpack.c.l.b16 %v56
  %v398 = vunpack.c.l.b16 %v57
  %v399 = vunpack.c.l.b16 %v58
  %v400 = vunpack.c.l.b16 %v59
  %v401 = vunpack.c.l.b16 %v60
  %v402 = vunpack.c.l.b16 %v61
  %v403 = vunpack.c.l.b16 %v62
  %v404 = vunpack.c.l.b16 %v63
  %v405 = vunpack.c.l.b16 %v64
  %v406 = vunpack.c.l.b16 %v65
  %v407 = vunpack.c.l.b16 %v66
  %v408 = vunpack.c.l.b16 %v67
  %v409 = vunpack.c.l.b16 %v68
  %v410 = vunpack.c.l.b16 %v69
  %v411 = vunpack.c.l.b16 %v70
  %v412 = vunpack.c.l.b16 %v71
  %v413 = vunpack.c.l.b16 %v72
  %v414 = vunpack.c.l.b16 %v73
  %v415 = vunpack.c.l.b16 %v74
  %v416 = vunpack.c.l.b16 %v75
  %v417 = vunpack.c.l.b16 %v76
  %v418 = vunpack.c.l.b16 %v77
  %v419 = vunpack.c.l.b16 %v78
  %v420 = vunpack.c.l.b16 %v79
  %v421 = vunpack.c.l.b16 %v80
  %v422 = vunpack.c.l.b16 %v81
  %v423 = vunpack.c.l.b16 %v82
  %v424 = vunpack.c.l.b16 %v83
  %v425 = vunpack.c.l.b16 %v84
  %v426 = vunpack.c.l.b16 %v85
  %v427 = vunpack.c.l.b16 %v86
  %v428 = vunpack.c.l.b16 %v87
  %v429 = vunpack.c.l.b16 %v88
  %v430 = vunpack.c.l.b16 %v89
  %v431 = vunpack.c.l.b16 %v90
  %v432 = vunpack.c.l.b16 %v91
  %v433 = vunpack.c.l.b16 %v92
  %v434 = vunpack.c.l.b16 %v93
  %v435 = vunpack.c.l.b16 %v94
  %v436 = vunpack.c.l.b16 %v95
  %v437 = vunpack.c.l.b16 %v96
  %v438 = vunpack.c.l.b16 %v97
  %v439 = vunpack.c.l.b16 %v98
  %v440 = vunpack.c.l.b16 %v99
  %v441 = vunpack.c.l.b16 %v100
  %v442 = vunpack.c.l.b16 %v101
  %v443 = vunpack.c.l.b16 %v102
  %v444 = vunpack.c.l.b16 %v103
  %v445 = vunpack.c.l.b16 %v104
  %v446 = vunpack.c.l.b16 %v105
  %v447 = vunpack.c.l.b16 %v106
  %v448 = vunpack.c.l.b16 %v107
  %v449 = vunpack.c.l.b16 %v108
  %v450 = vunpack.c.l.b16 %v109
  %v451 = vunpack.c.l.b16 %v110
  %v452 = vunpack.c.l.b16 %v111
  %v453 = vunpack.c.l.b16 %v112
  %v454 = vunpack.c.l.b16 %v113
  %v455 = vunpack.c.l.b16 %v114
  %v456 = vunpack.c.l.b16 %v115
  %v457 = vunpack.c.l.b16 %v116
  %v458 = vunpack.c.l.b16 %v117
  %v459 = vunpack.c.l.b16 %v118
  %v460 = vunpack.c.l.b16 %v119
  %v461 = vunpack.c.l.b16 %v120
  %v462 = vunpack.c.l.b16 %v121
  %v463 = vunpack.c.l.b16 %v122
  %v464 = vunpack.c.l.b16 %v123
  %v465 = vunpack.c.l.b16 %v124
  %v466 = vunpack.c.l.b16 %v125
  %v467 = vunpack.c.l.b16 %v126
  %v468 = vunpack.c.l.b16 %v127
  %v469 = vunpack.c.l.b16 %v128
  %v470 = vunpack.c.l.b16 %v129
  %v471 = vunpack.c.l.b16 %v130
  %v472 = vunpack.c.l.b16 %v131
  %v473 = vunpack.c.l.b16 %v132
  %v474 = vunpack.c.l.b16 %v133
  %v475 = vpack.c.b16 %v396, %v395
  %v476 = vpack.c.b16 %v398, %v397
  %v477 = vpack.c.b16 %v400, %v399
  %v478 = vpack.c.b16 %v402, %v401
  %v479 = vpack.c.b16 %v404, %v403
  %v480 = vpack.c.b16 %v406, %v405
  %v481 = vpack.c.b16 %v408, %v407
  %v482 = vpack.c.b16 %v410, %v409
  %v483 = vpack.c.b16 %v412, %v411
  %v484 = vpack.c.b16 %v414, %v413
  %v485 = vpack.c.b16 %v416, %v415
  %v486 = vpack.c.b16 %v418, %v417
  %v487 = vpack.c.b16 %v420, %v419
  %v488 = vpack.c.b16 %v422, %v421
  %v489 = vpack.c.b16 %v424, %v423
  %v490 = vpack.c.b16 %v426, %v425
  %v491 = vpack.c.b16 %v428, %v427
  %v492 = vpack.c.b16 %v430, %v429
  %v493 = vpack.c.b16 %v432, %v431
  %v494 = vpack.c.b16 %v434, %v433
  %v495 = vpack.c.b16 %v436, %v435
  %v496 = vpack.c.b16 %v438, %v437
  %v497 = vpack.c.b16 %v440, %v439
  %v498 = vpack.c.b16 %v442, %v441
  %v499 = vpack.c.b16 %v444, %v443
  %v500 = vpack.c.b16 %v446, %v445
  %v501 = vpack.c.b16 %v448, %v447
  %v502 = vpack.c.b16 %v450, %v449
  %v503 = vpack.c.b16 %v452, %v451
  %v504 = vpack.c.b16 %v454, %v453
  %v505 = vpack.c.b16 %v456, %v455
  %v506 = vpack.c.b16 %v458, %v457
  %v507 = vpack.c.b16 %v460, %v459
  %v508 = vpack.c.b16 %v462, %v461
  %v509 = vpack.c.b16 %v464, %v463
  %v510 = vpack.c.b16 %v466, %v465
  %v511 = vpack.c.b16 %v468, %v467
  %v512 = vpack.c.b16 %v470, %v469
  %v513 = vpack.c.b16 %v472, %v471
  %v514 = vpack.c.b16 %v474, %v473
  %555 = vmatprep.subr.bf16.mxu0 0
  %556 = vmatpush1.bf16.msra.mxu0 %v475
  %557 = vmatprep.subr.bf16.mxu0 0
  %558 = vmatpush1.bf16.msra.mxu0 %v476
  %559 = vmatprep.subr.bf16.mxu0 0
  %560 = vmatpush1.bf16.msra.mxu0 %v477
  %561 = vmatprep.subr.bf16.mxu0 0
  %562 = vmatpush1.bf16.msra.mxu0 %v478
  %563 = vmatprep.subr.bf16.mxu0 0
  %564 = vmatpush1.bf16.msra.mxu0 %v479
  %565 = vmatprep.subr.bf16.mxu0 0
  %566 = vmatpush1.bf16.msra.mxu0 %v480
  %567 = vmatprep.subr.bf16.mxu0 0
  %568 = vmatpush1.bf16.msra.mxu0 %v481
  %569 = vmatprep.subr.bf16.mxu0 0
  %570 = vmatpush1.bf16.msra.mxu0 %v482
  %571 = vmatprep.subr.bf16.mxu0 0
  %572 = vmatpush1.bf16.msra.mxu0 %v483
  %573 = vmatprep.subr.bf16.mxu0 0
  %574 = vmatpush1.bf16.msra.mxu0 %v484
  %575 = vmatprep.subr.bf16.mxu0 0
  %576 = vmatpush1.bf16.msra.mxu0 %v485
  %577 = vmatprep.subr.bf16.mxu0 0
  %578 = vmatpush1.bf16.msra.mxu0 %v486
  %579 = vmatprep.subr.bf16.mxu0 0
  %580 = vmatpush1.bf16.msra.mxu0 %v487
  %581 = vmatprep.subr.bf16.mxu0 0
  %582 = vmatpush1.bf16.msra.mxu0 %v488
  %583 = vmatprep.subr.bf16.mxu0 0
  %584 = vmatpush1.bf16.msra.mxu0 %v489
  %585 = vmatprep.subr.bf16.mxu0 0
  %586 = vmatpush1.bf16.msra.mxu0 %v490
  %587 = vmatprep.mubr.bf16.mxu0 %v246
  %588 = vmatmul.mubr.bf16.gmra.mrb[0].mxu0 %v245
  %v589 = vpop.f32.mrb[0].mxu0
  %v590 = vadd.f32 %v139, %v589
  %v591 = vpop.f32.mrb[0].mxu0
  %v592 = vpop.f32.mrb[0].mxu0
  %v593 = vadd.f32 %v139, %v592
  %v594 = vpop.f32.mrb[0].mxu0
  %595 = vmatprep.mubr.bf16.mxu0 %v251
  %596 = vmatmul.mubr.bf16.gmra.mrb[0].mxu0 %v250
  %v597 = vpop.f32.mrb[0].mxu0
  %v598 = vadd.f32 %v139, %v597
  %v599 = vpop.f32.mrb[0].mxu0
  %v600 = vpop.f32.mrb[0].mxu0
  %v601 = vadd.f32 %v139, %v600
  %v602 = vpop.f32.mrb[0].mxu0
  %603 = vmatprep.mubr.bf16.mxu0 %v256
  %604 = vmatmul.mubr.bf16.gmra.mrb[0].mxu0 %v255
  %v605 = vpop.f32.mrb[0].mxu0
  %v606 = vadd.f32 %v139, %v605
  %v607 = vpop.f32.mrb[0].mxu0
  %v608 = vpop.f32.mrb[0].mxu0
  %v609 = vadd.f32 %v139, %v608
  %v610 = vpop.f32.mrb[0].mxu0
  %611 = vmatprep.mubr.bf16.mxu0 %v261
  %612 = vmatmul.mubr.bf16.gmra.mrb[0].mxu0 %v260
  %v613 = vpop.f32.mrb[0].mxu0
  %v614 = vadd.f32 %v139, %v613
  %v615 = vpop.f32.mrb[0].mxu0
  %v616 = vpop.f32.mrb[0].mxu0
  %v617 = vadd.f32 %v139, %v616
  %v618 = vpop.f32.mrb[0].mxu0
  %619 = vmatprep.mubr.bf16.mxu0 %v266
  %620 = vmatmul.mubr.bf16.gmra.mrb[0].mxu0 %v265
  %v621 = vpop.f32.mrb[0].mxu0
  %v622 = vadd.f32 %v139, %v621
  %v623 = vpop.f32.mrb[0].mxu0
  %v624 = vpop.f32.mrb[0].mxu0
  %v625 = vadd.f32 %v139, %v624
  %v626 = vpop.f32.mrb[0].mxu0
  %627 = vmatprep.mubr.bf16.mxu0 %v271
  %628 = vmatmul.mubr.bf16.gmra.mrb[0].mxu0 %v270
  %v629 = vpop.f32.mrb[0].mxu0
  %v630 = vadd.f32 %v139, %v629
  %v631 = vpop.f32.mrb[0].mxu0
  %v632 = vpop.f32.mrb[0].mxu0
  %v633 = vadd.f32 %v139, %v632
  %v634 = vpop.f32.mrb[0].mxu0
  %635 = vmatprep.mubr.bf16.mxu0 %v276
  %636 = vmatmul.mubr.bf16.gmra.mrb[0].mxu0 %v275
  %v637 = vpop.f32.mrb[0].mxu0
  %v638 = vadd.f32 %v139, %v637
  %v639 = vpop.f32.mrb[0].mxu0
  %v640 = vpop.f32.mrb[0].mxu0
  %v641 = vpop.f32.mrb[0].mxu0
  %642 = vdwg.mxu0
  %643 = vmatprep.subr.bf16.mxu0 0
  %644 = vmatpush1.bf16.msra.mxu0 %v491
  %645 = vmatprep.subr.bf16.mxu0 0
  %646 = vmatpush1.bf16.msra.mxu0 %v492
  %647 = vmatprep.subr.bf16.mxu0 0
  %648 = vmatpush1.bf16.msra.mxu0 %v493
  %649 = vmatprep.subr.bf16.mxu0 0
  %650 = vmatpush1.bf16.msra.mxu0 %v494
  %651 = vmatprep.subr.bf16.mxu0 0
  %652 = vmatpush1.bf16.msra.mxu0 %v495
  %653 = vmatprep.subr.bf16.mxu0 0
  %654 = vmatpush1.bf16.msra.mxu0 %v496
  %655 = vmatprep.subr.bf16.mxu0 0
  %656 = vmatpush1.bf16.msra.mxu0 %v497
  %657 = vmatprep.subr.bf16.mxu0 0
  %658 = vmatpush1.bf16.msra.mxu0 %v498
  %659 = vmatprep.subr.bf16.mxu0 0
  %660 = vmatpush1.bf16.msra.mxu0 %v499
  %661 = vmatprep.subr.bf16.mxu0 0
  %662 = vmatpush1.bf16.msra.mxu0 %v500
  %663 = vmatprep.subr.bf16.mxu0 0
  %664 = vmatpush1.bf16.msra.mxu0 %v501
  %665 = vmatprep.subr.bf16.mxu0 0
  %666 = vmatpush1.bf16.msra.mxu0 %v502
  %667 = vmatprep.subr.bf16.mxu0 0
  %668 = vmatpush1.bf16.msra.mxu0 %v503
  %669 = vmatprep.subr.bf16.mxu0 0
  %670 = vmatpush1.bf16.msra.mxu0 %v504
  %671 = vmatprep.subr.bf16.mxu0 0
  %672 = vmatpush1.bf16.msra.mxu0 %v505
  %673 = vmatprep.subr.bf16.mxu0 0
  %674 = vmatpush1.bf16.msra.mxu0 %v506
  %675 = vmatprep.mubr.bf16.mxu0 %v248
  %676 = vmatmul.mubr.bf16.gmra.mrb[0].mxu0 %v247
  %v677 = vpop.f32.mrb[0].mxu0
  %v678 = vadd.f32 %v590, %v677
  %v679 = vpop.f32.mrb[0].mxu0
  %v680 = vpop.f32.mrb[0].mxu0
  %v681 = vadd.f32 %v593, %v680
  %v682 = vpop.f32.mrb[0].mxu0
  %683 = vmatprep.mubr.bf16.mxu0 %v253
  %684 = vmatmul.mubr.bf16.gmra.mrb[0].mxu0 %v252
  %v685 = vpop.f32.mrb[0].mxu0
  %v686 = vadd.f32 %v598, %v685
  %v687 = vpop.f32.mrb[0].mxu0
  %v688 = vpop.f32.mrb[0].mxu0
  %v689 = vadd.f32 %v601, %v688
  %v690 = vpop.f32.mrb[0].mxu0
  %691 = vmatprep.mubr.bf16.mxu0 %v258
  %692 = vmatmul.mubr.bf16.gmra.mrb[0].mxu0 %v257
  %v693 = vpop.f32.mrb[0].mxu0
  %v694 = vadd.f32 %v606, %v693
  %v695 = vpop.f32.mrb[0].mxu0
  %v696 = vpop.f32.mrb[0].mxu0
  %v697 = vadd.f32 %v609, %v696
  %v698 = vpop.f32.mrb[0].mxu0
  %699 = vmatprep.mubr.bf16.mxu0 %v263
  %700 = vmatmul.mubr.bf16.gmra.mrb[0].mxu0 %v262
  %v701 = vpop.f32.mrb[0].mxu0
  %v702 = vadd.f32 %v614, %v701
  %v703 = vpop.f32.mrb[0].mxu0
  %v704 = vpop.f32.mrb[0].mxu0
  %v705 = vadd.f32 %v617, %v704
  %v706 = vpop.f32.mrb[0].mxu0
  %707 = vmatprep.mubr.bf16.mxu0 %v268
  %708 = vmatmul.mubr.bf16.gmra.mrb[0].mxu0 %v267
  %v709 = vpop.f32.mrb[0].mxu0
  %v710 = vadd.f32 %v622, %v709
  %v711 = vpop.f32.mrb[0].mxu0
  %v712 = vpop.f32.mrb[0].mxu0
  %v713 = vadd.f32 %v625, %v712
  %v714 = vpop.f32.mrb[0].mxu0
  %715 = vmatprep.mubr.bf16.mxu0 %v273
  %716 = vmatmul.mubr.bf16.gmra.mrb[0].mxu0 %v272
  %v717 = vpop.f32.mrb[0].mxu0
  %v718 = vadd.f32 %v630, %v717
  %v719 = vpop.f32.mrb[0].mxu0
  %v720 = vpop.f32.mrb[0].mxu0
  %v721 = vadd.f32 %v633, %v720
  %v722 = vpop.f32.mrb[0].mxu0
  %723 = vmatprep.mubr.bf16.mxu0 %v278
  %724 = vmatmul.mubr.bf16.gmra.mrb[0].mxu0 %v277
  %v725 = vpop.f32.mrb[0].mxu0
  %v726 = vadd.f32 %v638, %v725
  %v727 = vpop.f32.mrb[0].mxu0
  %v728 = vpop.f32.mrb[0].mxu0
  %v729 = vpop.f32.mrb[0].mxu0
  %730 = vdwg.mxu0
  %731 = vmatprep.subr.bf16.mxu0 0
  %732 = vmatpush1.bf16.msra.mxu0 %v507
  %733 = vmatprep.subr.bf16.mxu0 0
  %734 = vmatpush1.bf16.msra.mxu0 %v508
  %735 = vmatprep.subr.bf16.mxu0 0
  %736 = vmatpush1.bf16.msra.mxu0 %v509
  %737 = vmatprep.subr.bf16.mxu0 0
  %738 = vmatpush1.bf16.msra.mxu0 %v510
  %739 = vmatprep.subr.bf16.mxu0 0
  %740 = vmatpush1.bf16.msra.mxu0 %v511
  %741 = vmatprep.subr.bf16.mxu0 0
  %742 = vmatpush1.bf16.msra.mxu0 %v512
  %743 = vmatprep.subr.bf16.mxu0 0
  %744 = vmatpush1.bf16.msra.mxu0 %v513
  %745 = vmatprep.subr.bf16.mxu0 0
  %746 = vmatpush1.bf16.msra.mxu0 %v514
  %747 = vmatprep.subr.bf16.mxu0 0
  %748 = vmatpush1.bf16.msra.mxu0 0
  %749 = vmatprep.subr.bf16.mxu0 0
  %750 = vmatpush1.bf16.msra.mxu0 0
  %751 = vmatprep.subr.bf16.mxu0 0
  %752 = vmatpush1.bf16.msra.mxu0 0
  %753 = vmatprep.subr.bf16.mxu0 0
  %754 = vmatpush1.bf16.msra.mxu0 0
  %755 = vmatprep.subr.bf16.mxu0 0
  %756 = vmatpush1.bf16.msra.mxu0 0
  %757 = vmatprep.subr.bf16.mxu0 0
  %758 = vmatpush1.bf16.msra.mxu0 0
  %759 = vmatprep.subr.bf16.mxu0 0
  %760 = vmatpush1.bf16.msra.mxu0 0
  %761 = vmatprep.subr.bf16.mxu0 0
  %762 = vmatpush1.bf16.msra.mxu0 0
  %763 = vmatprep.mubr.bf16.mxu0 0
  %764 = vmatmul.mubr.bf16.gmra.mrb[0].mxu0 %v249
  %v765 = vpop.f32.mrb[0].mxu0
  %v766 = vadd.f32 %v678, %v765
  %v767 = vpop.f32.mrb[0].mxu0
  %v768 = vpop.f32.mrb[0].mxu0
  %v769 = vadd.f32 %v681, %v768
  %v770 = vpop.f32.mrb[0].mxu0
  %771 = vmatprep.mubr.bf16.mxu0 0
  %772 = vmatmul.mubr.bf16.gmra.mrb[0].mxu0 %v254
  %v773 = vpop.f32.mrb[0].mxu0
  %v774 = vadd.f32 %v686, %v773
  %v775 = vpop.f32.mrb[0].mxu0
  %v776 = vpop.f32.mrb[0].mxu0
  %v777 = vadd.f32 %v689, %v776
  %v778 = vpop.f32.mrb[0].mxu0
  %779 = vmatprep.mubr.bf16.mxu0 0
  %780 = vmatmul.mubr.bf16.gmra.mrb[0].mxu0 %v259
  %v781 = vpop.f32.mrb[0].mxu0
  %v782 = vadd.f32 %v694, %v781
  %v783 = vpop.f32.mrb[0].mxu0
  %v784 = vpop.f32.mrb[0].mxu0
  %v785 = vadd.f32 %v697, %v784
  %v786 = vpop.f32.mrb[0].mxu0
  %787 = vmatprep.mubr.bf16.mxu0 0
  %788 = vmatmul.mubr.bf16.gmra.mrb[0].mxu0 %v264
  %v789 = vpop.f32.mrb[0].mxu0
  %v790 = vadd.f32 %v702, %v789
  %v791 = vpop.f32.mrb[0].mxu0
  %v792 = vpop.f32.mrb[0].mxu0
  %v793 = vadd.f32 %v705, %v792
  %v794 = vpop.f32.mrb[0].mxu0
  %795 = vmatprep.mubr.bf16.mxu0 0
  %796 = vmatmul.mubr.bf16.gmra.mrb[0].mxu0 %v269
  %v797 = vpop.f32.mrb[0].mxu0
  %v798 = vadd.f32 %v710, %v797
  %v799 = vpop.f32.mrb[0].mxu0
  %v800 = vpop.f32.mrb[0].mxu0
  %v801 = vadd.f32 %v713, %v800
  %v802 = vpop.f32.mrb[0].mxu0
  %803 = vmatprep.mubr.bf16.mxu0 0
  %804 = vmatmul.mubr.bf16.gmra.mrb[0].mxu0 %v274
  %v805 = vpop.f32.mrb[0].mxu0
  %v806 = vadd.f32 %v718, %v805
  %v807 = vpop.f32.mrb[0].mxu0
  %v808 = vpop.f32.mrb[0].mxu0
  %v809 = vadd.f32 %v721, %v808
  %v810 = vpop.f32.mrb[0].mxu0
  %811 = vmatprep.mubr.bf16.mxu0 0
  %812 = vmatmul.mubr.bf16.gmra.mrb[0].mxu0 %v279
  %v813 = vpop.f32.mrb[0].mxu0
  %v814 = vadd.f32 %v726, %v813
  %v815 = vpop.f32.mrb[0].mxu0
  %v816 = vpop.f32.mrb[0].mxu0
  %v817 = vpop.f32.mrb[0].mxu0
  %818 = vdwg.mxu0
  %v819 = vmax.f32 %v766, 0.0
  %v820 = vmax.f32 %v769, 0.0
  %v821 = vmax.f32 %v774, 0.0
  %v822 = vmax.f32 %v777, 0.0
  %v823 = vmax.f32 %v782, 0.0
  %v824 = vmax.f32 %v785, 0.0
  %v825 = vmax.f32 %v790, 0.0
  %v826 = vmax.f32 %v793, 0.0
  %v827 = vmax.f32 %v798, 0.0
  %v828 = vmax.f32 %v801, 0.0
  %v829 = vmax.f32 %v806, 0.0
  %v830 = vmax.f32 %v809, 0.0
  %v831 = vmax.f32 %v814, 0.0
  %v832 = vpack.c.bf16 %v820, %v819
  %v833 = vpack.c.bf16 %v822, %v821
  %v834 = vpack.c.bf16 %v824, %v823
  %v835 = vpack.c.bf16 %v826, %v825
  %v836 = vpack.c.bf16 %v828, %v827
  %v837 = vpack.c.bf16 %v830, %v829
  %v838 = vpack.c.bf16 %v831, %v831
  %v846 = vunpack.c.l.b16 %v832
  %v847 = vunpack.c.h.b16 %v832
  %v848 = vunpack.c.l.b16 %v833
  %v849 = vunpack.c.h.b16 %v833
  %v850 = vunpack.c.l.b16 %v834
  %v851 = vunpack.c.h.b16 %v834
  %v852 = vunpack.c.l.b16 %v835
  %v853 = vunpack.c.h.b16 %v835
  %v854 = vunpack.c.l.b16 %v836
  %v855 = vunpack.c.h.b16 %v836
  %v856 = vunpack.c.l.b16 %v837
  %v857 = vunpack.c.h.b16 %v837
  %v858 = vunpack.c.l.b16 %v838
  %v859 = vpack.c.b16 %v846, %v846
  %v860 = vpack.c.b16 %v847, %v847
  %v861 = vpack.c.b16 %v848, %v848
  %v862 = vpack.c.b16 %v849, %v849
  %v863 = vpack.c.b16 %v850, %v850
  %v864 = vpack.c.b16 %v851, %v851
  %v865 = vpack.c.b16 %v852, %v852
  %v866 = vpack.c.b16 %v853, %v853
  %v867 = vpack.c.b16 %v854, %v854
  %v868 = vpack.c.b16 %v855, %v855
  %v869 = vpack.c.b16 %v856, %v856
  %v870 = vpack.c.b16 %v857, %v857
  %v871 = vpack.c.b16 %v858, %v858
  %vm885 = vcmask 519168
  %886 = vst.msk [vmem:[%s3] sm:$0xf] %vm885, %v859
  %887 = vst.msk [vmem:[%s3 + $0x4] sm:$0xf] %vm885, %v860
  %888 = vst.msk [vmem:[%s3 + $0x8] sm:$0xf] %vm885, %v861
  %889 = vst.msk [vmem:[%s3 + $0xc] sm:$0xf] %vm885, %v862
  %890 = vst.msk [vmem:[%s3 + $0x10] sm:$0xf] %vm885, %v863
  %891 = vst.msk [vmem:[%s3 + $0x14] sm:$0xf] %vm885, %v864
  %892 = vst.msk [vmem:[%s3 + $0x18] sm:$0xf] %vm885, %v865
  %893 = vst.msk [vmem:[%s3 + $0x1c] sm:$0xf] %vm885, %v866
  %894 = vst.msk [vmem:[%s3 + $0x20] sm:$0xf] %vm885, %v867
  %895 = vst.msk [vmem:[%s3 + $0x24] sm:$0xf] %vm885, %v868
  %896 = vst.msk [vmem:[%s3 + $0x28] sm:$0xf] %vm885, %v869
  %897 = vst.msk [vmem:[%s3 + $0x2c] sm:$0xf] %vm885, %v870
  %898 = vst.msk [vmem:[%s3 + $0x30] sm:$0xf] %vm885, %v871
  // Predicated region
  $region14: #{network_forward.7} parent=0 // pred_check
    _
  $region15: #{network_forward.7} parent=0 // pred_check_branch
    %900 = sbr.rel (0) target = $region17
  $region16: #{network_forward.7} parent=0 // pred_region
    _
  $region17: #{network_forward.7} parent=0 // pred_fallthru
    _
  // Predicated region
  $region18: #{network_forward.7} parent=0 // pred_check
    _
  $region19: #{network_forward.7} parent=0 // pred_check_branch
    %902 = sbr.rel (0) target = $region21
  $region20: #{network_forward.7} parent=0 // pred_region
    _
  $region21: #{network_forward.7} parent=0 // pred_fallthru
    _

// kernel: network_forward.9
$region0: #{network_forward.9}
  #allocation0 [shape = 'u32[]', space=smem, size = 0x4, offset = 0x4, fixed_abs, tag = 'smem constant byte address 0x4 - core index']
  #allocation1 [shape = 'u32[144,128]{1,0:T(1,128)}', space=vmem, size = 0x12000, scoped, tag = 'internal scratch']
  %s0 = inlined_call_operand.vmem [shape: bf16[8,1024], index: 0, kind: input, shape index: {}]
  %s1 = inlined_call_operand.vmem [shape: bf16[1024,128], index: 1, kind: input, shape index: {}]
  %s2 = inlined_call_operand.vmem [shape: f32[1,128], index: 2, kind: input, shape index: {}]
  %s3 = inlined_call_operand.vmem [shape: f32[8,128], index: 3, kind: output, shape index: {}]
  %s4 = sld [smem:[#allocation0]]
  $region22: #{network_forward.9} parent=0
    _
  %s6 = ssub.s32 1, %s4
  %s7 = scalar_select 0, %s6, %s4
  // Predicated region
  $region2: #{network_forward.9} parent=0 // pred_check
    _
  $region3: #{network_forward.9} parent=0 // pred_check_branch
    %9 = sbr.rel (0) target = $region5
  $region4: #{network_forward.9} parent=0 // pred_region
    _
  $region5: #{network_forward.9} parent=0 // pred_fallthru
    _
  // Predicated region
  $region6: #{network_forward.9} parent=0 // pred_check
    _
  $region7: #{network_forward.9} parent=0 // pred_check_branch
    %11 = sbr.rel (0) target = $region9
  $region8: #{network_forward.9} parent=0 // pred_region
    _
  $region9: #{network_forward.9} parent=0 // pred_fallthru
    _
  // Predicated region
  $region10: #{network_forward.9} parent=0 // pred_check
    _
  $region11: #{network_forward.9} parent=0 // pred_check_branch
    %13 = sbr.rel (0) target = $region13
  $region12: #{network_forward.9} parent=0 // pred_region
    _
  $region13: #{network_forward.9} parent=0 // pred_fallthru
    _
  %v15 = vld [vmem:[%s0] sm:$0xff]
  %v16 = vld [vmem:[%s0 + $0x8] sm:$0xff]
  %v17 = vld [vmem:[%s0 + $0x10] sm:$0xff]
  %v18 = vld [vmem:[%s0 + $0x18] sm:$0xff]
  %v19 = vld [vmem:[%s1] sm:$0xf]
  %v20 = vld [vmem:[%s1 + $0x4] sm:$0xf]
  %v21 = vld [vmem:[%s1 + $0x8] sm:$0xf]
  %v22 = vld [vmem:[%s1 + $0xc] sm:$0xf]
  %v23 = vld [vmem:[%s1 + $0x10] sm:$0xf]
  %v24 = vld [vmem:[%s1 + $0x14] sm:$0xf]
  %v25 = vld [vmem:[%s1 + $0x18] sm:$0xf]
  %v26 = vld [vmem:[%s1 + $0x1c] sm:$0xf]
  %v27 = vld [vmem:[%s1 + $0x20] sm:$0xf]
  %v28 = vld [vmem:[%s1 + $0x24] sm:$0xf]
  %v29 = vld [vmem:[%s1 + $0x28] sm:$0xf]
  %v30 = vld [vmem:[%s1 + $0x2c] sm:$0xf]
  %v31 = vld [vmem:[%s1 + $0x30] sm:$0xf]
  %v32 = vld [vmem:[%s1 + $0x34] sm:$0xf]
  %v33 = vld [vmem:[%s1 + $0x38] sm:$0xf]
  %v34 = vld [vmem:[%s1 + $0x3c] sm:$0xf]
  %v35 = vld [vmem:[%s1 + $0x40] sm:$0xf]
  %v36 = vld [vmem:[%s1 + $0x44] sm:$0xf]
  %v37 = vld [vmem:[%s1 + $0x48] sm:$0xf]
  %v38 = vld [vmem:[%s1 + $0x4c] sm:$0xf]
  %v39 = vld [vmem:[%s1 + $0x50] sm:$0xf]
  %v40 = vld [vmem:[%s1 + $0x54] sm:$0xf]
  %v41 = vld [vmem:[%s1 + $0x58] sm:$0xf]
  %v42 = vld [vmem:[%s1 + $0x5c] sm:$0xf]
  %v43 = vld [vmem:[%s1 + $0x60] sm:$0xf]
  %v44 = vld [vmem:[%s1 + $0x64] sm:$0xf]
  %v45 = vld [vmem:[%s1 + $0x68] sm:$0xf]
  %v46 = vld [vmem:[%s1 + $0x6c] sm:$0xf]
  %v47 = vld [vmem:[%s1 + $0x70] sm:$0xf]
  %v48 = vld [vmem:[%s1 + $0x74] sm:$0xf]
  %v49 = vld [vmem:[%s1 + $0x78] sm:$0xf]
  %v50 = vld [vmem:[%s1 + $0x7c] sm:$0xf]
  %v51 = vld [vmem:[%s1 + $0x80] sm:$0xf]
  %v52 = vld [vmem:[%s1 + $0x84] sm:$0xf]
  %v53 = vld [vmem:[%s1 + $0x88] sm:$0xf]
  %v54 = vld [vmem:[%s1 + $0x8c] sm:$0xf]
  %v55 = vld [vmem:[%s1 + $0x90] sm:$0xf]
  %v56 = vld [vmem:[%s1 + $0x94] sm:$0xf]
  %v57 = vld [vmem:[%s1 + $0x98] sm:$0xf]
  %v58 = vld [vmem:[%s1 + $0x9c] sm:$0xf]
  %v59 = vld [vmem:[%s1 + $0xa0] sm:$0xf]
  %v60 = vld [vmem:[%s1 + $0xa4] sm:$0xf]
  %v61 = vld [vmem:[%s1 + $0xa8] sm:$0xf]
  %v62 = vld [vmem:[%s1 + $0xac] sm:$0xf]
  %v63 = vld [vmem:[%s1 + $0xb0] sm:$0xf]
  %v64 = vld [vmem:[%s1 + $0xb4] sm:$0xf]
  %v65 = vld [vmem:[%s1 + $0xb8] sm:$0xf]
  %v66 = vld [vmem:[%s1 + $0xbc] sm:$0xf]
  %v67 = vld [vmem:[%s1 + $0xc0] sm:$0xf]
  %v68 = vld [vmem:[%s1 + $0xc4] sm:$0xf]
  %v69 = vld [vmem:[%s1 + $0xc8] sm:$0xf]
  %v70 = vld [vmem:[%s1 + $0xcc] sm:$0xf]
  %v71 = vld [vmem:[%s1 + $0xd0] sm:$0xf]
  %v72 = vld [vmem:[%s1 + $0xd4] sm:$0xf]
  %v73 = vld [vmem:[%s1 + $0xd8] sm:$0xf]
  %v74 = vld [vmem:[%s1 + $0xdc] sm:$0xf]
  %v75 = vld [vmem:[%s1 + $0xe0] sm:$0xf]
  %v76 = vld [vmem:[%s1 + $0xe4] sm:$0xf]
  %v77 = vld [vmem:[%s1 + $0xe8] sm:$0xf]
  %v78 = vld [vmem:[%s1 + $0xec] sm:$0xf]
  %v79 = vld [vmem:[%s1 + $0xf0] sm:$0xf]
  %v80 = vld [vmem:[%s1 + $0xf4] sm:$0xf]
  %v81 = vld [vmem:[%s1 + $0xf8] sm:$0xf]
  %v82 = vld [vmem:[%s1 + $0xfc] sm:$0xf]
  %v83 = vld [vmem:[%s1 + $0x100] sm:$0xf]
  %v84 = vld [vmem:[%s1 + $0x104] sm:$0xf]
  %v85 = vld [vmem:[%s1 + $0x108] sm:$0xf]
  %v86 = vld [vmem:[%s1 + $0x10c] sm:$0xf]
  %v87 = vld [vmem:[%s1 + $0x110] sm:$0xf]
  %v88 = vld [vmem:[%s1 + $0x114] sm:$0xf]
  %v89 = vld [vmem:[%s1 + $0x118] sm:$0xf]
  %v90 = vld [vmem:[%s1 + $0x11c] sm:$0xf]
  %v91 = vld [vmem:[%s1 + $0x120] sm:$0xf]
  %v92 = vld [vmem:[%s1 + $0x124] sm:$0xf]
  %v93 = vld [vmem:[%s1 + $0x128] sm:$0xf]
  %v94 = vld [vmem:[%s1 + $0x12c] sm:$0xf]
  %v95 = vld [vmem:[%s1 + $0x130] sm:$0xf]
  %v96 = vld [vmem:[%s1 + $0x134] sm:$0xf]
  %v97 = vld [vmem:[%s1 + $0x138] sm:$0xf]
  %v98 = vld [vmem:[%s1 + $0x13c] sm:$0xf]
  %v99 = vld [vmem:[%s1 + $0x140] sm:$0xf]
  %v100 = vld [vmem:[%s1 + $0x144] sm:$0xf]
  %v101 = vld [vmem:[%s1 + $0x148] sm:$0xf]
  %v102 = vld [vmem:[%s1 + $0x14c] sm:$0xf]
  %v103 = vld [vmem:[%s1 + $0x150] sm:$0xf]
  %v104 = vld [vmem:[%s1 + $0x154] sm:$0xf]
  %v105 = vld [vmem:[%s1 + $0x158] sm:$0xf]
  %v106 = vld [vmem:[%s1 + $0x15c] sm:$0xf]
  %v107 = vld [vmem:[%s1 + $0x160] sm:$0xf]
  %v108 = vld [vmem:[%s1 + $0x164] sm:$0xf]
  %v109 = vld [vmem:[%s1 + $0x168] sm:$0xf]
  %v110 = vld [vmem:[%s1 + $0x16c] sm:$0xf]
  %v111 = vld [vmem:[%s1 + $0x170] sm:$0xf]
  %v112 = vld [vmem:[%s1 + $0x174] sm:$0xf]
  %v113 = vld [vmem:[%s1 + $0x178] sm:$0xf]
  %v114 = vld [vmem:[%s1 + $0x17c] sm:$0xf]
  %v115 = vld [vmem:[%s1 + $0x180] sm:$0xf]
  %v116 = vld [vmem:[%s1 + $0x184] sm:$0xf]
  %v117 = vld [vmem:[%s1 + $0x188] sm:$0xf]
  %v118 = vld [vmem:[%s1 + $0x18c] sm:$0xf]
  %v119 = vld [vmem:[%s1 + $0x190] sm:$0xf]
  %v120 = vld [vmem:[%s1 + $0x194] sm:$0xf]
  %v121 = vld [vmem:[%s1 + $0x198] sm:$0xf]
  %v122 = vld [vmem:[%s1 + $0x19c] sm:$0xf]
  %v123 = vld [vmem:[%s1 + $0x1a0] sm:$0xf]
  %v124 = vld [vmem:[%s1 + $0x1a4] sm:$0xf]
  %v125 = vld [vmem:[%s1 + $0x1a8] sm:$0xf]
  %v126 = vld [vmem:[%s1 + $0x1ac] sm:$0xf]
  %v127 = vld [vmem:[%s1 + $0x1b0] sm:$0xf]
  %v128 = vld [vmem:[%s1 + $0x1b4] sm:$0xf]
  %v129 = vld [vmem:[%s1 + $0x1b8] sm:$0xf]
  %v130 = vld [vmem:[%s1 + $0x1bc] sm:$0xf]
  %v131 = vld [vmem:[%s1 + $0x1c0] sm:$0xf]
  %v132 = vld [vmem:[%s1 + $0x1c4] sm:$0xf]
  %v133 = vld [vmem:[%s1 + $0x1c8] sm:$0xf]
  %v134 = vld [vmem:[%s1 + $0x1cc] sm:$0xf]
  %v135 = vld [vmem:[%s1 + $0x1d0] sm:$0xf]
  %v136 = vld [vmem:[%s1 + $0x1d4] sm:$0xf]
  %v137 = vld [vmem:[%s1 + $0x1d8] sm:$0xf]
  %v138 = vld [vmem:[%s1 + $0x1dc] sm:$0xf]
  %v139 = vld [vmem:[%s1 + $0x1e0] sm:$0xf]
  %v140 = vld [vmem:[%s1 + $0x1e4] sm:$0xf]
  %v141 = vld [vmem:[%s1 + $0x1e8] sm:$0xf]
  %v142 = vld [vmem:[%s1 + $0x1ec] sm:$0xf]
  %v143 = vld [vmem:[%s1 + $0x1f0] sm:$0xf]
  %v144 = vld [vmem:[%s1 + $0x1f4] sm:$0xf]
  %v145 = vld [vmem:[%s1 + $0x1f8] sm:$0xf]
  %v146 = vld [vmem:[%s1 + $0x1fc] sm:$0xf]
  %v147 = vld [vmem:[%s2] sm:$0x1]
  %v149 = vlaneseq
  %v150 = vshrl.u32 %v149, 7
  %v151 = vsub.s32 0, %v150
  %v152 = vrot.slane %v147, %v151
  %v158 = vunpack.c.l.b16 %v15
  %v159 = vunpack.c.h.b16 %v15
  %v160 = vunpack.c.l.b16 %v16
  %v161 = vunpack.c.h.b16 %v16
  %v162 = vunpack.c.l.b16 %v17
  %v163 = vunpack.c.h.b16 %v17
  %v164 = vunpack.c.l.b16 %v18
  %v165 = vunpack.c.h.b16 %v18
  %v166 = vpack.c.b16 %v158, %v158
  %v167 = vpack.c.b16 %v159, %v159
  %v168 = vpack.c.b16 %v160, %v160
  %v169 = vpack.c.b16 %v161, %v161
  %v170 = vpack.c.b16 %v162, %v162
  %v171 = vpack.c.b16 %v163, %v163
  %v172 = vpack.c.b16 %v164, %v164
  %v173 = vpack.c.b16 %v165, %v165
  %v310 = vunpack.c.l.b16 %v19
  %v311 = vunpack.c.l.b16 %v20
  %v312 = vunpack.c.l.b16 %v21
  %v313 = vunpack.c.l.b16 %v22
  %v314 = vunpack.c.l.b16 %v23
  %v315 = vunpack.c.l.b16 %v24
  %v316 = vunpack.c.l.b16 %v25
  %v317 = vunpack.c.l.b16 %v26
  %v318 = vunpack.c.l.b16 %v27
  %v319 = vunpack.c.l.b16 %v28
  %v320 = vunpack.c.l.b16 %v29
  %v321 = vunpack.c.l.b16 %v30
  %v322 = vunpack.c.l.b16 %v31
  %v323 = vunpack.c.l.b16 %v32
  %v324 = vunpack.c.l.b16 %v33
  %v325 = vunpack.c.l.b16 %v34
  %v326 = vunpack.c.l.b16 %v35
  %v327 = vunpack.c.l.b16 %v36
  %v328 = vunpack.c.l.b16 %v37
  %v329 = vunpack.c.l.b16 %v38
  %v330 = vunpack.c.l.b16 %v39
  %v331 = vunpack.c.l.b16 %v40
  %v332 = vunpack.c.l.b16 %v41
  %v333 = vunpack.c.l.b16 %v42
  %v334 = vunpack.c.l.b16 %v43
  %v335 = vunpack.c.l.b16 %v44
  %v336 = vunpack.c.l.b16 %v45
  %v337 = vunpack.c.l.b16 %v46
  %v338 = vunpack.c.l.b16 %v47
  %v339 = vunpack.c.l.b16 %v48
  %v340 = vunpack.c.l.b16 %v49
  %v341 = vunpack.c.l.b16 %v50
  %v342 = vunpack.c.l.b16 %v51
  %v343 = vunpack.c.l.b16 %v52
  %v344 = vunpack.c.l.b16 %v53
  %v345 = vunpack.c.l.b16 %v54
  %v346 = vunpack.c.l.b16 %v55
  %v347 = vunpack.c.l.b16 %v56
  %v348 = vunpack.c.l.b16 %v57
  %v349 = vunpack.c.l.b16 %v58
  %v350 = vunpack.c.l.b16 %v59
  %v351 = vunpack.c.l.b16 %v60
  %v352 = vunpack.c.l.b16 %v61
  %v353 = vunpack.c.l.b16 %v62
  %v354 = vunpack.c.l.b16 %v63
  %v355 = vunpack.c.l.b16 %v64
  %v356 = vunpack.c.l.b16 %v65
  %v357 = vunpack.c.l.b16 %v66
  %v358 = vunpack.c.l.b16 %v67
  %v359 = vunpack.c.l.b16 %v68
  %v360 = vunpack.c.l.b16 %v69
  %v361 = vunpack.c.l.b16 %v70
  %v362 = vunpack.c.l.b16 %v71
  %v363 = vunpack.c.l.b16 %v72
  %v364 = vunpack.c.l.b16 %v73
  %v365 = vunpack.c.l.b16 %v74
  %v366 = vunpack.c.l.b16 %v75
  %v367 = vunpack.c.l.b16 %v76
  %v368 = vunpack.c.l.b16 %v77
  %v369 = vunpack.c.l.b16 %v78
  %v370 = vunpack.c.l.b16 %v79
  %v371 = vunpack.c.l.b16 %v80
  %v372 = vunpack.c.l.b16 %v81
  %v373 = vunpack.c.l.b16 %v82
  %v374 = vunpack.c.l.b16 %v83
  %v375 = vunpack.c.l.b16 %v84
  %v376 = vunpack.c.l.b16 %v85
  %v377 = vunpack.c.l.b16 %v86
  %v378 = vunpack.c.l.b16 %v87
  %v379 = vunpack.c.l.b16 %v88
  %v380 = vunpack.c.l.b16 %v89
  %v381 = vunpack.c.l.b16 %v90
  %v382 = vunpack.c.l.b16 %v91
  %v383 = vunpack.c.l.b16 %v92
  %v384 = vunpack.c.l.b16 %v93
  %v385 = vunpack.c.l.b16 %v94
  %v386 = vunpack.c.l.b16 %v95
  %v387 = vunpack.c.l.b16 %v96
  %v388 = vunpack.c.l.b16 %v97
  %v389 = vunpack.c.l.b16 %v98
  %v390 = vunpack.c.l.b16 %v99
  %v391 = vunpack.c.l.b16 %v100
  %v392 = vunpack.c.l.b16 %v101
  %v393 = vunpack.c.l.b16 %v102
  %v394 = vunpack.c.l.b16 %v103
  %v395 = vunpack.c.l.b16 %v104
  %v396 = vunpack.c.l.b16 %v105
  %v397 = vunpack.c.l.b16 %v106
  %v398 = vunpack.c.l.b16 %v107
  %v399 = vunpack.c.l.b16 %v108
  %v400 = vunpack.c.l.b16 %v109
  %v401 = vunpack.c.l.b16 %v110
  %v402 = vunpack.c.l.b16 %v111
  %v403 = vunpack.c.l.b16 %v112
  %v404 = vunpack.c.l.b16 %v113
  %v405 = vunpack.c.l.b16 %v114
  %v406 = vunpack.c.l.b16 %v115
  %v407 = vunpack.c.l.b16 %v116
  %v408 = vunpack.c.l.b16 %v117
  %v409 = vunpack.c.l.b16 %v118
  %v410 = vunpack.c.l.b16 %v119
  %v411 = vunpack.c.l.b16 %v120
  %v412 = vunpack.c.l.b16 %v121
  %v413 = vunpack.c.l.b16 %v122
  %v414 = vunpack.c.l.b16 %v123
  %v415 = vunpack.c.l.b16 %v124
  %v416 = vunpack.c.l.b16 %v125
  %v417 = vunpack.c.l.b16 %v126
  %v418 = vunpack.c.l.b16 %v127
  %v419 = vunpack.c.l.b16 %v128
  %v420 = vunpack.c.l.b16 %v129
  %v421 = vunpack.c.l.b16 %v130
  %v422 = vunpack.c.l.b16 %v131
  %v423 = vunpack.c.l.b16 %v132
  %v424 = vunpack.c.l.b16 %v133
  %v425 = vunpack.c.l.b16 %v134
  %v426 = vunpack.c.l.b16 %v135
  %v427 = vunpack.c.l.b16 %v136
  %v428 = vunpack.c.l.b16 %v137
  %v429 = vunpack.c.l.b16 %v138
  %v430 = vunpack.c.l.b16 %v139
  %v431 = vunpack.c.l.b16 %v140
  %v432 = vunpack.c.l.b16 %v141
  %v433 = vunpack.c.l.b16 %v142
  %v434 = vunpack.c.l.b16 %v143
  %v435 = vunpack.c.l.b16 %v144
  %v436 = vunpack.c.l.b16 %v145
  %v437 = vunpack.c.l.b16 %v146
  %v438 = vpack.c.b16 %v311, %v310
  %v439 = vpack.c.b16 %v313, %v312
  %v440 = vpack.c.b16 %v315, %v314
  %v441 = vpack.c.b16 %v317, %v316
  %v442 = vpack.c.b16 %v319, %v318
  %v443 = vpack.c.b16 %v321, %v320
  %v444 = vpack.c.b16 %v323, %v322
  %v445 = vpack.c.b16 %v325, %v324
  %v446 = vpack.c.b16 %v327, %v326
  %v447 = vpack.c.b16 %v329, %v328
  %v448 = vpack.c.b16 %v331, %v330
  %v449 = vpack.c.b16 %v333, %v332
  %v450 = vpack.c.b16 %v335, %v334
  %v451 = vpack.c.b16 %v337, %v336
  %v452 = vpack.c.b16 %v339, %v338
  %v453 = vpack.c.b16 %v341, %v340
  %v454 = vpack.c.b16 %v343, %v342
  %v455 = vpack.c.b16 %v345, %v344
  %v456 = vpack.c.b16 %v347, %v346
  %v457 = vpack.c.b16 %v349, %v348
  %v458 = vpack.c.b16 %v351, %v350
  %v459 = vpack.c.b16 %v353, %v352
  %v460 = vpack.c.b16 %v355, %v354
  %v461 = vpack.c.b16 %v357, %v356
  %v462 = vpack.c.b16 %v359, %v358
  %v463 = vpack.c.b16 %v361, %v360
  %v464 = vpack.c.b16 %v363, %v362
  %v465 = vpack.c.b16 %v365, %v364
  %v466 = vpack.c.b16 %v367, %v366
  %v467 = vpack.c.b16 %v369, %v368
  %v468 = vpack.c.b16 %v371, %v370
  %v469 = vpack.c.b16 %v373, %v372
  %v470 = vpack.c.b16 %v375, %v374
  %v471 = vpack.c.b16 %v377, %v376
  %v472 = vpack.c.b16 %v379, %v378
  %v473 = vpack.c.b16 %v381, %v380
  %v474 = vpack.c.b16 %v383, %v382
  %v475 = vpack.c.b16 %v385, %v384
  %v476 = vpack.c.b16 %v387, %v386
  %v477 = vpack.c.b16 %v389, %v388
  %v478 = vpack.c.b16 %v391, %v390
  %v479 = vpack.c.b16 %v393, %v392
  %v480 = vpack.c.b16 %v395, %v394
  %v481 = vpack.c.b16 %v397, %v396
  %v482 = vpack.c.b16 %v399, %v398
  %v483 = vpack.c.b16 %v401, %v400
  %v484 = vpack.c.b16 %v403, %v402
  %v485 = vpack.c.b16 %v405, %v404
  %v486 = vpack.c.b16 %v407, %v406
  %v487 = vpack.c.b16 %v409, %v408
  %v488 = vpack.c.b16 %v411, %v410
  %v489 = vpack.c.b16 %v413, %v412
  %v490 = vpack.c.b16 %v415, %v414
  %v491 = vpack.c.b16 %v417, %v416
  %v492 = vpack.c.b16 %v419, %v418
  %v493 = vpack.c.b16 %v421, %v420
  %v494 = vpack.c.b16 %v423, %v422
  %v495 = vpack.c.b16 %v425, %v424
  %v496 = vpack.c.b16 %v427, %v426
  %v497 = vpack.c.b16 %v429, %v428
  %v498 = vpack.c.b16 %v431, %v430
  %v499 = vpack.c.b16 %v433, %v432
  %v500 = vpack.c.b16 %v435, %v434
  %v501 = vpack.c.b16 %v437, %v436
  %566 = vmatprep.subr.bf16.mxu0 0
  %567 = vmatpush1.bf16.msra.mxu0 %v438
  %568 = vmatprep.subr.bf16.mxu0 0
  %569 = vmatpush1.bf16.msra.mxu0 %v439
  %570 = vmatprep.subr.bf16.mxu0 0
  %571 = vmatpush1.bf16.msra.mxu0 %v440
  %572 = vmatprep.subr.bf16.mxu0 0
  %573 = vmatpush1.bf16.msra.mxu0 %v441
  %574 = vmatprep.subr.bf16.mxu0 0
  %575 = vmatpush1.bf16.msra.mxu0 %v442
  %576 = vmatprep.subr.bf16.mxu0 0
  %577 = vmatpush1.bf16.msra.mxu0 %v443
  %578 = vmatprep.subr.bf16.mxu0 0
  %579 = vmatpush1.bf16.msra.mxu0 %v444
  %580 = vmatprep.subr.bf16.mxu0 0
  %581 = vmatpush1.bf16.msra.mxu0 %v445
  %582 = vmatprep.subr.bf16.mxu0 0
  %583 = vmatpush1.bf16.msra.mxu0 %v446
  %584 = vmatprep.subr.bf16.mxu0 0
  %585 = vmatpush1.bf16.msra.mxu0 %v447
  %586 = vmatprep.subr.bf16.mxu0 0
  %587 = vmatpush1.bf16.msra.mxu0 %v448
  %588 = vmatprep.subr.bf16.mxu0 0
  %589 = vmatpush1.bf16.msra.mxu0 %v449
  %590 = vmatprep.subr.bf16.mxu0 0
  %591 = vmatpush1.bf16.msra.mxu0 %v450
  %592 = vmatprep.subr.bf16.mxu0 0
  %593 = vmatpush1.bf16.msra.mxu0 %v451
  %594 = vmatprep.subr.bf16.mxu0 0
  %595 = vmatpush1.bf16.msra.mxu0 %v452
  %596 = vmatprep.subr.bf16.mxu0 0
  %597 = vmatpush1.bf16.msra.mxu0 %v453
  %598 = vmatprep.mubr.bf16.mxu0 %v167
  %599 = vmatmul.mubr.bf16.gmra.mrb[0].mxu0 %v166
  %v600 = vpop.f32.mrb[0].mxu0
  %v601 = vadd.f32 %v152, %v600
  %v602 = vpop.f32.mrb[0].mxu0
  %v603 = vpop.f32.mrb[0].mxu0
  %v604 = vpop.f32.mrb[0].mxu0
  %605 = vdwg.mxu0
  %606 = vmatprep.subr.bf16.mxu0 0
  %607 = vmatpush1.bf16.msra.mxu0 %v454
  %608 = vmatprep.subr.bf16.mxu0 0
  %609 = vmatpush1.bf16.msra.mxu0 %v455
  %610 = vmatprep.subr.bf16.mxu0 0
  %611 = vmatpush1.bf16.msra.mxu0 %v456
  %612 = vmatprep.subr.bf16.mxu0 0
  %613 = vmatpush1.bf16.msra.mxu0 %v457
  %614 = vmatprep.subr.bf16.mxu0 0
  %615 = vmatpush1.bf16.msra.mxu0 %v458
  %616 = vmatprep.subr.bf16.mxu0 0
  %617 = vmatpush1.bf16.msra.mxu0 %v459
  %618 = vmatprep.subr.bf16.mxu0 0
  %619 = vmatpush1.bf16.msra.mxu0 %v460
  %620 = vmatprep.subr.bf16.mxu0 0
  %621 = vmatpush1.bf16.msra.mxu0 %v461
  %622 = vmatprep.subr.bf16.mxu0 0
  %623 = vmatpush1.bf16.msra.mxu0 %v462
  %624 = vmatprep.subr.bf16.mxu0 0
  %625 = vmatpush1.bf16.msra.mxu0 %v463
  %626 = vmatprep.subr.bf16.mxu0 0
  %627 = vmatpush1.bf16.msra.mxu0 %v464
  %628 = vmatprep.subr.bf16.mxu0 0
  %629 = vmatpush1.bf16.msra.mxu0 %v465
  %630 = vmatprep.subr.bf16.mxu0 0
  %631 = vmatpush1.bf16.msra.mxu0 %v466
  %632 = vmatprep.subr.bf16.mxu0 0
  %633 = vmatpush1.bf16.msra.mxu0 %v467
  %634 = vmatprep.subr.bf16.mxu0 0
  %635 = vmatpush1.bf16.msra.mxu0 %v468
  %636 = vmatprep.subr.bf16.mxu0 0
  %637 = vmatpush1.bf16.msra.mxu0 %v469
  %638 = vmatprep.mubr.bf16.mxu0 %v169
  %639 = vmatmul.mubr.bf16.gmra.mrb[0].mxu0 %v168
  %v640 = vpop.f32.mrb[0].mxu0
  %v641 = vadd.f32 %v601, %v640
  %v642 = vpop.f32.mrb[0].mxu0
  %v643 = vpop.f32.mrb[0].mxu0
  %v644 = vpop.f32.mrb[0].mxu0
  %645 = vdwg.mxu0
  %646 = vmatprep.subr.bf16.mxu0 0
  %647 = vmatpush1.bf16.msra.mxu0 %v470
  %648 = vmatprep.subr.bf16.mxu0 0
  %649 = vmatpush1.bf16.msra.mxu0 %v471
  %650 = vmatprep.subr.bf16.mxu0 0
  %651 = vmatpush1.bf16.msra.mxu0 %v472
  %652 = vmatprep.subr.bf16.mxu0 0
  %653 = vmatpush1.bf16.msra.mxu0 %v473
  %654 = vmatprep.subr.bf16.mxu0 0
  %655 = vmatpush1.bf16.msra.mxu0 %v474
  %656 = vmatprep.subr.bf16.mxu0 0
  %657 = vmatpush1.bf16.msra.mxu0 %v475
  %658 = vmatprep.subr.bf16.mxu0 0
  %659 = vmatpush1.bf16.msra.mxu0 %v476
  %660 = vmatprep.subr.bf16.mxu0 0
  %661 = vmatpush1.bf16.msra.mxu0 %v477
  %662 = vmatprep.subr.bf16.mxu0 0
  %663 = vmatpush1.bf16.msra.mxu0 %v478
  %664 = vmatprep.subr.bf16.mxu0 0
  %665 = vmatpush1.bf16.msra.mxu0 %v479
  %666 = vmatprep.subr.bf16.mxu0 0
  %667 = vmatpush1.bf16.msra.mxu0 %v480
  %668 = vmatprep.subr.bf16.mxu0 0
  %669 = vmatpush1.bf16.msra.mxu0 %v481
  %670 = vmatprep.subr.bf16.mxu0 0
  %671 = vmatpush1.bf16.msra.mxu0 %v482
  %672 = vmatprep.subr.bf16.mxu0 0
  %673 = vmatpush1.bf16.msra.mxu0 %v483
  %674 = vmatprep.subr.bf16.mxu0 0
  %675 = vmatpush1.bf16.msra.mxu0 %v484
  %676 = vmatprep.subr.bf16.mxu0 0
  %677 = vmatpush1.bf16.msra.mxu0 %v485
  %678 = vmatprep.mubr.bf16.mxu0 %v171
  %679 = vmatmul.mubr.bf16.gmra.mrb[0].mxu0 %v170
  %v680 = vpop.f32.mrb[0].mxu0
  %v681 = vadd.f32 %v641, %v680
  %v682 = vpop.f32.mrb[0].mxu0
  %v683 = vpop.f32.mrb[0].mxu0
  %v684 = vpop.f32.mrb[0].mxu0
  %685 = vdwg.mxu0
  %686 = vmatprep.subr.bf16.mxu0 0
  %687 = vmatpush1.bf16.msra.mxu0 %v486
  %688 = vmatprep.subr.bf16.mxu0 0
  %689 = vmatpush1.bf16.msra.mxu0 %v487
  %690 = vmatprep.subr.bf16.mxu0 0
  %691 = vmatpush1.bf16.msra.mxu0 %v488
  %692 = vmatprep.subr.bf16.mxu0 0
  %693 = vmatpush1.bf16.msra.mxu0 %v489
  %694 = vmatprep.subr.bf16.mxu0 0
  %695 = vmatpush1.bf16.msra.mxu0 %v490
  %696 = vmatprep.subr.bf16.mxu0 0
  %697 = vmatpush1.bf16.msra.mxu0 %v491
  %698 = vmatprep.subr.bf16.mxu0 0
  %699 = vmatpush1.bf16.msra.mxu0 %v492
  %700 = vmatprep.subr.bf16.mxu0 0
  %701 = vmatpush1.bf16.msra.mxu0 %v493
  %702 = vmatprep.subr.bf16.mxu0 0
  %703 = vmatpush1.bf16.msra.mxu0 %v494
  %704 = vmatprep.subr.bf16.mxu0 0
  %705 = vmatpush1.bf16.msra.mxu0 %v495
  %706 = vmatprep.subr.bf16.mxu0 0
  %707 = vmatpush1.bf16.msra.mxu0 %v496
  %708 = vmatprep.subr.bf16.mxu0 0
  %709 = vmatpush1.bf16.msra.mxu0 %v497
  %710 = vmatprep.subr.bf16.mxu0 0
  %711 = vmatpush1.bf16.msra.mxu0 %v498
  %712 = vmatprep.subr.bf16.mxu0 0
  %713 = vmatpush1.bf16.msra.mxu0 %v499
  %714 = vmatprep.subr.bf16.mxu0 0
  %715 = vmatpush1.bf16.msra.mxu0 %v500
  %716 = vmatprep.subr.bf16.mxu0 0
  %717 = vmatpush1.bf16.msra.mxu0 %v501
  %718 = vmatprep.mubr.bf16.mxu0 %v173
  %719 = vmatmul.mubr.bf16.gmra.mrb[0].mxu0 %v172
  %v720 = vpop.f32.mrb[0].mxu0
  %v721 = vadd.f32 %v681, %v720
  %v722 = vpop.f32.mrb[0].mxu0
  %v723 = vpop.f32.mrb[0].mxu0
  %v724 = vpop.f32.mrb[0].mxu0
  %725 = vdwg.mxu0
  %v726 = vlaneseq
  %v727 = vand.u32 %v726, 127
  %vm728 = vcmp.lt.s32.totalorder %v727, 6
  %v729 = vsel %vm728, %v721, 0.0
  %730 = vadd.xlane.f32.xlu0 %v729
  %v731 = vpop.xlane.xlu0 %730
  %vm732 = vcmp.eq.s32.totalorder %v727, 6
  %v733 = vsel %vm732, %v721, 0.0
  %734 = vadd.xlane.f32.xlu0 %v733
  %v735 = vpop.xlane.xlu0 %734
  %v736 = vadd.f32 %v735, %v721
  %v737 = vmul.f32 %v731, 0.16666667
  %v738 = vsub.f32 %v736, %v737
  %739 = vst [vmem:[%s3] sm:$0xff] %v738
  // Predicated region
  $region14: #{network_forward.9} parent=0 // pred_check
    _
  $region15: #{network_forward.9} parent=0 // pred_check_branch
    %741 = sbr.rel (0) target = $region17
  $region16: #{network_forward.9} parent=0 // pred_region
    _
  $region17: #{network_forward.9} parent=0 // pred_fallthru
    _
  // Predicated region
  $region18: #{network_forward.9} parent=0 // pred_check
    _
  $region19: #{network_forward.9} parent=0 // pred_check_branch
    %743 = sbr.rel (0) target = $region21
  $region20: #{network_forward.9} parent=0 // pred_region
    _
  $region21: #{network_forward.9} parent=0 // pred_fallthru
    _

// kernel: network_forward.8
$region0: #{network_forward.8}
  #allocation0 [shape = 'u32[]', space=smem, size = 0x4, offset = 0x4, fixed_abs, tag = 'smem constant byte address 0x4 - core index']
  #allocation1 [shape = 'u32[144,128]{1,0:T(1,128)}', space=vmem, size = 0x12000, scoped, tag = 'internal scratch']
  %s0 = inlined_call_operand.vmem [shape: bf16[8,3200], index: 0, kind: input, shape index: {}]
  %s1 = inlined_call_operand.vmem [shape: bf16[3200,1024], index: 1, kind: input, shape index: {}]
  %s2 = inlined_call_operand.vmem [shape: f32[1,1024], index: 2, kind: input, shape index: {}]
  %s3 = inlined_call_operand.vmem [shape: bf16[8,1024], index: 3, kind: output, shape index: {}]
  %s4 = sld [smem:[#allocation0]]
  $region22: #{network_forward.8} parent=0
    _
  %s6 = ssub.s32 1, %s4
  %s7 = scalar_select 0, %s6, %s4
  // Predicated region
  $region2: #{network_forward.8} parent=0 // pred_check
    _
  $region3: #{network_forward.8} parent=0 // pred_check_branch
    %9 = sbr.rel (0) target = $region5
  $region4: #{network_forward.8} parent=0 // pred_region
    _
  $region5: #{network_forward.8} parent=0 // pred_fallthru
    _
  // Predicated region
  $region6: #{network_forward.8} parent=0 // pred_check
    _
  $region7: #{network_forward.8} parent=0 // pred_check_branch
    %11 = sbr.rel (0) target = $region9
  $region8: #{network_forward.8} parent=0 // pred_region
    _
  $region9: #{network_forward.8} parent=0 // pred_fallthru
    _
  // Predicated region
  $region10: #{network_forward.8} parent=0 // pred_check
    _
  $region11: #{network_forward.8} parent=0 // pred_check_branch
    %13 = sbr.rel (0) target = $region13
  $region12: #{network_forward.8} parent=0 // pred_region
    _
  $region13: #{network_forward.8} parent=0 // pred_fallthru
    _
  %v15 = vld [vmem:[%s0] sm:$0xff]
  %v16 = vld [vmem:[%s0 + $0x8] sm:$0xff]
  %v17 = vld [vmem:[%s0 + $0x10] sm:$0xff]
  %v18 = vld [vmem:[%s0 + $0x18] sm:$0xff]
  %v19 = vld [vmem:[%s0 + $0x20] sm:$0xff]
  %v20 = vld [vmem:[%s0 + $0x28] sm:$0xff]
  %v21 = vld [vmem:[%s0 + $0x30] sm:$0xff]
  %v22 = vld [vmem:[%s0 + $0x38] sm:$0xff]
  %v23 = vld [vmem:[%s0 + $0x40] sm:$0xff]
  %v24 = vld [vmem:[%s0 + $0x48] sm:$0xff]
  %v25 = vld [vmem:[%s0 + $0x50] sm:$0xff]
  %v26 = vld [vmem:[%s0 + $0x58] sm:$0xff]
  %v27 = vld [vmem:[%s0 + $0x60] sm:$0xf]
  %v28 = vld [vmem:[%s1] sm:$0xff]
  %v29 = vld [vmem:[%s1 + $0x8] sm:$0xff]
  %v30 = vld [vmem:[%s1 + $0x10] sm:$0xff]
  %v31 = vld [vmem:[%s1 + $0x18] sm:$0xff]
  %v32 = vld [vmem:[%s1 + $0x20] sm:$0xff]
  %v33 = vld [vmem:[%s1 + $0x28] sm:$0xff]
  %v34 = vld [vmem:[%s1 + $0x30] sm:$0xff]
  %v35 = vld [vmem:[%s1 + $0x38] sm:$0xff]
  %v36 = vld [vmem:[%s1 + $0x40] sm:$0xff]
  %v37 = vld [vmem:[%s1 + $0x48] sm:$0xff]
  %v38 = vld [vmem:[%s1 + $0x50] sm:$0xff]
  %v39 = vld [vmem:[%s1 + $0x58] sm:$0xff]
  %v40 = vld [vmem:[%s1 + $0x60] sm:$0xff]
  %v41 = vld [vmem:[%s1 + $0x68] sm:$0xff]
  %v42 = vld [vmem:[%s1 + $0x70] sm:$0xff]
  %v43 = vld [vmem:[%s1 + $0x78] sm:$0xff]
  %v44 = vld [vmem:[%s1 + $0x80] sm:$0xff]
  %v45 = vld [vmem:[%s1 + $0x88] sm:$0xff]
  %v46 = vld [vmem:[%s1 + $0x90] sm:$0xff]
  %v47 = vld [vmem:[%s1 + $0x98] sm:$0xff]
  %v48 = vld [vmem:[%s1 + $0xa0] sm:$0xff]
  %v49 = vld [vmem:[%s1 + $0xa8] sm:$0xff]
  %v50 = vld [vmem:[%s1 + $0xb0] sm:$0xff]
  %v51 = vld [vmem:[%s1 + $0xb8] sm:$0xff]
  %v52 = vld [vmem:[%s1 + $0xc0] sm:$0xff]
  %v53 = vld [vmem:[%s1 + $0xc8] sm:$0xff]
  %v54 = vld [vmem:[%s1 + $0xd0] sm:$0xff]
  %v55 = vld [vmem:[%s1 + $0xd8] sm:$0xff]
  %v56 = vld [vmem:[%s1 + $0xe0] sm:$0xff]
  %v57 = vld [vmem:[%s1 + $0xe8] sm:$0xff]
  %v58 = vld [vmem:[%s1 + $0xf0] sm:$0xff]
  %v59 = vld [vmem:[%s1 + $0xf8] sm:$0xff]
  %v60 = vld [vmem:[%s1 + $0x100] sm:$0xff]
  %v61 = vld [vmem:[%s1 + $0x108] sm:$0xff]
  %v62 = vld [vmem:[%s1 + $0x110] sm:$0xff]
  %v63 = vld [vmem:[%s1 + $0x118] sm:$0xff]
  %v64 = vld [vmem:[%s1 + $0x120] sm:$0xff]
  %v65 = vld [vmem:[%s1 + $0x128] sm:$0xff]
  %v66 = vld [vmem:[%s1 + $0x130] sm:$0xff]
  %v67 = vld [vmem:[%s1 + $0x138] sm:$0xff]
  %v68 = vld [vmem:[%s1 + $0x140] sm:$0xff]
  %v69 = vld [vmem:[%s1 + $0x148] sm:$0xff]
  %v70 = vld [vmem:[%s1 + $0x150] sm:$0xff]
  %v71 = vld [vmem:[%s1 + $0x158] sm:$0xff]
  %v72 = vld [vmem:[%s1 + $0x160] sm:$0xff]
  %v73 = vld [vmem:[%s1 + $0x168] sm:$0xff]
  %v74 = vld [vmem:[%s1 + $0x170] sm:$0xff]
  %v75 = vld [vmem:[%s1 + $0x178] sm:$0xff]
  %v76 = vld [vmem:[%s1 + $0x180] sm:$0xff]
  %v77 = vld [vmem:[%s1 + $0x188] sm:$0xff]
  %v78 = vld [vmem:[%s1 + $0x190] sm:$0xff]
  %v79 = vld [vmem:[%s1 + $0x198] sm:$0xff]
  %v80 = vld [vmem:[%s1 + $0x1a0] sm:$0xff]
  %v81 = vld [vmem:[%s1 + $0x1a8] sm:$0xff]
  %v82 = vld [vmem:[%s1 + $0x1b0] sm:$0xff]
  %v83 = vld [vmem:[%s1 + $0x1b8] sm:$0xff]
  %v84 = vld [vmem:[%s1 + $0x1c0] sm:$0xff]
  %v85 = vld [vmem:[%s1 + $0x1c8] sm:$0xff]
  %v86 = vld [vmem:[%s1 + $0x1d0] sm:$0xff]
  %v87 = vld [vmem:[%s1 + $0x1d8] sm:$0xff]
  %v88 = vld [vmem:[%s1 + $0x1e0] sm:$0xff]
  %v89 = vld [vmem:[%s1 + $0x1e8] sm:$0xff]
  %v90 = vld [vmem:[%s1 + $0x1f0] sm:$0xff]
  %v91 = vld [vmem:[%s1 + $0x1f8] sm:$0xff]
  %v92 = vld [vmem:[%s1 + $0x200] sm:$0xff]
  %v93 = vld [vmem:[%s1 + $0x208] sm:$0xff]
  %v94 = vld [vmem:[%s1 + $0x210] sm:$0xff]
  %v95 = vld [vmem:[%s1 + $0x218] sm:$0xff]
  %v96 = vld [vmem:[%s1 + $0x220] sm:$0xff]
  %v97 = vld [vmem:[%s1 + $0x228] sm:$0xff]
  %v98 = vld [vmem:[%s1 + $0x230] sm:$0xff]
  %v99 = vld [vmem:[%s1 + $0x238] sm:$0xff]
  %v100 = vld [vmem:[%s1 + $0x240] sm:$0xff]
  %v101 = vld [vmem:[%s1 + $0x248] sm:$0xff]
  %v102 = vld [vmem:[%s1 + $0x250] sm:$0xff]
  %v103 = vld [vmem:[%s1 + $0x258] sm:$0xff]
  %v104 = vld [vmem:[%s1 + $0x260] sm:$0xff]
  %v105 = vld [vmem:[%s1 + $0x268] sm:$0xff]
  %v106 = vld [vmem:[%s1 + $0x270] sm:$0xff]
  %v107 = vld [vmem:[%s1 + $0x278] sm:$0xff]
  %v108 = vld [vmem:[%s1 + $0x280] sm:$0xff]
  %v109 = vld [vmem:[%s1 + $0x288] sm:$0xff]
  %v110 = vld [vmem:[%s1 + $0x290] sm:$0xff]
  %v111 = vld [vmem:[%s1 + $0x298] sm:$0xff]
  %v112 = vld [vmem:[%s1 + $0x2a0] sm:$0xff]
  %v113 = vld [vmem:[%s1 + $0x2a8] sm:$0xff]
  %v114 = vld [vmem:[%s1 + $0x2b0] sm:$0xff]
  %v115 = vld [vmem:[%s1 + $0x2b8] sm:$0xff]
  %v116 = vld [vmem:[%s1 + $0x2c0] sm:$0xff]
  %v117 = vld [vmem:[%s1 + $0x2c8] sm:$0xff]
  %v118 = vld [vmem:[%s1 + $0x2d0] sm:$0xff]
  %v119 = vld [vmem:[%s1 + $0x2d8] sm:$0xff]
  %v120 = vld [vmem:[%s1 + $0x2e0] sm:$0xff]
  %v121 = vld [vmem:[%s1 + $0x2e8] sm:$0xff]
  %v122 = vld [vmem:[%s1 + $0x2f0] sm:$0xff]
  %v123 = vld [vmem:[%s1 + $0x2f8] sm:$0xff]
  %v124 = vld [vmem:[%s1 + $0x300] sm:$0xff]
  %v125 = vld [vmem:[%s1 + $0x308] sm:$0xff]
  %v126 = vld [vmem:[%s1 + $0x310] sm:$0xff]
  %v127 = vld [vmem:[%s1 + $0x318] sm:$0xff]
  %v128 = vld [vmem:[%s1 + $0x320] sm:$0xff]
  %v129 = vld [vmem:[%s1 + $0x328] sm:$0xff]
  %v130 = vld [vmem:[%s1 + $0x330] sm:$0xff]
  %v131 = vld [vmem:[%s1 + $0x338] sm:$0xff]
  %v132 = vld [vmem:[%s1 + $0x340] sm:$0xff]
  %v133 = vld [vmem:[%s1 + $0x348] sm:$0xff]
  %v134 = vld [vmem:[%s1 + $0x350] sm:$0xff]
  %v135 = vld [vmem:[%s1 + $0x358] sm:$0xff]
  %v136 = vld [vmem:[%s1 + $0x360] sm:$0xff]
  %v137 = vld [vmem:[%s1 + $0x368] sm:$0xff]
  %v138 = vld [vmem:[%s1 + $0x370] sm:$0xff]
  %v139 = vld [vmem:[%s1 + $0x378] sm:$0xff]
  %v140 = vld [vmem:[%s1 + $0x380] sm:$0xff]
  %v141 = vld [vmem:[%s1 + $0x388] sm:$0xff]
  %v142 = vld [vmem:[%s1 + $0x390] sm:$0xff]
  %v143 = vld [vmem:[%s1 + $0x398] sm:$0xff]
  %v144 = vld [vmem:[%s1 + $0x3a0] sm:$0xff]
  %v145 = vld [vmem:[%s1 + $0x3a8] sm:$0xff]
  %v146 = vld [vmem:[%s1 + $0x3b0] sm:$0xff]
  %v147 = vld [vmem:[%s1 + $0x3b8] sm:$0xff]
  %v148 = vld [vmem:[%s1 + $0x3c0] sm:$0xff]
  %v149 = vld [vmem:[%s1 + $0x3c8] sm:$0xff]
  %v150 = vld [vmem:[%s1 + $0x3d0] sm:$0xff]
  %v151 = vld [vmem:[%s1 + $0x3d8] sm:$0xff]
  %v152 = vld [vmem:[%s1 + $0x3e0] sm:$0xff]
  %v153 = vld [vmem:[%s1 + $0x3e8] sm:$0xff]
  %v154 = vld [vmem:[%s1 + $0x3f0] sm:$0xff]
  %v155 = vld [vmem:[%s1 + $0x3f8] sm:$0xff]
  %v156 = vld [vmem:[%s1 + $0x400] sm:$0xff]
  %v157 = vld [vmem:[%s1 + $0x408] sm:$0xff]
  %v158 = vld [vmem:[%s1 + $0x410] sm:$0xff]
  %v159 = vld [vmem:[%s1 + $0x418] sm:$0xff]
  %v160 = vld [vmem:[%s1 + $0x420] sm:$0xff]
  %v161 = vld [vmem:[%s1 + $0x428] sm:$0xff]
  %v162 = vld [vmem:[%s1 + $0x430] sm:$0xff]
  %v163 = vld [vmem:[%s1 + $0x438] sm:$0xff]
  %v164 = vld [vmem:[%s1 + $0x440] sm:$0xff]
  %v165 = vld [vmem:[%s1 + $0x448] sm:$0xff]
  %v166 = vld [vmem:[%s1 + $0x450] sm:$0xff]
  %v167 = vld [vmem:[%s1 + $0x458] sm:$0xff]
  %v168 = vld [vmem:[%s1 + $0x460] sm:$0xff]
  %v169 = vld [vmem:[%s1 + $0x468] sm:$0xff]
  %v170 = vld [vmem:[%s1 + $0x470] sm:$0xff]
  %v171 = vld [vmem:[%s1 + $0x478] sm:$0xff]
  %v172 = vld [vmem:[%s1 + $0x480] sm:$0xff]
  %v173 = vld [vmem:[%s1 + $0x488] sm:$0xff]
  %v174 = vld [vmem:[%s1 + $0x490] sm:$0xff]
  %v175 = vld [vmem:[%s1 + $0x498] sm:$0xff]
  %v176 = vld [vmem:[%s1 + $0x4a0] sm:$0xff]
  %v177 = vld [vmem:[%s1 + $0x4a8] sm:$0xff]
  %v178 = vld [vmem:[%s1 + $0x4b0] sm:$0xff]
  %v179 = vld [vmem:[%s1 + $0x4b8] sm:$0xff]
  %v180 = vld [vmem:[%s1 + $0x4c0] sm:$0xff]
  %v181 = vld [vmem:[%s1 + $0x4c8] sm:$0xff]
  %v182 = vld [vmem:[%s1 + $0x4d0] sm:$0xff]
  %v183 = vld [vmem:[%s1 + $0x4d8] sm:$0xff]
  %v184 = vld [vmem:[%s1 + $0x4e0] sm:$0xff]
  %v185 = vld [vmem:[%s1 + $0x4e8] sm:$0xff]
  %v186 = vld [vmem:[%s1 + $0x4f0] sm:$0xff]
  %v187 = vld [vmem:[%s1 + $0x4f8] sm:$0xff]
  %v188 = vld [vmem:[%s1 + $0x500] sm:$0xff]
  %v189 = vld [vmem:[%s1 + $0x508] sm:$0xff]
  %v190 = vld [vmem:[%s1 + $0x510] sm:$0xff]
  %v191 = vld [vmem:[%s1 + $0x518] sm:$0xff]
  %v192 = vld [vmem:[%s1 + $0x520] sm:$0xff]
  %v193 = vld [vmem:[%s1 + $0x528] sm:$0xff]
  %v194 = vld [vmem:[%s1 + $0x530] sm:$0xff]
  %v195 = vld [vmem:[%s1 + $0x538] sm:$0xff]
  %v196 = vld [vmem:[%s1 + $0x540] sm:$0xff]
  %v197 = vld [vmem:[%s1 + $0x548] sm:$0xff]
  %v198 = vld [vmem:[%s1 + $0x550] sm:$0xff]
  %v199 = vld [vmem:[%s1 + $0x558] sm:$0xff]
  %v200 = vld [vmem:[%s1 + $0x560] sm:$0xff]
  %v201 = vld [vmem:[%s1 + $0x568] sm:$0xff]
  %v202 = vld [vmem:[%s1 + $0x570] sm:$0xff]
  %v203 = vld [vmem:[%s1 + $0x578] sm:$0xff]
  %v204 = vld [vmem:[%s1 + $0x580] sm:$0xff]
  %v205 = vld [vmem:[%s1 + $0x588] sm:$0xff]
  %v206 = vld [vmem:[%s1 + $0x590] sm:$0xff]
  %v207 = vld [vmem:[%s1 + $0x598] sm:$0xff]
  %v208 = vld [vmem:[%s1 + $0x5a0] sm:$0xff]
  %v209 = vld [vmem:[%s1 + $0x5a8] sm:$0xff]
  %v210 = vld [vmem:[%s1 + $0x5b0] sm:$0xff]
  %v211 = vld [vmem:[%s1 + $0x5b8] sm:$0xff]
  %v212 = vld [vmem:[%s1 + $0x5c0] sm:$0xff]
  %v213 = vld [vmem:[%s1 + $0x5c8] sm:$0xff]
  %v214 = vld [vmem:[%s1 + $0x5d0] sm:$0xff]
  %v215 = vld [vmem:[%s1 + $0x5d8] sm:$0xff]
  %v216 = vld [vmem:[%s1 + $0x5e0] sm:$0xff]
  %v217 = vld [vmem:[%s1 + $0x5e8] sm:$0xff]
  %v218 = vld [vmem:[%s1 + $0x5f0] sm:$0xff]
  %v219 = vld [vmem:[%s1 + $0x5f8] sm:$0xff]
  %v220 = vld [vmem:[%s1 + $0x600] sm:$0xff]
  %v221 = vld [vmem:[%s1 + $0x608] sm:$0xff]
  %v222 = vld [vmem:[%s1 + $0x610] sm:$0xff]
  %v223 = vld [vmem:[%s1 + $0x618] sm:$0xff]
  %v224 = vld [vmem:[%s1 + $0x620] sm:$0xff]
  %v225 = vld [vmem:[%s1 + $0x628] sm:$0xff]
  %v226 = vld [vmem:[%s1 + $0x630] sm:$0xff]
  %v227 = vld [vmem:[%s1 + $0x638] sm:$0xff]
  %v228 = vld [vmem:[%s1 + $0x640] sm:$0xff]
  %v229 = vld [vmem:[%s1 + $0x648] sm:$0xff]
  %v230 = vld [vmem:[%s1 + $0x650] sm:$0xff]
  %v231 = vld [vmem:[%s1 + $0x658] sm:$0xff]
  %v232 = vld [vmem:[%s1 + $0x660] sm:$0xff]
  %v233 = vld [vmem:[%s1 + $0x668] sm:$0xff]
  %v234 = vld [vmem:[%s1 + $0x670] sm:$0xff]
  %v235 = vld [vmem:[%s1 + $0x678] sm:$0xff]
  %v236 = vld [vmem:[%s1 + $0x680] sm:$0xff]
  %v237 = vld [vmem:[%s1 + $0x688] sm:$0xff]
  %v238 = vld [vmem:[%s1 + $0x690] sm:$0xff]
  %v239 = vld [vmem:[%s1 + $0x698] sm:$0xff]
  %v240 = vld [vmem:[%s1 + $0x6a0] sm:$0xff]
  %v241 = vld [vmem:[%s1 + $0x6a8] sm:$0xff]
  %v242 = vld [vmem:[%s1 + $0x6b0] sm:$0xff]
  %v243 = vld [vmem:[%s1 + $0x6b8] sm:$0xff]
  %v244 = vld [vmem:[%s1 + $0x6c0] sm:$0xff]
  %v245 = vld [vmem:[%s1 + $0x6c8] sm:$0xff]
  %v246 = vld [vmem:[%s1 + $0x6d0] sm:$0xff]
  %v247 = vld [vmem:[%s1 + $0x6d8] sm:$0xff]
  %v248 = vld [vmem:[%s1 + $0x6e0] sm:$0xff]
  %v249 = vld [vmem:[%s1 + $0x6e8] sm:$0xff]
  %v250 = vld [vmem:[%s1 + $0x6f0] sm:$0xff]
  %v251 = vld [vmem:[%s1 + $0x6f8] sm:$0xff]
  %v252 = vld [vmem:[%s1 + $0x700] sm:$0xff]
  %v253 = vld [vmem:[%s1 + $0x708] sm:$0xff]
  %v254 = vld [vmem:[%s1 + $0x710] sm:$0xff]
  %v255 = vld [vmem:[%s1 + $0x718] sm:$0xff]
  %v256 = vld [vmem:[%s1 + $0x720] sm:$0xff]
  %v257 = vld [vmem:[%s1 + $0x728] sm:$0xff]
  %v258 = vld [vmem:[%s1 + $0x730] sm:$0xff]
  %v259 = vld [vmem:[%s1 + $0x738] sm:$0xff]
  %v260 = vld [vmem:[%s1 + $0x740] sm:$0xff]
  %v261 = vld [vmem:[%s1 + $0x748] sm:$0xff]
  %v262 = vld [vmem:[%s1 + $0x750] sm:$0xff]
  %v263 = vld [vmem:[%s1 + $0x758] sm:$0xff]
  %v264 = vld [vmem:[%s1 + $0x760] sm:$0xff]
  %v265 = vld [vmem:[%s1 + $0x768] sm:$0xff]
  %v266 = vld [vmem:[%s1 + $0x770] sm:$0xff]
  %v267 = vld [vmem:[%s1 + $0x778] sm:$0xff]
  %v268 = vld [vmem:[%s1 + $0x780] sm:$0xff]
  %v269 = vld [vmem:[%s1 + $0x788] sm:$0xff]
  %v270 = vld [vmem:[%s1 + $0x790] sm:$0xff]
  %v271 = vld [vmem:[%s1 + $0x798] sm:$0xff]
  %v272 = vld [vmem:[%s1 + $0x7a0] sm:$0xff]
  %v273 = vld [vmem:[%s1 + $0x7a8] sm:$0xff]
  %v274 = vld [vmem:[%s1 + $0x7b0] sm:$0xff]
  %v275 = vld [vmem:[%s1 + $0x7b8] sm:$0xff]
  %v276 = vld [vmem:[%s1 + $0x7c0] sm:$0xff]
  %v277 = vld [vmem:[%s1 + $0x7c8] sm:$0xff]
  %v278 = vld [vmem:[%s1 + $0x7d0] sm:$0xff]
  %v279 = vld [vmem:[%s1 + $0x7d8] sm:$0xff]
  %v280 = vld [vmem:[%s1 + $0x7e0] sm:$0xff]
  %v281 = vld [vmem:[%s1 + $0x7e8] sm:$0xff]
  %v282 = vld [vmem:[%s1 + $0x7f0] sm:$0xff]
  %v283 = vld [vmem:[%s1 + $0x7f8] sm:$0xff]
  %v284 = vld [vmem:[%s1 + $0x800] sm:$0xff]
  %v285 = vld [vmem:[%s1 + $0x808] sm:$0xff]
  %v286 = vld [vmem:[%s1 + $0x810] sm:$0xff]
  %v287 = vld [vmem:[%s1 + $0x818] sm:$0xff]
  %v288 = vld [vmem:[%s1 + $0x820] sm:$0xff]
  %v289 = vld [vmem:[%s1 + $0x828] sm:$0xff]
  %v290 = vld [vmem:[%s1 + $0x830] sm:$0xff]
  %v291 = vld [vmem:[%s1 + $0x838] sm:$0xff]
  %v292 = vld [vmem:[%s1 + $0x840] sm:$0xff]
  %v293 = vld [vmem:[%s1 + $0x848] sm:$0xff]
  %v294 = vld [vmem:[%s1 + $0x850] sm:$0xff]
  %v295 = vld [vmem:[%s1 + $0x858] sm:$0xff]
  %v296 = vld [vmem:[%s1 + $0x860] sm:$0xff]
  %v297 = vld [vmem:[%s1 + $0x868] sm:$0xff]
  %v298 = vld [vmem:[%s1 + $0x870] sm:$0xff]
  %v299 = vld [vmem:[%s1 + $0x878] sm:$0xff]
  %v300 = vld [vmem:[%s1 + $0x880] sm:$0xff]
  %v301 = vld [vmem:[%s1 + $0x888] sm:$0xff]
  %v302 = vld [vmem:[%s1 + $0x890] sm:$0xff]
  %v303 = vld [vmem:[%s1 + $0x898] sm:$0xff]
  %v304 = vld [vmem:[%s1 + $0x8a0] sm:$0xff]
  %v305 = vld [vmem:[%s1 + $0x8a8] sm:$0xff]
  %v306 = vld [vmem:[%s1 + $0x8b0] sm:$0xff]
  %v307 = vld [vmem:[%s1 + $0x8b8] sm:$0xff]
  %v308 = vld [vmem:[%s1 + $0x8c0] sm:$0xff]
  %v309 = vld [vmem:[%s1 + $0x8c8] sm:$0xff]
  %v310 = vld [vmem:[%s1 + $0x8d0] sm:$0xff]
  %v311 = vld [vmem:[%s1 + $0x8d8] sm:$0xff]
  %v312 = vld [vmem:[%s1 + $0x8e0] sm:$0xff]
  %v313 = vld [vmem:[%s1 + $0x8e8] sm:$0xff]
  %v314 = vld [vmem:[%s1 + $0x8f0] sm:$0xff]
  %v315 = vld [vmem:[%s1 + $0x8f8] sm:$0xff]
  %v316 = vld [vmem:[%s1 + $0x900] sm:$0xff]
  %v317 = vld [vmem:[%s1 + $0x908] sm:$0xff]
  %v318 = vld [vmem:[%s1 + $0x910] sm:$0xff]
  %v319 = vld [vmem:[%s1 + $0x918] sm:$0xff]
  %v320 = vld [vmem:[%s1 + $0x920] sm:$0xff]
  %v321 = vld [vmem:[%s1 + $0x928] sm:$0xff]
  %v322 = vld [vmem:[%s1 + $0x930] sm:$0xff]
  %v323 = vld [vmem:[%s1 + $0x938] sm:$0xff]
  %v324 = vld [vmem:[%s1 + $0x940] sm:$0xff]
  %v325 = vld [vmem:[%s1 + $0x948] sm:$0xff]
  %v326 = vld [vmem:[%s1 + $0x950] sm:$0xff]
  %v327 = vld [vmem:[%s1 + $0x958] sm:$0xff]
  %v328 = vld [vmem:[%s1 + $0x960] sm:$0xff]
  %v329 = vld [vmem:[%s1 + $0x968] sm:$0xff]
  %v330 = vld [vmem:[%s1 + $0x970] sm:$0xff]
  %v331 = vld [vmem:[%s1 + $0x978] sm:$0xff]
  %v332 = vld [vmem:[%s1 + $0x980] sm:$0xff]
  %v333 = vld [vmem:[%s1 + $0x988] sm:$0xff]
  %v334 = vld [vmem:[%s1 + $0x990] sm:$0xff]
  %v335 = vld [vmem:[%s1 + $0x998] sm:$0xff]
  %v336 = vld [vmem:[%s1 + $0x9a0] sm:$0xff]
  %v337 = vld [vmem:[%s1 + $0x9a8] sm:$0xff]
  %v338 = vld [vmem:[%s1 + $0x9b0] sm:$0xff]
  %v339 = vld [vmem:[%s1 + $0x9b8] sm:$0xff]
  %v340 = vld [vmem:[%s1 + $0x9c0] sm:$0xff]
  %v341 = vld [vmem:[%s1 + $0x9c8] sm:$0xff]
  %v342 = vld [vmem:[%s1 + $0x9d0] sm:$0xff]
  %v343 = vld [vmem:[%s1 + $0x9d8] sm:$0xff]
  %v344 = vld [vmem:[%s1 + $0x9e0] sm:$0xff]
  %v345 = vld [vmem:[%s1 + $0x9e8] sm:$0xff]
  %v346 = vld [vmem:[%s1 + $0x9f0] sm:$0xff]
  %v347 = vld [vmem:[%s1 + $0x9f8] sm:$0xff]
  %v348 = vld [vmem:[%s1 + $0xa00] sm:$0xff]
  %v349 = vld [vmem:[%s1 + $0xa08] sm:$0xff]
  %v350 = vld [vmem:[%s1 + $0xa10] sm:$0xff]
  %v351 = vld [vmem:[%s1 + $0xa18] sm:$0xff]
  %v352 = vld [vmem:[%s1 + $0xa20] sm:$0xff]
  %v353 = vld [vmem:[%s1 + $0xa28] sm:$0xff]
  %v354 = vld [vmem:[%s1 + $0xa30] sm:$0xff]
  %v355 = vld [vmem:[%s1 + $0xa38] sm:$0xff]
  %v356 = vld [vmem:[%s1 + $0xa40] sm:$0xff]
  %v357 = vld [vmem:[%s1 + $0xa48] sm:$0xff]
  %v358 = vld [vmem:[%s1 + $0xa50] sm:$0xff]
  %v359 = vld [vmem:[%s1 + $0xa58] sm:$0xff]
  %v360 = vld [vmem:[%s1 + $0xa60] sm:$0xff]
  %v361 = vld [vmem:[%s1 + $0xa68] sm:$0xff]
  %v362 = vld [vmem:[%s1 + $0xa70] sm:$0xff]
  %v363 = vld [vmem:[%s1 + $0xa78] sm:$0xff]
  %v364 = vld [vmem:[%s1 + $0xa80] sm:$0xff]
  %v365 = vld [vmem:[%s1 + $0xa88] sm:$0xff]
  %v366 = vld [vmem:[%s1 + $0xa90] sm:$0xff]
  %v367 = vld [vmem:[%s1 + $0xa98] sm:$0xff]
  %v368 = vld [vmem:[%s1 + $0xaa0] sm:$0xff]
  %v369 = vld [vmem:[%s1 + $0xaa8] sm:$0xff]
  %v370 = vld [vmem:[%s1 + $0xab0] sm:$0xff]
  %v371 = vld [vmem:[%s1 + $0xab8] sm:$0xff]
  %v372 = vld [vmem:[%s1 + $0xac0] sm:$0xff]
  %v373 = vld [vmem:[%s1 + $0xac8] sm:$0xff]
  %v374 = vld [vmem:[%s1 + $0xad0] sm:$0xff]
  %v375 = vld [vmem:[%s1 + $0xad8] sm:$0xff]
  %v376 = vld [vmem:[%s1 + $0xae0] sm:$0xff]
  %v377 = vld [vmem:[%s1 + $0xae8] sm:$0xff]
  %v378 = vld [vmem:[%s1 + $0xaf0] sm:$0xff]
  %v379 = vld [vmem:[%s1 + $0xaf8] sm:$0xff]
  %v380 = vld [vmem:[%s1 + $0xb00] sm:$0xff]
  %v381 = vld [vmem:[%s1 + $0xb08] sm:$0xff]
  %v382 = vld [vmem:[%s1 + $0xb10] sm:$0xff]
  %v383 = vld [vmem:[%s1 + $0xb18] sm:$0xff]
  %v384 = vld [vmem:[%s1 + $0xb20] sm:$0xff]
  %v385 = vld [vmem:[%s1 + $0xb28] sm:$0xff]
  %v386 = vld [vmem:[%s1 + $0xb30] sm:$0xff]
  %v387 = vld [vmem:[%s1 + $0xb38] sm:$0xff]
  %v388 = vld [vmem:[%s1 + $0xb40] sm:$0xff]
  %v389 = vld [vmem:[%s1 + $0xb48] sm:$0xff]
  %v390 = vld [vmem:[%s1 + $0xb50] sm:$0xff]
  %v391 = vld [vmem:[%s1 + $0xb58] sm:$0xff]
  %v392 = vld [vmem:[%s1 + $0xb60] sm:$0xff]
  %v393 = vld [vmem:[%s1 + $0xb68] sm:$0xff]
  %v394 = vld [vmem:[%s1 + $0xb70] sm:$0xff]
  %v395 = vld [vmem:[%s1 + $0xb78] sm:$0xff]
  %v396 = vld [vmem:[%s1 + $0xb80] sm:$0xff]
  %v397 = vld [vmem:[%s1 + $0xb88] sm:$0xff]
  %v398 = vld [vmem:[%s1 + $0xb90] sm:$0xff]
  %v399 = vld [vmem:[%s1 + $0xb98] sm:$0xff]
  %v400 = vld [vmem:[%s1 + $0xba0] sm:$0xff]
  %v401 = vld [vmem:[%s1 + $0xba8] sm:$0xff]
  %v402 = vld [vmem:[%s1 + $0xbb0] sm:$0xff]
  %v403 = vld [vmem:[%s1 + $0xbb8] sm:$0xff]
  %v404 = vld [vmem:[%s1 + $0xbc0] sm:$0xff]
  %v405 = vld [vmem:[%s1 + $0xbc8] sm:$0xff]
  %v406 = vld [vmem:[%s1 + $0xbd0] sm:$0xff]
  %v407 = vld [vmem:[%s1 + $0xbd8] sm:$0xff]
  %v408 = vld [vmem:[%s1 + $0xbe0] sm:$0xff]
  %v409 = vld [vmem:[%s1 + $0xbe8] sm:$0xff]
  %v410 = vld [vmem:[%s1 + $0xbf0] sm:$0xff]
  %v411 = vld [vmem:[%s1 + $0xbf8] sm:$0xff]
  %v412 = vld [vmem:[%s1 + $0xc00] sm:$0xff]
  %v413 = vld [vmem:[%s1 + $0xc08] sm:$0xff]
  %v414 = vld [vmem:[%s1 + $0xc10] sm:$0xff]
  %v415 = vld [vmem:[%s1 + $0xc18] sm:$0xff]
  %v416 = vld [vmem:[%s1 + $0xc20] sm:$0xff]
  %v417 = vld [vmem:[%s1 + $0xc28] sm:$0xff]
  %v418 = vld [vmem:[%s1 + $0xc30] sm:$0xff]
  %v419 = vld [vmem:[%s1 + $0xc38] sm:$0xff]
  %v420 = vld [vmem:[%s1 + $0xc40] sm:$0xff]
  %v421 = vld [vmem:[%s1 + $0xc48] sm:$0xff]
  %v422 = vld [vmem:[%s1 + $0xc50] sm:$0xff]
  %v423 = vld [vmem:[%s1 + $0xc58] sm:$0xff]
  %v424 = vld [vmem:[%s1 + $0xc60] sm:$0xff]
  %v425 = vld [vmem:[%s1 + $0xc68] sm:$0xff]
  %v426 = vld [vmem:[%s1 + $0xc70] sm:$0xff]
  %v427 = vld [vmem:[%s1 + $0xc78] sm:$0xff]
  %v428 = vld [vmem:[%s1 + $0xc80] sm:$0xff]
  %v429 = vld [vmem:[%s1 + $0xc88] sm:$0xff]
  %v430 = vld [vmem:[%s1 + $0xc90] sm:$0xff]
  %v431 = vld [vmem:[%s1 + $0xc98] sm:$0xff]
  %v432 = vld [vmem:[%s1 + $0xca0] sm:$0xff]
  %v433 = vld [vmem:[%s1 + $0xca8] sm:$0xff]
  %v434 = vld [vmem:[%s1 + $0xcb0] sm:$0xff]
  %v435 = vld [vmem:[%s1 + $0xcb8] sm:$0xff]
  %v436 = vld [vmem:[%s1 + $0xcc0] sm:$0xff]
  %v437 = vld [vmem:[%s1 + $0xcc8] sm:$0xff]
  %v438 = vld [vmem:[%s1 + $0xcd0] sm:$0xff]
  %v439 = vld [vmem:[%s1 + $0xcd8] sm:$0xff]
  %v440 = vld [vmem:[%s1 + $0xce0] sm:$0xff]
  %v441 = vld [vmem:[%s1 + $0xce8] sm:$0xff]
  %v442 = vld [vmem:[%s1 + $0xcf0] sm:$0xff]
  %v443 = vld [vmem:[%s1 + $0xcf8] sm:$0xff]
  %v444 = vld [vmem:[%s1 + $0xd00] sm:$0xff]
  %v445 = vld [vmem:[%s1 + $0xd08] sm:$0xff]
  %v446 = vld [vmem:[%s1 + $0xd10] sm:$0xff]
  %v447 = vld [vmem:[%s1 + $0xd18] sm:$0xff]
  %v448 = vld [vmem:[%s1 + $0xd20] sm:$0xff]
  %v449 = vld [vmem:[%s1 + $0xd28] sm:$0xff]
  %v450 = vld [vmem:[%s1 + $0xd30] sm:$0xff]
  %v451 = vld [vmem:[%s1 + $0xd38] sm:$0xff]
  %v452 = vld [vmem:[%s1 + $0xd40] sm:$0xff]
  %v453 = vld [vmem:[%s1 + $0xd48] sm:$0xff]
  %v454 = vld [vmem:[%s1 + $0xd50] sm:$0xff]
  %v455 = vld [vmem:[%s1 + $0xd58] sm:$0xff]
  %v456 = vld [vmem:[%s1 + $0xd60] sm:$0xff]
  %v457 = vld [vmem:[%s1 + $0xd68] sm:$0xff]
  %v458 = vld [vmem:[%s1 + $0xd70] sm:$0xff]
  %v459 = vld [vmem:[%s1 + $0xd78] sm:$0xff]
  %v460 = vld [vmem:[%s1 + $0xd80] sm:$0xff]
  %v461 = vld [vmem:[%s1 + $0xd88] sm:$0xff]
  %v462 = vld [vmem:[%s1 + $0xd90] sm:$0xff]
  %v463 = vld [vmem:[%s1 + $0xd98] sm:$0xff]
  %v464 = vld [vmem:[%s1 + $0xda0] sm:$0xff]
  %v465 = vld [vmem:[%s1 + $0xda8] sm:$0xff]
  %v466 = vld [vmem:[%s1 + $0xdb0] sm:$0xff]
  %v467 = vld [vmem:[%s1 + $0xdb8] sm:$0xff]
  %v468 = vld [vmem:[%s1 + $0xdc0] sm:$0xff]
  %v469 = vld [vmem:[%s1 + $0xdc8] sm:$0xff]
  %v470 = vld [vmem:[%s1 + $0xdd0] sm:$0xff]
  %v471 = vld [vmem:[%s1 + $0xdd8] sm:$0xff]
  %v472 = vld [vmem:[%s1 + $0xde0] sm:$0xff]
  %v473 = vld [vmem:[%s1 + $0xde8] sm:$0xff]
  %v474 = vld [vmem:[%s1 + $0xdf0] sm:$0xff]
  %v475 = vld [vmem:[%s1 + $0xdf8] sm:$0xff]
  %v476 = vld [vmem:[%s1 + $0xe00] sm:$0xff]
  %v477 = vld [vmem:[%s1 + $0xe08] sm:$0xff]
  %v478 = vld [vmem:[%s1 + $0xe10] sm:$0xff]
  %v479 = vld [vmem:[%s1 + $0xe18] sm:$0xff]
  %v480 = vld [vmem:[%s1 + $0xe20] sm:$0xff]
  %v481 = vld [vmem:[%s1 + $0xe28] sm:$0xff]
  %v482 = vld [vmem:[%s1 + $0xe30] sm:$0xff]
  %v483 = vld [vmem:[%s1 + $0xe38] sm:$0xff]
  %v484 = vld [vmem:[%s1 + $0xe40] sm:$0xff]
  %v485 = vld [vmem:[%s1 + $0xe48] sm:$0xff]
  %v486 = vld [vmem:[%s1 + $0xe50] sm:$0xff]
  %v487 = vld [vmem:[%s1 + $0xe58] sm:$0xff]
  %v488 = vld [vmem:[%s1 + $0xe60] sm:$0xff]
  %v489 = vld [vmem:[%s1 + $0xe68] sm:$0xff]
  %v490 = vld [vmem:[%s1 + $0xe70] sm:$0xff]
  %v491 = vld [vmem:[%s1 + $0xe78] sm:$0xff]
  %v492 = vld [vmem:[%s1 + $0xe80] sm:$0xff]
  %v493 = vld [vmem:[%s1 + $0xe88] sm:$0xff]
  %v494 = vld [vmem:[%s1 + $0xe90] sm:$0xff]
  %v495 = vld [vmem:[%s1 + $0xe98] sm:$0xff]
  %v496 = vld [vmem:[%s1 + $0xea0] sm:$0xff]
  %v497 = vld [vmem:[%s1 + $0xea8] sm:$0xff]
  %v498 = vld [vmem:[%s1 + $0xeb0] sm:$0xff]
  %v499 = vld [vmem:[%s1 + $0xeb8] sm:$0xff]
  %v500 = vld [vmem:[%s1 + $0xec0] sm:$0xff]
  %v501 = vld [vmem:[%s1 + $0xec8] sm:$0xff]
  %v502 = vld [vmem:[%s1 + $0xed0] sm:$0xff]
  %v503 = vld [vmem:[%s1 + $0xed8] sm:$0xff]
  %v504 = vld [vmem:[%s1 + $0xee0] sm:$0xff]
  %v505 = vld [vmem:[%s1 + $0xee8] sm:$0xff]
  %v506 = vld [vmem:[%s1 + $0xef0] sm:$0xff]
  %v507 = vld [vmem:[%s1 + $0xef8] sm:$0xff]
  %v508 = vld [vmem:[%s1 + $0xf00] sm:$0xff]
  %v509 = vld [vmem:[%s1 + $0xf08] sm:$0xff]
  %v510 = vld [vmem:[%s1 + $0xf10] sm:$0xff]
  %v511 = vld [vmem:[%s1 + $0xf18] sm:$0xff]
  %v512 = vld [vmem:[%s1 + $0xf20] sm:$0xff]
  %v513 = vld [vmem:[%s1 + $0xf28] sm:$0xff]
  %v514 = vld [vmem:[%s1 + $0xf30] sm:$0xff]
  %v515 = vld [vmem:[%s1 + $0xf38] sm:$0xff]
  %v516 = vld [vmem:[%s1 + $0xf40] sm:$0xff]
  %v517 = vld [vmem:[%s1 + $0xf48] sm:$0xff]
  %v518 = vld [vmem:[%s1 + $0xf50] sm:$0xff]
  %v519 = vld [vmem:[%s1 + $0xf58] sm:$0xff]
  %v520 = vld [vmem:[%s1 + $0xf60] sm:$0xff]
  %v521 = vld [vmem:[%s1 + $0xf68] sm:$0xff]
  %v522 = vld [vmem:[%s1 + $0xf70] sm:$0xff]
  %v523 = vld [vmem:[%s1 + $0xf78] sm:$0xff]
  %v524 = vld [vmem:[%s1 + $0xf80] sm:$0xff]
  %v525 = vld [vmem:[%s1 + $0xf88] sm:$0xff]
  %v526 = vld [vmem:[%s1 + $0xf90] sm:$0xff]
  %v527 = vld [vmem:[%s1 + $0xf98] sm:$0xff]
  %v528 = vld [vmem:[%s1 + $0xfa0] sm:$0xff]
  %v529 = vld [vmem:[%s1 + $0xfa8] sm:$0xff]
  %v530 = vld [vmem:[%s1 + $0xfb0] sm:$0xff]
  %v531 = vld [vmem:[%s1 + $0xfb8] sm:$0xff]
  %v532 = vld [vmem:[%s1 + $0xfc0] sm:$0xff]
  %v533 = vld [vmem:[%s1 + $0xfc8] sm:$0xff]
  %v534 = vld [vmem:[%s1 + $0xfd0] sm:$0xff]
  %v535 = vld [vmem:[%s1 + $0xfd8] sm:$0xff]
  %v536 = vld [vmem:[%s1 + $0xfe0] sm:$0xff]
  %v537 = vld [vmem:[%s1 + $0xfe8] sm:$0xff]
  %v538 = vld [vmem:[%s1 + $0xff0] sm:$0xff]
  %v539 = vld [vmem:[%s1 + $0xff8] sm:$0xff]
  %v540 = vld [vmem:[%s1 + $0x1000] sm:$0xff]
  %v541 = vld [vmem:[%s1 + $0x1008] sm:$0xff]
  %v542 = vld [vmem:[%s1 + $0x1010] sm:$0xff]
  %v543 = vld [vmem:[%s1 + $0x1018] sm:$0xff]
  %v544 = vld [vmem:[%s1 + $0x1020] sm:$0xff]
  %v545 = vld [vmem:[%s1 + $0x1028] sm:$0xff]
  %v546 = vld [vmem:[%s1 + $0x1030] sm:$0xff]
  %v547 = vld [vmem:[%s1 + $0x1038] sm:$0xff]
  %v548 = vld [vmem:[%s1 + $0x1040] sm:$0xff]
  %v549 = vld [vmem:[%s1 + $0x1048] sm:$0xff]
  %v550 = vld [vmem:[%s1 + $0x1050] sm:$0xff]
  %v551 = vld [vmem:[%s1 + $0x1058] sm:$0xff]
  %v552 = vld [vmem:[%s1 + $0x1060] sm:$0xff]
  %v553 = vld [vmem:[%s1 + $0x1068] sm:$0xff]
  %v554 = vld [vmem:[%s1 + $0x1070] sm:$0xff]
  %v555 = vld [vmem:[%s1 + $0x1078] sm:$0xff]
  %v556 = vld [vmem:[%s1 + $0x1080] sm:$0xff]
  %v557 = vld [vmem:[%s1 + $0x1088] sm:$0xff]
  %v558 = vld [vmem:[%s1 + $0x1090] sm:$0xff]
  %v559 = vld [vmem:[%s1 + $0x1098] sm:$0xff]
  %v560 = vld [vmem:[%s1 + $0x10a0] sm:$0xff]
  %v561 = vld [vmem:[%s1 + $0x10a8] sm:$0xff]
  %v562 = vld [vmem:[%s1 + $0x10b0] sm:$0xff]
  %v563 = vld [vmem:[%s1 + $0x10b8] sm:$0xff]
  %v564 = vld [vmem:[%s1 + $0x10c0] sm:$0xff]
  %v565 = vld [vmem:[%s1 + $0x10c8] sm:$0xff]
  %v566 = vld [vmem:[%s1 + $0x10d0] sm:$0xff]
  %v567 = vld [vmem:[%s1 + $0x10d8] sm:$0xff]
  %v568 = vld [vmem:[%s1 + $0x10e0] sm:$0xff]
  %v569 = vld [vmem:[%s1 + $0x10e8] sm:$0xff]
  %v570 = vld [vmem:[%s1 + $0x10f0] sm:$0xff]
  %v571 = vld [vmem:[%s1 + $0x10f8] sm:$0xff]
  %v572 = vld [vmem:[%s1 + $0x1100] sm:$0xff]
  %v573 = vld [vmem:[%s1 + $0x1108] sm:$0xff]
  %v574 = vld [vmem:[%s1 + $0x1110] sm:$0xff]
  %v575 = vld [vmem:[%s1 + $0x1118] sm:$0xff]
  %v576 = vld [vmem:[%s1 + $0x1120] sm:$0xff]
  %v577 = vld [vmem:[%s1 + $0x1128] sm:$0xff]
  %v578 = vld [vmem:[%s1 + $0x1130] sm:$0xff]
  %v579 = vld [vmem:[%s1 + $0x1138] sm:$0xff]
  %v580 = vld [vmem:[%s1 + $0x1140] sm:$0xff]
  %v581 = vld [vmem:[%s1 + $0x1148] sm:$0xff]
  %v582 = vld [vmem:[%s1 + $0x1150] sm:$0xff]
  %v583 = vld [vmem:[%s1 + $0x1158] sm:$0xff]
  %v584 = vld [vmem:[%s1 + $0x1160] sm:$0xff]
  %v585 = vld [vmem:[%s1 + $0x1168] sm:$0xff]
  %v586 = vld [vmem:[%s1 + $0x1170] sm:$0xff]
  %v587 = vld [vmem:[%s1 + $0x1178] sm:$0xff]
  %v588 = vld [vmem:[%s1 + $0x1180] sm:$0xff]
  %v589 = vld [vmem:[%s1 + $0x1188] sm:$0xff]
  %v590 = vld [vmem:[%s1 + $0x1190] sm:$0xff]
  %v591 = vld [vmem:[%s1 + $0x1198] sm:$0xff]
  %v592 = vld [vmem:[%s1 + $0x11a0] sm:$0xff]
  %v593 = vld [vmem:[%s1 + $0x11a8] sm:$0xff]
  %v594 = vld [vmem:[%s1 + $0x11b0] sm:$0xff]
  %v595 = vld [vmem:[%s1 + $0x11b8] sm:$0xff]
  %v596 = vld [vmem:[%s1 + $0x11c0] sm:$0xff]
  %v597 = vld [vmem:[%s1 + $0x11c8] sm:$0xff]
  %v598 = vld [vmem:[%s1 + $0x11d0] sm:$0xff]
  %v599 = vld [vmem:[%s1 + $0x11d8] sm:$0xff]
  %v600 = vld [vmem:[%s1 + $0x11e0] sm:$0xff]
  %v601 = vld [vmem:[%s1 + $0x11e8] sm:$0xff]
  %v602 = vld [vmem:[%s1 + $0x11f0] sm:$0xff]
  %v603 = vld [vmem:[%s1 + $0x11f8] sm:$0xff]
  %v604 = vld [vmem:[%s1 + $0x1200] sm:$0xff]
  %v605 = vld [vmem:[%s1 + $0x1208] sm:$0xff]
  %v606 = vld [vmem:[%s1 + $0x1210] sm:$0xff]
  %v607 = vld [vmem:[%s1 + $0x1218] sm:$0xff]
  %v608 = vld [vmem:[%s1 + $0x1220] sm:$0xff]
  %v609 = vld [vmem:[%s1 + $0x1228] sm:$0xff]
  %v610 = vld [vmem:[%s1 + $0x1230] sm:$0xff]
  %v611 = vld [vmem:[%s1 + $0x1238] sm:$0xff]
  %v612 = vld [vmem:[%s1 + $0x1240] sm:$0xff]
  %v613 = vld [vmem:[%s1 + $0x1248] sm:$0xff]
  %v614 = vld [vmem:[%s1 + $0x1250] sm:$0xff]
  %v615 = vld [vmem:[%s1 + $0x1258] sm:$0xff]
  %v616 = vld [vmem:[%s1 + $0x1260] sm:$0xff]
  %v617 = vld [vmem:[%s1 + $0x1268] sm:$0xff]
  %v618 = vld [vmem:[%s1 + $0x1270] sm:$0xff]
  %v619 = vld [vmem:[%s1 + $0x1278] sm:$0xff]
  %v620 = vld [vmem:[%s1 + $0x1280] sm:$0xff]
  %v621 = vld [vmem:[%s1 + $0x1288] sm:$0xff]
  %v622 = vld [vmem:[%s1 + $0x1290] sm:$0xff]
  %v623 = vld [vmem:[%s1 + $0x1298] sm:$0xff]
  %v624 = vld [vmem:[%s1 + $0x12a0] sm:$0xff]
  %v625 = vld [vmem:[%s1 + $0x12a8] sm:$0xff]
  %v626 = vld [vmem:[%s1 + $0x12b0] sm:$0xff]
  %v627 = vld [vmem:[%s1 + $0x12b8] sm:$0xff]
  %v628 = vld [vmem:[%s1 + $0x12c0] sm:$0xff]
  %v629 = vld [vmem:[%s1 + $0x12c8] sm:$0xff]
  %v630 = vld [vmem:[%s1 + $0x12d0] sm:$0xff]
  %v631 = vld [vmem:[%s1 + $0x12d8] sm:$0xff]
  %v632 = vld [vmem:[%s1 + $0x12e0] sm:$0xff]
  %v633 = vld [vmem:[%s1 + $0x12e8] sm:$0xff]
  %v634 = vld [vmem:[%s1 + $0x12f0] sm:$0xff]
  %v635 = vld [vmem:[%s1 + $0x12f8] sm:$0xff]
  %v636 = vld [vmem:[%s1 + $0x1300] sm:$0xff]
  %v637 = vld [vmem:[%s1 + $0x1308] sm:$0xff]
  %v638 = vld [vmem:[%s1 + $0x1310] sm:$0xff]
  %v639 = vld [vmem:[%s1 + $0x1318] sm:$0xff]
  %v640 = vld [vmem:[%s1 + $0x1320] sm:$0xff]
  %v641 = vld [vmem:[%s1 + $0x1328] sm:$0xff]
  %v642 = vld [vmem:[%s1 + $0x1330] sm:$0xff]
  %v643 = vld [vmem:[%s1 + $0x1338] sm:$0xff]
  %v644 = vld [vmem:[%s1 + $0x1340] sm:$0xff]
  %v645 = vld [vmem:[%s1 + $0x1348] sm:$0xff]
  %v646 = vld [vmem:[%s1 + $0x1350] sm:$0xff]
  %v647 = vld [vmem:[%s1 + $0x1358] sm:$0xff]
  %v648 = vld [vmem:[%s1 + $0x1360] sm:$0xff]
  %v649 = vld [vmem:[%s1 + $0x1368] sm:$0xff]
  %v650 = vld [vmem:[%s1 + $0x1370] sm:$0xff]
  %v651 = vld [vmem:[%s1 + $0x1378] sm:$0xff]
  %v652 = vld [vmem:[%s1 + $0x1380] sm:$0xff]
  %v653 = vld [vmem:[%s1 + $0x1388] sm:$0xff]
  %v654 = vld [vmem:[%s1 + $0x1390] sm:$0xff]
  %v655 = vld [vmem:[%s1 + $0x1398] sm:$0xff]
  %v656 = vld [vmem:[%s1 + $0x13a0] sm:$0xff]
  %v657 = vld [vmem:[%s1 + $0x13a8] sm:$0xff]
  %v658 = vld [vmem:[%s1 + $0x13b0] sm:$0xff]
  %v659 = vld [vmem:[%s1 + $0x13b8] sm:$0xff]
  %v660 = vld [vmem:[%s1 + $0x13c0] sm:$0xff]
  %v661 = vld [vmem:[%s1 + $0x13c8] sm:$0xff]
  %v662 = vld [vmem:[%s1 + $0x13d0] sm:$0xff]
  %v663 = vld [vmem:[%s1 + $0x13d8] sm:$0xff]
  %v664 = vld [vmem:[%s1 + $0x13e0] sm:$0xff]
  %v665 = vld [vmem:[%s1 + $0x13e8] sm:$0xff]
  %v666 = vld [vmem:[%s1 + $0x13f0] sm:$0xff]
  %v667 = vld [vmem:[%s1 + $0x13f8] sm:$0xff]
  %v668 = vld [vmem:[%s1 + $0x1400] sm:$0xff]
  %v669 = vld [vmem:[%s1 + $0x1408] sm:$0xff]
  %v670 = vld [vmem:[%s1 + $0x1410] sm:$0xff]
  %v671 = vld [vmem:[%s1 + $0x1418] sm:$0xff]
  %v672 = vld [vmem:[%s1 + $0x1420] sm:$0xff]
  %v673 = vld [vmem:[%s1 + $0x1428] sm:$0xff]
  %v674 = vld [vmem:[%s1 + $0x1430] sm:$0xff]
  %v675 = vld [vmem:[%s1 + $0x1438] sm:$0xff]
  %v676 = vld [vmem:[%s1 + $0x1440] sm:$0xff]
  %v677 = vld [vmem:[%s1 + $0x1448] sm:$0xff]
  %v678 = vld [vmem:[%s1 + $0x1450] sm:$0xff]
  %v679 = vld [vmem:[%s1 + $0x1458] sm:$0xff]
  %v680 = vld [vmem:[%s1 + $0x1460] sm:$0xff]
  %v681 = vld [vmem:[%s1 + $0x1468] sm:$0xff]
  %v682 = vld [vmem:[%s1 + $0x1470] sm:$0xff]
  %v683 = vld [vmem:[%s1 + $0x1478] sm:$0xff]
  %v684 = vld [vmem:[%s1 + $0x1480] sm:$0xff]
  %v685 = vld [vmem:[%s1 + $0x1488] sm:$0xff]
  %v686 = vld [vmem:[%s1 + $0x1490] sm:$0xff]
  %v687 = vld [vmem:[%s1 + $0x1498] sm:$0xff]
  %v688 = vld [vmem:[%s1 + $0x14a0] sm:$0xff]
  %v689 = vld [vmem:[%s1 + $0x14a8] sm:$0xff]
  %v690 = vld [vmem:[%s1 + $0x14b0] sm:$0xff]
  %v691 = vld [vmem:[%s1 + $0x14b8] sm:$0xff]
  %v692 = vld [vmem:[%s1 + $0x14c0] sm:$0xff]
  %v693 = vld [vmem:[%s1 + $0x14c8] sm:$0xff]
  %v694 = vld [vmem:[%s1 + $0x14d0] sm:$0xff]
  %v695 = vld [vmem:[%s1 + $0x14d8] sm:$0xff]
  %v696 = vld [vmem:[%s1 + $0x14e0] sm:$0xff]
  %v697 = vld [vmem:[%s1 + $0x14e8] sm:$0xff]
  %v698 = vld [vmem:[%s1 + $0x14f0] sm:$0xff]
  %v699 = vld [vmem:[%s1 + $0x14f8] sm:$0xff]
  %v700 = vld [vmem:[%s1 + $0x1500] sm:$0xff]
  %v701 = vld [vmem:[%s1 + $0x1508] sm:$0xff]
  %v702 = vld [vmem:[%s1 + $0x1510] sm:$0xff]
  %v703 = vld [vmem:[%s1 + $0x1518] sm:$0xff]
  %v704 = vld [vmem:[%s1 + $0x1520] sm:$0xff]
  %v705 = vld [vmem:[%s1 + $0x1528] sm:$0xff]
  %v706 = vld [vmem:[%s1 + $0x1530] sm:$0xff]
  %v707 = vld [vmem:[%s1 + $0x1538] sm:$0xff]
  %v708 = vld [vmem:[%s1 + $0x1540] sm:$0xff]
  %v709 = vld [vmem:[%s1 + $0x1548] sm:$0xff]
  %v710 = vld [vmem:[%s1 + $0x1550] sm:$0xff]
  %v711 = vld [vmem:[%s1 + $0x1558] sm:$0xff]
  %v712 = vld [vmem:[%s1 + $0x1560] sm:$0xff]
  %v713 = vld [vmem:[%s1 + $0x1568] sm:$0xff]
  %v714 = vld [vmem:[%s1 + $0x1570] sm:$0xff]
  %v715 = vld [vmem:[%s1 + $0x1578] sm:$0xff]
  %v716 = vld [vmem:[%s1 + $0x1580] sm:$0xff]
  %v717 = vld [vmem:[%s1 + $0x1588] sm:$0xff]
  %v718 = vld [vmem:[%s1 + $0x1590] sm:$0xff]
  %v719 = vld [vmem:[%s1 + $0x1598] sm:$0xff]
  %v720 = vld [vmem:[%s1 + $0x15a0] sm:$0xff]
  %v721 = vld [vmem:[%s1 + $0x15a8] sm:$0xff]
  %v722 = vld [vmem:[%s1 + $0x15b0] sm:$0xff]
  %v723 = vld [vmem:[%s1 + $0x15b8] sm:$0xff]
  %v724 = vld [vmem:[%s1 + $0x15c0] sm:$0xff]
  %v725 = vld [vmem:[%s1 + $0x15c8] sm:$0xff]
  %v726 = vld [vmem:[%s1 + $0x15d0] sm:$0xff]
  %v727 = vld [vmem:[%s1 + $0x15d8] sm:$0xff]
  %v728 = vld [vmem:[%s1 + $0x15e0] sm:$0xff]
  %v729 = vld [vmem:[%s1 + $0x15e8] sm:$0xff]
  %v730 = vld [vmem:[%s1 + $0x15f0] sm:$0xff]
  %v731 = vld [vmem:[%s1 + $0x15f8] sm:$0xff]
  %v732 = vld [vmem:[%s1 + $0x1600] sm:$0xff]
  %v733 = vld [vmem:[%s1 + $0x1608] sm:$0xff]
  %v734 = vld [vmem:[%s1 + $0x1610] sm:$0xff]
  %v735 = vld [vmem:[%s1 + $0x1618] sm:$0xff]
  %v736 = vld [vmem:[%s1 + $0x1620] sm:$0xff]
  %v737 = vld [vmem:[%s1 + $0x1628] sm:$0xff]
  %v738 = vld [vmem:[%s1 + $0x1630] sm:$0xff]
  %v739 = vld [vmem:[%s1 + $0x1638] sm:$0xff]
  %v740 = vld [vmem:[%s1 + $0x1640] sm:$0xff]
  %v741 = vld [vmem:[%s1 + $0x1648] sm:$0xff]
  %v742 = vld [vmem:[%s1 + $0x1650] sm:$0xff]
  %v743 = vld [vmem:[%s1 + $0x1658] sm:$0xff]
  %v744 = vld [vmem:[%s1 + $0x1660] sm:$0xff]
  %v745 = vld [vmem:[%s1 + $0x1668] sm:$0xff]
  %v746 = vld [vmem:[%s1 + $0x1670] sm:$0xff]
  %v747 = vld [vmem:[%s1 + $0x1678] sm:$0xff]
  %v748 = vld [vmem:[%s1 + $0x1680] sm:$0xff]
  %v749 = vld [vmem:[%s1 + $0x1688] sm:$0xff]
  %v750 = vld [vmem:[%s1 + $0x1690] sm:$0xff]
  %v751 = vld [vmem:[%s1 + $0x1698] sm:$0xff]
  %v752 = vld [vmem:[%s1 + $0x16a0] sm:$0xff]
  %v753 = vld [vmem:[%s1 + $0x16a8] sm:$0xff]
  %v754 = vld [vmem:[%s1 + $0x16b0] sm:$0xff]
  %v755 = vld [vmem:[%s1 + $0x16b8] sm:$0xff]
  %v756 = vld [vmem:[%s1 + $0x16c0] sm:$0xff]
  %v757 = vld [vmem:[%s1 + $0x16c8] sm:$0xff]
  %v758 = vld [vmem:[%s1 + $0x16d0] sm:$0xff]
  %v759 = vld [vmem:[%s1 + $0x16d8] sm:$0xff]
  %v760 = vld [vmem:[%s1 + $0x16e0] sm:$0xff]
  %v761 = vld [vmem:[%s1 + $0x16e8] sm:$0xff]
  %v762 = vld [vmem:[%s1 + $0x16f0] sm:$0xff]
  %v763 = vld [vmem:[%s1 + $0x16f8] sm:$0xff]
  %v764 = vld [vmem:[%s1 + $0x1700] sm:$0xff]
  %v765 = vld [vmem:[%s1 + $0x1708] sm:$0xff]
  %v766 = vld [vmem:[%s1 + $0x1710] sm:$0xff]
  %v767 = vld [vmem:[%s1 + $0x1718] sm:$0xff]
  %v768 = vld [vmem:[%s1 + $0x1720] sm:$0xff]
  %v769 = vld [vmem:[%s1 + $0x1728] sm:$0xff]
  %v770 = vld [vmem:[%s1 + $0x1730] sm:$0xff]
  %v771 = vld [vmem:[%s1 + $0x1738] sm:$0xff]
  %v772 = vld [vmem:[%s1 + $0x1740] sm:$0xff]
  %v773 = vld [vmem:[%s1 + $0x1748] sm:$0xff]
  %v774 = vld [vmem:[%s1 + $0x1750] sm:$0xff]
  %v775 = vld [vmem:[%s1 + $0x1758] sm:$0xff]
  %v776 = vld [vmem:[%s1 + $0x1760] sm:$0xff]
  %v777 = vld [vmem:[%s1 + $0x1768] sm:$0xff]
  %v778 = vld [vmem:[%s1 + $0x1770] sm:$0xff]
  %v779 = vld [vmem:[%s1 + $0x1778] sm:$0xff]
  %v780 = vld [vmem:[%s1 + $0x1780] sm:$0xff]
  %v781 = vld [vmem:[%s1 + $0x1788] sm:$0xff]
  %v782 = vld [vmem:[%s1 + $0x1790] sm:$0xff]
  %v783 = vld [vmem:[%s1 + $0x1798] sm:$0xff]
  %v784 = vld [vmem:[%s1 + $0x17a0] sm:$0xff]
  %v785 = vld [vmem:[%s1 + $0x17a8] sm:$0xff]
  %v786 = vld [vmem:[%s1 + $0x17b0] sm:$0xff]
  %v787 = vld [vmem:[%s1 + $0x17b8] sm:$0xff]
  %v788 = vld [vmem:[%s1 + $0x17c0] sm:$0xff]
  %v789 = vld [vmem:[%s1 + $0x17c8] sm:$0xff]
  %v790 = vld [vmem:[%s1 + $0x17d0] sm:$0xff]
  %v791 = vld [vmem:[%s1 + $0x17d8] sm:$0xff]
  %v792 = vld [vmem:[%s1 + $0x17e0] sm:$0xff]
  %v793 = vld [vmem:[%s1 + $0x17e8] sm:$0xff]
  %v794 = vld [vmem:[%s1 + $0x17f0] sm:$0xff]
  %v795 = vld [vmem:[%s1 + $0x17f8] sm:$0xff]
  %v796 = vld [vmem:[%s1 + $0x1800] sm:$0xff]
  %v797 = vld [vmem:[%s1 + $0x1808] sm:$0xff]
  %v798 = vld [vmem:[%s1 + $0x1810] sm:$0xff]
  %v799 = vld [vmem:[%s1 + $0x1818] sm:$0xff]
  %v800 = vld [vmem:[%s1 + $0x1820] sm:$0xff]
  %v801 = vld [vmem:[%s1 + $0x1828] sm:$0xff]
  %v802 = vld [vmem:[%s1 + $0x1830] sm:$0xff]
  %v803 = vld [vmem:[%s1 + $0x1838] sm:$0xff]
  %v804 = vld [vmem:[%s1 + $0x1840] sm:$0xff]
  %v805 = vld [vmem:[%s1 + $0x1848] sm:$0xff]
  %v806 = vld [vmem:[%s1 + $0x1850] sm:$0xff]
  %v807 = vld [vmem:[%s1 + $0x1858] sm:$0xff]
  %v808 = vld [vmem:[%s1 + $0x1860] sm:$0xff]
  %v809 = vld [vmem:[%s1 + $0x1868] sm:$0xff]
  %v810 = vld [vmem:[%s1 + $0x1870] sm:$0xff]
  %v811 = vld [vmem:[%s1 + $0x1878] sm:$0xff]
  %v812 = vld [vmem:[%s1 + $0x1880] sm:$0xff]
  %v813 = vld [vmem:[%s1 + $0x1888] sm:$0xff]
  %v814 = vld [vmem:[%s1 + $0x1890] sm:$0xff]
  %v815 = vld [vmem:[%s1 + $0x1898] sm:$0xff]
  %v816 = vld [vmem:[%s1 + $0x18a0] sm:$0xff]
  %v817 = vld [vmem:[%s1 + $0x18a8] sm:$0xff]
  %v818 = vld [vmem:[%s1 + $0x18b0] sm:$0xff]
  %v819 = vld [vmem:[%s1 + $0x18b8] sm:$0xff]
  %v820 = vld [vmem:[%s1 + $0x18c0] sm:$0xff]
  %v821 = vld [vmem:[%s1 + $0x18c8] sm:$0xff]
  %v822 = vld [vmem:[%s1 + $0x18d0] sm:$0xff]
  %v823 = vld [vmem:[%s1 + $0x18d8] sm:$0xff]
  %v824 = vld [vmem:[%s1 + $0x18e0] sm:$0xff]
  %v825 = vld [vmem:[%s1 + $0x18e8] sm:$0xff]
  %v826 = vld [vmem:[%s1 + $0x18f0] sm:$0xff]
  %v827 = vld [vmem:[%s1 + $0x18f8] sm:$0xff]
  %v828 = vld [vmem:[%s1 + $0x1900] sm:$0xff]
  %v829 = vld [vmem:[%s1 + $0x1908] sm:$0xff]
  %v830 = vld [vmem:[%s1 + $0x1910] sm:$0xff]
  %v831 = vld [vmem:[%s1 + $0x1918] sm:$0xff]
  %v832 = vld [vmem:[%s1 + $0x1920] sm:$0xff]
  %v833 = vld [vmem:[%s1 + $0x1928] sm:$0xff]
  %v834 = vld [vmem:[%s1 + $0x1930] sm:$0xff]
  %v835 = vld [vmem:[%s1 + $0x1938] sm:$0xff]
  %v836 = vld [vmem:[%s1 + $0x1940] sm:$0xff]
  %v837 = vld [vmem:[%s1 + $0x1948] sm:$0xff]
  %v838 = vld [vmem:[%s1 + $0x1950] sm:$0xff]
  %v839 = vld [vmem:[%s1 + $0x1958] sm:$0xff]
  %v840 = vld [vmem:[%s1 + $0x1960] sm:$0xff]
  %v841 = vld [vmem:[%s1 + $0x1968] sm:$0xff]
  %v842 = vld [vmem:[%s1 + $0x1970] sm:$0xff]
  %v843 = vld [vmem:[%s1 + $0x1978] sm:$0xff]
  %v844 = vld [vmem:[%s1 + $0x1980] sm:$0xff]
  %v845 = vld [vmem:[%s1 + $0x1988] sm:$0xff]
  %v846 = vld [vmem:[%s1 + $0x1990] sm:$0xff]
  %v847 = vld [vmem:[%s1 + $0x1998] sm:$0xff]
  %v848 = vld [vmem:[%s1 + $0x19a0] sm:$0xff]
  %v849 = vld [vmem:[%s1 + $0x19a8] sm:$0xff]
  %v850 = vld [vmem:[%s1 + $0x19b0] sm:$0xff]
  %v851 = vld [vmem:[%s1 + $0x19b8] sm:$0xff]
  %v852 = vld [vmem:[%s1 + $0x19c0] sm:$0xff]
  %v853 = vld [vmem:[%s1 + $0x19c8] sm:$0xff]
  %v854 = vld [vmem:[%s1 + $0x19d0] sm:$0xff]
  %v855 = vld [vmem:[%s1 + $0x19d8] sm:$0xff]
  %v856 = vld [vmem:[%s1 + $0x19e0] sm:$0xff]
  %v857 = vld [vmem:[%s1 + $0x19e8] sm:$0xff]
  %v858 = vld [vmem:[%s1 + $0x19f0] sm:$0xff]
  %v859 = vld [vmem:[%s1 + $0x19f8] sm:$0xff]
  %v860 = vld [vmem:[%s1 + $0x1a00] sm:$0xff]
  %v861 = vld [vmem:[%s1 + $0x1a08] sm:$0xff]
  %v862 = vld [vmem:[%s1 + $0x1a10] sm:$0xff]
  %v863 = vld [vmem:[%s1 + $0x1a18] sm:$0xff]
  %v864 = vld [vmem:[%s1 + $0x1a20] sm:$0xff]
  %v865 = vld [vmem:[%s1 + $0x1a28] sm:$0xff]
  %v866 = vld [vmem:[%s1 + $0x1a30] sm:$0xff]
  %v867 = vld [vmem:[%s1 + $0x1a38] sm:$0xff]
  %v868 = vld [vmem:[%s1 + $0x1a40] sm:$0xff]
  %v869 = vld [vmem:[%s1 + $0x1a48] sm:$0xff]
  %v870 = vld [vmem:[%s1 + $0x1a50] sm:$0xff]
  %v871 = vld [vmem:[%s1 + $0x1a58] sm:$0xff]
  %v872 = vld [vmem:[%s1 + $0x1a60] sm:$0xff]
  %v873 = vld [vmem:[%s1 + $0x1a68] sm:$0xff]
  %v874 = vld [vmem:[%s1 + $0x1a70] sm:$0xff]
  %v875 = vld [vmem:[%s1 + $0x1a78] sm:$0xff]
  %v876 = vld [vmem:[%s1 + $0x1a80] sm:$0xff]
  %v877 = vld [vmem:[%s1 + $0x1a88] sm:$0xff]
  %v878 = vld [vmem:[%s1 + $0x1a90] sm:$0xff]
  %v879 = vld [vmem:[%s1 + $0x1a98] sm:$0xff]
  %v880 = vld [vmem:[%s1 + $0x1aa0] sm:$0xff]
  %v881 = vld [vmem:[%s1 + $0x1aa8] sm:$0xff]
  %v882 = vld [vmem:[%s1 + $0x1ab0] sm:$0xff]
  %v883 = vld [vmem:[%s1 + $0x1ab8] sm:$0xff]
  %v884 = vld [vmem:[%s1 + $0x1ac0] sm:$0xff]
  %v885 = vld [vmem:[%s1 + $0x1ac8] sm:$0xff]
  %v886 = vld [vmem:[%s1 + $0x1ad0] sm:$0xff]
  %v887 = vld [vmem:[%s1 + $0x1ad8] sm:$0xff]
  %v888 = vld [vmem:[%s1 + $0x1ae0] sm:$0xff]
  %v889 = vld [vmem:[%s1 + $0x1ae8] sm:$0xff]
  %v890 = vld [vmem:[%s1 + $0x1af0] sm:$0xff]
  %v891 = vld [vmem:[%s1 + $0x1af8] sm:$0xff]
  %v892 = vld [vmem:[%s1 + $0x1b00] sm:$0xff]
  %v893 = vld [vmem:[%s1 + $0x1b08] sm:$0xff]
  %v894 = vld [vmem:[%s1 + $0x1b10] sm:$0xff]
  %v895 = vld [vmem:[%s1 + $0x1b18] sm:$0xff]
  %v896 = vld [vmem:[%s1 + $0x1b20] sm:$0xff]
  %v897 = vld [vmem:[%s1 + $0x1b28] sm:$0xff]
  %v898 = vld [vmem:[%s1 + $0x1b30] sm:$0xff]
  %v899 = vld [vmem:[%s1 + $0x1b38] sm:$0xff]
  %v900 = vld [vmem:[%s1 + $0x1b40] sm:$0xff]
  %v901 = vld [vmem:[%s1 + $0x1b48] sm:$0xff]
  %v902 = vld [vmem:[%s1 + $0x1b50] sm:$0xff]
  %v903 = vld [vmem:[%s1 + $0x1b58] sm:$0xff]
  %v904 = vld [vmem:[%s1 + $0x1b60] sm:$0xff]
  %v905 = vld [vmem:[%s1 + $0x1b68] sm:$0xff]
  %v906 = vld [vmem:[%s1 + $0x1b70] sm:$0xff]
  %v907 = vld [vmem:[%s1 + $0x1b78] sm:$0xff]
  %v908 = vld [vmem:[%s1 + $0x1b80] sm:$0xff]
  %v909 = vld [vmem:[%s1 + $0x1b88] sm:$0xff]
  %v910 = vld [vmem:[%s1 + $0x1b90] sm:$0xff]
  %v911 = vld [vmem:[%s1 + $0x1b98] sm:$0xff]
  %v912 = vld [vmem:[%s1 + $0x1ba0] sm:$0xff]
  %v913 = vld [vmem:[%s1 + $0x1ba8] sm:$0xff]
  %v914 = vld [vmem:[%s1 + $0x1bb0] sm:$0xff]
  %v915 = vld [vmem:[%s1 + $0x1bb8] sm:$0xff]
  %v916 = vld [vmem:[%s1 + $0x1bc0] sm:$0xff]
  %v917 = vld [vmem:[%s1 + $0x1bc8] sm:$0xff]
  %v918 = vld [vmem:[%s1 + $0x1bd0] sm:$0xff]
  %v919 = vld [vmem:[%s1 + $0x1bd8] sm:$0xff]
  %v920 = vld [vmem:[%s1 + $0x1be0] sm:$0xff]
  %v921 = vld [vmem:[%s1 + $0x1be8] sm:$0xff]
  %v922 = vld [vmem:[%s1 + $0x1bf0] sm:$0xff]
  %v923 = vld [vmem:[%s1 + $0x1bf8] sm:$0xff]
  %v924 = vld [vmem:[%s1 + $0x1c00] sm:$0xff]
  %v925 = vld [vmem:[%s1 + $0x1c08] sm:$0xff]
  %v926 = vld [vmem:[%s1 + $0x1c10] sm:$0xff]
  %v927 = vld [vmem:[%s1 + $0x1c18] sm:$0xff]
  %v928 = vld [vmem:[%s1 + $0x1c20] sm:$0xff]
  %v929 = vld [vmem:[%s1 + $0x1c28] sm:$0xff]
  %v930 = vld [vmem:[%s1 + $0x1c30] sm:$0xff]
  %v931 = vld [vmem:[%s1 + $0x1c38] sm:$0xff]
  %v932 = vld [vmem:[%s1 + $0x1c40] sm:$0xff]
  %v933 = vld [vmem:[%s1 + $0x1c48] sm:$0xff]
  %v934 = vld [vmem:[%s1 + $0x1c50] sm:$0xff]
  %v935 = vld [vmem:[%s1 + $0x1c58] sm:$0xff]
  %v936 = vld [vmem:[%s1 + $0x1c60] sm:$0xff]
  %v937 = vld [vmem:[%s1 + $0x1c68] sm:$0xff]
  %v938 = vld [vmem:[%s1 + $0x1c70] sm:$0xff]
  %v939 = vld [vmem:[%s1 + $0x1c78] sm:$0xff]
  %v940 = vld [vmem:[%s1 + $0x1c80] sm:$0xff]
  %v941 = vld [vmem:[%s1 + $0x1c88] sm:$0xff]
  %v942 = vld [vmem:[%s1 + $0x1c90] sm:$0xff]
  %v943 = vld [vmem:[%s1 + $0x1c98] sm:$0xff]
  %v944 = vld [vmem:[%s1 + $0x1ca0] sm:$0xff]
  %v945 = vld [vmem:[%s1 + $0x1ca8] sm:$0xff]
  %v946 = vld [vmem:[%s1 + $0x1cb0] sm:$0xff]
  %v947 = vld [vmem:[%s1 + $0x1cb8] sm:$0xff]
  %v948 = vld [vmem:[%s1 + $0x1cc0] sm:$0xff]
  %v949 = vld [vmem:[%s1 + $0x1cc8] sm:$0xff]
  %v950 = vld [vmem:[%s1 + $0x1cd0] sm:$0xff]
  %v951 = vld [vmem:[%s1 + $0x1cd8] sm:$0xff]
  %v952 = vld [vmem:[%s1 + $0x1ce0] sm:$0xff]
  %v953 = vld [vmem:[%s1 + $0x1ce8] sm:$0xff]
  %v954 = vld [vmem:[%s1 + $0x1cf0] sm:$0xff]
  %v955 = vld [vmem:[%s1 + $0x1cf8] sm:$0xff]
  %v956 = vld [vmem:[%s1 + $0x1d00] sm:$0xff]
  %v957 = vld [vmem:[%s1 + $0x1d08] sm:$0xff]
  %v958 = vld [vmem:[%s1 + $0x1d10] sm:$0xff]
  %v959 = vld [vmem:[%s1 + $0x1d18] sm:$0xff]
  %v960 = vld [vmem:[%s1 + $0x1d20] sm:$0xff]
  %v961 = vld [vmem:[%s1 + $0x1d28] sm:$0xff]
  %v962 = vld [vmem:[%s1 + $0x1d30] sm:$0xff]
  %v963 = vld [vmem:[%s1 + $0x1d38] sm:$0xff]
  %v964 = vld [vmem:[%s1 + $0x1d40] sm:$0xff]
  %v965 = vld [vmem:[%s1 + $0x1d48] sm:$0xff]
  %v966 = vld [vmem:[%s1 + $0x1d50] sm:$0xff]
  %v967 = vld [vmem:[%s1 + $0x1d58] sm:$0xff]
  %v968 = vld [vmem:[%s1 + $0x1d60] sm:$0xff]
  %v969 = vld [vmem:[%s1 + $0x1d68] sm:$0xff]
  %v970 = vld [vmem:[%s1 + $0x1d70] sm:$0xff]
  %v971 = vld [vmem:[%s1 + $0x1d78] sm:$0xff]
  %v972 = vld [vmem:[%s1 + $0x1d80] sm:$0xff]
  %v973 = vld [vmem:[%s1 + $0x1d88] sm:$0xff]
  %v974 = vld [vmem:[%s1 + $0x1d90] sm:$0xff]
  %v975 = vld [vmem:[%s1 + $0x1d98] sm:$0xff]
  %v976 = vld [vmem:[%s1 + $0x1da0] sm:$0xff]
  %v977 = vld [vmem:[%s1 + $0x1da8] sm:$0xff]
  %v978 = vld [vmem:[%s1 + $0x1db0] sm:$0xff]
  %v979 = vld [vmem:[%s1 + $0x1db8] sm:$0xff]
  %v980 = vld [vmem:[%s1 + $0x1dc0] sm:$0xff]
  %v981 = vld [vmem:[%s1 + $0x1dc8] sm:$0xff]
  %v982 = vld [vmem:[%s1 + $0x1dd0] sm:$0xff]
  %v983 = vld [vmem:[%s1 + $0x1dd8] sm:$0xff]
  %v984 = vld [vmem:[%s1 + $0x1de0] sm:$0xff]
  %v985 = vld [vmem:[%s1 + $0x1de8] sm:$0xff]
  %v986 = vld [vmem:[%s1 + $0x1df0] sm:$0xff]
  %v987 = vld [vmem:[%s1 + $0x1df8] sm:$0xff]
  %v988 = vld [vmem:[%s1 + $0x1e00] sm:$0xff]
  %v989 = vld [vmem:[%s1 + $0x1e08] sm:$0xff]
  %v990 = vld [vmem:[%s1 + $0x1e10] sm:$0xff]
  %v991 = vld [vmem:[%s1 + $0x1e18] sm:$0xff]
  %v992 = vld [vmem:[%s1 + $0x1e20] sm:$0xff]
  %v993 = vld [vmem:[%s1 + $0x1e28] sm:$0xff]
  %v994 = vld [vmem:[%s1 + $0x1e30] sm:$0xff]
  %v995 = vld [vmem:[%s1 + $0x1e38] sm:$0xff]
  %v996 = vld [vmem:[%s1 + $0x1e40] sm:$0xff]
  %v997 = vld [vmem:[%s1 + $0x1e48] sm:$0xff]
  %v998 = vld [vmem:[%s1 + $0x1e50] sm:$0xff]
  %v999 = vld [vmem:[%s1 + $0x1e58] sm:$0xff]
  %v1000 = vld [vmem:[%s1 + $0x1e60] sm:$0xff]
  %v1001 = vld [vmem:[%s1 + $0x1e68] sm:$0xff]
  %v1002 = vld [vmem:[%s1 + $0x1e70] sm:$0xff]
  %v1003 = vld [vmem:[%s1 + $0x1e78] sm:$0xff]
  %v1004 = vld [vmem:[%s1 + $0x1e80] sm:$0xff]
  %v1005 = vld [vmem:[%s1 + $0x1e88] sm:$0xff]
  %v1006 = vld [vmem:[%s1 + $0x1e90] sm:$0xff]
  %v1007 = vld [vmem:[%s1 + $0x1e98] sm:$0xff]
  %v1008 = vld [vmem:[%s1 + $0x1ea0] sm:$0xff]
  %v1009 = vld [vmem:[%s1 + $0x1ea8] sm:$0xff]
  %v1010 = vld [vmem:[%s1 + $0x1eb0] sm:$0xff]
  %v1011 = vld [vmem:[%s1 + $0x1eb8] sm:$0xff]
  %v1012 = vld [vmem:[%s1 + $0x1ec0] sm:$0xff]
  %v1013 = vld [vmem:[%s1 + $0x1ec8] sm:$0xff]
  %v1014 = vld [vmem:[%s1 + $0x1ed0] sm:$0xff]
  %v1015 = vld [vmem:[%s1 + $0x1ed8] sm:$0xff]
  %v1016 = vld [vmem:[%s1 + $0x1ee0] sm:$0xff]
  %v1017 = vld [vmem:[%s1 + $0x1ee8] sm:$0xff]
  %v1018 = vld [vmem:[%s1 + $0x1ef0] sm:$0xff]
  %v1019 = vld [vmem:[%s1 + $0x1ef8] sm:$0xff]
  %v1020 = vld [vmem:[%s1 + $0x1f00] sm:$0xff]
  %v1021 = vld [vmem:[%s1 + $0x1f08] sm:$0xff]
  %v1022 = vld [vmem:[%s1 + $0x1f10] sm:$0xff]
  %v1023 = vld [vmem:[%s1 + $0x1f18] sm:$0xff]
  %v1024 = vld [vmem:[%s1 + $0x1f20] sm:$0xff]
  %v1025 = vld [vmem:[%s1 + $0x1f28] sm:$0xff]
  %v1026 = vld [vmem:[%s1 + $0x1f30] sm:$0xff]
  %v1027 = vld [vmem:[%s1 + $0x1f38] sm:$0xff]
  %v1028 = vld [vmem:[%s1 + $0x1f40] sm:$0xff]
  %v1029 = vld [vmem:[%s1 + $0x1f48] sm:$0xff]
  %v1030 = vld [vmem:[%s1 + $0x1f50] sm:$0xff]
  %v1031 = vld [vmem:[%s1 + $0x1f58] sm:$0xff]
  %v1032 = vld [vmem:[%s1 + $0x1f60] sm:$0xff]
  %v1033 = vld [vmem:[%s1 + $0x1f68] sm:$0xff]
  %v1034 = vld [vmem:[%s1 + $0x1f70] sm:$0xff]
  %v1035 = vld [vmem:[%s1 + $0x1f78] sm:$0xff]
  %v1036 = vld [vmem:[%s1 + $0x1f80] sm:$0xff]
  %v1037 = vld [vmem:[%s1 + $0x1f88] sm:$0xff]
  %v1038 = vld [vmem:[%s1 + $0x1f90] sm:$0xff]
  %v1039 = vld [vmem:[%s1 + $0x1f98] sm:$0xff]
  %v1040 = vld [vmem:[%s1 + $0x1fa0] sm:$0xff]
  %v1041 = vld [vmem:[%s1 + $0x1fa8] sm:$0xff]
  %v1042 = vld [vmem:[%s1 + $0x1fb0] sm:$0xff]
  %v1043 = vld [vmem:[%s1 + $0x1fb8] sm:$0xff]
  %v1044 = vld [vmem:[%s1 + $0x1fc0] sm:$0xff]
  %v1045 = vld [vmem:[%s1 + $0x1fc8] sm:$0xff]
  %v1046 = vld [vmem:[%s1 + $0x1fd0] sm:$0xff]
  %v1047 = vld [vmem:[%s1 + $0x1fd8] sm:$0xff]
  %v1048 = vld [vmem:[%s1 + $0x1fe0] sm:$0xff]
  %v1049 = vld [vmem:[%s1 + $0x1fe8] sm:$0xff]
  %v1050 = vld [vmem:[%s1 + $0x1ff0] sm:$0xff]
  %v1051 = vld [vmem:[%s1 + $0x1ff8] sm:$0xff]
  %v1052 = vld [vmem:[%s1 + $0x2000] sm:$0xff]
  %v1053 = vld [vmem:[%s1 + $0x2008] sm:$0xff]
  %v1054 = vld [vmem:[%s1 + $0x2010] sm:$0xff]
  %v1055 = vld [vmem:[%s1 + $0x2018] sm:$0xff]
  %v1056 = vld [vmem:[%s1 + $0x2020] sm:$0xff]
  %v1057 = vld [vmem:[%s1 + $0x2028] sm:$0xff]
  %v1058 = vld [vmem:[%s1 + $0x2030] sm:$0xff]
  %v1059 = vld [vmem:[%s1 + $0x2038] sm:$0xff]
  %v1060 = vld [vmem:[%s1 + $0x2040] sm:$0xff]
  %v1061 = vld [vmem:[%s1 + $0x2048] sm:$0xff]
  %v1062 = vld [vmem:[%s1 + $0x2050] sm:$0xff]
  %v1063 = vld [vmem:[%s1 + $0x2058] sm:$0xff]
  %v1064 = vld [vmem:[%s1 + $0x2060] sm:$0xff]
  %v1065 = vld [vmem:[%s1 + $0x2068] sm:$0xff]
  %v1066 = vld [vmem:[%s1 + $0x2070] sm:$0xff]
  %v1067 = vld [vmem:[%s1 + $0x2078] sm:$0xff]
  %v1068 = vld [vmem:[%s1 + $0x2080] sm:$0xff]
  %v1069 = vld [vmem:[%s1 + $0x2088] sm:$0xff]
  %v1070 = vld [vmem:[%s1 + $0x2090] sm:$0xff]
  %v1071 = vld [vmem:[%s1 + $0x2098] sm:$0xff]
  %v1072 = vld [vmem:[%s1 + $0x20a0] sm:$0xff]
  %v1073 = vld [vmem:[%s1 + $0x20a8] sm:$0xff]
  %v1074 = vld [vmem:[%s1 + $0x20b0] sm:$0xff]
  %v1075 = vld [vmem:[%s1 + $0x20b8] sm:$0xff]
  %v1076 = vld [vmem:[%s1 + $0x20c0] sm:$0xff]
  %v1077 = vld [vmem:[%s1 + $0x20c8] sm:$0xff]
  %v1078 = vld [vmem:[%s1 + $0x20d0] sm:$0xff]
  %v1079 = vld [vmem:[%s1 + $0x20d8] sm:$0xff]
  %v1080 = vld [vmem:[%s1 + $0x20e0] sm:$0xff]
  %v1081 = vld [vmem:[%s1 + $0x20e8] sm:$0xff]
  %v1082 = vld [vmem:[%s1 + $0x20f0] sm:$0xff]
  %v1083 = vld [vmem:[%s1 + $0x20f8] sm:$0xff]
  %v1084 = vld [vmem:[%s1 + $0x2100] sm:$0xff]
  %v1085 = vld [vmem:[%s1 + $0x2108] sm:$0xff]
  %v1086 = vld [vmem:[%s1 + $0x2110] sm:$0xff]
  %v1087 = vld [vmem:[%s1 + $0x2118] sm:$0xff]
  %v1088 = vld [vmem:[%s1 + $0x2120] sm:$0xff]
  %v1089 = vld [vmem:[%s1 + $0x2128] sm:$0xff]
  %v1090 = vld [vmem:[%s1 + $0x2130] sm:$0xff]
  %v1091 = vld [vmem:[%s1 + $0x2138] sm:$0xff]
  %v1092 = vld [vmem:[%s1 + $0x2140] sm:$0xff]
  %v1093 = vld [vmem:[%s1 + $0x2148] sm:$0xff]
  %v1094 = vld [vmem:[%s1 + $0x2150] sm:$0xff]
  %v1095 = vld [vmem:[%s1 + $0x2158] sm:$0xff]
  %v1096 = vld [vmem:[%s1 + $0x2160] sm:$0xff]
  %v1097 = vld [vmem:[%s1 + $0x2168] sm:$0xff]
  %v1098 = vld [vmem:[%s1 + $0x2170] sm:$0xff]
  %v1099 = vld [vmem:[%s1 + $0x2178] sm:$0xff]
  %v1100 = vld [vmem:[%s1 + $0x2180] sm:$0xff]
  %v1101 = vld [vmem:[%s1 + $0x2188] sm:$0xff]
  %v1102 = vld [vmem:[%s1 + $0x2190] sm:$0xff]
  %v1103 = vld [vmem:[%s1 + $0x2198] sm:$0xff]
  %v1104 = vld [vmem:[%s1 + $0x21a0] sm:$0xff]
  %v1105 = vld [vmem:[%s1 + $0x21a8] sm:$0xff]
  %v1106 = vld [vmem:[%s1 + $0x21b0] sm:$0xff]
  %v1107 = vld [vmem:[%s1 + $0x21b8] sm:$0xff]
  %v1108 = vld [vmem:[%s1 + $0x21c0] sm:$0xff]
  %v1109 = vld [vmem:[%s1 + $0x21c8] sm:$0xff]
  %v1110 = vld [vmem:[%s1 + $0x21d0] sm:$0xff]
  %v1111 = vld [vmem:[%s1 + $0x21d8] sm:$0xff]
  %v1112 = vld [vmem:[%s1 + $0x21e0] sm:$0xff]
  %v1113 = vld [vmem:[%s1 + $0x21e8] sm:$0xff]
  %v1114 = vld [vmem:[%s1 + $0x21f0] sm:$0xff]
  %v1115 = vld [vmem:[%s1 + $0x21f8] sm:$0xff]
  %v1116 = vld [vmem:[%s1 + $0x2200] sm:$0xff]
  %v1117 = vld [vmem:[%s1 + $0x2208] sm:$0xff]
  %v1118 = vld [vmem:[%s1 + $0x2210] sm:$0xff]
  %v1119 = vld [vmem:[%s1 + $0x2218] sm:$0xff]
  %v1120 = vld [vmem:[%s1 + $0x2220] sm:$0xff]
  %v1121 = vld [vmem:[%s1 + $0x2228] sm:$0xff]
  %v1122 = vld [vmem:[%s1 + $0x2230] sm:$0xff]
  %v1123 = vld [vmem:[%s1 + $0x2238] sm:$0xff]
  %v1124 = vld [vmem:[%s1 + $0x2240] sm:$0xff]
  %v1125 = vld [vmem:[%s1 + $0x2248] sm:$0xff]
  %v1126 = vld [vmem:[%s1 + $0x2250] sm:$0xff]
  %v1127 = vld [vmem:[%s1 + $0x2258] sm:$0xff]
  %v1128 = vld [vmem:[%s1 + $0x2260] sm:$0xff]
  %v1129 = vld [vmem:[%s1 + $0x2268] sm:$0xff]
  %v1130 = vld [vmem:[%s1 + $0x2270] sm:$0xff]
  %v1131 = vld [vmem:[%s1 + $0x2278] sm:$0xff]
  %v1132 = vld [vmem:[%s1 + $0x2280] sm:$0xff]
  %v1133 = vld [vmem:[%s1 + $0x2288] sm:$0xff]
  %v1134 = vld [vmem:[%s1 + $0x2290] sm:$0xff]
  %v1135 = vld [vmem:[%s1 + $0x2298] sm:$0xff]
  %v1136 = vld [vmem:[%s1 + $0x22a0] sm:$0xff]
  %v1137 = vld [vmem:[%s1 + $0x22a8] sm:$0xff]
  %v1138 = vld [vmem:[%s1 + $0x22b0] sm:$0xff]
  %v1139 = vld [vmem:[%s1 + $0x22b8] sm:$0xff]
  %v1140 = vld [vmem:[%s1 + $0x22c0] sm:$0xff]
  %v1141 = vld [vmem:[%s1 + $0x22c8] sm:$0xff]
  %v1142 = vld [vmem:[%s1 + $0x22d0] sm:$0xff]
  %v1143 = vld [vmem:[%s1 + $0x22d8] sm:$0xff]
  %v1144 = vld [vmem:[%s1 + $0x22e0] sm:$0xff]
  %v1145 = vld [vmem:[%s1 + $0x22e8] sm:$0xff]
  %v1146 = vld [vmem:[%s1 + $0x22f0] sm:$0xff]
  %v1147 = vld [vmem:[%s1 + $0x22f8] sm:$0xff]
  %v1148 = vld [vmem:[%s1 + $0x2300] sm:$0xff]
  %v1149 = vld [vmem:[%s1 + $0x2308] sm:$0xff]
  %v1150 = vld [vmem:[%s1 + $0x2310] sm:$0xff]
  %v1151 = vld [vmem:[%s1 + $0x2318] sm:$0xff]
  %v1152 = vld [vmem:[%s1 + $0x2320] sm:$0xff]
  %v1153 = vld [vmem:[%s1 + $0x2328] sm:$0xff]
  %v1154 = vld [vmem:[%s1 + $0x2330] sm:$0xff]
  %v1155 = vld [vmem:[%s1 + $0x2338] sm:$0xff]
  %v1156 = vld [vmem:[%s1 + $0x2340] sm:$0xff]
  %v1157 = vld [vmem:[%s1 + $0x2348] sm:$0xff]
  %v1158 = vld [vmem:[%s1 + $0x2350] sm:$0xff]
  %v1159 = vld [vmem:[%s1 + $0x2358] sm:$0xff]
  %v1160 = vld [vmem:[%s1 + $0x2360] sm:$0xff]
  %v1161 = vld [vmem:[%s1 + $0x2368] sm:$0xff]
  %v1162 = vld [vmem:[%s1 + $0x2370] sm:$0xff]
  %v1163 = vld [vmem:[%s1 + $0x2378] sm:$0xff]
  %v1164 = vld [vmem:[%s1 + $0x2380] sm:$0xff]
  %v1165 = vld [vmem:[%s1 + $0x2388] sm:$0xff]
  %v1166 = vld [vmem:[%s1 + $0x2390] sm:$0xff]
  %v1167 = vld [vmem:[%s1 + $0x2398] sm:$0xff]
  %v1168 = vld [vmem:[%s1 + $0x23a0] sm:$0xff]
  %v1169 = vld [vmem:[%s1 + $0x23a8] sm:$0xff]
  %v1170 = vld [vmem:[%s1 + $0x23b0] sm:$0xff]
  %v1171 = vld [vmem:[%s1 + $0x23b8] sm:$0xff]
  %v1172 = vld [vmem:[%s1 + $0x23c0] sm:$0xff]
  %v1173 = vld [vmem:[%s1 + $0x23c8] sm:$0xff]
  %v1174 = vld [vmem:[%s1 + $0x23d0] sm:$0xff]
  %v1175 = vld [vmem:[%s1 + $0x23d8] sm:$0xff]
  %v1176 = vld [vmem:[%s1 + $0x23e0] sm:$0xff]
  %v1177 = vld [vmem:[%s1 + $0x23e8] sm:$0xff]
  %v1178 = vld [vmem:[%s1 + $0x23f0] sm:$0xff]
  %v1179 = vld [vmem:[%s1 + $0x23f8] sm:$0xff]
  %v1180 = vld [vmem:[%s1 + $0x2400] sm:$0xff]
  %v1181 = vld [vmem:[%s1 + $0x2408] sm:$0xff]
  %v1182 = vld [vmem:[%s1 + $0x2410] sm:$0xff]
  %v1183 = vld [vmem:[%s1 + $0x2418] sm:$0xff]
  %v1184 = vld [vmem:[%s1 + $0x2420] sm:$0xff]
  %v1185 = vld [vmem:[%s1 + $0x2428] sm:$0xff]
  %v1186 = vld [vmem:[%s1 + $0x2430] sm:$0xff]
  %v1187 = vld [vmem:[%s1 + $0x2438] sm:$0xff]
  %v1188 = vld [vmem:[%s1 + $0x2440] sm:$0xff]
  %v1189 = vld [vmem:[%s1 + $0x2448] sm:$0xff]
  %v1190 = vld [vmem:[%s1 + $0x2450] sm:$0xff]
  %v1191 = vld [vmem:[%s1 + $0x2458] sm:$0xff]
  %v1192 = vld [vmem:[%s1 + $0x2460] sm:$0xff]
  %v1193 = vld [vmem:[%s1 + $0x2468] sm:$0xff]
  %v1194 = vld [vmem:[%s1 + $0x2470] sm:$0xff]
  %v1195 = vld [vmem:[%s1 + $0x2478] sm:$0xff]
  %v1196 = vld [vmem:[%s1 + $0x2480] sm:$0xff]
  %v1197 = vld [vmem:[%s1 + $0x2488] sm:$0xff]
  %v1198 = vld [vmem:[%s1 + $0x2490] sm:$0xff]
  %v1199 = vld [vmem:[%s1 + $0x2498] sm:$0xff]
  %v1200 = vld [vmem:[%s1 + $0x24a0] sm:$0xff]
  %v1201 = vld [vmem:[%s1 + $0x24a8] sm:$0xff]
  %v1202 = vld [vmem:[%s1 + $0x24b0] sm:$0xff]
  %v1203 = vld [vmem:[%s1 + $0x24b8] sm:$0xff]
  %v1204 = vld [vmem:[%s1 + $0x24c0] sm:$0xff]
  %v1205 = vld [vmem:[%s1 + $0x24c8] sm:$0xff]
  %v1206 = vld [vmem:[%s1 + $0x24d0] sm:$0xff]
  %v1207 = vld [vmem:[%s1 + $0x24d8] sm:$0xff]
  %v1208 = vld [vmem:[%s1 + $0x24e0] sm:$0xff]
  %v1209 = vld [vmem:[%s1 + $0x24e8] sm:$0xff]
  %v1210 = vld [vmem:[%s1 + $0x24f0] sm:$0xff]
  %v1211 = vld [vmem:[%s1 + $0x24f8] sm:$0xff]
  %v1212 = vld [vmem:[%s1 + $0x2500] sm:$0xff]
  %v1213 = vld [vmem:[%s1 + $0x2508] sm:$0xff]
  %v1214 = vld [vmem:[%s1 + $0x2510] sm:$0xff]
  %v1215 = vld [vmem:[%s1 + $0x2518] sm:$0xff]
  %v1216 = vld [vmem:[%s1 + $0x2520] sm:$0xff]
  %v1217 = vld [vmem:[%s1 + $0x2528] sm:$0xff]
  %v1218 = vld [vmem:[%s1 + $0x2530] sm:$0xff]
  %v1219 = vld [vmem:[%s1 + $0x2538] sm:$0xff]
  %v1220 = vld [vmem:[%s1 + $0x2540] sm:$0xff]
  %v1221 = vld [vmem:[%s1 + $0x2548] sm:$0xff]
  %v1222 = vld [vmem:[%s1 + $0x2550] sm:$0xff]
  %v1223 = vld [vmem:[%s1 + $0x2558] sm:$0xff]
  %v1224 = vld [vmem:[%s1 + $0x2560] sm:$0xff]
  %v1225 = vld [vmem:[%s1 + $0x2568] sm:$0xff]
  %v1226 = vld [vmem:[%s1 + $0x2570] sm:$0xff]
  %v1227 = vld [vmem:[%s1 + $0x2578] sm:$0xff]
  %v1228 = vld [vmem:[%s1 + $0x2580] sm:$0xff]
  %v1229 = vld [vmem:[%s1 + $0x2588] sm:$0xff]
  %v1230 = vld [vmem:[%s1 + $0x2590] sm:$0xff]
  %v1231 = vld [vmem:[%s1 + $0x2598] sm:$0xff]
  %v1232 = vld [vmem:[%s1 + $0x25a0] sm:$0xff]
  %v1233 = vld [vmem:[%s1 + $0x25a8] sm:$0xff]
  %v1234 = vld [vmem:[%s1 + $0x25b0] sm:$0xff]
  %v1235 = vld [vmem:[%s1 + $0x25b8] sm:$0xff]
  %v1236 = vld [vmem:[%s1 + $0x25c0] sm:$0xff]
  %v1237 = vld [vmem:[%s1 + $0x25c8] sm:$0xff]
  %v1238 = vld [vmem:[%s1 + $0x25d0] sm:$0xff]
  %v1239 = vld [vmem:[%s1 + $0x25d8] sm:$0xff]
  %v1240 = vld [vmem:[%s1 + $0x25e0] sm:$0xff]
  %v1241 = vld [vmem:[%s1 + $0x25e8] sm:$0xff]
  %v1242 = vld [vmem:[%s1 + $0x25f0] sm:$0xff]
  %v1243 = vld [vmem:[%s1 + $0x25f8] sm:$0xff]
  %v1244 = vld [vmem:[%s1 + $0x2600] sm:$0xff]
  %v1245 = vld [vmem:[%s1 + $0x2608] sm:$0xff]
  %v1246 = vld [vmem:[%s1 + $0x2610] sm:$0xff]
  %v1247 = vld [vmem:[%s1 + $0x2618] sm:$0xff]
  %v1248 = vld [vmem:[%s1 + $0x2620] sm:$0xff]
  %v1249 = vld [vmem:[%s1 + $0x2628] sm:$0xff]
  %v1250 = vld [vmem:[%s1 + $0x2630] sm:$0xff]
  %v1251 = vld [vmem:[%s1 + $0x2638] sm:$0xff]
  %v1252 = vld [vmem:[%s1 + $0x2640] sm:$0xff]
  %v1253 = vld [vmem:[%s1 + $0x2648] sm:$0xff]
  %v1254 = vld [vmem:[%s1 + $0x2650] sm:$0xff]
  %v1255 = vld [vmem:[%s1 + $0x2658] sm:$0xff]
  %v1256 = vld [vmem:[%s1 + $0x2660] sm:$0xff]
  %v1257 = vld [vmem:[%s1 + $0x2668] sm:$0xff]
  %v1258 = vld [vmem:[%s1 + $0x2670] sm:$0xff]
  %v1259 = vld [vmem:[%s1 + $0x2678] sm:$0xff]
  %v1260 = vld [vmem:[%s1 + $0x2680] sm:$0xff]
  %v1261 = vld [vmem:[%s1 + $0x2688] sm:$0xff]
  %v1262 = vld [vmem:[%s1 + $0x2690] sm:$0xff]
  %v1263 = vld [vmem:[%s1 + $0x2698] sm:$0xff]
  %v1264 = vld [vmem:[%s1 + $0x26a0] sm:$0xff]
  %v1265 = vld [vmem:[%s1 + $0x26a8] sm:$0xff]
  %v1266 = vld [vmem:[%s1 + $0x26b0] sm:$0xff]
  %v1267 = vld [vmem:[%s1 + $0x26b8] sm:$0xff]
  %v1268 = vld [vmem:[%s1 + $0x26c0] sm:$0xff]
  %v1269 = vld [vmem:[%s1 + $0x26c8] sm:$0xff]
  %v1270 = vld [vmem:[%s1 + $0x26d0] sm:$0xff]
  %v1271 = vld [vmem:[%s1 + $0x26d8] sm:$0xff]
  %v1272 = vld [vmem:[%s1 + $0x26e0] sm:$0xff]
  %v1273 = vld [vmem:[%s1 + $0x26e8] sm:$0xff]
  %v1274 = vld [vmem:[%s1 + $0x26f0] sm:$0xff]
  %v1275 = vld [vmem:[%s1 + $0x26f8] sm:$0xff]
  %v1276 = vld [vmem:[%s1 + $0x2700] sm:$0xff]
  %v1277 = vld [vmem:[%s1 + $0x2708] sm:$0xff]
  %v1278 = vld [vmem:[%s1 + $0x2710] sm:$0xff]
  %v1279 = vld [vmem:[%s1 + $0x2718] sm:$0xff]
  %v1280 = vld [vmem:[%s1 + $0x2720] sm:$0xff]
  %v1281 = vld [vmem:[%s1 + $0x2728] sm:$0xff]
  %v1282 = vld [vmem:[%s1 + $0x2730] sm:$0xff]
  %v1283 = vld [vmem:[%s1 + $0x2738] sm:$0xff]
  %v1284 = vld [vmem:[%s1 + $0x2740] sm:$0xff]
  %v1285 = vld [vmem:[%s1 + $0x2748] sm:$0xff]
  %v1286 = vld [vmem:[%s1 + $0x2750] sm:$0xff]
  %v1287 = vld [vmem:[%s1 + $0x2758] sm:$0xff]
  %v1288 = vld [vmem:[%s1 + $0x2760] sm:$0xff]
  %v1289 = vld [vmem:[%s1 + $0x2768] sm:$0xff]
  %v1290 = vld [vmem:[%s1 + $0x2770] sm:$0xff]
  %v1291 = vld [vmem:[%s1 + $0x2778] sm:$0xff]
  %v1292 = vld [vmem:[%s1 + $0x2780] sm:$0xff]
  %v1293 = vld [vmem:[%s1 + $0x2788] sm:$0xff]
  %v1294 = vld [vmem:[%s1 + $0x2790] sm:$0xff]
  %v1295 = vld [vmem:[%s1 + $0x2798] sm:$0xff]
  %v1296 = vld [vmem:[%s1 + $0x27a0] sm:$0xff]
  %v1297 = vld [vmem:[%s1 + $0x27a8] sm:$0xff]
  %v1298 = vld [vmem:[%s1 + $0x27b0] sm:$0xff]
  %v1299 = vld [vmem:[%s1 + $0x27b8] sm:$0xff]
  %v1300 = vld [vmem:[%s1 + $0x27c0] sm:$0xff]
  %v1301 = vld [vmem:[%s1 + $0x27c8] sm:$0xff]
  %v1302 = vld [vmem:[%s1 + $0x27d0] sm:$0xff]
  %v1303 = vld [vmem:[%s1 + $0x27d8] sm:$0xff]
  %v1304 = vld [vmem:[%s1 + $0x27e0] sm:$0xff]
  %v1305 = vld [vmem:[%s1 + $0x27e8] sm:$0xff]
  %v1306 = vld [vmem:[%s1 + $0x27f0] sm:$0xff]
  %v1307 = vld [vmem:[%s1 + $0x27f8] sm:$0xff]
  %v1308 = vld [vmem:[%s1 + $0x2800] sm:$0xff]
  %v1309 = vld [vmem:[%s1 + $0x2808] sm:$0xff]
  %v1310 = vld [vmem:[%s1 + $0x2810] sm:$0xff]
  %v1311 = vld [vmem:[%s1 + $0x2818] sm:$0xff]
  %v1312 = vld [vmem:[%s1 + $0x2820] sm:$0xff]
  %v1313 = vld [vmem:[%s1 + $0x2828] sm:$0xff]
  %v1314 = vld [vmem:[%s1 + $0x2830] sm:$0xff]
  %v1315 = vld [vmem:[%s1 + $0x2838] sm:$0xff]
  %v1316 = vld [vmem:[%s1 + $0x2840] sm:$0xff]
  %v1317 = vld [vmem:[%s1 + $0x2848] sm:$0xff]
  %v1318 = vld [vmem:[%s1 + $0x2850] sm:$0xff]
  %v1319 = vld [vmem:[%s1 + $0x2858] sm:$0xff]
  %v1320 = vld [vmem:[%s1 + $0x2860] sm:$0xff]
  %v1321 = vld [vmem:[%s1 + $0x2868] sm:$0xff]
  %v1322 = vld [vmem:[%s1 + $0x2870] sm:$0xff]
  %v1323 = vld [vmem:[%s1 + $0x2878] sm:$0xff]
  %v1324 = vld [vmem:[%s1 + $0x2880] sm:$0xff]
  %v1325 = vld [vmem:[%s1 + $0x2888] sm:$0xff]
  %v1326 = vld [vmem:[%s1 + $0x2890] sm:$0xff]
  %v1327 = vld [vmem:[%s1 + $0x2898] sm:$0xff]
  %v1328 = vld [vmem:[%s1 + $0x28a0] sm:$0xff]
  %v1329 = vld [vmem:[%s1 + $0x28a8] sm:$0xff]
  %v1330 = vld [vmem:[%s1 + $0x28b0] sm:$0xff]
  %v1331 = vld [vmem:[%s1 + $0x28b8] sm:$0xff]
  %v1332 = vld [vmem:[%s1 + $0x28c0] sm:$0xff]
  %v1333 = vld [vmem:[%s1 + $0x28c8] sm:$0xff]
  %v1334 = vld [vmem:[%s1 + $0x28d0] sm:$0xff]
  %v1335 = vld [vmem:[%s1 + $0x28d8] sm:$0xff]
  %v1336 = vld [vmem:[%s1 + $0x28e0] sm:$0xff]
  %v1337 = vld [vmem:[%s1 + $0x28e8] sm:$0xff]
  %v1338 = vld [vmem:[%s1 + $0x28f0] sm:$0xff]
  %v1339 = vld [vmem:[%s1 + $0x28f8] sm:$0xff]
  %v1340 = vld [vmem:[%s1 + $0x2900] sm:$0xff]
  %v1341 = vld [vmem:[%s1 + $0x2908] sm:$0xff]
  %v1342 = vld [vmem:[%s1 + $0x2910] sm:$0xff]
  %v1343 = vld [vmem:[%s1 + $0x2918] sm:$0xff]
  %v1344 = vld [vmem:[%s1 + $0x2920] sm:$0xff]
  %v1345 = vld [vmem:[%s1 + $0x2928] sm:$0xff]
  %v1346 = vld [vmem:[%s1 + $0x2930] sm:$0xff]
  %v1347 = vld [vmem:[%s1 + $0x2938] sm:$0xff]
  %v1348 = vld [vmem:[%s1 + $0x2940] sm:$0xff]
  %v1349 = vld [vmem:[%s1 + $0x2948] sm:$0xff]
  %v1350 = vld [vmem:[%s1 + $0x2950] sm:$0xff]
  %v1351 = vld [vmem:[%s1 + $0x2958] sm:$0xff]
  %v1352 = vld [vmem:[%s1 + $0x2960] sm:$0xff]
  %v1353 = vld [vmem:[%s1 + $0x2968] sm:$0xff]
  %v1354 = vld [vmem:[%s1 + $0x2970] sm:$0xff]
  %v1355 = vld [vmem:[%s1 + $0x2978] sm:$0xff]
  %v1356 = vld [vmem:[%s1 + $0x2980] sm:$0xff]
  %v1357 = vld [vmem:[%s1 + $0x2988] sm:$0xff]
  %v1358 = vld [vmem:[%s1 + $0x2990] sm:$0xff]
  %v1359 = vld [vmem:[%s1 + $0x2998] sm:$0xff]
  %v1360 = vld [vmem:[%s1 + $0x29a0] sm:$0xff]
  %v1361 = vld [vmem:[%s1 + $0x29a8] sm:$0xff]
  %v1362 = vld [vmem:[%s1 + $0x29b0] sm:$0xff]
  %v1363 = vld [vmem:[%s1 + $0x29b8] sm:$0xff]
  %v1364 = vld [vmem:[%s1 + $0x29c0] sm:$0xff]
  %v1365 = vld [vmem:[%s1 + $0x29c8] sm:$0xff]
  %v1366 = vld [vmem:[%s1 + $0x29d0] sm:$0xff]
  %v1367 = vld [vmem:[%s1 + $0x29d8] sm:$0xff]
  %v1368 = vld [vmem:[%s1 + $0x29e0] sm:$0xff]
  %v1369 = vld [vmem:[%s1 + $0x29e8] sm:$0xff]
  %v1370 = vld [vmem:[%s1 + $0x29f0] sm:$0xff]
  %v1371 = vld [vmem:[%s1 + $0x29f8] sm:$0xff]
  %v1372 = vld [vmem:[%s1 + $0x2a00] sm:$0xff]
  %v1373 = vld [vmem:[%s1 + $0x2a08] sm:$0xff]
  %v1374 = vld [vmem:[%s1 + $0x2a10] sm:$0xff]
  %v1375 = vld [vmem:[%s1 + $0x2a18] sm:$0xff]
  %v1376 = vld [vmem:[%s1 + $0x2a20] sm:$0xff]
  %v1377 = vld [vmem:[%s1 + $0x2a28] sm:$0xff]
  %v1378 = vld [vmem:[%s1 + $0x2a30] sm:$0xff]
  %v1379 = vld [vmem:[%s1 + $0x2a38] sm:$0xff]
  %v1380 = vld [vmem:[%s1 + $0x2a40] sm:$0xff]
  %v1381 = vld [vmem:[%s1 + $0x2a48] sm:$0xff]
  %v1382 = vld [vmem:[%s1 + $0x2a50] sm:$0xff]
  %v1383 = vld [vmem:[%s1 + $0x2a58] sm:$0xff]
  %v1384 = vld [vmem:[%s1 + $0x2a60] sm:$0xff]
  %v1385 = vld [vmem:[%s1 + $0x2a68] sm:$0xff]
  %v1386 = vld [vmem:[%s1 + $0x2a70] sm:$0xff]
  %v1387 = vld [vmem:[%s1 + $0x2a78] sm:$0xff]
  %v1388 = vld [vmem:[%s1 + $0x2a80] sm:$0xff]
  %v1389 = vld [vmem:[%s1 + $0x2a88] sm:$0xff]
  %v1390 = vld [vmem:[%s1 + $0x2a90] sm:$0xff]
  %v1391 = vld [vmem:[%s1 + $0x2a98] sm:$0xff]
  %v1392 = vld [vmem:[%s1 + $0x2aa0] sm:$0xff]
  %v1393 = vld [vmem:[%s1 + $0x2aa8] sm:$0xff]
  %v1394 = vld [vmem:[%s1 + $0x2ab0] sm:$0xff]
  %v1395 = vld [vmem:[%s1 + $0x2ab8] sm:$0xff]
  %v1396 = vld [vmem:[%s1 + $0x2ac0] sm:$0xff]
  %v1397 = vld [vmem:[%s1 + $0x2ac8] sm:$0xff]
  %v1398 = vld [vmem:[%s1 + $0x2ad0] sm:$0xff]
  %v1399 = vld [vmem:[%s1 + $0x2ad8] sm:$0xff]
  %v1400 = vld [vmem:[%s1 + $0x2ae0] sm:$0xff]
  %v1401 = vld [vmem:[%s1 + $0x2ae8] sm:$0xff]
  %v1402 = vld [vmem:[%s1 + $0x2af0] sm:$0xff]
  %v1403 = vld [vmem:[%s1 + $0x2af8] sm:$0xff]
  %v1404 = vld [vmem:[%s1 + $0x2b00] sm:$0xff]
  %v1405 = vld [vmem:[%s1 + $0x2b08] sm:$0xff]
  %v1406 = vld [vmem:[%s1 + $0x2b10] sm:$0xff]
  %v1407 = vld [vmem:[%s1 + $0x2b18] sm:$0xff]
  %v1408 = vld [vmem:[%s1 + $0x2b20] sm:$0xff]
  %v1409 = vld [vmem:[%s1 + $0x2b28] sm:$0xff]
  %v1410 = vld [vmem:[%s1 + $0x2b30] sm:$0xff]
  %v1411 = vld [vmem:[%s1 + $0x2b38] sm:$0xff]
  %v1412 = vld [vmem:[%s1 + $0x2b40] sm:$0xff]
  %v1413 = vld [vmem:[%s1 + $0x2b48] sm:$0xff]
  %v1414 = vld [vmem:[%s1 + $0x2b50] sm:$0xff]
  %v1415 = vld [vmem:[%s1 + $0x2b58] sm:$0xff]
  %v1416 = vld [vmem:[%s1 + $0x2b60] sm:$0xff]
  %v1417 = vld [vmem:[%s1 + $0x2b68] sm:$0xff]
  %v1418 = vld [vmem:[%s1 + $0x2b70] sm:$0xff]
  %v1419 = vld [vmem:[%s1 + $0x2b78] sm:$0xff]
  %v1420 = vld [vmem:[%s1 + $0x2b80] sm:$0xff]
  %v1421 = vld [vmem:[%s1 + $0x2b88] sm:$0xff]
  %v1422 = vld [vmem:[%s1 + $0x2b90] sm:$0xff]
  %v1423 = vld [vmem:[%s1 + $0x2b98] sm:$0xff]
  %v1424 = vld [vmem:[%s1 + $0x2ba0] sm:$0xff]
  %v1425 = vld [vmem:[%s1 + $0x2ba8] sm:$0xff]
  %v1426 = vld [vmem:[%s1 + $0x2bb0] sm:$0xff]
  %v1427 = vld [vmem:[%s1 + $0x2bb8] sm:$0xff]
  %v1428 = vld [vmem:[%s1 + $0x2bc0] sm:$0xff]
  %v1429 = vld [vmem:[%s1 + $0x2bc8] sm:$0xff]
  %v1430 = vld [vmem:[%s1 + $0x2bd0] sm:$0xff]
  %v1431 = vld [vmem:[%s1 + $0x2bd8] sm:$0xff]
  %v1432 = vld [vmem:[%s1 + $0x2be0] sm:$0xff]
  %v1433 = vld [vmem:[%s1 + $0x2be8] sm:$0xff]
  %v1434 = vld [vmem:[%s1 + $0x2bf0] sm:$0xff]
  %v1435 = vld [vmem:[%s1 + $0x2bf8] sm:$0xff]
  %v1436 = vld [vmem:[%s1 + $0x2c00] sm:$0xff]
  %v1437 = vld [vmem:[%s1 + $0x2c08] sm:$0xff]
  %v1438 = vld [vmem:[%s1 + $0x2c10] sm:$0xff]
  %v1439 = vld [vmem:[%s1 + $0x2c18] sm:$0xff]
  %v1440 = vld [vmem:[%s1 + $0x2c20] sm:$0xff]
  %v1441 = vld [vmem:[%s1 + $0x2c28] sm:$0xff]
  %v1442 = vld [vmem:[%s1 + $0x2c30] sm:$0xff]
  %v1443 = vld [vmem:[%s1 + $0x2c38] sm:$0xff]
  %v1444 = vld [vmem:[%s1 + $0x2c40] sm:$0xff]
  %v1445 = vld [vmem:[%s1 + $0x2c48] sm:$0xff]
  %v1446 = vld [vmem:[%s1 + $0x2c50] sm:$0xff]
  %v1447 = vld [vmem:[%s1 + $0x2c58] sm:$0xff]
  %v1448 = vld [vmem:[%s1 + $0x2c60] sm:$0xff]
  %v1449 = vld [vmem:[%s1 + $0x2c68] sm:$0xff]
  %v1450 = vld [vmem:[%s1 + $0x2c70] sm:$0xff]
  %v1451 = vld [vmem:[%s1 + $0x2c78] sm:$0xff]
  %v1452 = vld [vmem:[%s1 + $0x2c80] sm:$0xff]
  %v1453 = vld [vmem:[%s1 + $0x2c88] sm:$0xff]
  %v1454 = vld [vmem:[%s1 + $0x2c90] sm:$0xff]
  %v1455 = vld [vmem:[%s1 + $0x2c98] sm:$0xff]
  %v1456 = vld [vmem:[%s1 + $0x2ca0] sm:$0xff]
  %v1457 = vld [vmem:[%s1 + $0x2ca8] sm:$0xff]
  %v1458 = vld [vmem:[%s1 + $0x2cb0] sm:$0xff]
  %v1459 = vld [vmem:[%s1 + $0x2cb8] sm:$0xff]
  %v1460 = vld [vmem:[%s1 + $0x2cc0] sm:$0xff]
  %v1461 = vld [vmem:[%s1 + $0x2cc8] sm:$0xff]
  %v1462 = vld [vmem:[%s1 + $0x2cd0] sm:$0xff]
  %v1463 = vld [vmem:[%s1 + $0x2cd8] sm:$0xff]
  %v1464 = vld [vmem:[%s1 + $0x2ce0] sm:$0xff]
  %v1465 = vld [vmem:[%s1 + $0x2ce8] sm:$0xff]
  %v1466 = vld [vmem:[%s1 + $0x2cf0] sm:$0xff]
  %v1467 = vld [vmem:[%s1 + $0x2cf8] sm:$0xff]
  %v1468 = vld [vmem:[%s1 + $0x2d00] sm:$0xff]
  %v1469 = vld [vmem:[%s1 + $0x2d08] sm:$0xff]
  %v1470 = vld [vmem:[%s1 + $0x2d10] sm:$0xff]
  %v1471 = vld [vmem:[%s1 + $0x2d18] sm:$0xff]
  %v1472 = vld [vmem:[%s1 + $0x2d20] sm:$0xff]
  %v1473 = vld [vmem:[%s1 + $0x2d28] sm:$0xff]
  %v1474 = vld [vmem:[%s1 + $0x2d30] sm:$0xff]
  %v1475 = vld [vmem:[%s1 + $0x2d38] sm:$0xff]
  %v1476 = vld [vmem:[%s1 + $0x2d40] sm:$0xff]
  %v1477 = vld [vmem:[%s1 + $0x2d48] sm:$0xff]
  %v1478 = vld [vmem:[%s1 + $0x2d50] sm:$0xff]
  %v1479 = vld [vmem:[%s1 + $0x2d58] sm:$0xff]
  %v1480 = vld [vmem:[%s1 + $0x2d60] sm:$0xff]
  %v1481 = vld [vmem:[%s1 + $0x2d68] sm:$0xff]
  %v1482 = vld [vmem:[%s1 + $0x2d70] sm:$0xff]
  %v1483 = vld [vmem:[%s1 + $0x2d78] sm:$0xff]
  %v1484 = vld [vmem:[%s1 + $0x2d80] sm:$0xff]
  %v1485 = vld [vmem:[%s1 + $0x2d88] sm:$0xff]
  %v1486 = vld [vmem:[%s1 + $0x2d90] sm:$0xff]
  %v1487 = vld [vmem:[%s1 + $0x2d98] sm:$0xff]
  %v1488 = vld [vmem:[%s1 + $0x2da0] sm:$0xff]
  %v1489 = vld [vmem:[%s1 + $0x2da8] sm:$0xff]
  %v1490 = vld [vmem:[%s1 + $0x2db0] sm:$0xff]
  %v1491 = vld [vmem:[%s1 + $0x2db8] sm:$0xff]
  %v1492 = vld [vmem:[%s1 + $0x2dc0] sm:$0xff]
  %v1493 = vld [vmem:[%s1 + $0x2dc8] sm:$0xff]
  %v1494 = vld [vmem:[%s1 + $0x2dd0] sm:$0xff]
  %v1495 = vld [vmem:[%s1 + $0x2dd8] sm:$0xff]
  %v1496 = vld [vmem:[%s1 + $0x2de0] sm:$0xff]
  %v1497 = vld [vmem:[%s1 + $0x2de8] sm:$0xff]
  %v1498 = vld [vmem:[%s1 + $0x2df0] sm:$0xff]
  %v1499 = vld [vmem:[%s1 + $0x2df8] sm:$0xff]
  %v1500 = vld [vmem:[%s1 + $0x2e00] sm:$0xff]
  %v1501 = vld [vmem:[%s1 + $0x2e08] sm:$0xff]
  %v1502 = vld [vmem:[%s1 + $0x2e10] sm:$0xff]
  %v1503 = vld [vmem:[%s1 + $0x2e18] sm:$0xff]
  %v1504 = vld [vmem:[%s1 + $0x2e20] sm:$0xff]
  %v1505 = vld [vmem:[%s1 + $0x2e28] sm:$0xff]
  %v1506 = vld [vmem:[%s1 + $0x2e30] sm:$0xff]
  %v1507 = vld [vmem:[%s1 + $0x2e38] sm:$0xff]
  %v1508 = vld [vmem:[%s1 + $0x2e40] sm:$0xff]
  %v1509 = vld [vmem:[%s1 + $0x2e48] sm:$0xff]
  %v1510 = vld [vmem:[%s1 + $0x2e50] sm:$0xff]
  %v1511 = vld [vmem:[%s1 + $0x2e58] sm:$0xff]
  %v1512 = vld [vmem:[%s1 + $0x2e60] sm:$0xff]
  %v1513 = vld [vmem:[%s1 + $0x2e68] sm:$0xff]
  %v1514 = vld [vmem:[%s1 + $0x2e70] sm:$0xff]
  %v1515 = vld [vmem:[%s1 + $0x2e78] sm:$0xff]
  %v1516 = vld [vmem:[%s1 + $0x2e80] sm:$0xff]
  %v1517 = vld [vmem:[%s1 + $0x2e88] sm:$0xff]
  %v1518 = vld [vmem:[%s1 + $0x2e90] sm:$0xff]
  %v1519 = vld [vmem:[%s1 + $0x2e98] sm:$0xff]
  %v1520 = vld [vmem:[%s1 + $0x2ea0] sm:$0xff]
  %v1521 = vld [vmem:[%s1 + $0x2ea8] sm:$0xff]
  %v1522 = vld [vmem:[%s1 + $0x2eb0] sm:$0xff]
  %v1523 = vld [vmem:[%s1 + $0x2eb8] sm:$0xff]
  %v1524 = vld [vmem:[%s1 + $0x2ec0] sm:$0xff]
  %v1525 = vld [vmem:[%s1 + $0x2ec8] sm:$0xff]
  %v1526 = vld [vmem:[%s1 + $0x2ed0] sm:$0xff]
  %v1527 = vld [vmem:[%s1 + $0x2ed8] sm:$0xff]
  %v1528 = vld [vmem:[%s1 + $0x2ee0] sm:$0xff]
  %v1529 = vld [vmem:[%s1 + $0x2ee8] sm:$0xff]
  %v1530 = vld [vmem:[%s1 + $0x2ef0] sm:$0xff]
  %v1531 = vld [vmem:[%s1 + $0x2ef8] sm:$0xff]
  %v1532 = vld [vmem:[%s1 + $0x2f00] sm:$0xff]
  %v1533 = vld [vmem:[%s1 + $0x2f08] sm:$0xff]
  %v1534 = vld [vmem:[%s1 + $0x2f10] sm:$0xff]
  %v1535 = vld [vmem:[%s1 + $0x2f18] sm:$0xff]
  %v1536 = vld [vmem:[%s1 + $0x2f20] sm:$0xff]
  %v1537 = vld [vmem:[%s1 + $0x2f28] sm:$0xff]
  %v1538 = vld [vmem:[%s1 + $0x2f30] sm:$0xff]
  %v1539 = vld [vmem:[%s1 + $0x2f38] sm:$0xff]
  %v1540 = vld [vmem:[%s1 + $0x2f40] sm:$0xff]
  %v1541 = vld [vmem:[%s1 + $0x2f48] sm:$0xff]
  %v1542 = vld [vmem:[%s1 + $0x2f50] sm:$0xff]
  %v1543 = vld [vmem:[%s1 + $0x2f58] sm:$0xff]
  %v1544 = vld [vmem:[%s1 + $0x2f60] sm:$0xff]
  %v1545 = vld [vmem:[%s1 + $0x2f68] sm:$0xff]
  %v1546 = vld [vmem:[%s1 + $0x2f70] sm:$0xff]
  %v1547 = vld [vmem:[%s1 + $0x2f78] sm:$0xff]
  %v1548 = vld [vmem:[%s1 + $0x2f80] sm:$0xff]
  %v1549 = vld [vmem:[%s1 + $0x2f88] sm:$0xff]
  %v1550 = vld [vmem:[%s1 + $0x2f90] sm:$0xff]
  %v1551 = vld [vmem:[%s1 + $0x2f98] sm:$0xff]
  %v1552 = vld [vmem:[%s1 + $0x2fa0] sm:$0xff]
  %v1553 = vld [vmem:[%s1 + $0x2fa8] sm:$0xff]
  %v1554 = vld [vmem:[%s1 + $0x2fb0] sm:$0xff]
  %v1555 = vld [vmem:[%s1 + $0x2fb8] sm:$0xff]
  %v1556 = vld [vmem:[%s1 + $0x2fc0] sm:$0xff]
  %v1557 = vld [vmem:[%s1 + $0x2fc8] sm:$0xff]
  %v1558 = vld [vmem:[%s1 + $0x2fd0] sm:$0xff]
  %v1559 = vld [vmem:[%s1 + $0x2fd8] sm:$0xff]
  %v1560 = vld [vmem:[%s1 + $0x2fe0] sm:$0xff]
  %v1561 = vld [vmem:[%s1 + $0x2fe8] sm:$0xff]
  %v1562 = vld [vmem:[%s1 + $0x2ff0] sm:$0xff]
  %v1563 = vld [vmem:[%s1 + $0x2ff8] sm:$0xff]
  %v1564 = vld [vmem:[%s1 + $0x3000] sm:$0xff]
  %v1565 = vld [vmem:[%s1 + $0x3008] sm:$0xff]
  %v1566 = vld [vmem:[%s1 + $0x3010] sm:$0xff]
  %v1567 = vld [vmem:[%s1 + $0x3018] sm:$0xff]
  %v1568 = vld [vmem:[%s1 + $0x3020] sm:$0xff]
  %v1569 = vld [vmem:[%s1 + $0x3028] sm:$0xff]
  %v1570 = vld [vmem:[%s1 + $0x3030] sm:$0xff]
  %v1571 = vld [vmem:[%s1 + $0x3038] sm:$0xff]
  %v1572 = vld [vmem:[%s1 + $0x3040] sm:$0xff]
  %v1573 = vld [vmem:[%s1 + $0x3048] sm:$0xff]
  %v1574 = vld [vmem:[%s1 + $0x3050] sm:$0xff]
  %v1575 = vld [vmem:[%s1 + $0x3058] sm:$0xff]
  %v1576 = vld [vmem:[%s1 + $0x3060] sm:$0xff]
  %v1577 = vld [vmem:[%s1 + $0x3068] sm:$0xff]
  %v1578 = vld [vmem:[%s1 + $0x3070] sm:$0xff]
  %v1579 = vld [vmem:[%s1 + $0x3078] sm:$0xff]
  %v1580 = vld [vmem:[%s1 + $0x3080] sm:$0xff]
  %v1581 = vld [vmem:[%s1 + $0x3088] sm:$0xff]
  %v1582 = vld [vmem:[%s1 + $0x3090] sm:$0xff]
  %v1583 = vld [vmem:[%s1 + $0x3098] sm:$0xff]
  %v1584 = vld [vmem:[%s1 + $0x30a0] sm:$0xff]
  %v1585 = vld [vmem:[%s1 + $0x30a8] sm:$0xff]
  %v1586 = vld [vmem:[%s1 + $0x30b0] sm:$0xff]
  %v1587 = vld [vmem:[%s1 + $0x30b8] sm:$0xff]
  %v1588 = vld [vmem:[%s1 + $0x30c0] sm:$0xff]
  %v1589 = vld [vmem:[%s1 + $0x30c8] sm:$0xff]
  %v1590 = vld [vmem:[%s1 + $0x30d0] sm:$0xff]
  %v1591 = vld [vmem:[%s1 + $0x30d8] sm:$0xff]
  %v1592 = vld [vmem:[%s1 + $0x30e0] sm:$0xff]
  %v1593 = vld [vmem:[%s1 + $0x30e8] sm:$0xff]
  %v1594 = vld [vmem:[%s1 + $0x30f0] sm:$0xff]
  %v1595 = vld [vmem:[%s1 + $0x30f8] sm:$0xff]
  %v1596 = vld [vmem:[%s1 + $0x3100] sm:$0xff]
  %v1597 = vld [vmem:[%s1 + $0x3108] sm:$0xff]
  %v1598 = vld [vmem:[%s1 + $0x3110] sm:$0xff]
  %v1599 = vld [vmem:[%s1 + $0x3118] sm:$0xff]
  %v1600 = vld [vmem:[%s1 + $0x3120] sm:$0xff]
  %v1601 = vld [vmem:[%s1 + $0x3128] sm:$0xff]
  %v1602 = vld [vmem:[%s1 + $0x3130] sm:$0xff]
  %v1603 = vld [vmem:[%s1 + $0x3138] sm:$0xff]
  %v1604 = vld [vmem:[%s1 + $0x3140] sm:$0xff]
  %v1605 = vld [vmem:[%s1 + $0x3148] sm:$0xff]
  %v1606 = vld [vmem:[%s1 + $0x3150] sm:$0xff]
  %v1607 = vld [vmem:[%s1 + $0x3158] sm:$0xff]
  %v1608 = vld [vmem:[%s1 + $0x3160] sm:$0xff]
  %v1609 = vld [vmem:[%s1 + $0x3168] sm:$0xff]
  %v1610 = vld [vmem:[%s1 + $0x3170] sm:$0xff]
  %v1611 = vld [vmem:[%s1 + $0x3178] sm:$0xff]
  %v1612 = vld [vmem:[%s1 + $0x3180] sm:$0xff]
  %v1613 = vld [vmem:[%s1 + $0x3188] sm:$0xff]
  %v1614 = vld [vmem:[%s1 + $0x3190] sm:$0xff]
  %v1615 = vld [vmem:[%s1 + $0x3198] sm:$0xff]
  %v1616 = vld [vmem:[%s1 + $0x31a0] sm:$0xff]
  %v1617 = vld [vmem:[%s1 + $0x31a8] sm:$0xff]
  %v1618 = vld [vmem:[%s1 + $0x31b0] sm:$0xff]
  %v1619 = vld [vmem:[%s1 + $0x31b8] sm:$0xff]
  %v1620 = vld [vmem:[%s1 + $0x31c0] sm:$0xff]
  %v1621 = vld [vmem:[%s1 + $0x31c8] sm:$0xff]
  %v1622 = vld [vmem:[%s1 + $0x31d0] sm:$0xff]
  %v1623 = vld [vmem:[%s1 + $0x31d8] sm:$0xff]
  %v1624 = vld [vmem:[%s1 + $0x31e0] sm:$0xff]
  %v1625 = vld [vmem:[%s1 + $0x31e8] sm:$0xff]
  %v1626 = vld [vmem:[%s1 + $0x31f0] sm:$0xff]
  %v1627 = vld [vmem:[%s1 + $0x31f8] sm:$0xff]
  %v1628 = vld [vmem:[%s2] sm:$0xff]
  %v1630 = vlaneseq
  %v1631 = vshrl.u32 %v1630, 7
  %v1632 = vsub.s32 0, %v1631
  %v1633 = vrot.slane %v1628, %v1632
  %v1634 = vlaneseq
  %v1635 = vshrl.u32 %v1634, 7
  %v1636 = vsub.s32 1, %v1635
  %v1637 = vrot.slane %v1628, %v1636
  %v1638 = vlaneseq
  %v1639 = vshrl.u32 %v1638, 7
  %v1640 = vsub.s32 2, %v1639
  %v1641 = vrot.slane %v1628, %v1640
  %v1642 = vlaneseq
  %v1643 = vshrl.u32 %v1642, 7
  %v1644 = vsub.s32 3, %v1643
  %v1645 = vrot.slane %v1628, %v1644
  %v1646 = vlaneseq
  %v1647 = vshrl.u32 %v1646, 7
  %v1648 = vsub.s32 4, %v1647
  %v1649 = vrot.slane %v1628, %v1648
  %v1650 = vlaneseq
  %v1651 = vshrl.u32 %v1650, 7
  %v1652 = vsub.s32 5, %v1651
  %v1653 = vrot.slane %v1628, %v1652
  %v1654 = vlaneseq
  %v1655 = vshrl.u32 %v1654, 7
  %v1656 = vsub.s32 6, %v1655
  %v1657 = vrot.slane %v1628, %v1656
  %v1658 = vlaneseq
  %v1659 = vshrl.u32 %v1658, 7
  %v1660 = vsub.s32 7, %v1659
  %v1661 = vrot.slane %v1628, %v1660
  %v1683 = vunpack.c.l.b16 %v15
  %v1684 = vunpack.c.h.b16 %v15
  %v1685 = vunpack.c.l.b16 %v16
  %v1686 = vunpack.c.h.b16 %v16
  %v1687 = vunpack.c.l.b16 %v17
  %v1688 = vunpack.c.h.b16 %v17
  %v1689 = vunpack.c.l.b16 %v18
  %v1690 = vunpack.c.h.b16 %v18
  %v1691 = vunpack.c.l.b16 %v19
  %v1692 = vunpack.c.h.b16 %v19
  %v1693 = vunpack.c.l.b16 %v20
  %v1694 = vunpack.c.h.b16 %v20
  %v1695 = vunpack.c.l.b16 %v21
  %v1696 = vunpack.c.h.b16 %v21
  %v1697 = vunpack.c.l.b16 %v22
  %v1698 = vunpack.c.h.b16 %v22
  %v1699 = vunpack.c.l.b16 %v23
  %v1700 = vunpack.c.h.b16 %v23
  %v1701 = vunpack.c.l.b16 %v24
  %v1702 = vunpack.c.h.b16 %v24
  %v1703 = vunpack.c.l.b16 %v25
  %v1704 = vunpack.c.h.b16 %v25
  %v1705 = vunpack.c.l.b16 %v26
  %v1706 = vunpack.c.h.b16 %v26
  %v1707 = vunpack.c.l.b16 %v27
  %v1708 = vpack.c.b16 %v1683, %v1683
  %v1709 = vpack.c.b16 %v1684, %v1684
  %v1710 = vpack.c.b16 %v1685, %v1685
  %v1711 = vpack.c.b16 %v1686, %v1686
  %v1712 = vpack.c.b16 %v1687, %v1687
  %v1713 = vpack.c.b16 %v1688, %v1688
  %v1714 = vpack.c.b16 %v1689, %v1689
  %v1715 = vpack.c.b16 %v1690, %v1690
  %v1716 = vpack.c.b16 %v1691, %v1691
  %v1717 = vpack.c.b16 %v1692, %v1692
  %v1718 = vpack.c.b16 %v1693, %v1693
  %v1719 = vpack.c.b16 %v1694, %v1694
  %v1720 = vpack.c.b16 %v1695, %v1695
  %v1721 = vpack.c.b16 %v1696, %v1696
  %v1722 = vpack.c.b16 %v1697, %v1697
  %v1723 = vpack.c.b16 %v1698, %v1698
  %v1724 = vpack.c.b16 %v1699, %v1699
  %v1725 = vpack.c.b16 %v1700, %v1700
  %v1726 = vpack.c.b16 %v1701, %v1701
  %v1727 = vpack.c.b16 %v1702, %v1702
  %v1728 = vpack.c.b16 %v1703, %v1703
  %v1729 = vpack.c.b16 %v1704, %v1704
  %v1730 = vpack.c.b16 %v1705, %v1705
  %v1731 = vpack.c.b16 %v1706, %v1706
  %v1732 = vpack.c.b16 %v1707, %v1707
  %v3358 = vunpack.c.l.b16 %v28
  %v3359 = vunpack.c.h.b16 %v28
  %v3360 = vunpack.c.l.b16 %v29
  %v3361 = vunpack.c.h.b16 %v29
  %v3362 = vunpack.c.l.b16 %v30
  %v3363 = vunpack.c.h.b16 %v30
  %v3364 = vunpack.c.l.b16 %v31
  %v3365 = vunpack.c.h.b16 %v31
  %v3366 = vunpack.c.l.b16 %v32
  %v3367 = vunpack.c.h.b16 %v32
  %v3368 = vunpack.c.l.b16 %v33
  %v3369 = vunpack.c.h.b16 %v33
  %v3370 = vunpack.c.l.b16 %v34
  %v3371 = vunpack.c.h.b16 %v34
  %v3372 = vunpack.c.l.b16 %v35
  %v3373 = vunpack.c.h.b16 %v35
  %v3374 = vunpack.c.l.b16 %v36
  %v3375 = vunpack.c.h.b16 %v36
  %v3376 = vunpack.c.l.b16 %v37
  %v3377 = vunpack.c.h.b16 %v37
  %v3378 = vunpack.c.l.b16 %v38
  %v3379 = vunpack.c.h.b16 %v38
  %v3380 = vunpack.c.l.b16 %v39
  %v3381 = vunpack.c.h.b16 %v39
  %v3382 = vunpack.c.l.b16 %v40
  %v3383 = vunpack.c.h.b16 %v40
  %v3384 = vunpack.c.l.b16 %v41
  %v3385 = vunpack.c.h.b16 %v41
  %v3386 = vunpack.c.l.b16 %v42
  %v3387 = vunpack.c.h.b16 %v42
  %v3388 = vunpack.c.l.b16 %v43
  %v3389 = vunpack.c.h.b16 %v43
  %v3390 = vunpack.c.l.b16 %v44
  %v3391 = vunpack.c.h.b16 %v44
  %v3392 = vunpack.c.l.b16 %v45
  %v3393 = vunpack.c.h.b16 %v45
  %v3394 = vunpack.c.l.b16 %v46
  %v3395 = vunpack.c.h.b16 %v46
  %v3396 = vunpack.c.l.b16 %v47
  %v3397 = vunpack.c.h.b16 %v47
  %v3398 = vunpack.c.l.b16 %v48
  %v3399 = vunpack.c.h.b16 %v48
  %v3400 = vunpack.c.l.b16 %v49
  %v3401 = vunpack.c.h.b16 %v49
  %v3402 = vunpack.c.l.b16 %v50
  %v3403 = vunpack.c.h.b16 %v50
  %v3404 = vunpack.c.l.b16 %v51
  %v3405 = vunpack.c.h.b16 %v51
  %v3406 = vunpack.c.l.b16 %v52
  %v3407 = vunpack.c.h.b16 %v52
  %v3408 = vunpack.c.l.b16 %v53
  %v3409 = vunpack.c.h.b16 %v53
  %v3410 = vunpack.c.l.b16 %v54
  %v3411 = vunpack.c.h.b16 %v54
  %v3412 = vunpack.c.l.b16 %v55
  %v3413 = vunpack.c.h.b16 %v55
  %v3414 = vunpack.c.l.b16 %v56
  %v3415 = vunpack.c.h.b16 %v56
  %v3416 = vunpack.c.l.b16 %v57
  %v3417 = vunpack.c.h.b16 %v57
  %v3418 = vunpack.c.l.b16 %v58
  %v3419 = vunpack.c.h.b16 %v58
  %v3420 = vunpack.c.l.b16 %v59
  %v3421 = vunpack.c.h.b16 %v59
  %v3422 = vunpack.c.l.b16 %v60
  %v3423 = vunpack.c.h.b16 %v60
  %v3424 = vunpack.c.l.b16 %v61
  %v3425 = vunpack.c.h.b16 %v61
  %v3426 = vunpack.c.l.b16 %v62
  %v3427 = vunpack.c.h.b16 %v62
  %v3428 = vunpack.c.l.b16 %v63
  %v3429 = vunpack.c.h.b16 %v63
  %v3430 = vunpack.c.l.b16 %v64
  %v3431 = vunpack.c.h.b16 %v64
  %v3432 = vunpack.c.l.b16 %v65
  %v3433 = vunpack.c.h.b16 %v65
  %v3434 = vunpack.c.l.b16 %v66
  %v3435 = vunpack.c.h.b16 %v66
  %v3436 = vunpack.c.l.b16 %v67
  %v3437 = vunpack.c.h.b16 %v67
  %v3438 = vunpack.c.l.b16 %v68
  %v3439 = vunpack.c.h.b16 %v68
  %v3440 = vunpack.c.l.b16 %v69
  %v3441 = vunpack.c.h.b16 %v69
  %v3442 = vunpack.c.l.b16 %v70
  %v3443 = vunpack.c.h.b16 %v70
  %v3444 = vunpack.c.l.b16 %v71
  %v3445 = vunpack.c.h.b16 %v71
  %v3446 = vunpack.c.l.b16 %v72
  %v3447 = vunpack.c.h.b16 %v72
  %v3448 = vunpack.c.l.b16 %v73
  %v3449 = vunpack.c.h.b16 %v73
  %v3450 = vunpack.c.l.b16 %v74
  %v3451 = vunpack.c.h.b16 %v74
  %v3452 = vunpack.c.l.b16 %v75
  %v3453 = vunpack.c.h.b16 %v75
  %v3454 = vunpack.c.l.b16 %v76
  %v3455 = vunpack.c.h.b16 %v76
  %v3456 = vunpack.c.l.b16 %v77
  %v3457 = vunpack.c.h.b16 %v77
  %v3458 = vunpack.c.l.b16 %v78
  %v3459 = vunpack.c.h.b16 %v78
  %v3460 = vunpack.c.l.b16 %v79
  %v3461 = vunpack.c.h.b16 %v79
  %v3462 = vunpack.c.l.b16 %v80
  %v3463 = vunpack.c.h.b16 %v80
  %v3464 = vunpack.c.l.b16 %v81
  %v3465 = vunpack.c.h.b16 %v81
  %v3466 = vunpack.c.l.b16 %v82
  %v3467 = vunpack.c.h.b16 %v82
  %v3468 = vunpack.c.l.b16 %v83
  %v3469 = vunpack.c.h.b16 %v83
  %v3470 = vunpack.c.l.b16 %v84
  %v3471 = vunpack.c.h.b16 %v84
  %v3472 = vunpack.c.l.b16 %v85
  %v3473 = vunpack.c.h.b16 %v85
  %v3474 = vunpack.c.l.b16 %v86
  %v3475 = vunpack.c.h.b16 %v86
  %v3476 = vunpack.c.l.b16 %v87
  %v3477 = vunpack.c.h.b16 %v87
  %v3478 = vunpack.c.l.b16 %v88
  %v3479 = vunpack.c.h.b16 %v88
  %v3480 = vunpack.c.l.b16 %v89
  %v3481 = vunpack.c.h.b16 %v89
  %v3482 = vunpack.c.l.b16 %v90
  %v3483 = vunpack.c.h.b16 %v90
  %v3484 = vunpack.c.l.b16 %v91
  %v3485 = vunpack.c.h.b16 %v91
  %v3486 = vunpack.c.l.b16 %v92
  %v3487 = vunpack.c.h.b16 %v92
  %v3488 = vunpack.c.l.b16 %v93
  %v3489 = vunpack.c.h.b16 %v93
  %v3490 = vunpack.c.l.b16 %v94
  %v3491 = vunpack.c.h.b16 %v94
  %v3492 = vunpack.c.l.b16 %v95
  %v3493 = vunpack.c.h.b16 %v95
  %v3494 = vunpack.c.l.b16 %v96
  %v3495 = vunpack.c.h.b16 %v96
  %v3496 = vunpack.c.l.b16 %v97
  %v3497 = vunpack.c.h.b16 %v97
  %v3498 = vunpack.c.l.b16 %v98
  %v3499 = vunpack.c.h.b16 %v98
  %v3500 = vunpack.c.l.b16 %v99
  %v3501 = vunpack.c.h.b16 %v99
  %v3502 = vunpack.c.l.b16 %v100
  %v3503 = vunpack.c.h.b16 %v100
  %v3504 = vunpack.c.l.b16 %v101
  %v3505 = vunpack.c.h.b16 %v101
  %v3506 = vunpack.c.l.b16 %v102
  %v3507 = vunpack.c.h.b16 %v102
  %v3508 = vunpack.c.l.b16 %v103
  %v3509 = vunpack.c.h.b16 %v103
  %v3510 = vunpack.c.l.b16 %v104
  %v3511 = vunpack.c.h.b16 %v104
  %v3512 = vunpack.c.l.b16 %v105
  %v3513 = vunpack.c.h.b16 %v105
  %v3514 = vunpack.c.l.b16 %v106
  %v3515 = vunpack.c.h.b16 %v106
  %v3516 = vunpack.c.l.b16 %v107
  %v3517 = vunpack.c.h.b16 %v107
  %v3518 = vunpack.c.l.b16 %v108
  %v3519 = vunpack.c.h.b16 %v108
  %v3520 = vunpack.c.l.b16 %v109
  %v3521 = vunpack.c.h.b16 %v109
  %v3522 = vunpack.c.l.b16 %v110
  %v3523 = vunpack.c.h.b16 %v110
  %v3524 = vunpack.c.l.b16 %v111
  %v3525 = vunpack.c.h.b16 %v111
  %v3526 = vunpack.c.l.b16 %v112
  %v3527 = vunpack.c.h.b16 %v112
  %v3528 = vunpack.c.l.b16 %v113
  %v3529 = vunpack.c.h.b16 %v113
  %v3530 = vunpack.c.l.b16 %v114
  %v3531 = vunpack.c.h.b16 %v114
  %v3532 = vunpack.c.l.b16 %v115
  %v3533 = vunpack.c.h.b16 %v115
  %v3534 = vunpack.c.l.b16 %v116
  %v3535 = vunpack.c.h.b16 %v116
  %v3536 = vunpack.c.l.b16 %v117
  %v3537 = vunpack.c.h.b16 %v117
  %v3538 = vunpack.c.l.b16 %v118
  %v3539 = vunpack.c.h.b16 %v118
  %v3540 = vunpack.c.l.b16 %v119
  %v3541 = vunpack.c.h.b16 %v119
  %v3542 = vunpack.c.l.b16 %v120
  %v3543 = vunpack.c.h.b16 %v120
  %v3544 = vunpack.c.l.b16 %v121
  %v3545 = vunpack.c.h.b16 %v121
  %v3546 = vunpack.c.l.b16 %v122
  %v3547 = vunpack.c.h.b16 %v122
  %v3548 = vunpack.c.l.b16 %v123
  %v3549 = vunpack.c.h.b16 %v123
  %v3550 = vunpack.c.l.b16 %v124
  %v3551 = vunpack.c.h.b16 %v124
  %v3552 = vunpack.c.l.b16 %v125
  %v3553 = vunpack.c.h.b16 %v125
  %v3554 = vunpack.c.l.b16 %v126
  %v3555 = vunpack.c.h.b16 %v126
  %v3556 = vunpack.c.l.b16 %v127
  %v3557 = vunpack.c.h.b16 %v127
  %v3558 = vunpack.c.l.b16 %v128
  %v3559 = vunpack.c.h.b16 %v128
  %v3560 = vunpack.c.l.b16 %v129
  %v3561 = vunpack.c.h.b16 %v129
  %v3562 = vunpack.c.l.b16 %v130
  %v3563 = vunpack.c.h.b16 %v130
  %v3564 = vunpack.c.l.b16 %v131
  %v3565 = vunpack.c.h.b16 %v131
  %v3566 = vunpack.c.l.b16 %v132
  %v3567 = vunpack.c.h.b16 %v132
  %v3568 = vunpack.c.l.b16 %v133
  %v3569 = vunpack.c.h.b16 %v133
  %v3570 = vunpack.c.l.b16 %v134
  %v3571 = vunpack.c.h.b16 %v134
  %v3572 = vunpack.c.l.b16 %v135
  %v3573 = vunpack.c.h.b16 %v135
  %v3574 = vunpack.c.l.b16 %v136
  %v3575 = vunpack.c.h.b16 %v136
  %v3576 = vunpack.c.l.b16 %v137
  %v3577 = vunpack.c.h.b16 %v137
  %v3578 = vunpack.c.l.b16 %v138
  %v3579 = vunpack.c.h.b16 %v138
  %v3580 = vunpack.c.l.b16 %v139
  %v3581 = vunpack.c.h.b16 %v139
  %v3582 = vunpack.c.l.b16 %v140
  %v3583 = vunpack.c.h.b16 %v140
  %v3584 = vunpack.c.l.b16 %v141
  %v3585 = vunpack.c.h.b16 %v141
  %v3586 = vunpack.c.l.b16 %v142
  %v3587 = vunpack.c.h.b16 %v142
  %v3588 = vunpack.c.l.b16 %v143
  %v3589 = vunpack.c.h.b16 %v143
  %v3590 = vunpack.c.l.b16 %v144
  %v3591 = vunpack.c.h.b16 %v144
  %v3592 = vunpack.c.l.b16 %v145
  %v3593 = vunpack.c.h.b16 %v145
  %v3594 = vunpack.c.l.b16 %v146
  %v3595 = vunpack.c.h.b16 %v146
  %v3596 = vunpack.c.l.b16 %v147
  %v3597 = vunpack.c.h.b16 %v147
  %v3598 = vunpack.c.l.b16 %v148
  %v3599 = vunpack.c.h.b16 %v148
  %v3600 = vunpack.c.l.b16 %v149
  %v3601 = vunpack.c.h.b16 %v149
  %v3602 = vunpack.c.l.b16 %v150
  %v3603 = vunpack.c.h.b16 %v150
  %v3604 = vunpack.c.l.b16 %v151
  %v3605 = vunpack.c.h.b16 %v151
  %v3606 = vunpack.c.l.b16 %v152
  %v3607 = vunpack.c.h.b16 %v152
  %v3608 = vunpack.c.l.b16 %v153
  %v3609 = vunpack.c.h.b16 %v153
  %v3610 = vunpack.c.l.b16 %v154
  %v3611 = vunpack.c.h.b16 %v154
  %v3612 = vunpack.c.l.b16 %v155
  %v3613 = vunpack.c.h.b16 %v155
  %v3614 = vunpack.c.l.b16 %v156
  %v3615 = vunpack.c.h.b16 %v156
  %v3616 = vunpack.c.l.b16 %v157
  %v3617 = vunpack.c.h.b16 %v157
  %v3618 = vunpack.c.l.b16 %v158
  %v3619 = vunpack.c.h.b16 %v158
  %v3620 = vunpack.c.l.b16 %v159
  %v3621 = vunpack.c.h.b16 %v159
  %v3622 = vunpack.c.l.b16 %v160
  %v3623 = vunpack.c.h.b16 %v160
  %v3624 = vunpack.c.l.b16 %v161
  %v3625 = vunpack.c.h.b16 %v161
  %v3626 = vunpack.c.l.b16 %v162
  %v3627 = vunpack.c.h.b16 %v162
  %v3628 = vunpack.c.l.b16 %v163
  %v3629 = vunpack.c.h.b16 %v163
  %v3630 = vunpack.c.l.b16 %v164
  %v3631 = vunpack.c.h.b16 %v164
  %v3632 = vunpack.c.l.b16 %v165
  %v3633 = vunpack.c.h.b16 %v165
  %v3634 = vunpack.c.l.b16 %v166
  %v3635 = vunpack.c.h.b16 %v166
  %v3636 = vunpack.c.l.b16 %v167
  %v3637 = vunpack.c.h.b16 %v167
  %v3638 = vunpack.c.l.b16 %v168
  %v3639 = vunpack.c.h.b16 %v168
  %v3640 = vunpack.c.l.b16 %v169
  %v3641 = vunpack.c.h.b16 %v169
  %v3642 = vunpack.c.l.b16 %v170
  %v3643 = vunpack.c.h.b16 %v170
  %v3644 = vunpack.c.l.b16 %v171
  %v3645 = vunpack.c.h.b16 %v171
  %v3646 = vunpack.c.l.b16 %v172
  %v3647 = vunpack.c.h.b16 %v172
  %v3648 = vunpack.c.l.b16 %v173
  %v3649 = vunpack.c.h.b16 %v173
  %v3650 = vunpack.c.l.b16 %v174
  %v3651 = vunpack.c.h.b16 %v174
  %v3652 = vunpack.c.l.b16 %v175
  %v3653 = vunpack.c.h.b16 %v175
  %v3654 = vunpack.c.l.b16 %v176
  %v3655 = vunpack.c.h.b16 %v176
  %v3656 = vunpack.c.l.b16 %v177
  %v3657 = vunpack.c.h.b16 %v177
  %v3658 = vunpack.c.l.b16 %v178
  %v3659 = vunpack.c.h.b16 %v178
  %v3660 = vunpack.c.l.b16 %v179
  %v3661 = vunpack.c.h.b16 %v179
  %v3662 = vunpack.c.l.b16 %v180
  %v3663 = vunpack.c.h.b16 %v180
  %v3664 = vunpack.c.l.b16 %v181
  %v3665 = vunpack.c.h.b16 %v181
  %v3666 = vunpack.c.l.b16 %v182
  %v3667 = vunpack.c.h.b16 %v182
  %v3668 = vunpack.c.l.b16 %v183
  %v3669 = vunpack.c.h.b16 %v183
  %v3670 = vunpack.c.l.b16 %v184
  %v3671 = vunpack.c.h.b16 %v184
  %v3672 = vunpack.c.l.b16 %v185
  %v3673 = vunpack.c.h.b16 %v185
  %v3674 = vunpack.c.l.b16 %v186
  %v3675 = vunpack.c.h.b16 %v186
  %v3676 = vunpack.c.l.b16 %v187
  %v3677 = vunpack.c.h.b16 %v187
  %v3678 = vunpack.c.l.b16 %v188
  %v3679 = vunpack.c.h.b16 %v188
  %v3680 = vunpack.c.l.b16 %v189
  %v3681 = vunpack.c.h.b16 %v189
  %v3682 = vunpack.c.l.b16 %v190
  %v3683 = vunpack.c.h.b16 %v190
  %v3684 = vunpack.c.l.b16 %v191
  %v3685 = vunpack.c.h.b16 %v191
  %v3686 = vunpack.c.l.b16 %v192
  %v3687 = vunpack.c.h.b16 %v192
  %v3688 = vunpack.c.l.b16 %v193
  %v3689 = vunpack.c.h.b16 %v193
  %v3690 = vunpack.c.l.b16 %v194
  %v3691 = vunpack.c.h.b16 %v194
  %v3692 = vunpack.c.l.b16 %v195
  %v3693 = vunpack.c.h.b16 %v195
  %v3694 = vunpack.c.l.b16 %v196
  %v3695 = vunpack.c.h.b16 %v196
  %v3696 = vunpack.c.l.b16 %v197
  %v3697 = vunpack.c.h.b16 %v197
  %v3698 = vunpack.c.l.b16 %v198
  %v3699 = vunpack.c.h.b16 %v198
  %v3700 = vunpack.c.l.b16 %v199
  %v3701 = vunpack.c.h.b16 %v199
  %v3702 = vunpack.c.l.b16 %v200
  %v3703 = vunpack.c.h.b16 %v200
  %v3704 = vunpack.c.l.b16 %v201
  %v3705 = vunpack.c.h.b16 %v201
  %v3706 = vunpack.c.l.b16 %v202
  %v3707 = vunpack.c.h.b16 %v202
  %v3708 = vunpack.c.l.b16 %v203
  %v3709 = vunpack.c.h.b16 %v203
  %v3710 = vunpack.c.l.b16 %v204
  %v3711 = vunpack.c.h.b16 %v204
  %v3712 = vunpack.c.l.b16 %v205
  %v3713 = vunpack.c.h.b16 %v205
  %v3714 = vunpack.c.l.b16 %v206
  %v3715 = vunpack.c.h.b16 %v206
  %v3716 = vunpack.c.l.b16 %v207
  %v3717 = vunpack.c.h.b16 %v207
  %v3718 = vunpack.c.l.b16 %v208
  %v3719 = vunpack.c.h.b16 %v208
  %v3720 = vunpack.c.l.b16 %v209
  %v3721 = vunpack.c.h.b16 %v209
  %v3722 = vunpack.c.l.b16 %v210
  %v3723 = vunpack.c.h.b16 %v210
  %v3724 = vunpack.c.l.b16 %v211
  %v3725 = vunpack.c.h.b16 %v211
  %v3726 = vunpack.c.l.b16 %v212
  %v3727 = vunpack.c.h.b16 %v212
  %v3728 = vunpack.c.l.b16 %v213
  %v3729 = vunpack.c.h.b16 %v213
  %v3730 = vunpack.c.l.b16 %v214
  %v3731 = vunpack.c.h.b16 %v214
  %v3732 = vunpack.c.l.b16 %v215
  %v3733 = vunpack.c.h.b16 %v215
  %v3734 = vunpack.c.l.b16 %v216
  %v3735 = vunpack.c.h.b16 %v216
  %v3736 = vunpack.c.l.b16 %v217
  %v3737 = vunpack.c.h.b16 %v217
  %v3738 = vunpack.c.l.b16 %v218
  %v3739 = vunpack.c.h.b16 %v218
  %v3740 = vunpack.c.l.b16 %v219
  %v3741 = vunpack.c.h.b16 %v219
  %v3742 = vunpack.c.l.b16 %v220
  %v3743 = vunpack.c.h.b16 %v220
  %v3744 = vunpack.c.l.b16 %v221
  %v3745 = vunpack.c.h.b16 %v221
  %v3746 = vunpack.c.l.b16 %v222
  %v3747 = vunpack.c.h.b16 %v222
  %v3748 = vunpack.c.l.b16 %v223
  %v3749 = vunpack.c.h.b16 %v223
  %v3750 = vunpack.c.l.b16 %v224
  %v3751 = vunpack.c.h.b16 %v224
  %v3752 = vunpack.c.l.b16 %v225
  %v3753 = vunpack.c.h.b16 %v225
  %v3754 = vunpack.c.l.b16 %v226
  %v3755 = vunpack.c.h.b16 %v226
  %v3756 = vunpack.c.l.b16 %v227
  %v3757 = vunpack.c.h.b16 %v227
  %v3758 = vunpack.c.l.b16 %v228
  %v3759 = vunpack.c.h.b16 %v228
  %v3760 = vunpack.c.l.b16 %v229
  %v3761 = vunpack.c.h.b16 %v229
  %v3762 = vunpack.c.l.b16 %v230
  %v3763 = vunpack.c.h.b16 %v230
  %v3764 = vunpack.c.l.b16 %v231
  %v3765 = vunpack.c.h.b16 %v231
  %v3766 = vunpack.c.l.b16 %v232
  %v3767 = vunpack.c.h.b16 %v232
  %v3768 = vunpack.c.l.b16 %v233
  %v3769 = vunpack.c.h.b16 %v233
  %v3770 = vunpack.c.l.b16 %v234
  %v3771 = vunpack.c.h.b16 %v234
  %v3772 = vunpack.c.l.b16 %v235
  %v3773 = vunpack.c.h.b16 %v235
  %v3774 = vunpack.c.l.b16 %v236
  %v3775 = vunpack.c.h.b16 %v236
  %v3776 = vunpack.c.l.b16 %v237
  %v3777 = vunpack.c.h.b16 %v237
  %v3778 = vunpack.c.l.b16 %v238
  %v3779 = vunpack.c.h.b16 %v238
  %v3780 = vunpack.c.l.b16 %v239
  %v3781 = vunpack.c.h.b16 %v239
  %v3782 = vunpack.c.l.b16 %v240
  %v3783 = vunpack.c.h.b16 %v240
  %v3784 = vunpack.c.l.b16 %v241
  %v3785 = vunpack.c.h.b16 %v241
  %v3786 = vunpack.c.l.b16 %v242
  %v3787 = vunpack.c.h.b16 %v242
  %v3788 = vunpack.c.l.b16 %v243
  %v3789 = vunpack.c.h.b16 %v243
  %v3790 = vunpack.c.l.b16 %v244
  %v3791 = vunpack.c.h.b16 %v244
  %v3792 = vunpack.c.l.b16 %v245
  %v3793 = vunpack.c.h.b16 %v245
  %v3794 = vunpack.c.l.b16 %v246
  %v3795 = vunpack.c.h.b16 %v246
  %v3796 = vunpack.c.l.b16 %v247
  %v3797 = vunpack.c.h.b16 %v247
  %v3798 = vunpack.c.l.b16 %v248
  %v3799 = vunpack.c.h.b16 %v248
  %v3800 = vunpack.c.l.b16 %v249
  %v3801 = vunpack.c.h.b16 %v249
  %v3802 = vunpack.c.l.b16 %v250
  %v3803 = vunpack.c.h.b16 %v250
  %v3804 = vunpack.c.l.b16 %v251
  %v3805 = vunpack.c.h.b16 %v251
  %v3806 = vunpack.c.l.b16 %v252
  %v3807 = vunpack.c.h.b16 %v252
  %v3808 = vunpack.c.l.b16 %v253
  %v3809 = vunpack.c.h.b16 %v253
  %v3810 = vunpack.c.l.b16 %v254
  %v3811 = vunpack.c.h.b16 %v254
  %v3812 = vunpack.c.l.b16 %v255
  %v3813 = vunpack.c.h.b16 %v255
  %v3814 = vunpack.c.l.b16 %v256
  %v3815 = vunpack.c.h.b16 %v256
  %v3816 = vunpack.c.l.b16 %v257
  %v3817 = vunpack.c.h.b16 %v257
  %v3818 = vunpack.c.l.b16 %v258
  %v3819 = vunpack.c.h.b16 %v258
  %v3820 = vunpack.c.l.b16 %v259
  %v3821 = vunpack.c.h.b16 %v259
  %v3822 = vunpack.c.l.b16 %v260
  %v3823 = vunpack.c.h.b16 %v260
  %v3824 = vunpack.c.l.b16 %v261
  %v3825 = vunpack.c.h.b16 %v261
  %v3826 = vunpack.c.l.b16 %v262
  %v3827 = vunpack.c.h.b16 %v262
  %v3828 = vunpack.c.l.b16 %v263
  %v3829 = vunpack.c.h.b16 %v263
  %v3830 = vunpack.c.l.b16 %v264
  %v3831 = vunpack.c.h.b16 %v264
  %v3832 = vunpack.c.l.b16 %v265
  %v3833 = vunpack.c.h.b16 %v265
  %v3834 = vunpack.c.l.b16 %v266
  %v3835 = vunpack.c.h.b16 %v266
  %v3836 = vunpack.c.l.b16 %v267
  %v3837 = vunpack.c.h.b16 %v267
  %v3838 = vunpack.c.l.b16 %v268
  %v3839 = vunpack.c.h.b16 %v268
  %v3840 = vunpack.c.l.b16 %v269
  %v3841 = vunpack.c.h.b16 %v269
  %v3842 = vunpack.c.l.b16 %v270
  %v3843 = vunpack.c.h.b16 %v270
  %v3844 = vunpack.c.l.b16 %v271
  %v3845 = vunpack.c.h.b16 %v271
  %v3846 = vunpack.c.l.b16 %v272
  %v3847 = vunpack.c.h.b16 %v272
  %v3848 = vunpack.c.l.b16 %v273
  %v3849 = vunpack.c.h.b16 %v273
  %v3850 = vunpack.c.l.b16 %v274
  %v3851 = vunpack.c.h.b16 %v274
  %v3852 = vunpack.c.l.b16 %v275
  %v3853 = vunpack.c.h.b16 %v275
  %v3854 = vunpack.c.l.b16 %v276
  %v3855 = vunpack.c.h.b16 %v276
  %v3856 = vunpack.c.l.b16 %v277
  %v3857 = vunpack.c.h.b16 %v277
  %v3858 = vunpack.c.l.b16 %v278
  %v3859 = vunpack.c.h.b16 %v278
  %v3860 = vunpack.c.l.b16 %v279
  %v3861 = vunpack.c.h.b16 %v279
  %v3862 = vunpack.c.l.b16 %v280
  %v3863 = vunpack.c.h.b16 %v280
  %v3864 = vunpack.c.l.b16 %v281
  %v3865 = vunpack.c.h.b16 %v281
  %v3866 = vunpack.c.l.b16 %v282
  %v3867 = vunpack.c.h.b16 %v282
  %v3868 = vunpack.c.l.b16 %v283
  %v3869 = vunpack.c.h.b16 %v283
  %v3870 = vunpack.c.l.b16 %v284
  %v3871 = vunpack.c.h.b16 %v284
  %v3872 = vunpack.c.l.b16 %v285
  %v3873 = vunpack.c.h.b16 %v285
  %v3874 = vunpack.c.l.b16 %v286
  %v3875 = vunpack.c.h.b16 %v286
  %v3876 = vunpack.c.l.b16 %v287
  %v3877 = vunpack.c.h.b16 %v287
  %v3878 = vunpack.c.l.b16 %v288
  %v3879 = vunpack.c.h.b16 %v288
  %v3880 = vunpack.c.l.b16 %v289
  %v3881 = vunpack.c.h.b16 %v289
  %v3882 = vunpack.c.l.b16 %v290
  %v3883 = vunpack.c.h.b16 %v290
  %v3884 = vunpack.c.l.b16 %v291
  %v3885 = vunpack.c.h.b16 %v291
  %v3886 = vunpack.c.l.b16 %v292
  %v3887 = vunpack.c.h.b16 %v292
  %v3888 = vunpack.c.l.b16 %v293
  %v3889 = vunpack.c.h.b16 %v293
  %v3890 = vunpack.c.l.b16 %v294
  %v3891 = vunpack.c.h.b16 %v294
  %v3892 = vunpack.c.l.b16 %v295
  %v3893 = vunpack.c.h.b16 %v295
  %v3894 = vunpack.c.l.b16 %v296
  %v3895 = vunpack.c.h.b16 %v296
  %v3896 = vunpack.c.l.b16 %v297
  %v3897 = vunpack.c.h.b16 %v297
  %v3898 = vunpack.c.l.b16 %v298
  %v3899 = vunpack.c.h.b16 %v298
  %v3900 = vunpack.c.l.b16 %v299
  %v3901 = vunpack.c.h.b16 %v299
  %v3902 = vunpack.c.l.b16 %v300
  %v3903 = vunpack.c.h.b16 %v300
  %v3904 = vunpack.c.l.b16 %v301
  %v3905 = vunpack.c.h.b16 %v301
  %v3906 = vunpack.c.l.b16 %v302
  %v3907 = vunpack.c.h.b16 %v302
  %v3908 = vunpack.c.l.b16 %v303
  %v3909 = vunpack.c.h.b16 %v303
  %v3910 = vunpack.c.l.b16 %v304
  %v3911 = vunpack.c.h.b16 %v304
  %v3912 = vunpack.c.l.b16 %v305
  %v3913 = vunpack.c.h.b16 %v305
  %v3914 = vunpack.c.l.b16 %v306
  %v3915 = vunpack.c.h.b16 %v306
  %v3916 = vunpack.c.l.b16 %v307
  %v3917 = vunpack.c.h.b16 %v307
  %v3918 = vunpack.c.l.b16 %v308
  %v3919 = vunpack.c.h.b16 %v308
  %v3920 = vunpack.c.l.b16 %v309
  %v3921 = vunpack.c.h.b16 %v309
  %v3922 = vunpack.c.l.b16 %v310
  %v3923 = vunpack.c.h.b16 %v310
  %v3924 = vunpack.c.l.b16 %v311
  %v3925 = vunpack.c.h.b16 %v311
  %v3926 = vunpack.c.l.b16 %v312
  %v3927 = vunpack.c.h.b16 %v312
  %v3928 = vunpack.c.l.b16 %v313
  %v3929 = vunpack.c.h.b16 %v313
  %v3930 = vunpack.c.l.b16 %v314
  %v3931 = vunpack.c.h.b16 %v314
  %v3932 = vunpack.c.l.b16 %v315
  %v3933 = vunpack.c.h.b16 %v315
  %v3934 = vunpack.c.l.b16 %v316
  %v3935 = vunpack.c.h.b16 %v316
  %v3936 = vunpack.c.l.b16 %v317
  %v3937 = vunpack.c.h.b16 %v317
  %v3938 = vunpack.c.l.b16 %v318
  %v3939 = vunpack.c.h.b16 %v318
  %v3940 = vunpack.c.l.b16 %v319
  %v3941 = vunpack.c.h.b16 %v319
  %v3942 = vunpack.c.l.b16 %v320
  %v3943 = vunpack.c.h.b16 %v320
  %v3944 = vunpack.c.l.b16 %v321
  %v3945 = vunpack.c.h.b16 %v321
  %v3946 = vunpack.c.l.b16 %v322
  %v3947 = vunpack.c.h.b16 %v322
  %v3948 = vunpack.c.l.b16 %v323
  %v3949 = vunpack.c.h.b16 %v323
  %v3950 = vunpack.c.l.b16 %v324
  %v3951 = vunpack.c.h.b16 %v324
  %v3952 = vunpack.c.l.b16 %v325
  %v3953 = vunpack.c.h.b16 %v325
  %v3954 = vunpack.c.l.b16 %v326
  %v3955 = vunpack.c.h.b16 %v326
  %v3956 = vunpack.c.l.b16 %v327
  %v3957 = vunpack.c.h.b16 %v327
  %v3958 = vunpack.c.l.b16 %v328
  %v3959 = vunpack.c.h.b16 %v328
  %v3960 = vunpack.c.l.b16 %v329
  %v3961 = vunpack.c.h.b16 %v329
  %v3962 = vunpack.c.l.b16 %v330
  %v3963 = vunpack.c.h.b16 %v330
  %v3964 = vunpack.c.l.b16 %v331
  %v3965 = vunpack.c.h.b16 %v331
  %v3966 = vunpack.c.l.b16 %v332
  %v3967 = vunpack.c.h.b16 %v332
  %v3968 = vunpack.c.l.b16 %v333
  %v3969 = vunpack.c.h.b16 %v333
  %v3970 = vunpack.c.l.b16 %v334
  %v3971 = vunpack.c.h.b16 %v334
  %v3972 = vunpack.c.l.b16 %v335
  %v3973 = vunpack.c.h.b16 %v335
  %v3974 = vunpack.c.l.b16 %v336
  %v3975 = vunpack.c.h.b16 %v336
  %v3976 = vunpack.c.l.b16 %v337
  %v3977 = vunpack.c.h.b16 %v337
  %v3978 = vunpack.c.l.b16 %v338
  %v3979 = vunpack.c.h.b16 %v338
  %v3980 = vunpack.c.l.b16 %v339
  %v3981 = vunpack.c.h.b16 %v339
  %v3982 = vunpack.c.l.b16 %v340
  %v3983 = vunpack.c.h.b16 %v340
  %v3984 = vunpack.c.l.b16 %v341
  %v3985 = vunpack.c.h.b16 %v341
  %v3986 = vunpack.c.l.b16 %v342
  %v3987 = vunpack.c.h.b16 %v342
  %v3988 = vunpack.c.l.b16 %v343
  %v3989 = vunpack.c.h.b16 %v343
  %v3990 = vunpack.c.l.b16 %v344
  %v3991 = vunpack.c.h.b16 %v344
  %v3992 = vunpack.c.l.b16 %v345
  %v3993 = vunpack.c.h.b16 %v345
  %v3994 = vunpack.c.l.b16 %v346
  %v3995 = vunpack.c.h.b16 %v346
  %v3996 = vunpack.c.l.b16 %v347
  %v3997 = vunpack.c.h.b16 %v347
  %v3998 = vunpack.c.l.b16 %v348
  %v3999 = vunpack.c.h.b16 %v348
  %v4000 = vunpack.c.l.b16 %v349
  %v4001 = vunpack.c.h.b16 %v349
  %v4002 = vunpack.c.l.b16 %v350
  %v4003 = vunpack.c.h.b16 %v350
  %v4004 = vunpack.c.l.b16 %v351
  %v4005 = vunpack.c.h.b16 %v351
  %v4006 = vunpack.c.l.b16 %v352
  %v4007 = vunpack.c.h.b16 %v352
  %v4008 = vunpack.c.l.b16 %v353
  %v4009 = vunpack.c.h.b16 %v353
  %v4010 = vunpack.c.l.b16 %v354
  %v4011 = vunpack.c.h.b16 %v354
  %v4012 = vunpack.c.l.b16 %v355
  %v4013 = vunpack.c.h.b16 %v355
  %v4014 = vunpack.c.l.b16 %v356
  %v4015 = vunpack.c.h.b16 %v356
  %v4016 = vunpack.c.l.b16 %v357
  %v4017 = vunpack.c.h.b16 %v357
  %v4018 = vunpack.c.l.b16 %v358
  %v4019 = vunpack.c.h.b16 %v358
  %v4020 = vunpack.c.l.b16 %v359
  %v4021 = vunpack.c.h.b16 %v359
  %v4022 = vunpack.c.l.b16 %v360
  %v4023 = vunpack.c.h.b16 %v360
  %v4024 = vunpack.c.l.b16 %v361
  %v4025 = vunpack.c.h.b16 %v361
  %v4026 = vunpack.c.l.b16 %v362
  %v4027 = vunpack.c.h.b16 %v362
  %v4028 = vunpack.c.l.b16 %v363
  %v4029 = vunpack.c.h.b16 %v363
  %v4030 = vunpack.c.l.b16 %v364
  %v4031 = vunpack.c.h.b16 %v364
  %v4032 = vunpack.c.l.b16 %v365
  %v4033 = vunpack.c.h.b16 %v365
  %v4034 = vunpack.c.l.b16 %v366
  %v4035 = vunpack.c.h.b16 %v366
  %v4036 = vunpack.c.l.b16 %v367
  %v4037 = vunpack.c.h.b16 %v367
  %v4038 = vunpack.c.l.b16 %v368
  %v4039 = vunpack.c.h.b16 %v368
  %v4040 = vunpack.c.l.b16 %v369
  %v4041 = vunpack.c.h.b16 %v369
  %v4042 = vunpack.c.l.b16 %v370
  %v4043 = vunpack.c.h.b16 %v370
  %v4044 = vunpack.c.l.b16 %v371
  %v4045 = vunpack.c.h.b16 %v371
  %v4046 = vunpack.c.l.b16 %v372
  %v4047 = vunpack.c.h.b16 %v372
  %v4048 = vunpack.c.l.b16 %v373
  %v4049 = vunpack.c.h.b16 %v373
  %v4050 = vunpack.c.l.b16 %v374
  %v4051 = vunpack.c.h.b16 %v374
  %v4052 = vunpack.c.l.b16 %v375
  %v4053 = vunpack.c.h.b16 %v375
  %v4054 = vunpack.c.l.b16 %v376
  %v4055 = vunpack.c.h.b16 %v376
  %v4056 = vunpack.c.l.b16 %v377
  %v4057 = vunpack.c.h.b16 %v377
  %v4058 = vunpack.c.l.b16 %v378
  %v4059 = vunpack.c.h.b16 %v378
  %v4060 = vunpack.c.l.b16 %v379
  %v4061 = vunpack.c.h.b16 %v379
  %v4062 = vunpack.c.l.b16 %v380
  %v4063 = vunpack.c.h.b16 %v380
  %v4064 = vunpack.c.l.b16 %v381
  %v4065 = vunpack.c.h.b16 %v381
  %v4066 = vunpack.c.l.b16 %v382
  %v4067 = vunpack.c.h.b16 %v382
  %v4068 = vunpack.c.l.b16 %v383
  %v4069 = vunpack.c.h.b16 %v383
  %v4070 = vunpack.c.l.b16 %v384
  %v4071 = vunpack.c.h.b16 %v384
  %v4072 = vunpack.c.l.b16 %v385
  %v4073 = vunpack.c.h.b16 %v385
  %v4074 = vunpack.c.l.b16 %v386
  %v4075 = vunpack.c.h.b16 %v386
  %v4076 = vunpack.c.l.b16 %v387
  %v4077 = vunpack.c.h.b16 %v387
  %v4078 = vunpack.c.l.b16 %v388
  %v4079 = vunpack.c.h.b16 %v388
  %v4080 = vunpack.c.l.b16 %v389
  %v4081 = vunpack.c.h.b16 %v389
  %v4082 = vunpack.c.l.b16 %v390
  %v4083 = vunpack.c.h.b16 %v390
  %v4084 = vunpack.c.l.b16 %v391
  %v4085 = vunpack.c.h.b16 %v391
  %v4086 = vunpack.c.l.b16 %v392
  %v4087 = vunpack.c.h.b16 %v392
  %v4088 = vunpack.c.l.b16 %v393
  %v4089 = vunpack.c.h.b16 %v393
  %v4090 = vunpack.c.l.b16 %v394
  %v4091 = vunpack.c.h.b16 %v394
  %v4092 = vunpack.c.l.b16 %v395
  %v4093 = vunpack.c.h.b16 %v395
  %v4094 = vunpack.c.l.b16 %v396
  %v4095 = vunpack.c.h.b16 %v396
  %v4096 = vunpack.c.l.b16 %v397
  %v4097 = vunpack.c.h.b16 %v397
  %v4098 = vunpack.c.l.b16 %v398
  %v4099 = vunpack.c.h.b16 %v398
  %v4100 = vunpack.c.l.b16 %v399
  %v4101 = vunpack.c.h.b16 %v399
  %v4102 = vunpack.c.l.b16 %v400
  %v4103 = vunpack.c.h.b16 %v400
  %v4104 = vunpack.c.l.b16 %v401
  %v4105 = vunpack.c.h.b16 %v401
  %v4106 = vunpack.c.l.b16 %v402
  %v4107 = vunpack.c.h.b16 %v402
  %v4108 = vunpack.c.l.b16 %v403
  %v4109 = vunpack.c.h.b16 %v403
  %v4110 = vunpack.c.l.b16 %v404
  %v4111 = vunpack.c.h.b16 %v404
  %v4112 = vunpack.c.l.b16 %v405
  %v4113 = vunpack.c.h.b16 %v405
  %v4114 = vunpack.c.l.b16 %v406
  %v4115 = vunpack.c.h.b16 %v406
  %v4116 = vunpack.c.l.b16 %v407
  %v4117 = vunpack.c.h.b16 %v407
  %v4118 = vunpack.c.l.b16 %v408
  %v4119 = vunpack.c.h.b16 %v408
  %v4120 = vunpack.c.l.b16 %v409
  %v4121 = vunpack.c.h.b16 %v409
  %v4122 = vunpack.c.l.b16 %v410
  %v4123 = vunpack.c.h.b16 %v410
  %v4124 = vunpack.c.l.b16 %v411
  %v4125 = vunpack.c.h.b16 %v411
  %v4126 = vunpack.c.l.b16 %v412
  %v4127 = vunpack.c.h.b16 %v412
  %v4128 = vunpack.c.l.b16 %v413
  %v4129 = vunpack.c.h.b16 %v413
  %v4130 = vunpack.c.l.b16 %v414
  %v4131 = vunpack.c.h.b16 %v414
  %v4132 = vunpack.c.l.b16 %v415
  %v4133 = vunpack.c.h.b16 %v415
  %v4134 = vunpack.c.l.b16 %v416
  %v4135 = vunpack.c.h.b16 %v416
  %v4136 = vunpack.c.l.b16 %v417
  %v4137 = vunpack.c.h.b16 %v417
  %v4138 = vunpack.c.l.b16 %v418
  %v4139 = vunpack.c.h.b16 %v418
  %v4140 = vunpack.c.l.b16 %v419
  %v4141 = vunpack.c.h.b16 %v419
  %v4142 = vunpack.c.l.b16 %v420
  %v4143 = vunpack.c.h.b16 %v420
  %v4144 = vunpack.c.l.b16 %v421
  %v4145 = vunpack.c.h.b16 %v421
  %v4146 = vunpack.c.l.b16 %v422
  %v4147 = vunpack.c.h.b16 %v422
  %v4148 = vunpack.c.l.b16 %v423
  %v4149 = vunpack.c.h.b16 %v423
  %v4150 = vunpack.c.l.b16 %v424
  %v4151 = vunpack.c.h.b16 %v424
  %v4152 = vunpack.c.l.b16 %v425
  %v4153 = vunpack.c.h.b16 %v425
  %v4154 = vunpack.c.l.b16 %v426
  %v4155 = vunpack.c.h.b16 %v426
  %v4156 = vunpack.c.l.b16 %v427
  %v4157 = vunpack.c.h.b16 %v427
  %v4158 = vunpack.c.l.b16 %v428
  %v4159 = vunpack.c.h.b16 %v428
  %v4160 = vunpack.c.l.b16 %v429
  %v4161 = vunpack.c.h.b16 %v429
  %v4162 = vunpack.c.l.b16 %v430
  %v4163 = vunpack.c.h.b16 %v430
  %v4164 = vunpack.c.l.b16 %v431
  %v4165 = vunpack.c.h.b16 %v431
  %v4166 = vunpack.c.l.b16 %v432
  %v4167 = vunpack.c.h.b16 %v432
  %v4168 = vunpack.c.l.b16 %v433
  %v4169 = vunpack.c.h.b16 %v433
  %v4170 = vunpack.c.l.b16 %v434
  %v4171 = vunpack.c.h.b16 %v434
  %v4172 = vunpack.c.l.b16 %v435
  %v4173 = vunpack.c.h.b16 %v435
  %v4174 = vunpack.c.l.b16 %v436
  %v4175 = vunpack.c.h.b16 %v436
  %v4176 = vunpack.c.l.b16 %v437
  %v4177 = vunpack.c.h.b16 %v437
  %v4178 = vunpack.c.l.b16 %v438
  %v4179 = vunpack.c.h.b16 %v438
  %v4180 = vunpack.c.l.b16 %v439
  %v4181 = vunpack.c.h.b16 %v439
  %v4182 = vunpack.c.l.b16 %v440
  %v4183 = vunpack.c.h.b16 %v440
  %v4184 = vunpack.c.l.b16 %v441
  %v4185 = vunpack.c.h.b16 %v441
  %v4186 = vunpack.c.l.b16 %v442
  %v4187 = vunpack.c.h.b16 %v442
  %v4188 = vunpack.c.l.b16 %v443
  %v4189 = vunpack.c.h.b16 %v443
  %v4190 = vunpack.c.l.b16 %v444
  %v4191 = vunpack.c.h.b16 %v444
  %v4192 = vunpack.c.l.b16 %v445
  %v4193 = vunpack.c.h.b16 %v445
  %v4194 = vunpack.c.l.b16 %v446
  %v4195 = vunpack.c.h.b16 %v446
  %v4196 = vunpack.c.l.b16 %v447
  %v4197 = vunpack.c.h.b16 %v447
  %v4198 = vunpack.c.l.b16 %v448
  %v4199 = vunpack.c.h.b16 %v448
  %v4200 = vunpack.c.l.b16 %v449
  %v4201 = vunpack.c.h.b16 %v449
  %v4202 = vunpack.c.l.b16 %v450
  %v4203 = vunpack.c.h.b16 %v450
  %v4204 = vunpack.c.l.b16 %v451
  %v4205 = vunpack.c.h.b16 %v451
  %v4206 = vunpack.c.l.b16 %v452
  %v4207 = vunpack.c.h.b16 %v452
  %v4208 = vunpack.c.l.b16 %v453
  %v4209 = vunpack.c.h.b16 %v453
  %v4210 = vunpack.c.l.b16 %v454
  %v4211 = vunpack.c.h.b16 %v454
  %v4212 = vunpack.c.l.b16 %v455
  %v4213 = vunpack.c.h.b16 %v455
  %v4214 = vunpack.c.l.b16 %v456
  %v4215 = vunpack.c.h.b16 %v456
  %v4216 = vunpack.c.l.b16 %v457
  %v4217 = vunpack.c.h.b16 %v457
  %v4218 = vunpack.c.l.b16 %v458
  %v4219 = vunpack.c.h.b16 %v458
  %v4220 = vunpack.c.l.b16 %v459
  %v4221 = vunpack.c.h.b16 %v459
  %v4222 = vunpack.c.l.b16 %v460
  %v4223 = vunpack.c.h.b16 %v460
  %v4224 = vunpack.c.l.b16 %v461
  %v4225 = vunpack.c.h.b16 %v461
  %v4226 = vunpack.c.l.b16 %v462
  %v4227 = vunpack.c.h.b16 %v462
  %v4228 = vunpack.c.l.b16 %v463
  %v4229 = vunpack.c.h.b16 %v463
  %v4230 = vunpack.c.l.b16 %v464
  %v4231 = vunpack.c.h.b16 %v464
  %v4232 = vunpack.c.l.b16 %v465
  %v4233 = vunpack.c.h.b16 %v465
  %v4234 = vunpack.c.l.b16 %v466
  %v4235 = vunpack.c.h.b16 %v466
  %v4236 = vunpack.c.l.b16 %v467
  %v4237 = vunpack.c.h.b16 %v467
  %v4238 = vunpack.c.l.b16 %v468
  %v4239 = vunpack.c.h.b16 %v468
  %v4240 = vunpack.c.l.b16 %v469
  %v4241 = vunpack.c.h.b16 %v469
  %v4242 = vunpack.c.l.b16 %v470
  %v4243 = vunpack.c.h.b16 %v470
  %v4244 = vunpack.c.l.b16 %v471
  %v4245 = vunpack.c.h.b16 %v471
  %v4246 = vunpack.c.l.b16 %v472
  %v4247 = vunpack.c.h.b16 %v472
  %v4248 = vunpack.c.l.b16 %v473
  %v4249 = vunpack.c.h.b16 %v473
  %v4250 = vunpack.c.l.b16 %v474
  %v4251 = vunpack.c.h.b16 %v474
  %v4252 = vunpack.c.l.b16 %v475
  %v4253 = vunpack.c.h.b16 %v475
  %v4254 = vunpack.c.l.b16 %v476
  %v4255 = vunpack.c.h.b16 %v476
  %v4256 = vunpack.c.l.b16 %v477
  %v4257 = vunpack.c.h.b16 %v477
  %v4258 = vunpack.c.l.b16 %v478
  %v4259 = vunpack.c.h.b16 %v478
  %v4260 = vunpack.c.l.b16 %v479
  %v4261 = vunpack.c.h.b16 %v479
  %v4262 = vunpack.c.l.b16 %v480
  %v4263 = vunpack.c.h.b16 %v480
  %v4264 = vunpack.c.l.b16 %v481
  %v4265 = vunpack.c.h.b16 %v481
  %v4266 = vunpack.c.l.b16 %v482
  %v4267 = vunpack.c.h.b16 %v482
  %v4268 = vunpack.c.l.b16 %v483
  %v4269 = vunpack.c.h.b16 %v483
  %v4270 = vunpack.c.l.b16 %v484
  %v4271 = vunpack.c.h.b16 %v484
  %v4272 = vunpack.c.l.b16 %v485
  %v4273 = vunpack.c.h.b16 %v485
  %v4274 = vunpack.c.l.b16 %v486
  %v4275 = vunpack.c.h.b16 %v486
  %v4276 = vunpack.c.l.b16 %v487
  %v4277 = vunpack.c.h.b16 %v487
  %v4278 = vunpack.c.l.b16 %v488
  %v4279 = vunpack.c.h.b16 %v488
  %v4280 = vunpack.c.l.b16 %v489
  %v4281 = vunpack.c.h.b16 %v489
  %v4282 = vunpack.c.l.b16 %v490
  %v4283 = vunpack.c.h.b16 %v490
  %v4284 = vunpack.c.l.b16 %v491
  %v4285 = vunpack.c.h.b16 %v491
  %v4286 = vunpack.c.l.b16 %v492
  %v4287 = vunpack.c.h.b16 %v492
  %v4288 = vunpack.c.l.b16 %v493
  %v4289 = vunpack.c.h.b16 %v493
  %v4290 = vunpack.c.l.b16 %v494
  %v4291 = vunpack.c.h.b16 %v494
  %v4292 = vunpack.c.l.b16 %v495
  %v4293 = vunpack.c.h.b16 %v495
  %v4294 = vunpack.c.l.b16 %v496
  %v4295 = vunpack.c.h.b16 %v496
  %v4296 = vunpack.c.l.b16 %v497
  %v4297 = vunpack.c.h.b16 %v497
  %v4298 = vunpack.c.l.b16 %v498
  %v4299 = vunpack.c.h.b16 %v498
  %v4300 = vunpack.c.l.b16 %v499
  %v4301 = vunpack.c.h.b16 %v499
  %v4302 = vunpack.c.l.b16 %v500
  %v4303 = vunpack.c.h.b16 %v500
  %v4304 = vunpack.c.l.b16 %v501
  %v4305 = vunpack.c.h.b16 %v501
  %v4306 = vunpack.c.l.b16 %v502
  %v4307 = vunpack.c.h.b16 %v502
  %v4308 = vunpack.c.l.b16 %v503
  %v4309 = vunpack.c.h.b16 %v503
  %v4310 = vunpack.c.l.b16 %v504
  %v4311 = vunpack.c.h.b16 %v504
  %v4312 = vunpack.c.l.b16 %v505
  %v4313 = vunpack.c.h.b16 %v505
  %v4314 = vunpack.c.l.b16 %v506
  %v4315 = vunpack.c.h.b16 %v506
  %v4316 = vunpack.c.l.b16 %v507
  %v4317 = vunpack.c.h.b16 %v507
  %v4318 = vunpack.c.l.b16 %v508
  %v4319 = vunpack.c.h.b16 %v508
  %v4320 = vunpack.c.l.b16 %v509
  %v4321 = vunpack.c.h.b16 %v509
  %v4322 = vunpack.c.l.b16 %v510
  %v4323 = vunpack.c.h.b16 %v510
  %v4324 = vunpack.c.l.b16 %v511
  %v4325 = vunpack.c.h.b16 %v511
  %v4326 = vunpack.c.l.b16 %v512
  %v4327 = vunpack.c.h.b16 %v512
  %v4328 = vunpack.c.l.b16 %v513
  %v4329 = vunpack.c.h.b16 %v513
  %v4330 = vunpack.c.l.b16 %v514
  %v4331 = vunpack.c.h.b16 %v514
  %v4332 = vunpack.c.l.b16 %v515
  %v4333 = vunpack.c.h.b16 %v515
  %v4334 = vunpack.c.l.b16 %v516
  %v4335 = vunpack.c.h.b16 %v516
  %v4336 = vunpack.c.l.b16 %v517
  %v4337 = vunpack.c.h.b16 %v517
  %v4338 = vunpack.c.l.b16 %v518
  %v4339 = vunpack.c.h.b16 %v518
  %v4340 = vunpack.c.l.b16 %v519
  %v4341 = vunpack.c.h.b16 %v519
  %v4342 = vunpack.c.l.b16 %v520
  %v4343 = vunpack.c.h.b16 %v520
  %v4344 = vunpack.c.l.b16 %v521
  %v4345 = vunpack.c.h.b16 %v521
  %v4346 = vunpack.c.l.b16 %v522
  %v4347 = vunpack.c.h.b16 %v522
  %v4348 = vunpack.c.l.b16 %v523
  %v4349 = vunpack.c.h.b16 %v523
  %v4350 = vunpack.c.l.b16 %v524
  %v4351 = vunpack.c.h.b16 %v524
  %v4352 = vunpack.c.l.b16 %v525
  %v4353 = vunpack.c.h.b16 %v525
  %v4354 = vunpack.c.l.b16 %v526
  %v4355 = vunpack.c.h.b16 %v526
  %v4356 = vunpack.c.l.b16 %v527
  %v4357 = vunpack.c.h.b16 %v527
  %v4358 = vunpack.c.l.b16 %v528
  %v4359 = vunpack.c.h.b16 %v528
  %v4360 = vunpack.c.l.b16 %v529
  %v4361 = vunpack.c.h.b16 %v529
  %v4362 = vunpack.c.l.b16 %v530
  %v4363 = vunpack.c.h.b16 %v530
  %v4364 = vunpack.c.l.b16 %v531
  %v4365 = vunpack.c.h.b16 %v531
  %v4366 = vunpack.c.l.b16 %v532
  %v4367 = vunpack.c.h.b16 %v532
  %v4368 = vunpack.c.l.b16 %v533
  %v4369 = vunpack.c.h.b16 %v533
  %v4370 = vunpack.c.l.b16 %v534
  %v4371 = vunpack.c.h.b16 %v534
  %v4372 = vunpack.c.l.b16 %v535
  %v4373 = vunpack.c.h.b16 %v535
  %v4374 = vunpack.c.l.b16 %v536
  %v4375 = vunpack.c.h.b16 %v536
  %v4376 = vunpack.c.l.b16 %v537
  %v4377 = vunpack.c.h.b16 %v537
  %v4378 = vunpack.c.l.b16 %v538
  %v4379 = vunpack.c.h.b16 %v538
  %v4380 = vunpack.c.l.b16 %v539
  %v4381 = vunpack.c.h.b16 %v539
  %v4382 = vunpack.c.l.b16 %v540
  %v4383 = vunpack.c.h.b16 %v540
  %v4384 = vunpack.c.l.b16 %v541
  %v4385 = vunpack.c.h.b16 %v541
  %v4386 = vunpack.c.l.b16 %v542
  %v4387 = vunpack.c.h.b16 %v542
  %v4388 = vunpack.c.l.b16 %v543
  %v4389 = vunpack.c.h.b16 %v543
  %v4390 = vunpack.c.l.b16 %v544
  %v4391 = vunpack.c.h.b16 %v544
  %v4392 = vunpack.c.l.b16 %v545
  %v4393 = vunpack.c.h.b16 %v545
  %v4394 = vunpack.c.l.b16 %v546
  %v4395 = vunpack.c.h.b16 %v546
  %v4396 = vunpack.c.l.b16 %v547
  %v4397 = vunpack.c.h.b16 %v547
  %v4398 = vunpack.c.l.b16 %v548
  %v4399 = vunpack.c.h.b16 %v548
  %v4400 = vunpack.c.l.b16 %v549
  %v4401 = vunpack.c.h.b16 %v549
  %v4402 = vunpack.c.l.b16 %v550
  %v4403 = vunpack.c.h.b16 %v550
  %v4404 = vunpack.c.l.b16 %v551
  %v4405 = vunpack.c.h.b16 %v551
  %v4406 = vunpack.c.l.b16 %v552
  %v4407 = vunpack.c.h.b16 %v552
  %v4408 = vunpack.c.l.b16 %v553
  %v4409 = vunpack.c.h.b16 %v553
  %v4410 = vunpack.c.l.b16 %v554
  %v4411 = vunpack.c.h.b16 %v554
  %v4412 = vunpack.c.l.b16 %v555
  %v4413 = vunpack.c.h.b16 %v555
  %v4414 = vunpack.c.l.b16 %v556
  %v4415 = vunpack.c.h.b16 %v556
  %v4416 = vunpack.c.l.b16 %v557
  %v4417 = vunpack.c.h.b16 %v557
  %v4418 = vunpack.c.l.b16 %v558
  %v4419 = vunpack.c.h.b16 %v558
  %v4420 = vunpack.c.l.b16 %v559
  %v4421 = vunpack.c.h.b16 %v559
  %v4422 = vunpack.c.l.b16 %v560
  %v4423 = vunpack.c.h.b16 %v560
  %v4424 = vunpack.c.l.b16 %v561
  %v4425 = vunpack.c.h.b16 %v561
  %v4426 = vunpack.c.l.b16 %v562
  %v4427 = vunpack.c.h.b16 %v562
  %v4428 = vunpack.c.l.b16 %v563
  %v4429 = vunpack.c.h.b16 %v563
  %v4430 = vunpack.c.l.b16 %v564
  %v4431 = vunpack.c.h.b16 %v564
  %v4432 = vunpack.c.l.b16 %v565
  %v4433 = vunpack.c.h.b16 %v565
  %v4434 = vunpack.c.l.b16 %v566
  %v4435 = vunpack.c.h.b16 %v566
  %v4436 = vunpack.c.l.b16 %v567
  %v4437 = vunpack.c.h.b16 %v567
  %v4438 = vunpack.c.l.b16 %v568
  %v4439 = vunpack.c.h.b16 %v568
  %v4440 = vunpack.c.l.b16 %v569
  %v4441 = vunpack.c.h.b16 %v569
  %v4442 = vunpack.c.l.b16 %v570
  %v4443 = vunpack.c.h.b16 %v570
  %v4444 = vunpack.c.l.b16 %v571
  %v4445 = vunpack.c.h.b16 %v571
  %v4446 = vunpack.c.l.b16 %v572
  %v4447 = vunpack.c.h.b16 %v572
  %v4448 = vunpack.c.l.b16 %v573
  %v4449 = vunpack.c.h.b16 %v573
  %v4450 = vunpack.c.l.b16 %v574
  %v4451 = vunpack.c.h.b16 %v574
  %v4452 = vunpack.c.l.b16 %v575
  %v4453 = vunpack.c.h.b16 %v575
  %v4454 = vunpack.c.l.b16 %v576
  %v4455 = vunpack.c.h.b16 %v576
  %v4456 = vunpack.c.l.b16 %v577
  %v4457 = vunpack.c.h.b16 %v577
  %v4458 = vunpack.c.l.b16 %v578
  %v4459 = vunpack.c.h.b16 %v578
  %v4460 = vunpack.c.l.b16 %v579
  %v4461 = vunpack.c.h.b16 %v579
  %v4462 = vunpack.c.l.b16 %v580
  %v4463 = vunpack.c.h.b16 %v580
  %v4464 = vunpack.c.l.b16 %v581
  %v4465 = vunpack.c.h.b16 %v581
  %v4466 = vunpack.c.l.b16 %v582
  %v4467 = vunpack.c.h.b16 %v582
  %v4468 = vunpack.c.l.b16 %v583
  %v4469 = vunpack.c.h.b16 %v583
  %v4470 = vunpack.c.l.b16 %v584
  %v4471 = vunpack.c.h.b16 %v584
  %v4472 = vunpack.c.l.b16 %v585
  %v4473 = vunpack.c.h.b16 %v585
  %v4474 = vunpack.c.l.b16 %v586
  %v4475 = vunpack.c.h.b16 %v586
  %v4476 = vunpack.c.l.b16 %v587
  %v4477 = vunpack.c.h.b16 %v587
  %v4478 = vunpack.c.l.b16 %v588
  %v4479 = vunpack.c.h.b16 %v588
  %v4480 = vunpack.c.l.b16 %v589
  %v4481 = vunpack.c.h.b16 %v589
  %v4482 = vunpack.c.l.b16 %v590
  %v4483 = vunpack.c.h.b16 %v590
  %v4484 = vunpack.c.l.b16 %v591
  %v4485 = vunpack.c.h.b16 %v591
  %v4486 = vunpack.c.l.b16 %v592
  %v4487 = vunpack.c.h.b16 %v592
  %v4488 = vunpack.c.l.b16 %v593
  %v4489 = vunpack.c.h.b16 %v593
  %v4490 = vunpack.c.l.b16 %v594
  %v4491 = vunpack.c.h.b16 %v594
  %v4492 = vunpack.c.l.b16 %v595
  %v4493 = vunpack.c.h.b16 %v595
  %v4494 = vunpack.c.l.b16 %v596
  %v4495 = vunpack.c.h.b16 %v596
  %v4496 = vunpack.c.l.b16 %v597
  %v4497 = vunpack.c.h.b16 %v597
  %v4498 = vunpack.c.l.b16 %v598
  %v4499 = vunpack.c.h.b16 %v598
  %v4500 = vunpack.c.l.b16 %v599
  %v4501 = vunpack.c.h.b16 %v599
  %v4502 = vunpack.c.l.b16 %v600
  %v4503 = vunpack.c.h.b16 %v600
  %v4504 = vunpack.c.l.b16 %v601
  %v4505 = vunpack.c.h.b16 %v601
  %v4506 = vunpack.c.l.b16 %v602
  %v4507 = vunpack.c.h.b16 %v602
  %v4508 = vunpack.c.l.b16 %v603
  %v4509 = vunpack.c.h.b16 %v603
  %v4510 = vunpack.c.l.b16 %v604
  %v4511 = vunpack.c.h.b16 %v604
  %v4512 = vunpack.c.l.b16 %v605
  %v4513 = vunpack.c.h.b16 %v605
  %v4514 = vunpack.c.l.b16 %v606
  %v4515 = vunpack.c.h.b16 %v606
  %v4516 = vunpack.c.l.b16 %v607
  %v4517 = vunpack.c.h.b16 %v607
  %v4518 = vunpack.c.l.b16 %v608
  %v4519 = vunpack.c.h.b16 %v608
  %v4520 = vunpack.c.l.b16 %v609
  %v4521 = vunpack.c.h.b16 %v609
  %v4522 = vunpack.c.l.b16 %v610
  %v4523 = vunpack.c.h.b16 %v610
  %v4524 = vunpack.c.l.b16 %v611
  %v4525 = vunpack.c.h.b16 %v611
  %v4526 = vunpack.c.l.b16 %v612
  %v4527 = vunpack.c.h.b16 %v612
  %v4528 = vunpack.c.l.b16 %v613
  %v4529 = vunpack.c.h.b16 %v613
  %v4530 = vunpack.c.l.b16 %v614
  %v4531 = vunpack.c.h.b16 %v614
  %v4532 = vunpack.c.l.b16 %v615
  %v4533 = vunpack.c.h.b16 %v615
  %v4534 = vunpack.c.l.b16 %v616
  %v4535 = vunpack.c.h.b16 %v616
  %v4536 = vunpack.c.l.b16 %v617
  %v4537 = vunpack.c.h.b16 %v617
  %v4538 = vunpack.c.l.b16 %v618
  %v4539 = vunpack.c.h.b16 %v618
  %v4540 = vunpack.c.l.b16 %v619
  %v4541 = vunpack.c.h.b16 %v619
  %v4542 = vunpack.c.l.b16 %v620
  %v4543 = vunpack.c.h.b16 %v620
  %v4544 = vunpack.c.l.b16 %v621
  %v4545 = vunpack.c.h.b16 %v621
  %v4546 = vunpack.c.l.b16 %v622
  %v4547 = vunpack.c.h.b16 %v622
  %v4548 = vunpack.c.l.b16 %v623
  %v4549 = vunpack.c.h.b16 %v623
  %v4550 = vunpack.c.l.b16 %v624
  %v4551 = vunpack.c.h.b16 %v624
  %v4552 = vunpack.c.l.b16 %v625
  %v4553 = vunpack.c.h.b16 %v625
  %v4554 = vunpack.c.l.b16 %v626
  %v4555 = vunpack.c.h.b16 %v626
  %v4556 = vunpack.c.l.b16 %v627
  %v4557 = vunpack.c.h.b16 %v627
  %v4558 = vunpack.c.l.b16 %v628
  %v4559 = vunpack.c.h.b16 %v628
  %v4560 = vunpack.c.l.b16 %v629
  %v4561 = vunpack.c.h.b16 %v629
  %v4562 = vunpack.c.l.b16 %v630
  %v4563 = vunpack.c.h.b16 %v630
  %v4564 = vunpack.c.l.b16 %v631
  %v4565 = vunpack.c.h.b16 %v631
  %v4566 = vunpack.c.l.b16 %v632
  %v4567 = vunpack.c.h.b16 %v632
  %v4568 = vunpack.c.l.b16 %v633
  %v4569 = vunpack.c.h.b16 %v633
  %v4570 = vunpack.c.l.b16 %v634
  %v4571 = vunpack.c.h.b16 %v634
  %v4572 = vunpack.c.l.b16 %v635
  %v4573 = vunpack.c.h.b16 %v635
  %v4574 = vunpack.c.l.b16 %v636
  %v4575 = vunpack.c.h.b16 %v636
  %v4576 = vunpack.c.l.b16 %v637
  %v4577 = vunpack.c.h.b16 %v637
  %v4578 = vunpack.c.l.b16 %v638
  %v4579 = vunpack.c.h.b16 %v638
  %v4580 = vunpack.c.l.b16 %v639
  %v4581 = vunpack.c.h.b16 %v639
  %v4582 = vunpack.c.l.b16 %v640
  %v4583 = vunpack.c.h.b16 %v640
  %v4584 = vunpack.c.l.b16 %v641
  %v4585 = vunpack.c.h.b16 %v641
  %v4586 = vunpack.c.l.b16 %v642
  %v4587 = vunpack.c.h.b16 %v642
  %v4588 = vunpack.c.l.b16 %v643
  %v4589 = vunpack.c.h.b16 %v643
  %v4590 = vunpack.c.l.b16 %v644
  %v4591 = vunpack.c.h.b16 %v644
  %v4592 = vunpack.c.l.b16 %v645
  %v4593 = vunpack.c.h.b16 %v645
  %v4594 = vunpack.c.l.b16 %v646
  %v4595 = vunpack.c.h.b16 %v646
  %v4596 = vunpack.c.l.b16 %v647
  %v4597 = vunpack.c.h.b16 %v647
  %v4598 = vunpack.c.l.b16 %v648
  %v4599 = vunpack.c.h.b16 %v648
  %v4600 = vunpack.c.l.b16 %v649
  %v4601 = vunpack.c.h.b16 %v649
  %v4602 = vunpack.c.l.b16 %v650
  %v4603 = vunpack.c.h.b16 %v650
  %v4604 = vunpack.c.l.b16 %v651
  %v4605 = vunpack.c.h.b16 %v651
  %v4606 = vunpack.c.l.b16 %v652
  %v4607 = vunpack.c.h.b16 %v652
  %v4608 = vunpack.c.l.b16 %v653
  %v4609 = vunpack.c.h.b16 %v653
  %v4610 = vunpack.c.l.b16 %v654
  %v4611 = vunpack.c.h.b16 %v654
  %v4612 = vunpack.c.l.b16 %v655
  %v4613 = vunpack.c.h.b16 %v655
  %v4614 = vunpack.c.l.b16 %v656
  %v4615 = vunpack.c.h.b16 %v656
  %v4616 = vunpack.c.l.b16 %v657
  %v4617 = vunpack.c.h.b16 %v657
  %v4618 = vunpack.c.l.b16 %v658
  %v4619 = vunpack.c.h.b16 %v658
  %v4620 = vunpack.c.l.b16 %v659
  %v4621 = vunpack.c.h.b16 %v659
  %v4622 = vunpack.c.l.b16 %v660
  %v4623 = vunpack.c.h.b16 %v660
  %v4624 = vunpack.c.l.b16 %v661
  %v4625 = vunpack.c.h.b16 %v661
  %v4626 = vunpack.c.l.b16 %v662
  %v4627 = vunpack.c.h.b16 %v662
  %v4628 = vunpack.c.l.b16 %v663
  %v4629 = vunpack.c.h.b16 %v663
  %v4630 = vunpack.c.l.b16 %v664
  %v4631 = vunpack.c.h.b16 %v664
  %v4632 = vunpack.c.l.b16 %v665
  %v4633 = vunpack.c.h.b16 %v665
  %v4634 = vunpack.c.l.b16 %v666
  %v4635 = vunpack.c.h.b16 %v666
  %v4636 = vunpack.c.l.b16 %v667
  %v4637 = vunpack.c.h.b16 %v667
  %v4638 = vunpack.c.l.b16 %v668
  %v4639 = vunpack.c.h.b16 %v668
  %v4640 = vunpack.c.l.b16 %v669
  %v4641 = vunpack.c.h.b16 %v669
  %v4642 = vunpack.c.l.b16 %v670
  %v4643 = vunpack.c.h.b16 %v670
  %v4644 = vunpack.c.l.b16 %v671
  %v4645 = vunpack.c.h.b16 %v671
  %v4646 = vunpack.c.l.b16 %v672
  %v4647 = vunpack.c.h.b16 %v672
  %v4648 = vunpack.c.l.b16 %v673
  %v4649 = vunpack.c.h.b16 %v673
  %v4650 = vunpack.c.l.b16 %v674
  %v4651 = vunpack.c.h.b16 %v674
  %v4652 = vunpack.c.l.b16 %v675
  %v4653 = vunpack.c.h.b16 %v675
  %v4654 = vunpack.c.l.b16 %v676
  %v4655 = vunpack.c.h.b16 %v676
  %v4656 = vunpack.c.l.b16 %v677
  %v4657 = vunpack.c.h.b16 %v677
  %v4658 = vunpack.c.l.b16 %v678
  %v4659 = vunpack.c.h.b16 %v678
  %v4660 = vunpack.c.l.b16 %v679
  %v4661 = vunpack.c.h.b16 %v679
  %v4662 = vunpack.c.l.b16 %v680
  %v4663 = vunpack.c.h.b16 %v680
  %v4664 = vunpack.c.l.b16 %v681
  %v4665 = vunpack.c.h.b16 %v681
  %v4666 = vunpack.c.l.b16 %v682
  %v4667 = vunpack.c.h.b16 %v682
  %v4668 = vunpack.c.l.b16 %v683
  %v4669 = vunpack.c.h.b16 %v683
  %v4670 = vunpack.c.l.b16 %v684
  %v4671 = vunpack.c.h.b16 %v684
  %v4672 = vunpack.c.l.b16 %v685
  %v4673 = vunpack.c.h.b16 %v685
  %v4674 = vunpack.c.l.b16 %v686
  %v4675 = vunpack.c.h.b16 %v686
  %v4676 = vunpack.c.l.b16 %v687
  %v4677 = vunpack.c.h.b16 %v687
  %v4678 = vunpack.c.l.b16 %v688
  %v4679 = vunpack.c.h.b16 %v688
  %v4680 = vunpack.c.l.b16 %v689
  %v4681 = vunpack.c.h.b16 %v689
  %v4682 = vunpack.c.l.b16 %v690
  %v4683 = vunpack.c.h.b16 %v690
  %v4684 = vunpack.c.l.b16 %v691
  %v4685 = vunpack.c.h.b16 %v691
  %v4686 = vunpack.c.l.b16 %v692
  %v4687 = vunpack.c.h.b16 %v692
  %v4688 = vunpack.c.l.b16 %v693
  %v4689 = vunpack.c.h.b16 %v693
  %v4690 = vunpack.c.l.b16 %v694
  %v4691 = vunpack.c.h.b16 %v694
  %v4692 = vunpack.c.l.b16 %v695
  %v4693 = vunpack.c.h.b16 %v695
  %v4694 = vunpack.c.l.b16 %v696
  %v4695 = vunpack.c.h.b16 %v696
  %v4696 = vunpack.c.l.b16 %v697
  %v4697 = vunpack.c.h.b16 %v697
  %v4698 = vunpack.c.l.b16 %v698
  %v4699 = vunpack.c.h.b16 %v698
  %v4700 = vunpack.c.l.b16 %v699
  %v4701 = vunpack.c.h.b16 %v699
  %v4702 = vunpack.c.l.b16 %v700
  %v4703 = vunpack.c.h.b16 %v700
  %v4704 = vunpack.c.l.b16 %v701
  %v4705 = vunpack.c.h.b16 %v701
  %v4706 = vunpack.c.l.b16 %v702
  %v4707 = vunpack.c.h.b16 %v702
  %v4708 = vunpack.c.l.b16 %v703
  %v4709 = vunpack.c.h.b16 %v703
  %v4710 = vunpack.c.l.b16 %v704
  %v4711 = vunpack.c.h.b16 %v704
  %v4712 = vunpack.c.l.b16 %v705
  %v4713 = vunpack.c.h.b16 %v705
  %v4714 = vunpack.c.l.b16 %v706
  %v4715 = vunpack.c.h.b16 %v706
  %v4716 = vunpack.c.l.b16 %v707
  %v4717 = vunpack.c.h.b16 %v707
  %v4718 = vunpack.c.l.b16 %v708
  %v4719 = vunpack.c.h.b16 %v708
  %v4720 = vunpack.c.l.b16 %v709
  %v4721 = vunpack.c.h.b16 %v709
  %v4722 = vunpack.c.l.b16 %v710
  %v4723 = vunpack.c.h.b16 %v710
  %v4724 = vunpack.c.l.b16 %v711
  %v4725 = vunpack.c.h.b16 %v711
  %v4726 = vunpack.c.l.b16 %v712
  %v4727 = vunpack.c.h.b16 %v712
  %v4728 = vunpack.c.l.b16 %v713
  %v4729 = vunpack.c.h.b16 %v713
  %v4730 = vunpack.c.l.b16 %v714
  %v4731 = vunpack.c.h.b16 %v714
  %v4732 = vunpack.c.l.b16 %v715
  %v4733 = vunpack.c.h.b16 %v715
  %v4734 = vunpack.c.l.b16 %v716
  %v4735 = vunpack.c.h.b16 %v716
  %v4736 = vunpack.c.l.b16 %v717
  %v4737 = vunpack.c.h.b16 %v717
  %v4738 = vunpack.c.l.b16 %v718
  %v4739 = vunpack.c.h.b16 %v718
  %v4740 = vunpack.c.l.b16 %v719
  %v4741 = vunpack.c.h.b16 %v719
  %v4742 = vunpack.c.l.b16 %v720
  %v4743 = vunpack.c.h.b16 %v720
  %v4744 = vunpack.c.l.b16 %v721
  %v4745 = vunpack.c.h.b16 %v721
  %v4746 = vunpack.c.l.b16 %v722
  %v4747 = vunpack.c.h.b16 %v722
  %v4748 = vunpack.c.l.b16 %v723
  %v4749 = vunpack.c.h.b16 %v723
  %v4750 = vunpack.c.l.b16 %v724
  %v4751 = vunpack.c.h.b16 %v724
  %v4752 = vunpack.c.l.b16 %v725
  %v4753 = vunpack.c.h.b16 %v725
  %v4754 = vunpack.c.l.b16 %v726
  %v4755 = vunpack.c.h.b16 %v726
  %v4756 = vunpack.c.l.b16 %v727
  %v4757 = vunpack.c.h.b16 %v727
  %v4758 = vunpack.c.l.b16 %v728
  %v4759 = vunpack.c.h.b16 %v728
  %v4760 = vunpack.c.l.b16 %v729
  %v4761 = vunpack.c.h.b16 %v729
  %v4762 = vunpack.c.l.b16 %v730
  %v4763 = vunpack.c.h.b16 %v730
  %v4764 = vunpack.c.l.b16 %v731
  %v4765 = vunpack.c.h.b16 %v731
  %v4766 = vunpack.c.l.b16 %v732
  %v4767 = vunpack.c.h.b16 %v732
  %v4768 = vunpack.c.l.b16 %v733
  %v4769 = vunpack.c.h.b16 %v733
  %v4770 = vunpack.c.l.b16 %v734
  %v4771 = vunpack.c.h.b16 %v734
  %v4772 = vunpack.c.l.b16 %v735
  %v4773 = vunpack.c.h.b16 %v735
  %v4774 = vunpack.c.l.b16 %v736
  %v4775 = vunpack.c.h.b16 %v736
  %v4776 = vunpack.c.l.b16 %v737
  %v4777 = vunpack.c.h.b16 %v737
  %v4778 = vunpack.c.l.b16 %v738
  %v4779 = vunpack.c.h.b16 %v738
  %v4780 = vunpack.c.l.b16 %v739
  %v4781 = vunpack.c.h.b16 %v739
  %v4782 = vunpack.c.l.b16 %v740
  %v4783 = vunpack.c.h.b16 %v740
  %v4784 = vunpack.c.l.b16 %v741
  %v4785 = vunpack.c.h.b16 %v741
  %v4786 = vunpack.c.l.b16 %v742
  %v4787 = vunpack.c.h.b16 %v742
  %v4788 = vunpack.c.l.b16 %v743
  %v4789 = vunpack.c.h.b16 %v743
  %v4790 = vunpack.c.l.b16 %v744
  %v4791 = vunpack.c.h.b16 %v744
  %v4792 = vunpack.c.l.b16 %v745
  %v4793 = vunpack.c.h.b16 %v745
  %v4794 = vunpack.c.l.b16 %v746
  %v4795 = vunpack.c.h.b16 %v746
  %v4796 = vunpack.c.l.b16 %v747
  %v4797 = vunpack.c.h.b16 %v747
  %v4798 = vunpack.c.l.b16 %v748
  %v4799 = vunpack.c.h.b16 %v748
  %v4800 = vunpack.c.l.b16 %v749
  %v4801 = vunpack.c.h.b16 %v749
  %v4802 = vunpack.c.l.b16 %v750
  %v4803 = vunpack.c.h.b16 %v750
  %v4804 = vunpack.c.l.b16 %v751
  %v4805 = vunpack.c.h.b16 %v751
  %v4806 = vunpack.c.l.b16 %v752
  %v4807 = vunpack.c.h.b16 %v752
  %v4808 = vunpack.c.l.b16 %v753
  %v4809 = vunpack.c.h.b16 %v753
  %v4810 = vunpack.c.l.b16 %v754
  %v4811 = vunpack.c.h.b16 %v754
  %v4812 = vunpack.c.l.b16 %v755
  %v4813 = vunpack.c.h.b16 %v755
  %v4814 = vunpack.c.l.b16 %v756
  %v4815 = vunpack.c.h.b16 %v756
  %v4816 = vunpack.c.l.b16 %v757
  %v4817 = vunpack.c.h.b16 %v757
  %v4818 = vunpack.c.l.b16 %v758
  %v4819 = vunpack.c.h.b16 %v758
  %v4820 = vunpack.c.l.b16 %v759
  %v4821 = vunpack.c.h.b16 %v759
  %v4822 = vunpack.c.l.b16 %v760
  %v4823 = vunpack.c.h.b16 %v760
  %v4824 = vunpack.c.l.b16 %v761
  %v4825 = vunpack.c.h.b16 %v761
  %v4826 = vunpack.c.l.b16 %v762
  %v4827 = vunpack.c.h.b16 %v762
  %v4828 = vunpack.c.l.b16 %v763
  %v4829 = vunpack.c.h.b16 %v763
  %v4830 = vunpack.c.l.b16 %v764
  %v4831 = vunpack.c.h.b16 %v764
  %v4832 = vunpack.c.l.b16 %v765
  %v4833 = vunpack.c.h.b16 %v765
  %v4834 = vunpack.c.l.b16 %v766
  %v4835 = vunpack.c.h.b16 %v766
  %v4836 = vunpack.c.l.b16 %v767
  %v4837 = vunpack.c.h.b16 %v767
  %v4838 = vunpack.c.l.b16 %v768
  %v4839 = vunpack.c.h.b16 %v768
  %v4840 = vunpack.c.l.b16 %v769
  %v4841 = vunpack.c.h.b16 %v769
  %v4842 = vunpack.c.l.b16 %v770
  %v4843 = vunpack.c.h.b16 %v770
  %v4844 = vunpack.c.l.b16 %v771
  %v4845 = vunpack.c.h.b16 %v771
  %v4846 = vunpack.c.l.b16 %v772
  %v4847 = vunpack.c.h.b16 %v772
  %v4848 = vunpack.c.l.b16 %v773
  %v4849 = vunpack.c.h.b16 %v773
  %v4850 = vunpack.c.l.b16 %v774
  %v4851 = vunpack.c.h.b16 %v774
  %v4852 = vunpack.c.l.b16 %v775
  %v4853 = vunpack.c.h.b16 %v775
  %v4854 = vunpack.c.l.b16 %v776
  %v4855 = vunpack.c.h.b16 %v776
  %v4856 = vunpack.c.l.b16 %v777
  %v4857 = vunpack.c.h.b16 %v777
  %v4858 = vunpack.c.l.b16 %v778
  %v4859 = vunpack.c.h.b16 %v778
  %v4860 = vunpack.c.l.b16 %v779
  %v4861 = vunpack.c.h.b16 %v779
  %v4862 = vunpack.c.l.b16 %v780
  %v4863 = vunpack.c.h.b16 %v780
  %v4864 = vunpack.c.l.b16 %v781
  %v4865 = vunpack.c.h.b16 %v781
  %v4866 = vunpack.c.l.b16 %v782
  %v4867 = vunpack.c.h.b16 %v782
  %v4868 = vunpack.c.l.b16 %v783
  %v4869 = vunpack.c.h.b16 %v783
  %v4870 = vunpack.c.l.b16 %v784
  %v4871 = vunpack.c.h.b16 %v784
  %v4872 = vunpack.c.l.b16 %v785
  %v4873 = vunpack.c.h.b16 %v785
  %v4874 = vunpack.c.l.b16 %v786
  %v4875 = vunpack.c.h.b16 %v786
  %v4876 = vunpack.c.l.b16 %v787
  %v4877 = vunpack.c.h.b16 %v787
  %v4878 = vunpack.c.l.b16 %v788
  %v4879 = vunpack.c.h.b16 %v788
  %v4880 = vunpack.c.l.b16 %v789
  %v4881 = vunpack.c.h.b16 %v789
  %v4882 = vunpack.c.l.b16 %v790
  %v4883 = vunpack.c.h.b16 %v790
  %v4884 = vunpack.c.l.b16 %v791
  %v4885 = vunpack.c.h.b16 %v791
  %v4886 = vunpack.c.l.b16 %v792
  %v4887 = vunpack.c.h.b16 %v792
  %v4888 = vunpack.c.l.b16 %v793
  %v4889 = vunpack.c.h.b16 %v793
  %v4890 = vunpack.c.l.b16 %v794
  %v4891 = vunpack.c.h.b16 %v794
  %v4892 = vunpack.c.l.b16 %v795
  %v4893 = vunpack.c.h.b16 %v795
  %v4894 = vunpack.c.l.b16 %v796
  %v4895 = vunpack.c.h.b16 %v796
  %v4896 = vunpack.c.l.b16 %v797
  %v4897 = vunpack.c.h.b16 %v797
  %v4898 = vunpack.c.l.b16 %v798
  %v4899 = vunpack.c.h.b16 %v798
  %v4900 = vunpack.c.l.b16 %v799
  %v4901 = vunpack.c.h.b16 %v799
  %v4902 = vunpack.c.l.b16 %v800
  %v4903 = vunpack.c.h.b16 %v800
  %v4904 = vunpack.c.l.b16 %v801
  %v4905 = vunpack.c.h.b16 %v801
  %v4906 = vunpack.c.l.b16 %v802
  %v4907 = vunpack.c.h.b16 %v802
  %v4908 = vunpack.c.l.b16 %v803
  %v4909 = vunpack.c.h.b16 %v803
  %v4910 = vunpack.c.l.b16 %v804
  %v4911 = vunpack.c.h.b16 %v804
  %v4912 = vunpack.c.l.b16 %v805
  %v4913 = vunpack.c.h.b16 %v805
  %v4914 = vunpack.c.l.b16 %v806
  %v4915 = vunpack.c.h.b16 %v806
  %v4916 = vunpack.c.l.b16 %v807
  %v4917 = vunpack.c.h.b16 %v807
  %v4918 = vunpack.c.l.b16 %v808
  %v4919 = vunpack.c.h.b16 %v808
  %v4920 = vunpack.c.l.b16 %v809
  %v4921 = vunpack.c.h.b16 %v809
  %v4922 = vunpack.c.l.b16 %v810
  %v4923 = vunpack.c.h.b16 %v810
  %v4924 = vunpack.c.l.b16 %v811
  %v4925 = vunpack.c.h.b16 %v811
  %v4926 = vunpack.c.l.b16 %v812
  %v4927 = vunpack.c.h.b16 %v812
  %v4928 = vunpack.c.l.b16 %v813
  %v4929 = vunpack.c.h.b16 %v813
  %v4930 = vunpack.c.l.b16 %v814
  %v4931 = vunpack.c.h.b16 %v814
  %v4932 = vunpack.c.l.b16 %v815
  %v4933 = vunpack.c.h.b16 %v815
  %v4934 = vunpack.c.l.b16 %v816
  %v4935 = vunpack.c.h.b16 %v816
  %v4936 = vunpack.c.l.b16 %v817
  %v4937 = vunpack.c.h.b16 %v817
  %v4938 = vunpack.c.l.b16 %v818
  %v4939 = vunpack.c.h.b16 %v818
  %v4940 = vunpack.c.l.b16 %v819
  %v4941 = vunpack.c.h.b16 %v819
  %v4942 = vunpack.c.l.b16 %v820
  %v4943 = vunpack.c.h.b16 %v820
  %v4944 = vunpack.c.l.b16 %v821
  %v4945 = vunpack.c.h.b16 %v821
  %v4946 = vunpack.c.l.b16 %v822
  %v4947 = vunpack.c.h.b16 %v822
  %v4948 = vunpack.c.l.b16 %v823
  %v4949 = vunpack.c.h.b16 %v823
  %v4950 = vunpack.c.l.b16 %v824
  %v4951 = vunpack.c.h.b16 %v824
  %v4952 = vunpack.c.l.b16 %v825
  %v4953 = vunpack.c.h.b16 %v825
  %v4954 = vunpack.c.l.b16 %v826
  %v4955 = vunpack.c.h.b16 %v826
  %v4956 = vunpack.c.l.b16 %v827
  %v4957 = vunpack.c.h.b16 %v827
  %v4958 = vunpack.c.l.b16 %v828
  %v4959 = vunpack.c.h.b16 %v828
  %v4960 = vunpack.c.l.b16 %v829
  %v4961 = vunpack.c.h.b16 %v829
  %v4962 = vunpack.c.l.b16 %v830
  %v4963 = vunpack.c.h.b16 %v830
  %v4964 = vunpack.c.l.b16 %v831
  %v4965 = vunpack.c.h.b16 %v831
  %v4966 = vunpack.c.l.b16 %v832
  %v4967 = vunpack.c.h.b16 %v832
  %v4968 = vunpack.c.l.b16 %v833
  %v4969 = vunpack.c.h.b16 %v833
  %v4970 = vunpack.c.l.b16 %v834
  %v4971 = vunpack.c.h.b16 %v834
  %v4972 = vunpack.c.l.b16 %v835
  %v4973 = vunpack.c.h.b16 %v835
  %v4974 = vunpack.c.l.b16 %v836
  %v4975 = vunpack.c.h.b16 %v836
  %v4976 = vunpack.c.l.b16 %v837
  %v4977 = vunpack.c.h.b16 %v837
  %v4978 = vunpack.c.l.b16 %v838
  %v4979 = vunpack.c.h.b16 %v838
  %v4980 = vunpack.c.l.b16 %v839
  %v4981 = vunpack.c.h.b16 %v839
  %v4982 = vunpack.c.l.b16 %v840
  %v4983 = vunpack.c.h.b16 %v840
  %v4984 = vunpack.c.l.b16 %v841
  %v4985 = vunpack.c.h.b16 %v841
  %v4986 = vunpack.c.l.b16 %v842
  %v4987 = vunpack.c.h.b16 %v842
  %v4988 = vunpack.c.l.b16 %v843
  %v4989 = vunpack.c.h.b16 %v843
  %v4990 = vunpack.c.l.b16 %v844
  %v4991 = vunpack.c.h.b16 %v844
  %v4992 = vunpack.c.l.b16 %v845
  %v4993 = vunpack.c.h.b16 %v845
  %v4994 = vunpack.c.l.b16 %v846
  %v4995 = vunpack.c.h.b16 %v846
  %v4996 = vunpack.c.l.b16 %v847
  %v4997 = vunpack.c.h.b16 %v847
  %v4998 = vunpack.c.l.b16 %v848
  %v4999 = vunpack.c.h.b16 %v848
  %v5000 = vunpack.c.l.b16 %v849
  %v5001 = vunpack.c.h.b16 %v849
  %v5002 = vunpack.c.l.b16 %v850
  %v5003 = vunpack.c.h.b16 %v850
  %v5004 = vunpack.c.l.b16 %v851
  %v5005 = vunpack.c.h.b16 %v851
  %v5006 = vunpack.c.l.b16 %v852
  %v5007 = vunpack.c.h.b16 %v852
  %v5008 = vunpack.c.l.b16 %v853
  %v5009 = vunpack.c.h.b16 %v853
  %v5010 = vunpack.c.l.b16 %v854
  %v5011 = vunpack.c.h.b16 %v854
  %v5012 = vunpack.c.l.b16 %v855
  %v5013 = vunpack.c.h.b16 %v855
  %v5014 = vunpack.c.l.b16 %v856
  %v5015 = vunpack.c.h.b16 %v856
  %v5016 = vunpack.c.l.b16 %v857
  %v5017 = vunpack.c.h.b16 %v857
  %v5018 = vunpack.c.l.b16 %v858
  %v5019 = vunpack.c.h.b16 %v858
  %v5020 = vunpack.c.l.b16 %v859
  %v5021 = vunpack.c.h.b16 %v859
  %v5022 = vunpack.c.l.b16 %v860
  %v5023 = vunpack.c.h.b16 %v860
  %v5024 = vunpack.c.l.b16 %v861
  %v5025 = vunpack.c.h.b16 %v861
  %v5026 = vunpack.c.l.b16 %v862
  %v5027 = vunpack.c.h.b16 %v862
  %v5028 = vunpack.c.l.b16 %v863
  %v5029 = vunpack.c.h.b16 %v863
  %v5030 = vunpack.c.l.b16 %v864
  %v5031 = vunpack.c.h.b16 %v864
  %v5032 = vunpack.c.l.b16 %v865
  %v5033 = vunpack.c.h.b16 %v865
  %v5034 = vunpack.c.l.b16 %v866
  %v5035 = vunpack.c.h.b16 %v866
  %v5036 = vunpack.c.l.b16 %v867
  %v5037 = vunpack.c.h.b16 %v867
  %v5038 = vunpack.c.l.b16 %v868
  %v5039 = vunpack.c.h.b16 %v868
  %v5040 = vunpack.c.l.b16 %v869
  %v5041 = vunpack.c.h.b16 %v869
  %v5042 = vunpack.c.l.b16 %v870
  %v5043 = vunpack.c.h.b16 %v870
  %v5044 = vunpack.c.l.b16 %v871
  %v5045 = vunpack.c.h.b16 %v871
  %v5046 = vunpack.c.l.b16 %v872
  %v5047 = vunpack.c.h.b16 %v872
  %v5048 = vunpack.c.l.b16 %v873
  %v5049 = vunpack.c.h.b16 %v873
  %v5050 = vunpack.c.l.b16 %v874
  %v5051 = vunpack.c.h.b16 %v874
  %v5052 = vunpack.c.l.b16 %v875
  %v5053 = vunpack.c.h.b16 %v875
  %v5054 = vunpack.c.l.b16 %v876
  %v5055 = vunpack.c.h.b16 %v876
  %v5056 = vunpack.c.l.b16 %v877
  %v5057 = vunpack.c.h.b16 %v877
  %v5058 = vunpack.c.l.b16 %v878
  %v5059 = vunpack.c.h.b16 %v878
  %v5060 = vunpack.c.l.b16 %v879
  %v5061 = vunpack.c.h.b16 %v879
  %v5062 = vunpack.c.l.b16 %v880
  %v5063 = vunpack.c.h.b16 %v880
  %v5064 = vunpack.c.l.b16 %v881
  %v5065 = vunpack.c.h.b16 %v881
  %v5066 = vunpack.c.l.b16 %v882
  %v5067 = vunpack.c.h.b16 %v882
  %v5068 = vunpack.c.l.b16 %v883
  %v5069 = vunpack.c.h.b16 %v883
  %v5070 = vunpack.c.l.b16 %v884
  %v5071 = vunpack.c.h.b16 %v884
  %v5072 = vunpack.c.l.b16 %v885
  %v5073 = vunpack.c.h.b16 %v885
  %v5074 = vunpack.c.l.b16 %v886
  %v5075 = vunpack.c.h.b16 %v886
  %v5076 = vunpack.c.l.b16 %v887
  %v5077 = vunpack.c.h.b16 %v887
  %v5078 = vunpack.c.l.b16 %v888
  %v5079 = vunpack.c.h.b16 %v888
  %v5080 = vunpack.c.l.b16 %v889
  %v5081 = vunpack.c.h.b16 %v889
  %v5082 = vunpack.c.l.b16 %v890
  %v5083 = vunpack.c.h.b16 %v890
  %v5084 = vunpack.c.l.b16 %v891
  %v5085 = vunpack.c.h.b16 %v891
  %v5086 = vunpack.c.l.b16 %v892
  %v5087 = vunpack.c.h.b16 %v892
  %v5088 = vunpack.c.l.b16 %v893
  %v5089 = vunpack.c.h.b16 %v893
  %v5090 = vunpack.c.l.b16 %v894
  %v5091 = vunpack.c.h.b16 %v894
  %v5092 = vunpack.c.l.b16 %v895
  %v5093 = vunpack.c.h.b16 %v895
  %v5094 = vunpack.c.l.b16 %v896
  %v5095 = vunpack.c.h.b16 %v896
  %v5096 = vunpack.c.l.b16 %v897
  %v5097 = vunpack.c.h.b16 %v897
  %v5098 = vunpack.c.l.b16 %v898
  %v5099 = vunpack.c.h.b16 %v898
  %v5100 = vunpack.c.l.b16 %v899
  %v5101 = vunpack.c.h.b16 %v899
  %v5102 = vunpack.c.l.b16 %v900
  %v5103 = vunpack.c.h.b16 %v900
  %v5104 = vunpack.c.l.b16 %v901
  %v5105 = vunpack.c.h.b16 %v901
  %v5106 = vunpack.c.l.b16 %v902
  %v5107 = vunpack.c.h.b16 %v902
  %v5108 = vunpack.c.l.b16 %v903
  %v5109 = vunpack.c.h.b16 %v903
  %v5110 = vunpack.c.l.b16 %v904
  %v5111 = vunpack.c.h.b16 %v904
  %v5112 = vunpack.c.l.b16 %v905
  %v5113 = vunpack.c.h.b16 %v905
  %v5114 = vunpack.c.l.b16 %v906
  %v5115 = vunpack.c.h.b16 %v906
  %v5116 = vunpack.c.l.b16 %v907
  %v5117 = vunpack.c.h.b16 %v907
  %v5118 = vunpack.c.l.b16 %v908
  %v5119 = vunpack.c.h.b16 %v908
  %v5120 = vunpack.c.l.b16 %v909
  %v5121 = vunpack.c.h.b16 %v909
  %v5122 = vunpack.c.l.b16 %v910
  %v5123 = vunpack.c.h.b16 %v910
  %v5124 = vunpack.c.l.b16 %v911
  %v5125 = vunpack.c.h.b16 %v911
  %v5126 = vunpack.c.l.b16 %v912
  %v5127 = vunpack.c.h.b16 %v912
  %v5128 = vunpack.c.l.b16 %v913
  %v5129 = vunpack.c.h.b16 %v913
  %v5130 = vunpack.c.l.b16 %v914
  %v5131 = vunpack.c.h.b16 %v914
  %v5132 = vunpack.c.l.b16 %v915
  %v5133 = vunpack.c.h.b16 %v915
  %v5134 = vunpack.c.l.b16 %v916
  %v5135 = vunpack.c.h.b16 %v916
  %v5136 = vunpack.c.l.b16 %v917
  %v5137 = vunpack.c.h.b16 %v917
  %v5138 = vunpack.c.l.b16 %v918
  %v5139 = vunpack.c.h.b16 %v918
  %v5140 = vunpack.c.l.b16 %v919
  %v5141 = vunpack.c.h.b16 %v919
  %v5142 = vunpack.c.l.b16 %v920
  %v5143 = vunpack.c.h.b16 %v920
  %v5144 = vunpack.c.l.b16 %v921
  %v5145 = vunpack.c.h.b16 %v921
  %v5146 = vunpack.c.l.b16 %v922
  %v5147 = vunpack.c.h.b16 %v922
  %v5148 = vunpack.c.l.b16 %v923
  %v5149 = vunpack.c.h.b16 %v923
  %v5150 = vunpack.c.l.b16 %v924
  %v5151 = vunpack.c.h.b16 %v924
  %v5152 = vunpack.c.l.b16 %v925
  %v5153 = vunpack.c.h.b16 %v925
  %v5154 = vunpack.c.l.b16 %v926
  %v5155 = vunpack.c.h.b16 %v926
  %v5156 = vunpack.c.l.b16 %v927
  %v5157 = vunpack.c.h.b16 %v927
  %v5158 = vunpack.c.l.b16 %v928
  %v5159 = vunpack.c.h.b16 %v928
  %v5160 = vunpack.c.l.b16 %v929
  %v5161 = vunpack.c.h.b16 %v929
  %v5162 = vunpack.c.l.b16 %v930
  %v5163 = vunpack.c.h.b16 %v930
  %v5164 = vunpack.c.l.b16 %v931
  %v5165 = vunpack.c.h.b16 %v931
  %v5166 = vunpack.c.l.b16 %v932
  %v5167 = vunpack.c.h.b16 %v932
  %v5168 = vunpack.c.l.b16 %v933
  %v5169 = vunpack.c.h.b16 %v933
  %v5170 = vunpack.c.l.b16 %v934
  %v5171 = vunpack.c.h.b16 %v934
  %v5172 = vunpack.c.l.b16 %v935
  %v5173 = vunpack.c.h.b16 %v935
  %v5174 = vunpack.c.l.b16 %v936
  %v5175 = vunpack.c.h.b16 %v936
  %v5176 = vunpack.c.l.b16 %v937
  %v5177 = vunpack.c.h.b16 %v937
  %v5178 = vunpack.c.l.b16 %v938
  %v5179 = vunpack.c.h.b16 %v938
  %v5180 = vunpack.c.l.b16 %v939
  %v5181 = vunpack.c.h.b16 %v939
  %v5182 = vunpack.c.l.b16 %v940
  %v5183 = vunpack.c.h.b16 %v940
  %v5184 = vunpack.c.l.b16 %v941
  %v5185 = vunpack.c.h.b16 %v941
  %v5186 = vunpack.c.l.b16 %v942
  %v5187 = vunpack.c.h.b16 %v942
  %v5188 = vunpack.c.l.b16 %v943
  %v5189 = vunpack.c.h.b16 %v943
  %v5190 = vunpack.c.l.b16 %v944
  %v5191 = vunpack.c.h.b16 %v944
  %v5192 = vunpack.c.l.b16 %v945
  %v5193 = vunpack.c.h.b16 %v945
  %v5194 = vunpack.c.l.b16 %v946
  %v5195 = vunpack.c.h.b16 %v946
  %v5196 = vunpack.c.l.b16 %v947
  %v5197 = vunpack.c.h.b16 %v947
  %v5198 = vunpack.c.l.b16 %v948
  %v5199 = vunpack.c.h.b16 %v948
  %v5200 = vunpack.c.l.b16 %v949
  %v5201 = vunpack.c.h.b16 %v949
  %v5202 = vunpack.c.l.b16 %v950
  %v5203 = vunpack.c.h.b16 %v950
  %v5204 = vunpack.c.l.b16 %v951
  %v5205 = vunpack.c.h.b16 %v951
  %v5206 = vunpack.c.l.b16 %v952
  %v5207 = vunpack.c.h.b16 %v952
  %v5208 = vunpack.c.l.b16 %v953
  %v5209 = vunpack.c.h.b16 %v953
  %v5210 = vunpack.c.l.b16 %v954
  %v5211 = vunpack.c.h.b16 %v954
  %v5212 = vunpack.c.l.b16 %v955
  %v5213 = vunpack.c.h.b16 %v955
  %v5214 = vunpack.c.l.b16 %v956
  %v5215 = vunpack.c.h.b16 %v956
  %v5216 = vunpack.c.l.b16 %v957
  %v5217 = vunpack.c.h.b16 %v957
  %v5218 = vunpack.c.l.b16 %v958
  %v5219 = vunpack.c.h.b16 %v958
  %v5220 = vunpack.c.l.b16 %v959
  %v5221 = vunpack.c.h.b16 %v959
  %v5222 = vunpack.c.l.b16 %v960
  %v5223 = vunpack.c.h.b16 %v960
  %v5224 = vunpack.c.l.b16 %v961
  %v5225 = vunpack.c.h.b16 %v961
  %v5226 = vunpack.c.l.b16 %v962
  %v5227 = vunpack.c.h.b16 %v962
  %v5228 = vunpack.c.l.b16 %v963
  %v5229 = vunpack.c.h.b16 %v963
  %v5230 = vunpack.c.l.b16 %v964
  %v5231 = vunpack.c.h.b16 %v964
  %v5232 = vunpack.c.l.b16 %v965
  %v5233 = vunpack.c.h.b16 %v965
  %v5234 = vunpack.c.l.b16 %v966
  %v5235 = vunpack.c.h.b16 %v966
  %v5236 = vunpack.c.l.b16 %v967
  %v5237 = vunpack.c.h.b16 %v967
  %v5238 = vunpack.c.l.b16 %v968
  %v5239 = vunpack.c.h.b16 %v968
  %v5240 = vunpack.c.l.b16 %v969
  %v5241 = vunpack.c.h.b16 %v969
  %v5242 = vunpack.c.l.b16 %v970
  %v5243 = vunpack.c.h.b16 %v970
  %v5244 = vunpack.c.l.b16 %v971
  %v5245 = vunpack.c.h.b16 %v971
  %v5246 = vunpack.c.l.b16 %v972
  %v5247 = vunpack.c.h.b16 %v972
  %v5248 = vunpack.c.l.b16 %v973
  %v5249 = vunpack.c.h.b16 %v973
  %v5250 = vunpack.c.l.b16 %v974
  %v5251 = vunpack.c.h.b16 %v974
  %v5252 = vunpack.c.l.b16 %v975
  %v5253 = vunpack.c.h.b16 %v975
  %v5254 = vunpack.c.l.b16 %v976
  %v5255 = vunpack.c.h.b16 %v976
  %v5256 = vunpack.c.l.b16 %v977
  %v5257 = vunpack.c.h.b16 %v977
  %v5258 = vunpack.c.l.b16 %v978
  %v5259 = vunpack.c.h.b16 %v978
  %v5260 = vunpack.c.l.b16 %v979
  %v5261 = vunpack.c.h.b16 %v979
  %v5262 = vunpack.c.l.b16 %v980
  %v5263 = vunpack.c.h.b16 %v980
  %v5264 = vunpack.c.l.b16 %v981
  %v5265 = vunpack.c.h.b16 %v981
  %v5266 = vunpack.c.l.b16 %v982
  %v5267 = vunpack.c.h.b16 %v982
  %v5268 = vunpack.c.l.b16 %v983
  %v5269 = vunpack.c.h.b16 %v983
  %v5270 = vunpack.c.l.b16 %v984
  %v5271 = vunpack.c.h.b16 %v984
  %v5272 = vunpack.c.l.b16 %v985
  %v5273 = vunpack.c.h.b16 %v985
  %v5274 = vunpack.c.l.b16 %v986
  %v5275 = vunpack.c.h.b16 %v986
  %v5276 = vunpack.c.l.b16 %v987
  %v5277 = vunpack.c.h.b16 %v987
  %v5278 = vunpack.c.l.b16 %v988
  %v5279 = vunpack.c.h.b16 %v988
  %v5280 = vunpack.c.l.b16 %v989
  %v5281 = vunpack.c.h.b16 %v989
  %v5282 = vunpack.c.l.b16 %v990
  %v5283 = vunpack.c.h.b16 %v990
  %v5284 = vunpack.c.l.b16 %v991
  %v5285 = vunpack.c.h.b16 %v991
  %v5286 = vunpack.c.l.b16 %v992
  %v5287 = vunpack.c.h.b16 %v992
  %v5288 = vunpack.c.l.b16 %v993
  %v5289 = vunpack.c.h.b16 %v993
  %v5290 = vunpack.c.l.b16 %v994
  %v5291 = vunpack.c.h.b16 %v994
  %v5292 = vunpack.c.l.b16 %v995
  %v5293 = vunpack.c.h.b16 %v995
  %v5294 = vunpack.c.l.b16 %v996
  %v5295 = vunpack.c.h.b16 %v996
  %v5296 = vunpack.c.l.b16 %v997
  %v5297 = vunpack.c.h.b16 %v997
  %v5298 = vunpack.c.l.b16 %v998
  %v5299 = vunpack.c.h.b16 %v998
  %v5300 = vunpack.c.l.b16 %v999
  %v5301 = vunpack.c.h.b16 %v999
  %v5302 = vunpack.c.l.b16 %v1000
  %v5303 = vunpack.c.h.b16 %v1000
  %v5304 = vunpack.c.l.b16 %v1001
  %v5305 = vunpack.c.h.b16 %v1001
  %v5306 = vunpack.c.l.b16 %v1002
  %v5307 = vunpack.c.h.b16 %v1002
  %v5308 = vunpack.c.l.b16 %v1003
  %v5309 = vunpack.c.h.b16 %v1003
  %v5310 = vunpack.c.l.b16 %v1004
  %v5311 = vunpack.c.h.b16 %v1004
  %v5312 = vunpack.c.l.b16 %v1005
  %v5313 = vunpack.c.h.b16 %v1005
  %v5314 = vunpack.c.l.b16 %v1006
  %v5315 = vunpack.c.h.b16 %v1006
  %v5316 = vunpack.c.l.b16 %v1007
  %v5317 = vunpack.c.h.b16 %v1007
  %v5318 = vunpack.c.l.b16 %v1008
  %v5319 = vunpack.c.h.b16 %v1008
  %v5320 = vunpack.c.l.b16 %v1009
  %v5321 = vunpack.c.h.b16 %v1009
  %v5322 = vunpack.c.l.b16 %v1010
  %v5323 = vunpack.c.h.b16 %v1010
  %v5324 = vunpack.c.l.b16 %v1011
  %v5325 = vunpack.c.h.b16 %v1011
  %v5326 = vunpack.c.l.b16 %v1012
  %v5327 = vunpack.c.h.b16 %v1012
  %v5328 = vunpack.c.l.b16 %v1013
  %v5329 = vunpack.c.h.b16 %v1013
  %v5330 = vunpack.c.l.b16 %v1014
  %v5331 = vunpack.c.h.b16 %v1014
  %v5332 = vunpack.c.l.b16 %v1015
  %v5333 = vunpack.c.h.b16 %v1015
  %v5334 = vunpack.c.l.b16 %v1016
  %v5335 = vunpack.c.h.b16 %v1016
  %v5336 = vunpack.c.l.b16 %v1017
  %v5337 = vunpack.c.h.b16 %v1017
  %v5338 = vunpack.c.l.b16 %v1018
  %v5339 = vunpack.c.h.b16 %v1018
  %v5340 = vunpack.c.l.b16 %v1019
  %v5341 = vunpack.c.h.b16 %v1019
  %v5342 = vunpack.c.l.b16 %v1020
  %v5343 = vunpack.c.h.b16 %v1020
  %v5344 = vunpack.c.l.b16 %v1021
  %v5345 = vunpack.c.h.b16 %v1021
  %v5346 = vunpack.c.l.b16 %v1022
  %v5347 = vunpack.c.h.b16 %v1022
  %v5348 = vunpack.c.l.b16 %v1023
  %v5349 = vunpack.c.h.b16 %v1023
  %v5350 = vunpack.c.l.b16 %v1024
  %v5351 = vunpack.c.h.b16 %v1024
  %v5352 = vunpack.c.l.b16 %v1025
  %v5353 = vunpack.c.h.b16 %v1025
  %v5354 = vunpack.c.l.b16 %v1026
  %v5355 = vunpack.c.h.b16 %v1026
  %v5356 = vunpack.c.l.b16 %v1027
  %v5357 = vunpack.c.h.b16 %v1027
  %v5358 = vunpack.c.l.b16 %v1028
  %v5359 = vunpack.c.h.b16 %v1028
  %v5360 = vunpack.c.l.b16 %v1029
  %v5361 = vunpack.c.h.b16 %v1029
  %v5362 = vunpack.c.l.b16 %v1030
  %v5363 = vunpack.c.h.b16 %v1030
  %v5364 = vunpack.c.l.b16 %v1031
  %v5365 = vunpack.c.h.b16 %v1031
  %v5366 = vunpack.c.l.b16 %v1032
  %v5367 = vunpack.c.h.b16 %v1032
  %v5368 = vunpack.c.l.b16 %v1033
  %v5369 = vunpack.c.h.b16 %v1033
  %v5370 = vunpack.c.l.b16 %v1034
  %v5371 = vunpack.c.h.b16 %v1034
  %v5372 = vunpack.c.l.b16 %v1035
  %v5373 = vunpack.c.h.b16 %v1035
  %v5374 = vunpack.c.l.b16 %v1036
  %v5375 = vunpack.c.h.b16 %v1036
  %v5376 = vunpack.c.l.b16 %v1037
  %v5377 = vunpack.c.h.b16 %v1037
  %v5378 = vunpack.c.l.b16 %v1038
  %v5379 = vunpack.c.h.b16 %v1038
  %v5380 = vunpack.c.l.b16 %v1039
  %v5381 = vunpack.c.h.b16 %v1039
  %v5382 = vunpack.c.l.b16 %v1040
  %v5383 = vunpack.c.h.b16 %v1040
  %v5384 = vunpack.c.l.b16 %v1041
  %v5385 = vunpack.c.h.b16 %v1041
  %v5386 = vunpack.c.l.b16 %v1042
  %v5387 = vunpack.c.h.b16 %v1042
  %v5388 = vunpack.c.l.b16 %v1043
  %v5389 = vunpack.c.h.b16 %v1043
  %v5390 = vunpack.c.l.b16 %v1044
  %v5391 = vunpack.c.h.b16 %v1044
  %v5392 = vunpack.c.l.b16 %v1045
  %v5393 = vunpack.c.h.b16 %v1045
  %v5394 = vunpack.c.l.b16 %v1046
  %v5395 = vunpack.c.h.b16 %v1046
  %v5396 = vunpack.c.l.b16 %v1047
  %v5397 = vunpack.c.h.b16 %v1047
  %v5398 = vunpack.c.l.b16 %v1048
  %v5399 = vunpack.c.h.b16 %v1048
  %v5400 = vunpack.c.l.b16 %v1049
  %v5401 = vunpack.c.h.b16 %v1049
  %v5402 = vunpack.c.l.b16 %v1050
  %v5403 = vunpack.c.h.b16 %v1050
  %v5404 = vunpack.c.l.b16 %v1051
  %v5405 = vunpack.c.h.b16 %v1051
  %v5406 = vunpack.c.l.b16 %v1052
  %v5407 = vunpack.c.h.b16 %v1052
  %v5408 = vunpack.c.l.b16 %v1053
  %v5409 = vunpack.c.h.b16 %v1053
  %v5410 = vunpack.c.l.b16 %v1054
  %v5411 = vunpack.c.h.b16 %v1054
  %v5412 = vunpack.c.l.b16 %v1055
  %v5413 = vunpack.c.h.b16 %v1055
  %v5414 = vunpack.c.l.b16 %v1056
  %v5415 = vunpack.c.h.b16 %v1056
  %v5416 = vunpack.c.l.b16 %v1057
  %v5417 = vunpack.c.h.b16 %v1057
  %v5418 = vunpack.c.l.b16 %v1058
  %v5419 = vunpack.c.h.b16 %v1058
  %v5420 = vunpack.c.l.b16 %v1059
  %v5421 = vunpack.c.h.b16 %v1059
  %v5422 = vunpack.c.l.b16 %v1060
  %v5423 = vunpack.c.h.b16 %v1060
  %v5424 = vunpack.c.l.b16 %v1061
  %v5425 = vunpack.c.h.b16 %v1061
  %v5426 = vunpack.c.l.b16 %v1062
  %v5427 = vunpack.c.h.b16 %v1062
  %v5428 = vunpack.c.l.b16 %v1063
  %v5429 = vunpack.c.h.b16 %v1063
  %v5430 = vunpack.c.l.b16 %v1064
  %v5431 = vunpack.c.h.b16 %v1064
  %v5432 = vunpack.c.l.b16 %v1065
  %v5433 = vunpack.c.h.b16 %v1065
  %v5434 = vunpack.c.l.b16 %v1066
  %v5435 = vunpack.c.h.b16 %v1066
  %v5436 = vunpack.c.l.b16 %v1067
  %v5437 = vunpack.c.h.b16 %v1067
  %v5438 = vunpack.c.l.b16 %v1068
  %v5439 = vunpack.c.h.b16 %v1068
  %v5440 = vunpack.c.l.b16 %v1069
  %v5441 = vunpack.c.h.b16 %v1069
  %v5442 = vunpack.c.l.b16 %v1070
  %v5443 = vunpack.c.h.b16 %v1070
  %v5444 = vunpack.c.l.b16 %v1071
  %v5445 = vunpack.c.h.b16 %v1071
  %v5446 = vunpack.c.l.b16 %v1072
  %v5447 = vunpack.c.h.b16 %v1072
  %v5448 = vunpack.c.l.b16 %v1073
  %v5449 = vunpack.c.h.b16 %v1073
  %v5450 = vunpack.c.l.b16 %v1074
  %v5451 = vunpack.c.h.b16 %v1074
  %v5452 = vunpack.c.l.b16 %v1075
  %v5453 = vunpack.c.h.b16 %v1075
  %v5454 = vunpack.c.l.b16 %v1076
  %v5455 = vunpack.c.h.b16 %v1076
  %v5456 = vunpack.c.l.b16 %v1077
  %v5457 = vunpack.c.h.b16 %v1077
  %v5458 = vunpack.c.l.b16 %v1078
  %v5459 = vunpack.c.h.b16 %v1078
  %v5460 = vunpack.c.l.b16 %v1079
  %v5461 = vunpack.c.h.b16 %v1079
  %v5462 = vunpack.c.l.b16 %v1080
  %v5463 = vunpack.c.h.b16 %v1080
  %v5464 = vunpack.c.l.b16 %v1081
  %v5465 = vunpack.c.h.b16 %v1081
  %v5466 = vunpack.c.l.b16 %v1082
  %v5467 = vunpack.c.h.b16 %v1082
  %v5468 = vunpack.c.l.b16 %v1083
  %v5469 = vunpack.c.h.b16 %v1083
  %v5470 = vunpack.c.l.b16 %v1084
  %v5471 = vunpack.c.h.b16 %v1084
  %v5472 = vunpack.c.l.b16 %v1085
  %v5473 = vunpack.c.h.b16 %v1085
  %v5474 = vunpack.c.l.b16 %v1086
  %v5475 = vunpack.c.h.b16 %v1086
  %v5476 = vunpack.c.l.b16 %v1087
  %v5477 = vunpack.c.h.b16 %v1087
  %v5478 = vunpack.c.l.b16 %v1088
  %v5479 = vunpack.c.h.b16 %v1088
  %v5480 = vunpack.c.l.b16 %v1089
  %v5481 = vunpack.c.h.b16 %v1089
  %v5482 = vunpack.c.l.b16 %v1090
  %v5483 = vunpack.c.h.b16 %v1090
  %v5484 = vunpack.c.l.b16 %v1091
  %v5485 = vunpack.c.h.b16 %v1091
  %v5486 = vunpack.c.l.b16 %v1092
  %v5487 = vunpack.c.h.b16 %v1092
  %v5488 = vunpack.c.l.b16 %v1093
  %v5489 = vunpack.c.h.b16 %v1093
  %v5490 = vunpack.c.l.b16 %v1094
  %v5491 = vunpack.c.h.b16 %v1094
  %v5492 = vunpack.c.l.b16 %v1095
  %v5493 = vunpack.c.h.b16 %v1095
  %v5494 = vunpack.c.l.b16 %v1096
  %v5495 = vunpack.c.h.b16 %v1096
  %v5496 = vunpack.c.l.b16 %v1097
  %v5497 = vunpack.c.h.b16 %v1097
  %v5498 = vunpack.c.l.b16 %v1098
  %v5499 = vunpack.c.h.b16 %v1098
  %v5500 = vunpack.c.l.b16 %v1099
  %v5501 = vunpack.c.h.b16 %v1099
  %v5502 = vunpack.c.l.b16 %v1100
  %v5503 = vunpack.c.h.b16 %v1100
  %v5504 = vunpack.c.l.b16 %v1101
  %v5505 = vunpack.c.h.b16 %v1101
  %v5506 = vunpack.c.l.b16 %v1102
  %v5507 = vunpack.c.h.b16 %v1102
  %v5508 = vunpack.c.l.b16 %v1103
  %v5509 = vunpack.c.h.b16 %v1103
  %v5510 = vunpack.c.l.b16 %v1104
  %v5511 = vunpack.c.h.b16 %v1104
  %v5512 = vunpack.c.l.b16 %v1105
  %v5513 = vunpack.c.h.b16 %v1105
  %v5514 = vunpack.c.l.b16 %v1106
  %v5515 = vunpack.c.h.b16 %v1106
  %v5516 = vunpack.c.l.b16 %v1107
  %v5517 = vunpack.c.h.b16 %v1107
  %v5518 = vunpack.c.l.b16 %v1108
  %v5519 = vunpack.c.h.b16 %v1108
  %v5520 = vunpack.c.l.b16 %v1109
  %v5521 = vunpack.c.h.b16 %v1109
  %v5522 = vunpack.c.l.b16 %v1110
  %v5523 = vunpack.c.h.b16 %v1110
  %v5524 = vunpack.c.l.b16 %v1111
  %v5525 = vunpack.c.h.b16 %v1111
  %v5526 = vunpack.c.l.b16 %v1112
  %v5527 = vunpack.c.h.b16 %v1112
  %v5528 = vunpack.c.l.b16 %v1113
  %v5529 = vunpack.c.h.b16 %v1113
  %v5530 = vunpack.c.l.b16 %v1114
  %v5531 = vunpack.c.h.b16 %v1114
  %v5532 = vunpack.c.l.b16 %v1115
  %v5533 = vunpack.c.h.b16 %v1115
  %v5534 = vunpack.c.l.b16 %v1116
  %v5535 = vunpack.c.h.b16 %v1116
  %v5536 = vunpack.c.l.b16 %v1117
  %v5537 = vunpack.c.h.b16 %v1117
  %v5538 = vunpack.c.l.b16 %v1118
  %v5539 = vunpack.c.h.b16 %v1118
  %v5540 = vunpack.c.l.b16 %v1119
  %v5541 = vunpack.c.h.b16 %v1119
  %v5542 = vunpack.c.l.b16 %v1120
  %v5543 = vunpack.c.h.b16 %v1120
  %v5544 = vunpack.c.l.b16 %v1121
  %v5545 = vunpack.c.h.b16 %v1121
  %v5546 = vunpack.c.l.b16 %v1122
  %v5547 = vunpack.c.h.b16 %v1122
  %v5548 = vunpack.c.l.b16 %v1123
  %v5549 = vunpack.c.h.b16 %v1123
  %v5550 = vunpack.c.l.b16 %v1124
  %v5551 = vunpack.c.h.b16 %v1124
  %v5552 = vunpack.c.l.b16 %v1125
  %v5553 = vunpack.c.h.b16 %v1125
  %v5554 = vunpack.c.l.b16 %v1126
  %v5555 = vunpack.c.h.b16 %v1126
  %v5556 = vunpack.c.l.b16 %v1127
  %v5557 = vunpack.c.h.b16 %v1127
  %v5558 = vunpack.c.l.b16 %v1128
  %v5559 = vunpack.c.h.b16 %v1128
  %v5560 = vunpack.c.l.b16 %v1129
  %v5561 = vunpack.c.h.b16 %v1129
  %v5562 = vunpack.c.l.b16 %v1130
  %v5563 = vunpack.c.h.b16 %v1130
  %v5564 = vunpack.c.l.b16 %v1131
  %v5565 = vunpack.c.h.b16 %v1131
  %v5566 = vunpack.c.l.b16 %v1132
  %v5567 = vunpack.c.h.b16 %v1132
  %v5568 = vunpack.c.l.b16 %v1133
  %v5569 = vunpack.c.h.b16 %v1133
  %v5570 = vunpack.c.l.b16 %v1134
  %v5571 = vunpack.c.h.b16 %v1134
  %v5572 = vunpack.c.l.b16 %v1135
  %v5573 = vunpack.c.h.b16 %v1135
  %v5574 = vunpack.c.l.b16 %v1136
  %v5575 = vunpack.c.h.b16 %v1136
  %v5576 = vunpack.c.l.b16 %v1137
  %v5577 = vunpack.c.h.b16 %v1137
  %v5578 = vunpack.c.l.b16 %v1138
  %v5579 = vunpack.c.h.b16 %v1138
  %v5580 = vunpack.c.l.b16 %v1139
  %v5581 = vunpack.c.h.b16 %v1139
  %v5582 = vunpack.c.l.b16 %v1140
  %v5583 = vunpack.c.h.b16 %v1140
  %v5584 = vunpack.c.l.b16 %v1141
  %v5585 = vunpack.c.h.b16 %v1141
  %v5586 = vunpack.c.l.b16 %v1142
  %v5587 = vunpack.c.h.b16 %v1142
  %v5588 = vunpack.c.l.b16 %v1143
  %v5589 = vunpack.c.h.b16 %v1143
  %v5590 = vunpack.c.l.b16 %v1144
  %v5591 = vunpack.c.h.b16 %v1144
  %v5592 = vunpack.c.l.b16 %v1145
  %v5593 = vunpack.c.h.b16 %v1145
  %v5594 = vunpack.c.l.b16 %v1146
  %v5595 = vunpack.c.h.b16 %v1146
  %v5596 = vunpack.c.l.b16 %v1147
  %v5597 = vunpack.c.h.b16 %v1147
  %v5598 = vunpack.c.l.b16 %v1148
  %v5599 = vunpack.c.h.b16 %v1148
  %v5600 = vunpack.c.l.b16 %v1149
  %v5601 = vunpack.c.h.b16 %v1149
  %v5602 = vunpack.c.l.b16 %v1150
  %v5603 = vunpack.c.h.b16 %v1150
  %v5604 = vunpack.c.l.b16 %v1151
  %v5605 = vunpack.c.h.b16 %v1151
  %v5606 = vunpack.c.l.b16 %v1152
  %v5607 = vunpack.c.h.b16 %v1152
  %v5608 = vunpack.c.l.b16 %v1153
  %v5609 = vunpack.c.h.b16 %v1153
  %v5610 = vunpack.c.l.b16 %v1154
  %v5611 = vunpack.c.h.b16 %v1154
  %v5612 = vunpack.c.l.b16 %v1155
  %v5613 = vunpack.c.h.b16 %v1155
  %v5614 = vunpack.c.l.b16 %v1156
  %v5615 = vunpack.c.h.b16 %v1156
  %v5616 = vunpack.c.l.b16 %v1157
  %v5617 = vunpack.c.h.b16 %v1157
  %v5618 = vunpack.c.l.b16 %v1158
  %v5619 = vunpack.c.h.b16 %v1158
  %v5620 = vunpack.c.l.b16 %v1159
  %v5621 = vunpack.c.h.b16 %v1159
  %v5622 = vunpack.c.l.b16 %v1160
  %v5623 = vunpack.c.h.b16 %v1160
  %v5624 = vunpack.c.l.b16 %v1161
  %v5625 = vunpack.c.h.b16 %v1161
  %v5626 = vunpack.c.l.b16 %v1162
  %v5627 = vunpack.c.h.b16 %v1162
  %v5628 = vunpack.c.l.b16 %v1163
  %v5629 = vunpack.c.h.b16 %v1163
  %v5630 = vunpack.c.l.b16 %v1164
  %v5631 = vunpack.c.h.b16 %v1164
  %v5632 = vunpack.c.l.b16 %v1165
  %v5633 = vunpack.c.h.b16 %v1165
  %v5634 = vunpack.c.l.b16 %v1166
  %v5635 = vunpack.c.h.b16 %v1166
  %v5636 = vunpack.c.l.b16 %v1167
  %v5637 = vunpack.c.h.b16 %v1167
  %v5638 = vunpack.c.l.b16 %v1168
  %v5639 = vunpack.c.h.b16 %v1168
  %v5640 = vunpack.c.l.b16 %v1169
  %v5641 = vunpack.c.h.b16 %v1169
  %v5642 = vunpack.c.l.b16 %v1170
  %v5643 = vunpack.c.h.b16 %v1170
  %v5644 = vunpack.c.l.b16 %v1171
  %v5645 = vunpack.c.h.b16 %v1171
  %v5646 = vunpack.c.l.b16 %v1172
  %v5647 = vunpack.c.h.b16 %v1172
  %v5648 = vunpack.c.l.b16 %v1173
  %v5649 = vunpack.c.h.b16 %v1173
  %v5650 = vunpack.c.l.b16 %v1174
  %v5651 = vunpack.c.h.b16 %v1174
  %v5652 = vunpack.c.l.b16 %v1175
  %v5653 = vunpack.c.h.b16 %v1175
  %v5654 = vunpack.c.l.b16 %v1176
  %v5655 = vunpack.c.h.b16 %v1176
  %v5656 = vunpack.c.l.b16 %v1177
  %v5657 = vunpack.c.h.b16 %v1177
  %v5658 = vunpack.c.l.b16 %v1178
  %v5659 = vunpack.c.h.b16 %v1178
  %v5660 = vunpack.c.l.b16 %v1179
  %v5661 = vunpack.c.h.b16 %v1179
  %v5662 = vunpack.c.l.b16 %v1180
  %v5663 = vunpack.c.h.b16 %v1180
  %v5664 = vunpack.c.l.b16 %v1181
  %v5665 = vunpack.c.h.b16 %v1181
  %v5666 = vunpack.c.l.b16 %v1182
  %v5667 = vunpack.c.h.b16 %v1182
  %v5668 = vunpack.c.l.b16 %v1183
  %v5669 = vunpack.c.h.b16 %v1183
  %v5670 = vunpack.c.l.b16 %v1184
  %v5671 = vunpack.c.h.b16 %v1184
  %v5672 = vunpack.c.l.b16 %v1185
  %v5673 = vunpack.c.h.b16 %v1185
  %v5674 = vunpack.c.l.b16 %v1186
  %v5675 = vunpack.c.h.b16 %v1186
  %v5676 = vunpack.c.l.b16 %v1187
  %v5677 = vunpack.c.h.b16 %v1187
  %v5678 = vunpack.c.l.b16 %v1188
  %v5679 = vunpack.c.h.b16 %v1188
  %v5680 = vunpack.c.l.b16 %v1189
  %v5681 = vunpack.c.h.b16 %v1189
  %v5682 = vunpack.c.l.b16 %v1190
  %v5683 = vunpack.c.h.b16 %v1190
  %v5684 = vunpack.c.l.b16 %v1191
  %v5685 = vunpack.c.h.b16 %v1191
  %v5686 = vunpack.c.l.b16 %v1192
  %v5687 = vunpack.c.h.b16 %v1192
  %v5688 = vunpack.c.l.b16 %v1193
  %v5689 = vunpack.c.h.b16 %v1193
  %v5690 = vunpack.c.l.b16 %v1194
  %v5691 = vunpack.c.h.b16 %v1194
  %v5692 = vunpack.c.l.b16 %v1195
  %v5693 = vunpack.c.h.b16 %v1195
  %v5694 = vunpack.c.l.b16 %v1196
  %v5695 = vunpack.c.h.b16 %v1196
  %v5696 = vunpack.c.l.b16 %v1197
  %v5697 = vunpack.c.h.b16 %v1197
  %v5698 = vunpack.c.l.b16 %v1198
  %v5699 = vunpack.c.h.b16 %v1198
  %v5700 = vunpack.c.l.b16 %v1199
  %v5701 = vunpack.c.h.b16 %v1199
  %v5702 = vunpack.c.l.b16 %v1200
  %v5703 = vunpack.c.h.b16 %v1200
  %v5704 = vunpack.c.l.b16 %v1201
  %v5705 = vunpack.c.h.b16 %v1201
  %v5706 = vunpack.c.l.b16 %v1202
  %v5707 = vunpack.c.h.b16 %v1202
  %v5708 = vunpack.c.l.b16 %v1203
  %v5709 = vunpack.c.h.b16 %v1203
  %v5710 = vunpack.c.l.b16 %v1204
  %v5711 = vunpack.c.h.b16 %v1204
  %v5712 = vunpack.c.l.b16 %v1205
  %v5713 = vunpack.c.h.b16 %v1205
  %v5714 = vunpack.c.l.b16 %v1206
  %v5715 = vunpack.c.h.b16 %v1206
  %v5716 = vunpack.c.l.b16 %v1207
  %v5717 = vunpack.c.h.b16 %v1207
  %v5718 = vunpack.c.l.b16 %v1208
  %v5719 = vunpack.c.h.b16 %v1208
  %v5720 = vunpack.c.l.b16 %v1209
  %v5721 = vunpack.c.h.b16 %v1209
  %v5722 = vunpack.c.l.b16 %v1210
  %v5723 = vunpack.c.h.b16 %v1210
  %v5724 = vunpack.c.l.b16 %v1211
  %v5725 = vunpack.c.h.b16 %v1211
  %v5726 = vunpack.c.l.b16 %v1212
  %v5727 = vunpack.c.h.b16 %v1212
  %v5728 = vunpack.c.l.b16 %v1213
  %v5729 = vunpack.c.h.b16 %v1213
  %v5730 = vunpack.c.l.b16 %v1214
  %v5731 = vunpack.c.h.b16 %v1214
  %v5732 = vunpack.c.l.b16 %v1215
  %v5733 = vunpack.c.h.b16 %v1215
  %v5734 = vunpack.c.l.b16 %v1216
  %v5735 = vunpack.c.h.b16 %v1216
  %v5736 = vunpack.c.l.b16 %v1217
  %v5737 = vunpack.c.h.b16 %v1217
  %v5738 = vunpack.c.l.b16 %v1218
  %v5739 = vunpack.c.h.b16 %v1218
  %v5740 = vunpack.c.l.b16 %v1219
  %v5741 = vunpack.c.h.b16 %v1219
  %v5742 = vunpack.c.l.b16 %v1220
  %v5743 = vunpack.c.h.b16 %v1220
  %v5744 = vunpack.c.l.b16 %v1221
  %v5745 = vunpack.c.h.b16 %v1221
  %v5746 = vunpack.c.l.b16 %v1222
  %v5747 = vunpack.c.h.b16 %v1222
  %v5748 = vunpack.c.l.b16 %v1223
  %v5749 = vunpack.c.h.b16 %v1223
  %v5750 = vunpack.c.l.b16 %v1224
  %v5751 = vunpack.c.h.b16 %v1224
  %v5752 = vunpack.c.l.b16 %v1225
  %v5753 = vunpack.c.h.b16 %v1225
  %v5754 = vunpack.c.l.b16 %v1226
  %v5755 = vunpack.c.h.b16 %v1226
  %v5756 = vunpack.c.l.b16 %v1227
  %v5757 = vunpack.c.h.b16 %v1227
  %v5758 = vunpack.c.l.b16 %v1228
  %v5759 = vunpack.c.h.b16 %v1228
  %v5760 = vunpack.c.l.b16 %v1229
  %v5761 = vunpack.c.h.b16 %v1229
  %v5762 = vunpack.c.l.b16 %v1230
  %v5763 = vunpack.c.h.b16 %v1230
  %v5764 = vunpack.c.l.b16 %v1231
  %v5765 = vunpack.c.h.b16 %v1231
  %v5766 = vunpack.c.l.b16 %v1232
  %v5767 = vunpack.c.h.b16 %v1232
  %v5768 = vunpack.c.l.b16 %v1233
  %v5769 = vunpack.c.h.b16 %v1233
  %v5770 = vunpack.c.l.b16 %v1234
  %v5771 = vunpack.c.h.b16 %v1234
  %v5772 = vunpack.c.l.b16 %v1235
  %v5773 = vunpack.c.h.b16 %v1235
  %v5774 = vunpack.c.l.b16 %v1236
  %v5775 = vunpack.c.h.b16 %v1236
  %v5776 = vunpack.c.l.b16 %v1237
  %v5777 = vunpack.c.h.b16 %v1237
  %v5778 = vunpack.c.l.b16 %v1238
  %v5779 = vunpack.c.h.b16 %v1238
  %v5780 = vunpack.c.l.b16 %v1239
  %v5781 = vunpack.c.h.b16 %v1239
  %v5782 = vunpack.c.l.b16 %v1240
  %v5783 = vunpack.c.h.b16 %v1240
  %v5784 = vunpack.c.l.b16 %v1241
  %v5785 = vunpack.c.h.b16 %v1241
  %v5786 = vunpack.c.l.b16 %v1242
  %v5787 = vunpack.c.h.b16 %v1242
  %v5788 = vunpack.c.l.b16 %v1243
  %v5789 = vunpack.c.h.b16 %v1243
  %v5790 = vunpack.c.l.b16 %v1244
  %v5791 = vunpack.c.h.b16 %v1244
  %v5792 = vunpack.c.l.b16 %v1245
  %v5793 = vunpack.c.h.b16 %v1245
  %v5794 = vunpack.c.l.b16 %v1246
  %v5795 = vunpack.c.h.b16 %v1246
  %v5796 = vunpack.c.l.b16 %v1247
  %v5797 = vunpack.c.h.b16 %v1247
  %v5798 = vunpack.c.l.b16 %v1248
  %v5799 = vunpack.c.h.b16 %v1248
  %v5800 = vunpack.c.l.b16 %v1249
  %v5801 = vunpack.c.h.b16 %v1249
  %v5802 = vunpack.c.l.b16 %v1250
  %v5803 = vunpack.c.h.b16 %v1250
  %v5804 = vunpack.c.l.b16 %v1251
  %v5805 = vunpack.c.h.b16 %v1251
  %v5806 = vunpack.c.l.b16 %v1252
  %v5807 = vunpack.c.h.b16 %v1252
  %v5808 = vunpack.c.l.b16 %v1253
  %v5809 = vunpack.c.h.b16 %v1253
  %v5810 = vunpack.c.l.b16 %v1254
  %v5811 = vunpack.c.h.b16 %v1254
  %v5812 = vunpack.c.l.b16 %v1255
  %v5813 = vunpack.c.h.b16 %v1255
  %v5814 = vunpack.c.l.b16 %v1256
  %v5815 = vunpack.c.h.b16 %v1256
  %v5816 = vunpack.c.l.b16 %v1257
  %v5817 = vunpack.c.h.b16 %v1257
  %v5818 = vunpack.c.l.b16 %v1258
  %v5819 = vunpack.c.h.b16 %v1258
  %v5820 = vunpack.c.l.b16 %v1259
  %v5821 = vunpack.c.h.b16 %v1259
  %v5822 = vunpack.c.l.b16 %v1260
  %v5823 = vunpack.c.h.b16 %v1260
  %v5824 = vunpack.c.l.b16 %v1261
  %v5825 = vunpack.c.h.b16 %v1261
  %v5826 = vunpack.c.l.b16 %v1262
  %v5827 = vunpack.c.h.b16 %v1262
  %v5828 = vunpack.c.l.b16 %v1263
  %v5829 = vunpack.c.h.b16 %v1263
  %v5830 = vunpack.c.l.b16 %v1264
  %v5831 = vunpack.c.h.b16 %v1264
  %v5832 = vunpack.c.l.b16 %v1265
  %v5833 = vunpack.c.h.b16 %v1265
  %v5834 = vunpack.c.l.b16 %v1266
  %v5835 = vunpack.c.h.b16 %v1266
  %v5836 = vunpack.c.l.b16 %v1267
  %v5837 = vunpack.c.h.b16 %v1267
  %v5838 = vunpack.c.l.b16 %v1268
  %v5839 = vunpack.c.h.b16 %v1268
  %v5840 = vunpack.c.l.b16 %v1269
  %v5841 = vunpack.c.h.b16 %v1269
  %v5842 = vunpack.c.l.b16 %v1270
  %v5843 = vunpack.c.h.b16 %v1270
  %v5844 = vunpack.c.l.b16 %v1271
  %v5845 = vunpack.c.h.b16 %v1271
  %v5846 = vunpack.c.l.b16 %v1272
  %v5847 = vunpack.c.h.b16 %v1272
  %v5848 = vunpack.c.l.b16 %v1273
  %v5849 = vunpack.c.h.b16 %v1273
  %v5850 = vunpack.c.l.b16 %v1274
  %v5851 = vunpack.c.h.b16 %v1274
  %v5852 = vunpack.c.l.b16 %v1275
  %v5853 = vunpack.c.h.b16 %v1275
  %v5854 = vunpack.c.l.b16 %v1276
  %v5855 = vunpack.c.h.b16 %v1276
  %v5856 = vunpack.c.l.b16 %v1277
  %v5857 = vunpack.c.h.b16 %v1277
  %v5858 = vunpack.c.l.b16 %v1278
  %v5859 = vunpack.c.h.b16 %v1278
  %v5860 = vunpack.c.l.b16 %v1279
  %v5861 = vunpack.c.h.b16 %v1279
  %v5862 = vunpack.c.l.b16 %v1280
  %v5863 = vunpack.c.h.b16 %v1280
  %v5864 = vunpack.c.l.b16 %v1281
  %v5865 = vunpack.c.h.b16 %v1281
  %v5866 = vunpack.c.l.b16 %v1282
  %v5867 = vunpack.c.h.b16 %v1282
  %v5868 = vunpack.c.l.b16 %v1283
  %v5869 = vunpack.c.h.b16 %v1283
  %v5870 = vunpack.c.l.b16 %v1284
  %v5871 = vunpack.c.h.b16 %v1284
  %v5872 = vunpack.c.l.b16 %v1285
  %v5873 = vunpack.c.h.b16 %v1285
  %v5874 = vunpack.c.l.b16 %v1286
  %v5875 = vunpack.c.h.b16 %v1286
  %v5876 = vunpack.c.l.b16 %v1287
  %v5877 = vunpack.c.h.b16 %v1287
  %v5878 = vunpack.c.l.b16 %v1288
  %v5879 = vunpack.c.h.b16 %v1288
  %v5880 = vunpack.c.l.b16 %v1289
  %v5881 = vunpack.c.h.b16 %v1289
  %v5882 = vunpack.c.l.b16 %v1290
  %v5883 = vunpack.c.h.b16 %v1290
  %v5884 = vunpack.c.l.b16 %v1291
  %v5885 = vunpack.c.h.b16 %v1291
  %v5886 = vunpack.c.l.b16 %v1292
  %v5887 = vunpack.c.h.b16 %v1292
  %v5888 = vunpack.c.l.b16 %v1293
  %v5889 = vunpack.c.h.b16 %v1293
  %v5890 = vunpack.c.l.b16 %v1294
  %v5891 = vunpack.c.h.b16 %v1294
  %v5892 = vunpack.c.l.b16 %v1295
  %v5893 = vunpack.c.h.b16 %v1295
  %v5894 = vunpack.c.l.b16 %v1296
  %v5895 = vunpack.c.h.b16 %v1296
  %v5896 = vunpack.c.l.b16 %v1297
  %v5897 = vunpack.c.h.b16 %v1297
  %v5898 = vunpack.c.l.b16 %v1298
  %v5899 = vunpack.c.h.b16 %v1298
  %v5900 = vunpack.c.l.b16 %v1299
  %v5901 = vunpack.c.h.b16 %v1299
  %v5902 = vunpack.c.l.b16 %v1300
  %v5903 = vunpack.c.h.b16 %v1300
  %v5904 = vunpack.c.l.b16 %v1301
  %v5905 = vunpack.c.h.b16 %v1301
  %v5906 = vunpack.c.l.b16 %v1302
  %v5907 = vunpack.c.h.b16 %v1302
  %v5908 = vunpack.c.l.b16 %v1303
  %v5909 = vunpack.c.h.b16 %v1303
  %v5910 = vunpack.c.l.b16 %v1304
  %v5911 = vunpack.c.h.b16 %v1304
  %v5912 = vunpack.c.l.b16 %v1305
  %v5913 = vunpack.c.h.b16 %v1305
  %v5914 = vunpack.c.l.b16 %v1306
  %v5915 = vunpack.c.h.b16 %v1306
  %v5916 = vunpack.c.l.b16 %v1307
  %v5917 = vunpack.c.h.b16 %v1307
  %v5918 = vunpack.c.l.b16 %v1308
  %v5919 = vunpack.c.h.b16 %v1308
  %v5920 = vunpack.c.l.b16 %v1309
  %v5921 = vunpack.c.h.b16 %v1309
  %v5922 = vunpack.c.l.b16 %v1310
  %v5923 = vunpack.c.h.b16 %v1310
  %v5924 = vunpack.c.l.b16 %v1311
  %v5925 = vunpack.c.h.b16 %v1311
  %v5926 = vunpack.c.l.b16 %v1312
  %v5927 = vunpack.c.h.b16 %v1312
  %v5928 = vunpack.c.l.b16 %v1313
  %v5929 = vunpack.c.h.b16 %v1313
  %v5930 = vunpack.c.l.b16 %v1314
  %v5931 = vunpack.c.h.b16 %v1314
  %v5932 = vunpack.c.l.b16 %v1315
  %v5933 = vunpack.c.h.b16 %v1315
  %v5934 = vunpack.c.l.b16 %v1316
  %v5935 = vunpack.c.h.b16 %v1316
  %v5936 = vunpack.c.l.b16 %v1317
  %v5937 = vunpack.c.h.b16 %v1317
  %v5938 = vunpack.c.l.b16 %v1318
  %v5939 = vunpack.c.h.b16 %v1318
  %v5940 = vunpack.c.l.b16 %v1319
  %v5941 = vunpack.c.h.b16 %v1319
  %v5942 = vunpack.c.l.b16 %v1320
  %v5943 = vunpack.c.h.b16 %v1320
  %v5944 = vunpack.c.l.b16 %v1321
  %v5945 = vunpack.c.h.b16 %v1321
  %v5946 = vunpack.c.l.b16 %v1322
  %v5947 = vunpack.c.h.b16 %v1322
  %v5948 = vunpack.c.l.b16 %v1323
  %v5949 = vunpack.c.h.b16 %v1323
  %v5950 = vunpack.c.l.b16 %v1324
  %v5951 = vunpack.c.h.b16 %v1324
  %v5952 = vunpack.c.l.b16 %v1325
  %v5953 = vunpack.c.h.b16 %v1325
  %v5954 = vunpack.c.l.b16 %v1326
  %v5955 = vunpack.c.h.b16 %v1326
  %v5956 = vunpack.c.l.b16 %v1327
  %v5957 = vunpack.c.h.b16 %v1327
  %v5958 = vunpack.c.l.b16 %v1328
  %v5959 = vunpack.c.h.b16 %v1328
  %v5960 = vunpack.c.l.b16 %v1329
  %v5961 = vunpack.c.h.b16 %v1329
  %v5962 = vunpack.c.l.b16 %v1330
  %v5963 = vunpack.c.h.b16 %v1330
  %v5964 = vunpack.c.l.b16 %v1331
  %v5965 = vunpack.c.h.b16 %v1331
  %v5966 = vunpack.c.l.b16 %v1332
  %v5967 = vunpack.c.h.b16 %v1332
  %v5968 = vunpack.c.l.b16 %v1333
  %v5969 = vunpack.c.h.b16 %v1333
  %v5970 = vunpack.c.l.b16 %v1334
  %v5971 = vunpack.c.h.b16 %v1334
  %v5972 = vunpack.c.l.b16 %v1335
  %v5973 = vunpack.c.h.b16 %v1335
  %v5974 = vunpack.c.l.b16 %v1336
  %v5975 = vunpack.c.h.b16 %v1336
  %v5976 = vunpack.c.l.b16 %v1337
  %v5977 = vunpack.c.h.b16 %v1337
  %v5978 = vunpack.c.l.b16 %v1338
  %v5979 = vunpack.c.h.b16 %v1338
  %v5980 = vunpack.c.l.b16 %v1339
  %v5981 = vunpack.c.h.b16 %v1339
  %v5982 = vunpack.c.l.b16 %v1340
  %v5983 = vunpack.c.h.b16 %v1340
  %v5984 = vunpack.c.l.b16 %v1341
  %v5985 = vunpack.c.h.b16 %v1341
  %v5986 = vunpack.c.l.b16 %v1342
  %v5987 = vunpack.c.h.b16 %v1342
  %v5988 = vunpack.c.l.b16 %v1343
  %v5989 = vunpack.c.h.b16 %v1343
  %v5990 = vunpack.c.l.b16 %v1344
  %v5991 = vunpack.c.h.b16 %v1344
  %v5992 = vunpack.c.l.b16 %v1345
  %v5993 = vunpack.c.h.b16 %v1345
  %v5994 = vunpack.c.l.b16 %v1346
  %v5995 = vunpack.c.h.b16 %v1346
  %v5996 = vunpack.c.l.b16 %v1347
  %v5997 = vunpack.c.h.b16 %v1347
  %v5998 = vunpack.c.l.b16 %v1348
  %v5999 = vunpack.c.h.b16 %v1348
  %v6000 = vunpack.c.l.b16 %v1349
  %v6001 = vunpack.c.h.b16 %v1349
  %v6002 = vunpack.c.l.b16 %v1350
  %v6003 = vunpack.c.h.b16 %v1350
  %v6004 = vunpack.c.l.b16 %v1351
  %v6005 = vunpack.c.h.b16 %v1351
  %v6006 = vunpack.c.l.b16 %v1352
  %v6007 = vunpack.c.h.b16 %v1352
  %v6008 = vunpack.c.l.b16 %v1353
  %v6009 = vunpack.c.h.b16 %v1353
  %v6010 = vunpack.c.l.b16 %v1354
  %v6011 = vunpack.c.h.b16 %v1354
  %v6012 = vunpack.c.l.b16 %v1355
  %v6013 = vunpack.c.h.b16 %v1355
  %v6014 = vunpack.c.l.b16 %v1356
  %v6015 = vunpack.c.h.b16 %v1356
  %v6016 = vunpack.c.l.b16 %v1357
  %v6017 = vunpack.c.h.b16 %v1357
  %v6018 = vunpack.c.l.b16 %v1358
  %v6019 = vunpack.c.h.b16 %v1358
  %v6020 = vunpack.c.l.b16 %v1359
  %v6021 = vunpack.c.h.b16 %v1359
  %v6022 = vunpack.c.l.b16 %v1360
  %v6023 = vunpack.c.h.b16 %v1360
  %v6024 = vunpack.c.l.b16 %v1361
  %v6025 = vunpack.c.h.b16 %v1361
  %v6026 = vunpack.c.l.b16 %v1362
  %v6027 = vunpack.c.h.b16 %v1362
  %v6028 = vunpack.c.l.b16 %v1363
  %v6029 = vunpack.c.h.b16 %v1363
  %v6030 = vunpack.c.l.b16 %v1364
  %v6031 = vunpack.c.h.b16 %v1364
  %v6032 = vunpack.c.l.b16 %v1365
  %v6033 = vunpack.c.h.b16 %v1365
  %v6034 = vunpack.c.l.b16 %v1366
  %v6035 = vunpack.c.h.b16 %v1366
  %v6036 = vunpack.c.l.b16 %v1367
  %v6037 = vunpack.c.h.b16 %v1367
  %v6038 = vunpack.c.l.b16 %v1368
  %v6039 = vunpack.c.h.b16 %v1368
  %v6040 = vunpack.c.l.b16 %v1369
  %v6041 = vunpack.c.h.b16 %v1369
  %v6042 = vunpack.c.l.b16 %v1370
  %v6043 = vunpack.c.h.b16 %v1370
  %v6044 = vunpack.c.l.b16 %v1371
  %v6045 = vunpack.c.h.b16 %v1371
  %v6046 = vunpack.c.l.b16 %v1372
  %v6047 = vunpack.c.h.b16 %v1372
  %v6048 = vunpack.c.l.b16 %v1373
  %v6049 = vunpack.c.h.b16 %v1373
  %v6050 = vunpack.c.l.b16 %v1374
  %v6051 = vunpack.c.h.b16 %v1374
  %v6052 = vunpack.c.l.b16 %v1375
  %v6053 = vunpack.c.h.b16 %v1375
  %v6054 = vunpack.c.l.b16 %v1376
  %v6055 = vunpack.c.h.b16 %v1376
  %v6056 = vunpack.c.l.b16 %v1377
  %v6057 = vunpack.c.h.b16 %v1377
  %v6058 = vunpack.c.l.b16 %v1378
  %v6059 = vunpack.c.h.b16 %v1378
  %v6060 = vunpack.c.l.b16 %v1379
  %v6061 = vunpack.c.h.b16 %v1379
  %v6062 = vunpack.c.l.b16 %v1380
  %v6063 = vunpack.c.h.b16 %v1380
  %v6064 = vunpack.c.l.b16 %v1381
  %v6065 = vunpack.c.h.b16 %v1381
  %v6066 = vunpack.c.l.b16 %v1382
  %v6067 = vunpack.c.h.b16 %v1382
  %v6068 = vunpack.c.l.b16 %v1383
  %v6069 = vunpack.c.h.b16 %v1383
  %v6070 = vunpack.c.l.b16 %v1384
  %v6071 = vunpack.c.h.b16 %v1384
  %v6072 = vunpack.c.l.b16 %v1385
  %v6073 = vunpack.c.h.b16 %v1385
  %v6074 = vunpack.c.l.b16 %v1386
  %v6075 = vunpack.c.h.b16 %v1386
  %v6076 = vunpack.c.l.b16 %v1387
  %v6077 = vunpack.c.h.b16 %v1387
  %v6078 = vunpack.c.l.b16 %v1388
  %v6079 = vunpack.c.h.b16 %v1388
  %v6080 = vunpack.c.l.b16 %v1389
  %v6081 = vunpack.c.h.b16 %v1389
  %v6082 = vunpack.c.l.b16 %v1390
  %v6083 = vunpack.c.h.b16 %v1390
  %v6084 = vunpack.c.l.b16 %v1391
  %v6085 = vunpack.c.h.b16 %v1391
  %v6086 = vunpack.c.l.b16 %v1392
  %v6087 = vunpack.c.h.b16 %v1392
  %v6088 = vunpack.c.l.b16 %v1393
  %v6089 = vunpack.c.h.b16 %v1393
  %v6090 = vunpack.c.l.b16 %v1394
  %v6091 = vunpack.c.h.b16 %v1394
  %v6092 = vunpack.c.l.b16 %v1395
  %v6093 = vunpack.c.h.b16 %v1395
  %v6094 = vunpack.c.l.b16 %v1396
  %v6095 = vunpack.c.h.b16 %v1396
  %v6096 = vunpack.c.l.b16 %v1397
  %v6097 = vunpack.c.h.b16 %v1397
  %v6098 = vunpack.c.l.b16 %v1398
  %v6099 = vunpack.c.h.b16 %v1398
  %v6100 = vunpack.c.l.b16 %v1399
  %v6101 = vunpack.c.h.b16 %v1399
  %v6102 = vunpack.c.l.b16 %v1400
  %v6103 = vunpack.c.h.b16 %v1400
  %v6104 = vunpack.c.l.b16 %v1401
  %v6105 = vunpack.c.h.b16 %v1401
  %v6106 = vunpack.c.l.b16 %v1402
  %v6107 = vunpack.c.h.b16 %v1402
  %v6108 = vunpack.c.l.b16 %v1403
  %v6109 = vunpack.c.h.b16 %v1403
  %v6110 = vunpack.c.l.b16 %v1404
  %v6111 = vunpack.c.h.b16 %v1404
  %v6112 = vunpack.c.l.b16 %v1405
  %v6113 = vunpack.c.h.b16 %v1405
  %v6114 = vunpack.c.l.b16 %v1406
  %v6115 = vunpack.c.h.b16 %v1406
  %v6116 = vunpack.c.l.b16 %v1407
  %v6117 = vunpack.c.h.b16 %v1407
  %v6118 = vunpack.c.l.b16 %v1408
  %v6119 = vunpack.c.h.b16 %v1408
  %v6120 = vunpack.c.l.b16 %v1409
  %v6121 = vunpack.c.h.b16 %v1409
  %v6122 = vunpack.c.l.b16 %v1410
  %v6123 = vunpack.c.h.b16 %v1410
  %v6124 = vunpack.c.l.b16 %v1411
  %v6125 = vunpack.c.h.b16 %v1411
  %v6126 = vunpack.c.l.b16 %v1412
  %v6127 = vunpack.c.h.b16 %v1412
  %v6128 = vunpack.c.l.b16 %v1413
  %v6129 = vunpack.c.h.b16 %v1413
  %v6130 = vunpack.c.l.b16 %v1414
  %v6131 = vunpack.c.h.b16 %v1414
  %v6132 = vunpack.c.l.b16 %v1415
  %v6133 = vunpack.c.h.b16 %v1415
  %v6134 = vunpack.c.l.b16 %v1416
  %v6135 = vunpack.c.h.b16 %v1416
  %v6136 = vunpack.c.l.b16 %v1417
  %v6137 = vunpack.c.h.b16 %v1417
  %v6138 = vunpack.c.l.b16 %v1418
  %v6139 = vunpack.c.h.b16 %v1418
  %v6140 = vunpack.c.l.b16 %v1419
  %v6141 = vunpack.c.h.b16 %v1419
  %v6142 = vunpack.c.l.b16 %v1420
  %v6143 = vunpack.c.h.b16 %v1420
  %v6144 = vunpack.c.l.b16 %v1421
  %v6145 = vunpack.c.h.b16 %v1421
  %v6146 = vunpack.c.l.b16 %v1422
  %v6147 = vunpack.c.h.b16 %v1422
  %v6148 = vunpack.c.l.b16 %v1423
  %v6149 = vunpack.c.h.b16 %v1423
  %v6150 = vunpack.c.l.b16 %v1424
  %v6151 = vunpack.c.h.b16 %v1424
  %v6152 = vunpack.c.l.b16 %v1425
  %v6153 = vunpack.c.h.b16 %v1425
  %v6154 = vunpack.c.l.b16 %v1426
  %v6155 = vunpack.c.h.b16 %v1426
  %v6156 = vunpack.c.l.b16 %v1427
  %v6157 = vunpack.c.h.b16 %v1427
  %v6158 = vunpack.c.l.b16 %v1428
  %v6159 = vunpack.c.h.b16 %v1428
  %v6160 = vunpack.c.l.b16 %v1429
  %v6161 = vunpack.c.h.b16 %v1429
  %v6162 = vunpack.c.l.b16 %v1430
  %v6163 = vunpack.c.h.b16 %v1430
  %v6164 = vunpack.c.l.b16 %v1431
  %v6165 = vunpack.c.h.b16 %v1431
  %v6166 = vunpack.c.l.b16 %v1432
  %v6167 = vunpack.c.h.b16 %v1432
  %v6168 = vunpack.c.l.b16 %v1433
  %v6169 = vunpack.c.h.b16 %v1433
  %v6170 = vunpack.c.l.b16 %v1434
  %v6171 = vunpack.c.h.b16 %v1434
  %v6172 = vunpack.c.l.b16 %v1435
  %v6173 = vunpack.c.h.b16 %v1435
  %v6174 = vunpack.c.l.b16 %v1436
  %v6175 = vunpack.c.h.b16 %v1436
  %v6176 = vunpack.c.l.b16 %v1437
  %v6177 = vunpack.c.h.b16 %v1437
  %v6178 = vunpack.c.l.b16 %v1438
  %v6179 = vunpack.c.h.b16 %v1438
  %v6180 = vunpack.c.l.b16 %v1439
  %v6181 = vunpack.c.h.b16 %v1439
  %v6182 = vunpack.c.l.b16 %v1440
  %v6183 = vunpack.c.h.b16 %v1440
  %v6184 = vunpack.c.l.b16 %v1441
  %v6185 = vunpack.c.h.b16 %v1441
  %v6186 = vunpack.c.l.b16 %v1442
  %v6187 = vunpack.c.h.b16 %v1442
  %v6188 = vunpack.c.l.b16 %v1443
  %v6189 = vunpack.c.h.b16 %v1443
  %v6190 = vunpack.c.l.b16 %v1444
  %v6191 = vunpack.c.h.b16 %v1444
  %v6192 = vunpack.c.l.b16 %v1445
  %v6193 = vunpack.c.h.b16 %v1445
  %v6194 = vunpack.c.l.b16 %v1446
  %v6195 = vunpack.c.h.b16 %v1446
  %v6196 = vunpack.c.l.b16 %v1447
  %v6197 = vunpack.c.h.b16 %v1447
  %v6198 = vunpack.c.l.b16 %v1448
  %v6199 = vunpack.c.h.b16 %v1448
  %v6200 = vunpack.c.l.b16 %v1449
  %v6201 = vunpack.c.h.b16 %v1449
  %v6202 = vunpack.c.l.b16 %v1450
  %v6203 = vunpack.c.h.b16 %v1450
  %v6204 = vunpack.c.l.b16 %v1451
  %v6205 = vunpack.c.h.b16 %v1451
  %v6206 = vunpack.c.l.b16 %v1452
  %v6207 = vunpack.c.h.b16 %v1452
  %v6208 = vunpack.c.l.b16 %v1453
  %v6209 = vunpack.c.h.b16 %v1453
  %v6210 = vunpack.c.l.b16 %v1454
  %v6211 = vunpack.c.h.b16 %v1454
  %v6212 = vunpack.c.l.b16 %v1455
  %v6213 = vunpack.c.h.b16 %v1455
  %v6214 = vunpack.c.l.b16 %v1456
  %v6215 = vunpack.c.h.b16 %v1456
  %v6216 = vunpack.c.l.b16 %v1457
  %v6217 = vunpack.c.h.b16 %v1457
  %v6218 = vunpack.c.l.b16 %v1458
  %v6219 = vunpack.c.h.b16 %v1458
  %v6220 = vunpack.c.l.b16 %v1459
  %v6221 = vunpack.c.h.b16 %v1459
  %v6222 = vunpack.c.l.b16 %v1460
  %v6223 = vunpack.c.h.b16 %v1460
  %v6224 = vunpack.c.l.b16 %v1461
  %v6225 = vunpack.c.h.b16 %v1461
  %v6226 = vunpack.c.l.b16 %v1462
  %v6227 = vunpack.c.h.b16 %v1462
  %v6228 = vunpack.c.l.b16 %v1463
  %v6229 = vunpack.c.h.b16 %v1463
  %v6230 = vunpack.c.l.b16 %v1464
  %v6231 = vunpack.c.h.b16 %v1464
  %v6232 = vunpack.c.l.b16 %v1465
  %v6233 = vunpack.c.h.b16 %v1465
  %v6234 = vunpack.c.l.b16 %v1466
  %v6235 = vunpack.c.h.b16 %v1466
  %v6236 = vunpack.c.l.b16 %v1467
  %v6237 = vunpack.c.h.b16 %v1467
  %v6238 = vunpack.c.l.b16 %v1468
  %v6239 = vunpack.c.h.b16 %v1468
  %v6240 = vunpack.c.l.b16 %v1469
  %v6241 = vunpack.c.h.b16 %v1469
  %v6242 = vunpack.c.l.b16 %v1470
  %v6243 = vunpack.c.h.b16 %v1470
  %v6244 = vunpack.c.l.b16 %v1471
  %v6245 = vunpack.c.h.b16 %v1471
  %v6246 = vunpack.c.l.b16 %v1472
  %v6247 = vunpack.c.h.b16 %v1472
  %v6248 = vunpack.c.l.b16 %v1473
  %v6249 = vunpack.c.h.b16 %v1473
  %v6250 = vunpack.c.l.b16 %v1474
  %v6251 = vunpack.c.h.b16 %v1474
  %v6252 = vunpack.c.l.b16 %v1475
  %v6253 = vunpack.c.h.b16 %v1475
  %v6254 = vunpack.c.l.b16 %v1476
  %v6255 = vunpack.c.h.b16 %v1476
  %v6256 = vunpack.c.l.b16 %v1477
  %v6257 = vunpack.c.h.b16 %v1477
  %v6258 = vunpack.c.l.b16 %v1478
  %v6259 = vunpack.c.h.b16 %v1478
  %v6260 = vunpack.c.l.b16 %v1479
  %v6261 = vunpack.c.h.b16 %v1479
  %v6262 = vunpack.c.l.b16 %v1480
  %v6263 = vunpack.c.h.b16 %v1480
  %v6264 = vunpack.c.l.b16 %v1481
  %v6265 = vunpack.c.h.b16 %v1481
  %v6266 = vunpack.c.l.b16 %v1482
  %v6267 = vunpack.c.h.b16 %v1482
  %v6268 = vunpack.c.l.b16 %v1483
  %v6269 = vunpack.c.h.b16 %v1483
  %v6270 = vunpack.c.l.b16 %v1484
  %v6271 = vunpack.c.h.b16 %v1484
  %v6272 = vunpack.c.l.b16 %v1485
  %v6273 = vunpack.c.h.b16 %v1485
  %v6274 = vunpack.c.l.b16 %v1486
  %v6275 = vunpack.c.h.b16 %v1486
  %v6276 = vunpack.c.l.b16 %v1487
  %v6277 = vunpack.c.h.b16 %v1487
  %v6278 = vunpack.c.l.b16 %v1488
  %v6279 = vunpack.c.h.b16 %v1488
  %v6280 = vunpack.c.l.b16 %v1489
  %v6281 = vunpack.c.h.b16 %v1489
  %v6282 = vunpack.c.l.b16 %v1490
  %v6283 = vunpack.c.h.b16 %v1490
  %v6284 = vunpack.c.l.b16 %v1491
  %v6285 = vunpack.c.h.b16 %v1491
  %v6286 = vunpack.c.l.b16 %v1492
  %v6287 = vunpack.c.h.b16 %v1492
  %v6288 = vunpack.c.l.b16 %v1493
  %v6289 = vunpack.c.h.b16 %v1493
  %v6290 = vunpack.c.l.b16 %v1494
  %v6291 = vunpack.c.h.b16 %v1494
  %v6292 = vunpack.c.l.b16 %v1495
  %v6293 = vunpack.c.h.b16 %v1495
  %v6294 = vunpack.c.l.b16 %v1496
  %v6295 = vunpack.c.h.b16 %v1496
  %v6296 = vunpack.c.l.b16 %v1497
  %v6297 = vunpack.c.h.b16 %v1497
  %v6298 = vunpack.c.l.b16 %v1498
  %v6299 = vunpack.c.h.b16 %v1498
  %v6300 = vunpack.c.l.b16 %v1499
  %v6301 = vunpack.c.h.b16 %v1499
  %v6302 = vunpack.c.l.b16 %v1500
  %v6303 = vunpack.c.h.b16 %v1500
  %v6304 = vunpack.c.l.b16 %v1501
  %v6305 = vunpack.c.h.b16 %v1501
  %v6306 = vunpack.c.l.b16 %v1502
  %v6307 = vunpack.c.h.b16 %v1502
  %v6308 = vunpack.c.l.b16 %v1503
  %v6309 = vunpack.c.h.b16 %v1503
  %v6310 = vunpack.c.l.b16 %v1504
  %v6311 = vunpack.c.h.b16 %v1504
  %v6312 = vunpack.c.l.b16 %v1505
  %v6313 = vunpack.c.h.b16 %v1505
  %v6314 = vunpack.c.l.b16 %v1506
  %v6315 = vunpack.c.h.b16 %v1506
  %v6316 = vunpack.c.l.b16 %v1507
  %v6317 = vunpack.c.h.b16 %v1507
  %v6318 = vunpack.c.l.b16 %v1508
  %v6319 = vunpack.c.h.b16 %v1508
  %v6320 = vunpack.c.l.b16 %v1509
  %v6321 = vunpack.c.h.b16 %v1509
  %v6322 = vunpack.c.l.b16 %v1510
  %v6323 = vunpack.c.h.b16 %v1510
  %v6324 = vunpack.c.l.b16 %v1511
  %v6325 = vunpack.c.h.b16 %v1511
  %v6326 = vunpack.c.l.b16 %v1512
  %v6327 = vunpack.c.h.b16 %v1512
  %v6328 = vunpack.c.l.b16 %v1513
  %v6329 = vunpack.c.h.b16 %v1513
  %v6330 = vunpack.c.l.b16 %v1514
  %v6331 = vunpack.c.h.b16 %v1514
  %v6332 = vunpack.c.l.b16 %v1515
  %v6333 = vunpack.c.h.b16 %v1515
  %v6334 = vunpack.c.l.b16 %v1516
  %v6335 = vunpack.c.h.b16 %v1516
  %v6336 = vunpack.c.l.b16 %v1517
  %v6337 = vunpack.c.h.b16 %v1517
  %v6338 = vunpack.c.l.b16 %v1518
  %v6339 = vunpack.c.h.b16 %v1518
  %v6340 = vunpack.c.l.b16 %v1519
  %v6341 = vunpack.c.h.b16 %v1519
  %v6342 = vunpack.c.l.b16 %v1520
  %v6343 = vunpack.c.h.b16 %v1520
  %v6344 = vunpack.c.l.b16 %v1521
  %v6345 = vunpack.c.h.b16 %v1521
  %v6346 = vunpack.c.l.b16 %v1522
  %v6347 = vunpack.c.h.b16 %v1522
  %v6348 = vunpack.c.l.b16 %v1523
  %v6349 = vunpack.c.h.b16 %v1523
  %v6350 = vunpack.c.l.b16 %v1524
  %v6351 = vunpack.c.h.b16 %v1524
  %v6352 = vunpack.c.l.b16 %v1525
  %v6353 = vunpack.c.h.b16 %v1525
  %v6354 = vunpack.c.l.b16 %v1526
  %v6355 = vunpack.c.h.b16 %v1526
  %v6356 = vunpack.c.l.b16 %v1527
  %v6357 = vunpack.c.h.b16 %v1527
  %v6358 = vunpack.c.l.b16 %v1528
  %v6359 = vunpack.c.h.b16 %v1528
  %v6360 = vunpack.c.l.b16 %v1529
  %v6361 = vunpack.c.h.b16 %v1529
  %v6362 = vunpack.c.l.b16 %v1530
  %v6363 = vunpack.c.h.b16 %v1530
  %v6364 = vunpack.c.l.b16 %v1531
  %v6365 = vunpack.c.h.b16 %v1531
  %v6366 = vunpack.c.l.b16 %v1532
  %v6367 = vunpack.c.h.b16 %v1532
  %v6368 = vunpack.c.l.b16 %v1533
  %v6369 = vunpack.c.h.b16 %v1533
  %v6370 = vunpack.c.l.b16 %v1534
  %v6371 = vunpack.c.h.b16 %v1534
  %v6372 = vunpack.c.l.b16 %v1535
  %v6373 = vunpack.c.h.b16 %v1535
  %v6374 = vunpack.c.l.b16 %v1536
  %v6375 = vunpack.c.h.b16 %v1536
  %v6376 = vunpack.c.l.b16 %v1537
  %v6377 = vunpack.c.h.b16 %v1537
  %v6378 = vunpack.c.l.b16 %v1538
  %v6379 = vunpack.c.h.b16 %v1538
  %v6380 = vunpack.c.l.b16 %v1539
  %v6381 = vunpack.c.h.b16 %v1539
  %v6382 = vunpack.c.l.b16 %v1540
  %v6383 = vunpack.c.h.b16 %v1540
  %v6384 = vunpack.c.l.b16 %v1541
  %v6385 = vunpack.c.h.b16 %v1541
  %v6386 = vunpack.c.l.b16 %v1542
  %v6387 = vunpack.c.h.b16 %v1542
  %v6388 = vunpack.c.l.b16 %v1543
  %v6389 = vunpack.c.h.b16 %v1543
  %v6390 = vunpack.c.l.b16 %v1544
  %v6391 = vunpack.c.h.b16 %v1544
  %v6392 = vunpack.c.l.b16 %v1545
  %v6393 = vunpack.c.h.b16 %v1545
  %v6394 = vunpack.c.l.b16 %v1546
  %v6395 = vunpack.c.h.b16 %v1546
  %v6396 = vunpack.c.l.b16 %v1547
  %v6397 = vunpack.c.h.b16 %v1547
  %v6398 = vunpack.c.l.b16 %v1548
  %v6399 = vunpack.c.h.b16 %v1548
  %v6400 = vunpack.c.l.b16 %v1549
  %v6401 = vunpack.c.h.b16 %v1549
  %v6402 = vunpack.c.l.b16 %v1550
  %v6403 = vunpack.c.h.b16 %v1550
  %v6404 = vunpack.c.l.b16 %v1551
  %v6405 = vunpack.c.h.b16 %v1551
  %v6406 = vunpack.c.l.b16 %v1552
  %v6407 = vunpack.c.h.b16 %v1552
  %v6408 = vunpack.c.l.b16 %v1553
  %v6409 = vunpack.c.h.b16 %v1553
  %v6410 = vunpack.c.l.b16 %v1554
  %v6411 = vunpack.c.h.b16 %v1554
  %v6412 = vunpack.c.l.b16 %v1555
  %v6413 = vunpack.c.h.b16 %v1555
  %v6414 = vunpack.c.l.b16 %v1556
  %v6415 = vunpack.c.h.b16 %v1556
  %v6416 = vunpack.c.l.b16 %v1557
  %v6417 = vunpack.c.h.b16 %v1557
  %v6418 = vunpack.c.l.b16 %v1558
  %v6419 = vunpack.c.h.b16 %v1558
  %v6420 = vunpack.c.l.b16 %v1559
  %v6421 = vunpack.c.h.b16 %v1559
  %v6422 = vunpack.c.l.b16 %v1560
  %v6423 = vunpack.c.h.b16 %v1560
  %v6424 = vunpack.c.l.b16 %v1561
  %v6425 = vunpack.c.h.b16 %v1561
  %v6426 = vunpack.c.l.b16 %v1562
  %v6427 = vunpack.c.h.b16 %v1562
  %v6428 = vunpack.c.l.b16 %v1563
  %v6429 = vunpack.c.h.b16 %v1563
  %v6430 = vunpack.c.l.b16 %v1564
  %v6431 = vunpack.c.h.b16 %v1564
  %v6432 = vunpack.c.l.b16 %v1565
  %v6433 = vunpack.c.h.b16 %v1565
  %v6434 = vunpack.c.l.b16 %v1566
  %v6435 = vunpack.c.h.b16 %v1566
  %v6436 = vunpack.c.l.b16 %v1567
  %v6437 = vunpack.c.h.b16 %v1567
  %v6438 = vunpack.c.l.b16 %v1568
  %v6439 = vunpack.c.h.b16 %v1568
  %v6440 = vunpack.c.l.b16 %v1569
  %v6441 = vunpack.c.h.b16 %v1569
  %v6442 = vunpack.c.l.b16 %v1570
  %v6443 = vunpack.c.h.b16 %v1570
  %v6444 = vunpack.c.l.b16 %v1571
  %v6445 = vunpack.c.h.b16 %v1571
  %v6446 = vunpack.c.l.b16 %v1572
  %v6447 = vunpack.c.h.b16 %v1572
  %v6448 = vunpack.c.l.b16 %v1573
  %v6449 = vunpack.c.h.b16 %v1573
  %v6450 = vunpack.c.l.b16 %v1574
  %v6451 = vunpack.c.h.b16 %v1574
  %v6452 = vunpack.c.l.b16 %v1575
  %v6453 = vunpack.c.h.b16 %v1575
  %v6454 = vunpack.c.l.b16 %v1576
  %v6455 = vunpack.c.h.b16 %v1576
  %v6456 = vunpack.c.l.b16 %v1577
  %v6457 = vunpack.c.h.b16 %v1577
  %v6458 = vunpack.c.l.b16 %v1578
  %v6459 = vunpack.c.h.b16 %v1578
  %v6460 = vunpack.c.l.b16 %v1579
  %v6461 = vunpack.c.h.b16 %v1579
  %v6462 = vunpack.c.l.b16 %v1580
  %v6463 = vunpack.c.h.b16 %v1580
  %v6464 = vunpack.c.l.b16 %v1581
  %v6465 = vunpack.c.h.b16 %v1581
  %v6466 = vunpack.c.l.b16 %v1582
  %v6467 = vunpack.c.h.b16 %v1582
  %v6468 = vunpack.c.l.b16 %v1583
  %v6469 = vunpack.c.h.b16 %v1583
  %v6470 = vunpack.c.l.b16 %v1584
  %v6471 = vunpack.c.h.b16 %v1584
  %v6472 = vunpack.c.l.b16 %v1585
  %v6473 = vunpack.c.h.b16 %v1585
  %v6474 = vunpack.c.l.b16 %v1586
  %v6475 = vunpack.c.h.b16 %v1586
  %v6476 = vunpack.c.l.b16 %v1587
  %v6477 = vunpack.c.h.b16 %v1587
  %v6478 = vunpack.c.l.b16 %v1588
  %v6479 = vunpack.c.h.b16 %v1588
  %v6480 = vunpack.c.l.b16 %v1589
  %v6481 = vunpack.c.h.b16 %v1589
  %v6482 = vunpack.c.l.b16 %v1590
  %v6483 = vunpack.c.h.b16 %v1590
  %v6484 = vunpack.c.l.b16 %v1591
  %v6485 = vunpack.c.h.b16 %v1591
  %v6486 = vunpack.c.l.b16 %v1592
  %v6487 = vunpack.c.h.b16 %v1592
  %v6488 = vunpack.c.l.b16 %v1593
  %v6489 = vunpack.c.h.b16 %v1593
  %v6490 = vunpack.c.l.b16 %v1594
  %v6491 = vunpack.c.h.b16 %v1594
  %v6492 = vunpack.c.l.b16 %v1595
  %v6493 = vunpack.c.h.b16 %v1595
  %v6494 = vunpack.c.l.b16 %v1596
  %v6495 = vunpack.c.h.b16 %v1596
  %v6496 = vunpack.c.l.b16 %v1597
  %v6497 = vunpack.c.h.b16 %v1597
  %v6498 = vunpack.c.l.b16 %v1598
  %v6499 = vunpack.c.h.b16 %v1598
  %v6500 = vunpack.c.l.b16 %v1599
  %v6501 = vunpack.c.h.b16 %v1599
  %v6502 = vunpack.c.l.b16 %v1600
  %v6503 = vunpack.c.h.b16 %v1600
  %v6504 = vunpack.c.l.b16 %v1601
  %v6505 = vunpack.c.h.b16 %v1601
  %v6506 = vunpack.c.l.b16 %v1602
  %v6507 = vunpack.c.h.b16 %v1602
  %v6508 = vunpack.c.l.b16 %v1603
  %v6509 = vunpack.c.h.b16 %v1603
  %v6510 = vunpack.c.l.b16 %v1604
  %v6511 = vunpack.c.h.b16 %v1604
  %v6512 = vunpack.c.l.b16 %v1605
  %v6513 = vunpack.c.h.b16 %v1605
  %v6514 = vunpack.c.l.b16 %v1606
  %v6515 = vunpack.c.h.b16 %v1606
  %v6516 = vunpack.c.l.b16 %v1607
  %v6517 = vunpack.c.h.b16 %v1607
  %v6518 = vunpack.c.l.b16 %v1608
  %v6519 = vunpack.c.h.b16 %v1608
  %v6520 = vunpack.c.l.b16 %v1609
  %v6521 = vunpack.c.h.b16 %v1609
  %v6522 = vunpack.c.l.b16 %v1610
  %v6523 = vunpack.c.h.b16 %v1610
  %v6524 = vunpack.c.l.b16 %v1611
  %v6525 = vunpack.c.h.b16 %v1611
  %v6526 = vunpack.c.l.b16 %v1612
  %v6527 = vunpack.c.h.b16 %v1612
  %v6528 = vunpack.c.l.b16 %v1613
  %v6529 = vunpack.c.h.b16 %v1613
  %v6530 = vunpack.c.l.b16 %v1614
  %v6531 = vunpack.c.h.b16 %v1614
  %v6532 = vunpack.c.l.b16 %v1615
  %v6533 = vunpack.c.h.b16 %v1615
  %v6534 = vunpack.c.l.b16 %v1616
  %v6535 = vunpack.c.h.b16 %v1616
  %v6536 = vunpack.c.l.b16 %v1617
  %v6537 = vunpack.c.h.b16 %v1617
  %v6538 = vunpack.c.l.b16 %v1618
  %v6539 = vunpack.c.h.b16 %v1618
  %v6540 = vunpack.c.l.b16 %v1619
  %v6541 = vunpack.c.h.b16 %v1619
  %v6542 = vunpack.c.l.b16 %v1620
  %v6543 = vunpack.c.h.b16 %v1620
  %v6544 = vunpack.c.l.b16 %v1621
  %v6545 = vunpack.c.h.b16 %v1621
  %v6546 = vunpack.c.l.b16 %v1622
  %v6547 = vunpack.c.h.b16 %v1622
  %v6548 = vunpack.c.l.b16 %v1623
  %v6549 = vunpack.c.h.b16 %v1623
  %v6550 = vunpack.c.l.b16 %v1624
  %v6551 = vunpack.c.h.b16 %v1624
  %v6552 = vunpack.c.l.b16 %v1625
  %v6553 = vunpack.c.h.b16 %v1625
  %v6554 = vunpack.c.l.b16 %v1626
  %v6555 = vunpack.c.h.b16 %v1626
  %v6556 = vunpack.c.l.b16 %v1627
  %v6557 = vunpack.c.h.b16 %v1627
  %v6558 = vpack.c.b16 %v3366, %v3358
  %v6559 = vpack.c.b16 %v3367, %v3359
  %v6560 = vpack.c.b16 %v3368, %v3360
  %v6561 = vpack.c.b16 %v3369, %v3361
  %v6562 = vpack.c.b16 %v3370, %v3362
  %v6563 = vpack.c.b16 %v3371, %v3363
  %v6564 = vpack.c.b16 %v3372, %v3364
  %v6565 = vpack.c.b16 %v3373, %v3365
  %v6566 = vpack.c.b16 %v3382, %v3374
  %v6567 = vpack.c.b16 %v3383, %v3375
  %v6568 = vpack.c.b16 %v3384, %v3376
  %v6569 = vpack.c.b16 %v3385, %v3377
  %v6570 = vpack.c.b16 %v3386, %v3378
  %v6571 = vpack.c.b16 %v3387, %v3379
  %v6572 = vpack.c.b16 %v3388, %v3380
  %v6573 = vpack.c.b16 %v3389, %v3381
  %v6574 = vpack.c.b16 %v3398, %v3390
  %v6575 = vpack.c.b16 %v3399, %v3391
  %v6576 = vpack.c.b16 %v3400, %v3392
  %v6577 = vpack.c.b16 %v3401, %v3393
  %v6578 = vpack.c.b16 %v3402, %v3394
  %v6579 = vpack.c.b16 %v3403, %v3395
  %v6580 = vpack.c.b16 %v3404, %v3396
  %v6581 = vpack.c.b16 %v3405, %v3397
  %v6582 = vpack.c.b16 %v3414, %v3406
  %v6583 = vpack.c.b16 %v3415, %v3407
  %v6584 = vpack.c.b16 %v3416, %v3408
  %v6585 = vpack.c.b16 %v3417, %v3409
  %v6586 = vpack.c.b16 %v3418, %v3410
  %v6587 = vpack.c.b16 %v3419, %v3411
  %v6588 = vpack.c.b16 %v3420, %v3412
  %v6589 = vpack.c.b16 %v3421, %v3413
  %v6590 = vpack.c.b16 %v3430, %v3422
  %v6591 = vpack.c.b16 %v3431, %v3423
  %v6592 = vpack.c.b16 %v3432, %v3424
  %v6593 = vpack.c.b16 %v3433, %v3425
  %v6594 = vpack.c.b16 %v3434, %v3426
  %v6595 = vpack.c.b16 %v3435, %v3427
  %v6596 = vpack.c.b16 %v3436, %v3428
  %v6597 = vpack.c.b16 %v3437, %v3429
  %v6598 = vpack.c.b16 %v3446, %v3438
  %v6599 = vpack.c.b16 %v3447, %v3439
  %v6600 = vpack.c.b16 %v3448, %v3440
  %v6601 = vpack.c.b16 %v3449, %v3441
  %v6602 = vpack.c.b16 %v3450, %v3442
  %v6603 = vpack.c.b16 %v3451, %v3443
  %v6604 = vpack.c.b16 %v3452, %v3444
  %v6605 = vpack.c.b16 %v3453, %v3445
  %v6606 = vpack.c.b16 %v3462, %v3454
  %v6607 = vpack.c.b16 %v3463, %v3455
  %v6608 = vpack.c.b16 %v3464, %v3456
  %v6609 = vpack.c.b16 %v3465, %v3457
  %v6610 = vpack.c.b16 %v3466, %v3458
  %v6611 = vpack.c.b16 %v3467, %v3459
  %v6612 = vpack.c.b16 %v3468, %v3460
  %v6613 = vpack.c.b16 %v3469, %v3461
  %v6614 = vpack.c.b16 %v3478, %v3470
  %v6615 = vpack.c.b16 %v3479, %v3471
  %v6616 = vpack.c.b16 %v3480, %v3472
  %v6617 = vpack.c.b16 %v3481, %v3473
  %v6618 = vpack.c.b16 %v3482, %v3474
  %v6619 = vpack.c.b16 %v3483, %v3475
  %v6620 = vpack.c.b16 %v3484, %v3476
  %v6621 = vpack.c.b16 %v3485, %v3477
  %v6622 = vpack.c.b16 %v3494, %v3486
  %v6623 = vpack.c.b16 %v3495, %v3487
  %v6624 = vpack.c.b16 %v3496, %v3488
  %v6625 = vpack.c.b16 %v3497, %v3489
  %v6626 = vpack.c.b16 %v3498, %v3490
  %v6627 = vpack.c.b16 %v3499, %v3491
  %v6628 = vpack.c.b16 %v3500, %v3492
  %v6629 = vpack.c.b16 %v3501, %v3493
  %v6630 = vpack.c.b16 %v3510, %v3502
  %v6631 = vpack.c.b16 %v3511, %v3503
  %v6632 = vpack.c.b16 %v3512, %v3504
  %v6633 = vpack.c.b16 %v3513, %v3505
  %v6634 = vpack.c.b16 %v3514, %v3506
  %v6635 = vpack.c.b16 %v3515, %v3507
  %v6636 = vpack.c.b16 %v3516, %v3508
  %v6637 = vpack.c.b16 %v3517, %v3509
  %v6638 = vpack.c.b16 %v3526, %v3518
  %v6639 = vpack.c.b16 %v3527, %v3519
  %v6640 = vpack.c.b16 %v3528, %v3520
  %v6641 = vpack.c.b16 %v3529, %v3521
  %v6642 = vpack.c.b16 %v3530, %v3522
  %v6643 = vpack.c.b16 %v3531, %v3523
  %v6644 = vpack.c.b16 %v3532, %v3524
  %v6645 = vpack.c.b16 %v3533, %v3525
  %v6646 = vpack.c.b16 %v3542, %v3534
  %v6647 = vpack.c.b16 %v3543, %v3535
  %v6648 = vpack.c.b16 %v3544, %v3536
  %v6649 = vpack.c.b16 %v3545, %v3537
  %v6650 = vpack.c.b16 %v3546, %v3538
  %v6651 = vpack.c.b16 %v3547, %v3539
  %v6652 = vpack.c.b16 %v3548, %v3540
  %v6653 = vpack.c.b16 %v3549, %v3541
  %v6654 = vpack.c.b16 %v3558, %v3550
  %v6655 = vpack.c.b16 %v3559, %v3551
  %v6656 = vpack.c.b16 %v3560, %v3552
  %v6657 = vpack.c.b16 %v3561, %v3553
  %v6658 = vpack.c.b16 %v3562, %v3554
  %v6659 = vpack.c.b16 %v3563, %v3555
  %v6660 = vpack.c.b16 %v3564, %v3556
  %v6661 = vpack.c.b16 %v3565, %v3557
  %v6662 = vpack.c.b16 %v3574, %v3566
  %v6663 = vpack.c.b16 %v3575, %v3567
  %v6664 = vpack.c.b16 %v3576, %v3568
  %v6665 = vpack.c.b16 %v3577, %v3569
  %v6666 = vpack.c.b16 %v3578, %v3570
  %v6667 = vpack.c.b16 %v3579, %v3571
  %v6668 = vpack.c.b16 %v3580, %v3572
  %v6669 = vpack.c.b16 %v3581, %v3573
  %v6670 = vpack.c.b16 %v3590, %v3582
  %v6671 = vpack.c.b16 %v3591, %v3583
  %v6672 = vpack.c.b16 %v3592, %v3584
  %v6673 = vpack.c.b16 %v3593, %v3585
  %v6674 = vpack.c.b16 %v3594, %v3586
  %v6675 = vpack.c.b16 %v3595, %v3587
  %v6676 = vpack.c.b16 %v3596, %v3588
  %v6677 = vpack.c.b16 %v3597, %v3589
  %v6678 = vpack.c.b16 %v3606, %v3598
  %v6679 = vpack.c.b16 %v3607, %v3599
  %v6680 = vpack.c.b16 %v3608, %v3600
  %v6681 = vpack.c.b16 %v3609, %v3601
  %v6682 = vpack.c.b16 %v3610, %v3602
  %v6683 = vpack.c.b16 %v3611, %v3603
  %v6684 = vpack.c.b16 %v3612, %v3604
  %v6685 = vpack.c.b16 %v3613, %v3605
  %v6686 = vpack.c.b16 %v3622, %v3614
  %v6687 = vpack.c.b16 %v3623, %v3615
  %v6688 = vpack.c.b16 %v3624, %v3616
  %v6689 = vpack.c.b16 %v3625, %v3617
  %v6690 = vpack.c.b16 %v3626, %v3618
  %v6691 = vpack.c.b16 %v3627, %v3619
  %v6692 = vpack.c.b16 %v3628, %v3620
  %v6693 = vpack.c.b16 %v3629, %v3621
  %v6694 = vpack.c.b16 %v3638, %v3630
  %v6695 = vpack.c.b16 %v3639, %v3631
  %v6696 = vpack.c.b16 %v3640, %v3632
  %v6697 = vpack.c.b16 %v3641, %v3633
  %v6698 = vpack.c.b16 %v3642, %v3634
  %v6699 = vpack.c.b16 %v3643, %v3635
  %v6700 = vpack.c.b16 %v3644, %v3636
  %v6701 = vpack.c.b16 %v3645, %v3637
  %v6702 = vpack.c.b16 %v3654, %v3646
  %v6703 = vpack.c.b16 %v3655, %v3647
  %v6704 = vpack.c.b16 %v3656, %v3648
  %v6705 = vpack.c.b16 %v3657, %v3649
  %v6706 = vpack.c.b16 %v3658, %v3650
  %v6707 = vpack.c.b16 %v3659, %v3651
  %v6708 = vpack.c.b16 %v3660, %v3652
  %v6709 = vpack.c.b16 %v3661, %v3653
  %v6710 = vpack.c.b16 %v3670, %v3662
  %v6711 = vpack.c.b16 %v3671, %v3663
  %v6712 = vpack.c.b16 %v3672, %v3664
  %v6713 = vpack.c.b16 %v3673, %v3665
  %v6714 = vpack.c.b16 %v3674, %v3666
  %v6715 = vpack.c.b16 %v3675, %v3667
  %v6716 = vpack.c.b16 %v3676, %v3668
  %v6717 = vpack.c.b16 %v3677, %v3669
  %v6718 = vpack.c.b16 %v3686, %v3678
  %v6719 = vpack.c.b16 %v3687, %v3679
  %v6720 = vpack.c.b16 %v3688, %v3680
  %v6721 = vpack.c.b16 %v3689, %v3681
  %v6722 = vpack.c.b16 %v3690, %v3682
  %v6723 = vpack.c.b16 %v3691, %v3683
  %v6724 = vpack.c.b16 %v3692, %v3684
  %v6725 = vpack.c.b16 %v3693, %v3685
  %v6726 = vpack.c.b16 %v3702, %v3694
  %v6727 = vpack.c.b16 %v3703, %v3695
  %v6728 = vpack.c.b16 %v3704, %v3696
  %v6729 = vpack.c.b16 %v3705, %v3697
  %v6730 = vpack.c.b16 %v3706, %v3698
  %v6731 = vpack.c.b16 %v3707, %v3699
  %v6732 = vpack.c.b16 %v3708, %v3700
  %v6733 = vpack.c.b16 %v3709, %v3701
  %v6734 = vpack.c.b16 %v3718, %v3710
  %v6735 = vpack.c.b16 %v3719, %v3711
  %v6736 = vpack.c.b16 %v3720, %v3712
  %v6737 = vpack.c.b16 %v3721, %v3713
  %v6738 = vpack.c.b16 %v3722, %v3714
  %v6739 = vpack.c.b16 %v3723, %v3715
  %v6740 = vpack.c.b16 %v3724, %v3716
  %v6741 = vpack.c.b16 %v3725, %v3717
  %v6742 = vpack.c.b16 %v3734, %v3726
  %v6743 = vpack.c.b16 %v3735, %v3727
  %v6744 = vpack.c.b16 %v3736, %v3728
  %v6745 = vpack.c.b16 %v3737, %v3729
  %v6746 = vpack.c.b16 %v3738, %v3730
  %v6747 = vpack.c.b16 %v3739, %v3731
  %v6748 = vpack.c.b16 %v3740, %v3732
  %v6749 = vpack.c.b16 %v3741, %v3733
  %v6750 = vpack.c.b16 %v3750, %v3742
  %v6751 = vpack.c.b16 %v3751, %v3743
  %v6752 = vpack.c.b16 %v3752, %v3744
  %v6753 = vpack.c.b16 %v3753, %v3745
  %v6754 = vpack.c.b16 %v3754, %v3746
  %v6755 = vpack.c.b16 %v3755, %v3747
  %v6756 = vpack.c.b16 %v3756, %v3748
  %v6757 = vpack.c.b16 %v3757, %v3749
  %v6758 = vpack.c.b16 %v3766, %v3758
  %v6759 = vpack.c.b16 %v3767, %v3759
  %v6760 = vpack.c.b16 %v3768, %v3760
  %v6761 = vpack.c.b16 %v3769, %v3761
  %v6762 = vpack.c.b16 %v3770, %v3762
  %v6763 = vpack.c.b16 %v3771, %v3763
  %v6764 = vpack.c.b16 %v3772, %v3764
  %v6765 = vpack.c.b16 %v3773, %v3765
  %v6766 = vpack.c.b16 %v3782, %v3774
  %v6767 = vpack.c.b16 %v3783, %v3775
  %v6768 = vpack.c.b16 %v3784, %v3776
  %v6769 = vpack.c.b16 %v3785, %v3777
  %v6770 = vpack.c.b16 %v3786, %v3778
  %v6771 = vpack.c.b16 %v3787, %v3779
  %v6772 = vpack.c.b16 %v3788, %v3780
  %v6773 = vpack.c.b16 %v3789, %v3781
  %v6774 = vpack.c.b16 %v3798, %v3790
  %v6775 = vpack.c.b16 %v3799, %v3791
  %v6776 = vpack.c.b16 %v3800, %v3792
  %v6777 = vpack.c.b16 %v3801, %v3793
  %v6778 = vpack.c.b16 %v3802, %v3794
  %v6779 = vpack.c.b16 %v3803, %v3795
  %v6780 = vpack.c.b16 %v3804, %v3796
  %v6781 = vpack.c.b16 %v3805, %v3797
  %v6782 = vpack.c.b16 %v3814, %v3806
  %v6783 = vpack.c.b16 %v3815, %v3807
  %v6784 = vpack.c.b16 %v3816, %v3808
  %v6785 = vpack.c.b16 %v3817, %v3809
  %v6786 = vpack.c.b16 %v3818, %v3810
  %v6787 = vpack.c.b16 %v3819, %v3811
  %v6788 = vpack.c.b16 %v3820, %v3812
  %v6789 = vpack.c.b16 %v3821, %v3813
  %v6790 = vpack.c.b16 %v3830, %v3822
  %v6791 = vpack.c.b16 %v3831, %v3823
  %v6792 = vpack.c.b16 %v3832, %v3824
  %v6793 = vpack.c.b16 %v3833, %v3825
  %v6794 = vpack.c.b16 %v3834, %v3826
  %v6795 = vpack.c.b16 %v3835, %v3827
  %v6796 = vpack.c.b16 %v3836, %v3828
  %v6797 = vpack.c.b16 %v3837, %v3829
  %v6798 = vpack.c.b16 %v3846, %v3838
  %v6799 = vpack.c.b16 %v3847, %v3839
  %v6800 = vpack.c.b16 %v3848, %v3840
  %v6801 = vpack.c.b16 %v3849, %v3841
  %v6802 = vpack.c.b16 %v3850, %v3842
  %v6803 = vpack.c.b16 %v3851, %v3843
  %v6804 = vpack.c.b16 %v3852, %v3844
  %v6805 = vpack.c.b16 %v3853, %v3845
  %v6806 = vpack.c.b16 %v3862, %v3854
  %v6807 = vpack.c.b16 %v3863, %v3855
  %v6808 = vpack.c.b16 %v3864, %v3856
  %v6809 = vpack.c.b16 %v3865, %v3857
  %v6810 = vpack.c.b16 %v3866, %v3858
  %v6811 = vpack.c.b16 %v3867, %v3859
  %v6812 = vpack.c.b16 %v3868, %v3860
  %v6813 = vpack.c.b16 %v3869, %v3861
  %v6814 = vpack.c.b16 %v3878, %v3870
  %v6815 = vpack.c.b16 %v3879, %v3871
  %v6816 = vpack.c.b16 %v3880, %v3872
  %v6817 = vpack.c.b16 %v3881, %v3873
  %v6818 = vpack.c.b16 %v3882, %v3874
  %v6819 = vpack.c.b16 %v3883, %v3875
  %v6820 = vpack.c.b16 %v3884, %v3876
  %v6821 = vpack.c.b16 %v3885, %v3877
  %v6822 = vpack.c.b16 %v3894, %v3886
  %v6823 = vpack.c.b16 %v3895, %v3887
  %v6824 = vpack.c.b16 %v3896, %v3888
  %v6825 = vpack.c.b16 %v3897, %v3889
  %v6826 = vpack.c.b16 %v3898, %v3890
  %v6827 = vpack.c.b16 %v3899, %v3891
  %v6828 = vpack.c.b16 %v3900, %v3892
  %v6829 = vpack.c.b16 %v3901, %v3893
  %v6830 = vpack.c.b16 %v3910, %v3902
  %v6831 = vpack.c.b16 %v3911, %v3903
  %v6832 = vpack.c.b16 %v3912, %v3904
  %v6833 = vpack.c.b16 %v3913, %v3905
  %v6834 = vpack.c.b16 %v3914, %v3906
  %v6835 = vpack.c.b16 %v3915, %v3907
  %v6836 = vpack.c.b16 %v3916, %v3908
  %v6837 = vpack.c.b16 %v3917, %v3909
  %v6838 = vpack.c.b16 %v3926, %v3918
  %v6839 = vpack.c.b16 %v3927, %v3919
  %v6840 = vpack.c.b16 %v3928, %v3920
  %v6841 = vpack.c.b16 %v3929, %v3921
  %v6842 = vpack.c.b16 %v3930, %v3922
  %v6843 = vpack.c.b16 %v3931, %v3923
  %v6844 = vpack.c.b16 %v3932, %v3924
  %v6845 = vpack.c.b16 %v3933, %v3925
  %v6846 = vpack.c.b16 %v3942, %v3934
  %v6847 = vpack.c.b16 %v3943, %v3935
  %v6848 = vpack.c.b16 %v3944, %v3936
  %v6849 = vpack.c.b16 %v3945, %v3937
  %v6850 = vpack.c.b16 %v3946, %v3938
  %v6851 = vpack.c.b16 %v3947, %v3939
  %v6852 = vpack.c.b16 %v3948, %v3940
  %v6853 = vpack.c.b16 %v3949, %v3941
  %v6854 = vpack.c.b16 %v3958, %v3950
  %v6855 = vpack.c.b16 %v3959, %v3951
  %v6856 = vpack.c.b16 %v3960, %v3952
  %v6857 = vpack.c.b16 %v3961, %v3953
  %v6858 = vpack.c.b16 %v3962, %v3954
  %v6859 = vpack.c.b16 %v3963, %v3955
  %v6860 = vpack.c.b16 %v3964, %v3956
  %v6861 = vpack.c.b16 %v3965, %v3957
  %v6862 = vpack.c.b16 %v3974, %v3966
  %v6863 = vpack.c.b16 %v3975, %v3967
  %v6864 = vpack.c.b16 %v3976, %v3968
  %v6865 = vpack.c.b16 %v3977, %v3969
  %v6866 = vpack.c.b16 %v3978, %v3970
  %v6867 = vpack.c.b16 %v3979, %v3971
  %v6868 = vpack.c.b16 %v3980, %v3972
  %v6869 = vpack.c.b16 %v3981, %v3973
  %v6870 = vpack.c.b16 %v3990, %v3982
  %v6871 = vpack.c.b16 %v3991, %v3983
  %v6872 = vpack.c.b16 %v3992, %v3984
  %v6873 = vpack.c.b16 %v3993, %v3985
  %v6874 = vpack.c.b16 %v3994, %v3986
  %v6875 = vpack.c.b16 %v3995, %v3987
  %v6876 = vpack.c.b16 %v3996, %v3988
  %v6877 = vpack.c.b16 %v3997, %v3989
  %v6878 = vpack.c.b16 %v4006, %v3998
  %v6879 = vpack.c.b16 %v4007, %v3999
  %v6880 = vpack.c.b16 %v4008, %v4000
  %v6881 = vpack.c.b16 %v4009, %v4001
  %v6882 = vpack.c.b16 %v4010, %v4002
  %v6883 = vpack.c.b16 %v4011, %v4003
  %v6884 = vpack.c.b16 %v4012, %v4004
  %v6885 = vpack.c.b16 %v4013, %v4005
  %v6886 = vpack.c.b16 %v4022, %v4014
  %v6887 = vpack.c.b16 %v4023, %v4015
  %v6888 = vpack.c.b16 %v4024, %v4016
  %v6889 = vpack.c.b16 %v4025, %v4017
  %v6890 = vpack.c.b16 %v4026, %v4018
  %v6891 = vpack.c.b16 %v4027, %v4019
  %v6892 = vpack.c.b16 %v4028, %v4020
  %v6893 = vpack.c.b16 %v4029, %v4021
  %v6894 = vpack.c.b16 %v4038, %v4030
  %v6895 = vpack.c.b16 %v4039, %v4031
  %v6896 = vpack.c.b16 %v4040, %v4032
  %v6897 = vpack.c.b16 %v4041, %v4033
  %v6898 = vpack.c.b16 %v4042, %v4034
  %v6899 = vpack.c.b16 %v4043, %v4035
  %v6900 = vpack.c.b16 %v4044, %v4036
  %v6901 = vpack.c.b16 %v4045, %v4037
  %v6902 = vpack.c.b16 %v4054, %v4046
  %v6903 = vpack.c.b16 %v4055, %v4047
  %v6904 = vpack.c.b16 %v4056, %v4048
  %v6905 = vpack.c.b16 %v4057, %v4049
  %v6906 = vpack.c.b16 %v4058, %v4050
  %v6907 = vpack.c.b16 %v4059, %v4051
  %v6908 = vpack.c.b16 %v4060, %v4052
  %v6909 = vpack.c.b16 %v4061, %v4053
  %v6910 = vpack.c.b16 %v4070, %v4062
  %v6911 = vpack.c.b16 %v4071, %v4063
  %v6912 = vpack.c.b16 %v4072, %v4064
  %v6913 = vpack.c.b16 %v4073, %v4065
  %v6914 = vpack.c.b16 %v4074, %v4066
  %v6915 = vpack.c.b16 %v4075, %v4067
  %v6916 = vpack.c.b16 %v4076, %v4068
  %v6917 = vpack.c.b16 %v4077, %v4069
  %v6918 = vpack.c.b16 %v4086, %v4078
  %v6919 = vpack.c.b16 %v4087, %v4079
  %v6920 = vpack.c.b16 %v4088, %v4080
  %v6921 = vpack.c.b16 %v4089, %v4081
  %v6922 = vpack.c.b16 %v4090, %v4082
  %v6923 = vpack.c.b16 %v4091, %v4083
  %v6924 = vpack.c.b16 %v4092, %v4084
  %v6925 = vpack.c.b16 %v4093, %v4085
  %v6926 = vpack.c.b16 %v4102, %v4094
  %v6927 = vpack.c.b16 %v4103, %v4095
  %v6928 = vpack.c.b16 %v4104, %v4096
  %v6929 = vpack.c.b16 %v4105, %v4097
  %v6930 = vpack.c.b16 %v4106, %v4098
  %v6931 = vpack.c.b16 %v4107, %v4099
  %v6932 = vpack.c.b16 %v4108, %v4100
  %v6933 = vpack.c.b16 %v4109, %v4101
  %v6934 = vpack.c.b16 %v4118, %v4110
  %v6935 = vpack.c.b16 %v4119, %v4111
  %v6936 = vpack.c.b16 %v4120, %v4112
  %v6937 = vpack.c.b16 %v4121, %v4113
  %v6938 = vpack.c.b16 %v4122, %v4114
  %v6939 = vpack.c.b16 %v4123, %v4115
  %v6940 = vpack.c.b16 %v4124, %v4116
  %v6941 = vpack.c.b16 %v4125, %v4117
  %v6942 = vpack.c.b16 %v4134, %v4126
  %v6943 = vpack.c.b16 %v4135, %v4127
  %v6944 = vpack.c.b16 %v4136, %v4128
  %v6945 = vpack.c.b16 %v4137, %v4129
  %v6946 = vpack.c.b16 %v4138, %v4130
  %v6947 = vpack.c.b16 %v4139, %v4131
  %v6948 = vpack.c.b16 %v4140, %v4132
  %v6949 = vpack.c.b16 %v4141, %v4133
  %v6950 = vpack.c.b16 %v4150, %v4142
  %v6951 = vpack.c.b16 %v4151, %v4143
  %v6952 = vpack.c.b16 %v4152, %v4144
  %v6953 = vpack.c.b16 %v4153, %v4145
  %v6954 = vpack.c.b16 %v4154, %v4146
  %v6955 = vpack.c.b16 %v4155, %v4147
  %v6956 = vpack.c.b16 %v4156, %v4148
  %v6957 = vpack.c.b16 %v4157, %v4149
  %v6958 = vpack.c.b16 %v4166, %v4158
  %v6959 = vpack.c.b16 %v4167, %v4159
  %v6960 = vpack.c.b16 %v4168, %v4160
  %v6961 = vpack.c.b16 %v4169, %v4161
  %v6962 = vpack.c.b16 %v4170, %v4162
  %v6963 = vpack.c.b16 %v4171, %v4163
  %v6964 = vpack.c.b16 %v4172, %v4164
  %v6965 = vpack.c.b16 %v4173, %v4165
  %v6966 = vpack.c.b16 %v4182, %v4174
  %v6967 = vpack.c.b16 %v4183, %v4175
  %v6968 = vpack.c.b16 %v4184, %v4176
  %v6969 = vpack.c.b16 %v4185, %v4177
  %v6970 = vpack.c.b16 %v4186, %v4178
  %v6971 = vpack.c.b16 %v4187, %v4179
  %v6972 = vpack.c.b16 %v4188, %v4180
  %v6973 = vpack.c.b16 %v4189, %v4181
  %v6974 = vpack.c.b16 %v4198, %v4190
  %v6975 = vpack.c.b16 %v4199, %v4191
  %v6976 = vpack.c.b16 %v4200, %v4192
  %v6977 = vpack.c.b16 %v4201, %v4193
  %v6978 = vpack.c.b16 %v4202, %v4194
  %v6979 = vpack.c.b16 %v4203, %v4195
  %v6980 = vpack.c.b16 %v4204, %v4196
  %v6981 = vpack.c.b16 %v4205, %v4197
  %v6982 = vpack.c.b16 %v4214, %v4206
  %v6983 = vpack.c.b16 %v4215, %v4207
  %v6984 = vpack.c.b16 %v4216, %v4208
  %v6985 = vpack.c.b16 %v4217, %v4209
  %v6986 = vpack.c.b16 %v4218, %v4210
  %v6987 = vpack.c.b16 %v4219, %v4211
  %v6988 = vpack.c.b16 %v4220, %v4212
  %v6989 = vpack.c.b16 %v4221, %v4213
  %v6990 = vpack.c.b16 %v4230, %v4222
  %v6991 = vpack.c.b16 %v4231, %v4223
  %v6992 = vpack.c.b16 %v4232, %v4224
  %v6993 = vpack.c.b16 %v4233, %v4225
  %v6994 = vpack.c.b16 %v4234, %v4226
  %v6995 = vpack.c.b16 %v4235, %v4227
  %v6996 = vpack.c.b16 %v4236, %v4228
  %v6997 = vpack.c.b16 %v4237, %v4229
  %v6998 = vpack.c.b16 %v4246, %v4238
  %v6999 = vpack.c.b16 %v4247, %v4239
  %v7000 = vpack.c.b16 %v4248, %v4240
  %v7001 = vpack.c.b16 %v4249, %v4241
  %v7002 = vpack.c.b16 %v4250, %v4242
  %v7003 = vpack.c.b16 %v4251, %v4243
  %v7004 = vpack.c.b16 %v4252, %v4244
  %v7005 = vpack.c.b16 %v4253, %v4245
  %v7006 = vpack.c.b16 %v4262, %v4254
  %v7007 = vpack.c.b16 %v4263, %v4255
  %v7008 = vpack.c.b16 %v4264, %v4256
  %v7009 = vpack.c.b16 %v4265, %v4257
  %v7010 = vpack.c.b16 %v4266, %v4258
  %v7011 = vpack.c.b16 %v4267, %v4259
  %v7012 = vpack.c.b16 %v4268, %v4260
  %v7013 = vpack.c.b16 %v4269, %v4261
  %v7014 = vpack.c.b16 %v4278, %v4270
  %v7015 = vpack.c.b16 %v4279, %v4271
  %v7016 = vpack.c.b16 %v4280, %v4272
  %v7017 = vpack.c.b16 %v4281, %v4273
  %v7018 = vpack.c.b16 %v4282, %v4274
  %v7019 = vpack.c.b16 %v4283, %v4275
  %v7020 = vpack.c.b16 %v4284, %v4276
  %v7021 = vpack.c.b16 %v4285, %v4277
  %v7022 = vpack.c.b16 %v4294, %v4286
  %v7023 = vpack.c.b16 %v4295, %v4287
  %v7024 = vpack.c.b16 %v4296, %v4288
  %v7025 = vpack.c.b16 %v4297, %v4289
  %v7026 = vpack.c.b16 %v4298, %v4290
  %v7027 = vpack.c.b16 %v4299, %v4291
  %v7028 = vpack.c.b16 %v4300, %v4292
  %v7029 = vpack.c.b16 %v4301, %v4293
  %v7030 = vpack.c.b16 %v4310, %v4302
  %v7031 = vpack.c.b16 %v4311, %v4303
  %v7032 = vpack.c.b16 %v4312, %v4304
  %v7033 = vpack.c.b16 %v4313, %v4305
  %v7034 = vpack.c.b16 %v4314, %v4306
  %v7035 = vpack.c.b16 %v4315, %v4307
  %v7036 = vpack.c.b16 %v4316, %v4308
  %v7037 = vpack.c.b16 %v4317, %v4309
  %v7038 = vpack.c.b16 %v4326, %v4318
  %v7039 = vpack.c.b16 %v4327, %v4319
  %v7040 = vpack.c.b16 %v4328, %v4320
  %v7041 = vpack.c.b16 %v4329, %v4321
  %v7042 = vpack.c.b16 %v4330, %v4322
  %v7043 = vpack.c.b16 %v4331, %v4323
  %v7044 = vpack.c.b16 %v4332, %v4324
  %v7045 = vpack.c.b16 %v4333, %v4325
  %v7046 = vpack.c.b16 %v4342, %v4334
  %v7047 = vpack.c.b16 %v4343, %v4335
  %v7048 = vpack.c.b16 %v4344, %v4336
  %v7049 = vpack.c.b16 %v4345, %v4337
  %v7050 = vpack.c.b16 %v4346, %v4338
  %v7051 = vpack.c.b16 %v4347, %v4339
  %v7052 = vpack.c.b16 %v4348, %v4340
  %v7053 = vpack.c.b16 %v4349, %v4341
  %v7054 = vpack.c.b16 %v4358, %v4350
  %v7055 = vpack.c.b16 %v4359, %v4351
  %v7056 = vpack.c.b16 %v4360, %v4352
  %v7057 = vpack.c.b16 %v4361, %v4353
  %v7058 = vpack.c.b16 %v4362, %v4354
  %v7059 = vpack.c.b16 %v4363, %v4355
  %v7060 = vpack.c.b16 %v4364, %v4356
  %v7061 = vpack.c.b16 %v4365, %v4357
  %v7062 = vpack.c.b16 %v4374, %v4366
  %v7063 = vpack.c.b16 %v4375, %v4367
  %v7064 = vpack.c.b16 %v4376, %v4368
  %v7065 = vpack.c.b16 %v4377, %v4369
  %v7066 = vpack.c.b16 %v4378, %v4370
  %v7067 = vpack.c.b16 %v4379, %v4371
  %v7068 = vpack.c.b16 %v4380, %v4372
  %v7069 = vpack.c.b16 %v4381, %v4373
  %v7070 = vpack.c.b16 %v4390, %v4382
  %v7071 = vpack.c.b16 %v4391, %v4383
  %v7072 = vpack.c.b16 %v4392, %v4384
  %v7073 = vpack.c.b16 %v4393, %v4385
  %v7074 = vpack.c.b16 %v4394, %v4386
  %v7075 = vpack.c.b16 %v4395, %v4387
  %v7076 = vpack.c.b16 %v4396, %v4388
  %v7077 = vpack.c.b16 %v4397, %v4389
  %v7078 = vpack.c.b16 %v4406, %v4398
  %v7079 = vpack.c.b16 %v4407, %v4399
  %v7080 = vpack.c.b16 %v4408, %v4400
  %v7081 = vpack.c.b16 %v4409, %v4401
  %v7082 = vpack.c.b16 %v4410, %v4402
  %v7083 = vpack.c.b16 %v4411, %v4403
  %v7084 = vpack.c.b16 %v4412, %v4404
  %v7085 = vpack.c.b16 %v4413, %v4405
  %v7086 = vpack.c.b16 %v4422, %v4414
  %v7087 = vpack.c.b16 %v4423, %v4415
  %v7088 = vpack.c.b16 %v4424, %v4416
  %v7089 = vpack.c.b16 %v4425, %v4417
  %v7090 = vpack.c.b16 %v4426, %v4418
  %v7091 = vpack.c.b16 %v4427, %v4419
  %v7092 = vpack.c.b16 %v4428, %v4420
  %v7093 = vpack.c.b16 %v4429, %v4421
  %v7094 = vpack.c.b16 %v4438, %v4430
  %v7095 = vpack.c.b16 %v4439, %v4431
  %v7096 = vpack.c.b16 %v4440, %v4432
  %v7097 = vpack.c.b16 %v4441, %v4433
  %v7098 = vpack.c.b16 %v4442, %v4434
  %v7099 = vpack.c.b16 %v4443, %v4435
  %v7100 = vpack.c.b16 %v4444, %v4436
  %v7101 = vpack.c.b16 %v4445, %v4437
  %v7102 = vpack.c.b16 %v4454, %v4446
  %v7103 = vpack.c.b16 %v4455, %v4447
  %v7104 = vpack.c.b16 %v4456, %v4448
  %v7105 = vpack.c.b16 %v4457, %v4449
  %v7106 = vpack.c.b16 %v4458, %v4450
  %v7107 = vpack.c.b16 %v4459, %v4451
  %v7108 = vpack.c.b16 %v4460, %v4452
  %v7109 = vpack.c.b16 %v4461, %v4453
  %v7110 = vpack.c.b16 %v4470, %v4462
  %v7111 = vpack.c.b16 %v4471, %v4463
  %v7112 = vpack.c.b16 %v4472, %v4464
  %v7113 = vpack.c.b16 %v4473, %v4465
  %v7114 = vpack.c.b16 %v4474, %v4466
  %v7115 = vpack.c.b16 %v4475, %v4467
  %v7116 = vpack.c.b16 %v4476, %v4468
  %v7117 = vpack.c.b16 %v4477, %v4469
  %v7118 = vpack.c.b16 %v4486, %v4478
  %v7119 = vpack.c.b16 %v4487, %v4479
  %v7120 = vpack.c.b16 %v4488, %v4480
  %v7121 = vpack.c.b16 %v4489, %v4481
  %v7122 = vpack.c.b16 %v4490, %v4482
  %v7123 = vpack.c.b16 %v4491, %v4483
  %v7124 = vpack.c.b16 %v4492, %v4484
  %v7125 = vpack.c.b16 %v4493, %v4485
  %v7126 = vpack.c.b16 %v4502, %v4494
  %v7127 = vpack.c.b16 %v4503, %v4495
  %v7128 = vpack.c.b16 %v4504, %v4496
  %v7129 = vpack.c.b16 %v4505, %v4497
  %v7130 = vpack.c.b16 %v4506, %v4498
  %v7131 = vpack.c.b16 %v4507, %v4499
  %v7132 = vpack.c.b16 %v4508, %v4500
  %v7133 = vpack.c.b16 %v4509, %v4501
  %v7134 = vpack.c.b16 %v4518, %v4510
  %v7135 = vpack.c.b16 %v4519, %v4511
  %v7136 = vpack.c.b16 %v4520, %v4512
  %v7137 = vpack.c.b16 %v4521, %v4513
  %v7138 = vpack.c.b16 %v4522, %v4514
  %v7139 = vpack.c.b16 %v4523, %v4515
  %v7140 = vpack.c.b16 %v4524, %v4516
  %v7141 = vpack.c.b16 %v4525, %v4517
  %v7142 = vpack.c.b16 %v4534, %v4526
  %v7143 = vpack.c.b16 %v4535, %v4527
  %v7144 = vpack.c.b16 %v4536, %v4528
  %v7145 = vpack.c.b16 %v4537, %v4529
  %v7146 = vpack.c.b16 %v4538, %v4530
  %v7147 = vpack.c.b16 %v4539, %v4531
  %v7148 = vpack.c.b16 %v4540, %v4532
  %v7149 = vpack.c.b16 %v4541, %v4533
  %v7150 = vpack.c.b16 %v4550, %v4542
  %v7151 = vpack.c.b16 %v4551, %v4543
  %v7152 = vpack.c.b16 %v4552, %v4544
  %v7153 = vpack.c.b16 %v4553, %v4545
  %v7154 = vpack.c.b16 %v4554, %v4546
  %v7155 = vpack.c.b16 %v4555, %v4547
  %v7156 = vpack.c.b16 %v4556, %v4548
  %v7157 = vpack.c.b16 %v4557, %v4549
  %v7158 = vpack.c.b16 %v4566, %v4558
  %v7159 = vpack.c.b16 %v4567, %v4559
  %v7160 = vpack.c.b16 %v4568, %v4560
  %v7161 = vpack.c.b16 %v4569, %v4561
  %v7162 = vpack.c.b16 %v4570, %v4562
  %v7163 = vpack.c.b16 %v4571, %v4563
  %v7164 = vpack.c.b16 %v4572, %v4564
  %v7165 = vpack.c.b16 %v4573, %v4565
  %v7166 = vpack.c.b16 %v4582, %v4574
  %v7167 = vpack.c.b16 %v4583, %v4575
  %v7168 = vpack.c.b16 %v4584, %v4576
  %v7169 = vpack.c.b16 %v4585, %v4577
  %v7170 = vpack.c.b16 %v4586, %v4578
  %v7171 = vpack.c.b16 %v4587, %v4579
  %v7172 = vpack.c.b16 %v4588, %v4580
  %v7173 = vpack.c.b16 %v4589, %v4581
  %v7174 = vpack.c.b16 %v4598, %v4590
  %v7175 = vpack.c.b16 %v4599, %v4591
  %v7176 = vpack.c.b16 %v4600, %v4592
  %v7177 = vpack.c.b16 %v4601, %v4593
  %v7178 = vpack.c.b16 %v4602, %v4594
  %v7179 = vpack.c.b16 %v4603, %v4595
  %v7180 = vpack.c.b16 %v4604, %v4596
  %v7181 = vpack.c.b16 %v4605, %v4597
  %v7182 = vpack.c.b16 %v4614, %v4606
  %v7183 = vpack.c.b16 %v4615, %v4607
  %v7184 = vpack.c.b16 %v4616, %v4608
  %v7185 = vpack.c.b16 %v4617, %v4609
  %v7186 = vpack.c.b16 %v4618, %v4610
  %v7187 = vpack.c.b16 %v4619, %v4611
  %v7188 = vpack.c.b16 %v4620, %v4612
  %v7189 = vpack.c.b16 %v4621, %v4613
  %v7190 = vpack.c.b16 %v4630, %v4622
  %v7191 = vpack.c.b16 %v4631, %v4623
  %v7192 = vpack.c.b16 %v4632, %v4624
  %v7193 = vpack.c.b16 %v4633, %v4625
  %v7194 = vpack.c.b16 %v4634, %v4626
  %v7195 = vpack.c.b16 %v4635, %v4627
  %v7196 = vpack.c.b16 %v4636, %v4628
  %v7197 = vpack.c.b16 %v4637, %v4629
  %v7198 = vpack.c.b16 %v4646, %v4638
  %v7199 = vpack.c.b16 %v4647, %v4639
  %v7200 = vpack.c.b16 %v4648, %v4640
  %v7201 = vpack.c.b16 %v4649, %v4641
  %v7202 = vpack.c.b16 %v4650, %v4642
  %v7203 = vpack.c.b16 %v4651, %v4643
  %v7204 = vpack.c.b16 %v4652, %v4644
  %v7205 = vpack.c.b16 %v4653, %v4645
  %v7206 = vpack.c.b16 %v4662, %v4654
  %v7207 = vpack.c.b16 %v4663, %v4655
  %v7208 = vpack.c.b16 %v4664, %v4656
  %v7209 = vpack.c.b16 %v4665, %v4657
  %v7210 = vpack.c.b16 %v4666, %v4658
  %v7211 = vpack.c.b16 %v4667, %v4659
  %v7212 = vpack.c.b16 %v4668, %v4660
  %v7213 = vpack.c.b16 %v4669, %v4661
  %v7214 = vpack.c.b16 %v4678, %v4670
  %v7215 = vpack.c.b16 %v4679, %v4671
  %v7216 = vpack.c.b16 %v4680, %v4672
  %v7217 = vpack.c.b16 %v4681, %v4673
  %v7218 = vpack.c.b16 %v4682, %v4674
  %v7219 = vpack.c.b16 %v4683, %v4675
  %v7220 = vpack.c.b16 %v4684, %v4676
  %v7221 = vpack.c.b16 %v4685, %v4677
  %v7222 = vpack.c.b16 %v4694, %v4686
  %v7223 = vpack.c.b16 %v4695, %v4687
  %v7224 = vpack.c.b16 %v4696, %v4688
  %v7225 = vpack.c.b16 %v4697, %v4689
  %v7226 = vpack.c.b16 %v4698, %v4690
  %v7227 = vpack.c.b16 %v4699, %v4691
  %v7228 = vpack.c.b16 %v4700, %v4692
  %v7229 = vpack.c.b16 %v4701, %v4693
  %v7230 = vpack.c.b16 %v4710, %v4702
  %v7231 = vpack.c.b16 %v4711, %v4703
  %v7232 = vpack.c.b16 %v4712, %v4704
  %v7233 = vpack.c.b16 %v4713, %v4705
  %v7234 = vpack.c.b16 %v4714, %v4706
  %v7235 = vpack.c.b16 %v4715, %v4707
  %v7236 = vpack.c.b16 %v4716, %v4708
  %v7237 = vpack.c.b16 %v4717, %v4709
  %v7238 = vpack.c.b16 %v4726, %v4718
  %v7239 = vpack.c.b16 %v4727, %v4719
  %v7240 = vpack.c.b16 %v4728, %v4720
  %v7241 = vpack.c.b16 %v4729, %v4721
  %v7242 = vpack.c.b16 %v4730, %v4722
  %v7243 = vpack.c.b16 %v4731, %v4723
  %v7244 = vpack.c.b16 %v4732, %v4724
  %v7245 = vpack.c.b16 %v4733, %v4725
  %v7246 = vpack.c.b16 %v4742, %v4734
  %v7247 = vpack.c.b16 %v4743, %v4735
  %v7248 = vpack.c.b16 %v4744, %v4736
  %v7249 = vpack.c.b16 %v4745, %v4737
  %v7250 = vpack.c.b16 %v4746, %v4738
  %v7251 = vpack.c.b16 %v4747, %v4739
  %v7252 = vpack.c.b16 %v4748, %v4740
  %v7253 = vpack.c.b16 %v4749, %v4741
  %v7254 = vpack.c.b16 %v4758, %v4750
  %v7255 = vpack.c.b16 %v4759, %v4751
  %v7256 = vpack.c.b16 %v4760, %v4752
  %v7257 = vpack.c.b16 %v4761, %v4753
  %v7258 = vpack.c.b16 %v4762, %v4754
  %v7259 = vpack.c.b16 %v4763, %v4755
  %v7260 = vpack.c.b16 %v4764, %v4756
  %v7261 = vpack.c.b16 %v4765, %v4757
  %v7262 = vpack.c.b16 %v4774, %v4766
  %v7263 = vpack.c.b16 %v4775, %v4767
  %v7264 = vpack.c.b16 %v4776, %v4768
  %v7265 = vpack.c.b16 %v4777, %v4769
  %v7266 = vpack.c.b16 %v4778, %v4770
  %v7267 = vpack.c.b16 %v4779, %v4771
  %v7268 = vpack.c.b16 %v4780, %v4772
  %v7269 = vpack.c.b16 %v4781, %v4773
  %v7270 = vpack.c.b16 %v4790, %v4782
  %v7271 = vpack.c.b16 %v4791, %v4783
  %v7272 = vpack.c.b16 %v4792, %v4784
  %v7273 = vpack.c.b16 %v4793, %v4785
  %v7274 = vpack.c.b16 %v4794, %v4786
  %v7275 = vpack.c.b16 %v4795, %v4787
  %v7276 = vpack.c.b16 %v4796, %v4788
  %v7277 = vpack.c.b16 %v4797, %v4789
  %v7278 = vpack.c.b16 %v4806, %v4798
  %v7279 = vpack.c.b16 %v4807, %v4799
  %v7280 = vpack.c.b16 %v4808, %v4800
  %v7281 = vpack.c.b16 %v4809, %v4801
  %v7282 = vpack.c.b16 %v4810, %v4802
  %v7283 = vpack.c.b16 %v4811, %v4803
  %v7284 = vpack.c.b16 %v4812, %v4804
  %v7285 = vpack.c.b16 %v4813, %v4805
  %v7286 = vpack.c.b16 %v4822, %v4814
  %v7287 = vpack.c.b16 %v4823, %v4815
  %v7288 = vpack.c.b16 %v4824, %v4816
  %v7289 = vpack.c.b16 %v4825, %v4817
  %v7290 = vpack.c.b16 %v4826, %v4818
  %v7291 = vpack.c.b16 %v4827, %v4819
  %v7292 = vpack.c.b16 %v4828, %v4820
  %v7293 = vpack.c.b16 %v4829, %v4821
  %v7294 = vpack.c.b16 %v4838, %v4830
  %v7295 = vpack.c.b16 %v4839, %v4831
  %v7296 = vpack.c.b16 %v4840, %v4832
  %v7297 = vpack.c.b16 %v4841, %v4833
  %v7298 = vpack.c.b16 %v4842, %v4834
  %v7299 = vpack.c.b16 %v4843, %v4835
  %v7300 = vpack.c.b16 %v4844, %v4836
  %v7301 = vpack.c.b16 %v4845, %v4837
  %v7302 = vpack.c.b16 %v4854, %v4846
  %v7303 = vpack.c.b16 %v4855, %v4847
  %v7304 = vpack.c.b16 %v4856, %v4848
  %v7305 = vpack.c.b16 %v4857, %v4849
  %v7306 = vpack.c.b16 %v4858, %v4850
  %v7307 = vpack.c.b16 %v4859, %v4851
  %v7308 = vpack.c.b16 %v4860, %v4852
  %v7309 = vpack.c.b16 %v4861, %v4853
  %v7310 = vpack.c.b16 %v4870, %v4862
  %v7311 = vpack.c.b16 %v4871, %v4863
  %v7312 = vpack.c.b16 %v4872, %v4864
  %v7313 = vpack.c.b16 %v4873, %v4865
  %v7314 = vpack.c.b16 %v4874, %v4866
  %v7315 = vpack.c.b16 %v4875, %v4867
  %v7316 = vpack.c.b16 %v4876, %v4868
  %v7317 = vpack.c.b16 %v4877, %v4869
  %v7318 = vpack.c.b16 %v4886, %v4878
  %v7319 = vpack.c.b16 %v4887, %v4879
  %v7320 = vpack.c.b16 %v4888, %v4880
  %v7321 = vpack.c.b16 %v4889, %v4881
  %v7322 = vpack.c.b16 %v4890, %v4882
  %v7323 = vpack.c.b16 %v4891, %v4883
  %v7324 = vpack.c.b16 %v4892, %v4884
  %v7325 = vpack.c.b16 %v4893, %v4885
  %v7326 = vpack.c.b16 %v4902, %v4894
  %v7327 = vpack.c.b16 %v4903, %v4895
  %v7328 = vpack.c.b16 %v4904, %v4896
  %v7329 = vpack.c.b16 %v4905, %v4897
  %v7330 = vpack.c.b16 %v4906, %v4898
  %v7331 = vpack.c.b16 %v4907, %v4899
  %v7332 = vpack.c.b16 %v4908, %v4900
  %v7333 = vpack.c.b16 %v4909, %v4901
  %v7334 = vpack.c.b16 %v4918, %v4910
  %v7335 = vpack.c.b16 %v4919, %v4911
  %v7336 = vpack.c.b16 %v4920, %v4912
  %v7337 = vpack.c.b16 %v4921, %v4913
  %v7338 = vpack.c.b16 %v4922, %v4914
  %v7339 = vpack.c.b16 %v4923, %v4915
  %v7340 = vpack.c.b16 %v4924, %v4916
  %v7341 = vpack.c.b16 %v4925, %v4917
  %v7342 = vpack.c.b16 %v4934, %v4926
  %v7343 = vpack.c.b16 %v4935, %v4927
  %v7344 = vpack.c.b16 %v4936, %v4928
  %v7345 = vpack.c.b16 %v4937, %v4929
  %v7346 = vpack.c.b16 %v4938, %v4930
  %v7347 = vpack.c.b16 %v4939, %v4931
  %v7348 = vpack.c.b16 %v4940, %v4932
  %v7349 = vpack.c.b16 %v4941, %v4933
  %v7350 = vpack.c.b16 %v4950, %v4942
  %v7351 = vpack.c.b16 %v4951, %v4943
  %v7352 = vpack.c.b16 %v4952, %v4944
  %v7353 = vpack.c.b16 %v4953, %v4945
  %v7354 = vpack.c.b16 %v4954, %v4946
  %v7355 = vpack.c.b16 %v4955, %v4947
  %v7356 = vpack.c.b16 %v4956, %v4948
  %v7357 = vpack.c.b16 %v4957, %v4949
  %v7358 = vpack.c.b16 %v4966, %v4958
  %v7359 = vpack.c.b16 %v4967, %v4959
  %v7360 = vpack.c.b16 %v4968, %v4960
  %v7361 = vpack.c.b16 %v4969, %v4961
  %v7362 = vpack.c.b16 %v4970, %v4962
  %v7363 = vpack.c.b16 %v4971, %v4963
  %v7364 = vpack.c.b16 %v4972, %v4964
  %v7365 = vpack.c.b16 %v4973, %v4965
  %v7366 = vpack.c.b16 %v4982, %v4974
  %v7367 = vpack.c.b16 %v4983, %v4975
  %v7368 = vpack.c.b16 %v4984, %v4976
  %v7369 = vpack.c.b16 %v4985, %v4977
  %v7370 = vpack.c.b16 %v4986, %v4978
  %v7371 = vpack.c.b16 %v4987, %v4979
  %v7372 = vpack.c.b16 %v4988, %v4980
  %v7373 = vpack.c.b16 %v4989, %v4981
  %v7374 = vpack.c.b16 %v4998, %v4990
  %v7375 = vpack.c.b16 %v4999, %v4991
  %v7376 = vpack.c.b16 %v5000, %v4992
  %v7377 = vpack.c.b16 %v5001, %v4993
  %v7378 = vpack.c.b16 %v5002, %v4994
  %v7379 = vpack.c.b16 %v5003, %v4995
  %v7380 = vpack.c.b16 %v5004, %v4996
  %v7381 = vpack.c.b16 %v5005, %v4997
  %v7382 = vpack.c.b16 %v5014, %v5006
  %v7383 = vpack.c.b16 %v5015, %v5007
  %v7384 = vpack.c.b16 %v5016, %v5008
  %v7385 = vpack.c.b16 %v5017, %v5009
  %v7386 = vpack.c.b16 %v5018, %v5010
  %v7387 = vpack.c.b16 %v5019, %v5011
  %v7388 = vpack.c.b16 %v5020, %v5012
  %v7389 = vpack.c.b16 %v5021, %v5013
  %v7390 = vpack.c.b16 %v5030, %v5022
  %v7391 = vpack.c.b16 %v5031, %v5023
  %v7392 = vpack.c.b16 %v5032, %v5024
  %v7393 = vpack.c.b16 %v5033, %v5025
  %v7394 = vpack.c.b16 %v5034, %v5026
  %v7395 = vpack.c.b16 %v5035, %v5027
  %v7396 = vpack.c.b16 %v5036, %v5028
  %v7397 = vpack.c.b16 %v5037, %v5029
  %v7398 = vpack.c.b16 %v5046, %v5038
  %v7399 = vpack.c.b16 %v5047, %v5039
  %v7400 = vpack.c.b16 %v5048, %v5040
  %v7401 = vpack.c.b16 %v5049, %v5041
  %v7402 = vpack.c.b16 %v5050, %v5042
  %v7403 = vpack.c.b16 %v5051, %v5043
  %v7404 = vpack.c.b16 %v5052, %v5044
  %v7405 = vpack.c.b16 %v5053, %v5045
  %v7406 = vpack.c.b16 %v5062, %v5054
  %v7407 = vpack.c.b16 %v5063, %v5055
  %v7408 = vpack.c.b16 %v5064, %v5056
  %v7409 = vpack.c.b16 %v5065, %v5057
  %v7410 = vpack.c.b16 %v5066, %v5058
  %v7411 = vpack.c.b16 %v5067, %v5059
  %v7412 = vpack.c.b16 %v5068, %v5060
  %v7413 = vpack.c.b16 %v5069, %v5061
  %v7414 = vpack.c.b16 %v5078, %v5070
  %v7415 = vpack.c.b16 %v5079, %v5071
  %v7416 = vpack.c.b16 %v5080, %v5072
  %v7417 = vpack.c.b16 %v5081, %v5073
  %v7418 = vpack.c.b16 %v5082, %v5074
  %v7419 = vpack.c.b16 %v5083, %v5075
  %v7420 = vpack.c.b16 %v5084, %v5076
  %v7421 = vpack.c.b16 %v5085, %v5077
  %v7422 = vpack.c.b16 %v5094, %v5086
  %v7423 = vpack.c.b16 %v5095, %v5087
  %v7424 = vpack.c.b16 %v5096, %v5088
  %v7425 = vpack.c.b16 %v5097, %v5089
  %v7426 = vpack.c.b16 %v5098, %v5090
  %v7427 = vpack.c.b16 %v5099, %v5091
  %v7428 = vpack.c.b16 %v5100, %v5092
  %v7429 = vpack.c.b16 %v5101, %v5093
  %v7430 = vpack.c.b16 %v5110, %v5102
  %v7431 = vpack.c.b16 %v5111, %v5103
  %v7432 = vpack.c.b16 %v5112, %v5104
  %v7433 = vpack.c.b16 %v5113, %v5105
  %v7434 = vpack.c.b16 %v5114, %v5106
  %v7435 = vpack.c.b16 %v5115, %v5107
  %v7436 = vpack.c.b16 %v5116, %v5108
  %v7437 = vpack.c.b16 %v5117, %v5109
  %v7438 = vpack.c.b16 %v5126, %v5118
  %v7439 = vpack.c.b16 %v5127, %v5119
  %v7440 = vpack.c.b16 %v5128, %v5120
  %v7441 = vpack.c.b16 %v5129, %v5121
  %v7442 = vpack.c.b16 %v5130, %v5122
  %v7443 = vpack.c.b16 %v5131, %v5123
  %v7444 = vpack.c.b16 %v5132, %v5124
  %v7445 = vpack.c.b16 %v5133, %v5125
  %v7446 = vpack.c.b16 %v5142, %v5134
  %v7447 = vpack.c.b16 %v5143, %v5135
  %v7448 = vpack.c.b16 %v5144, %v5136
  %v7449 = vpack.c.b16 %v5145, %v5137
  %v7450 = vpack.c.b16 %v5146, %v5138
  %v7451 = vpack.c.b16 %v5147, %v5139
  %v7452 = vpack.c.b16 %v5148, %v5140
  %v7453 = vpack.c.b16 %v5149, %v5141
  %v7454 = vpack.c.b16 %v5158, %v5150
  %v7455 = vpack.c.b16 %v5159, %v5151
  %v7456 = vpack.c.b16 %v5160, %v5152
  %v7457 = vpack.c.b16 %v5161, %v5153
  %v7458 = vpack.c.b16 %v5162, %v5154
  %v7459 = vpack.c.b16 %v5163, %v5155
  %v7460 = vpack.c.b16 %v5164, %v5156
  %v7461 = vpack.c.b16 %v5165, %v5157
  %v7462 = vpack.c.b16 %v5174, %v5166
  %v7463 = vpack.c.b16 %v5175, %v5167
  %v7464 = vpack.c.b16 %v5176, %v5168
  %v7465 = vpack.c.b16 %v5177, %v5169
  %v7466 = vpack.c.b16 %v5178, %v5170
  %v7467 = vpack.c.b16 %v5179, %v5171
  %v7468 = vpack.c.b16 %v5180, %v5172
  %v7469 = vpack.c.b16 %v5181, %v5173
  %v7470 = vpack.c.b16 %v5190, %v5182
  %v7471 = vpack.c.b16 %v5191, %v5183
  %v7472 = vpack.c.b16 %v5192, %v5184
  %v7473 = vpack.c.b16 %v5193, %v5185
  %v7474 = vpack.c.b16 %v5194, %v5186
  %v7475 = vpack.c.b16 %v5195, %v5187
  %v7476 = vpack.c.b16 %v5196, %v5188
  %v7477 = vpack.c.b16 %v5197, %v5189
  %v7478 = vpack.c.b16 %v5206, %v5198
  %v7479 = vpack.c.b16 %v5207, %v5199
  %v7480 = vpack.c.b16 %v5208, %v5200
  %v7481 = vpack.c.b16 %v5209, %v5201
  %v7482 = vpack.c.b16 %v5210, %v5202
  %v7483 = vpack.c.b16 %v5211, %v5203
  %v7484 = vpack.c.b16 %v5212, %v5204
  %v7485 = vpack.c.b16 %v5213, %v5205
  %v7486 = vpack.c.b16 %v5222, %v5214
  %v7487 = vpack.c.b16 %v5223, %v5215
  %v7488 = vpack.c.b16 %v5224, %v5216
  %v7489 = vpack.c.b16 %v5225, %v5217
  %v7490 = vpack.c.b16 %v5226, %v5218
  %v7491 = vpack.c.b16 %v5227, %v5219
  %v7492 = vpack.c.b16 %v5228, %v5220
  %v7493 = vpack.c.b16 %v5229, %v5221
  %v7494 = vpack.c.b16 %v5238, %v5230
  %v7495 = vpack.c.b16 %v5239, %v5231
  %v7496 = vpack.c.b16 %v5240, %v5232
  %v7497 = vpack.c.b16 %v5241, %v5233
  %v7498 = vpack.c.b16 %v5242, %v5234
  %v7499 = vpack.c.b16 %v5243, %v5235
  %v7500 = vpack.c.b16 %v5244, %v5236
  %v7501 = vpack.c.b16 %v5245, %v5237
  %v7502 = vpack.c.b16 %v5254, %v5246
  %v7503 = vpack.c.b16 %v5255, %v5247
  %v7504 = vpack.c.b16 %v5256, %v5248
  %v7505 = vpack.c.b16 %v5257, %v5249
  %v7506 = vpack.c.b16 %v5258, %v5250
  %v7507 = vpack.c.b16 %v5259, %v5251
  %v7508 = vpack.c.b16 %v5260, %v5252
  %v7509 = vpack.c.b16 %v5261, %v5253
  %v7510 = vpack.c.b16 %v5270, %v5262
  %v7511 = vpack.c.b16 %v5271, %v5263
  %v7512 = vpack.c.b16 %v5272, %v5264
  %v7513 = vpack.c.b16 %v5273, %v5265
  %v7514 = vpack.c.b16 %v5274, %v5266
  %v7515 = vpack.c.b16 %v5275, %v5267
  %v7516 = vpack.c.b16 %v5276, %v5268
  %v7517 = vpack.c.b16 %v5277, %v5269
  %v7518 = vpack.c.b16 %v5286, %v5278
  %v7519 = vpack.c.b16 %v5287, %v5279
  %v7520 = vpack.c.b16 %v5288, %v5280
  %v7521 = vpack.c.b16 %v5289, %v5281
  %v7522 = vpack.c.b16 %v5290, %v5282
  %v7523 = vpack.c.b16 %v5291, %v5283
  %v7524 = vpack.c.b16 %v5292, %v5284
  %v7525 = vpack.c.b16 %v5293, %v5285
  %v7526 = vpack.c.b16 %v5302, %v5294
  %v7527 = vpack.c.b16 %v5303, %v5295
  %v7528 = vpack.c.b16 %v5304, %v5296
  %v7529 = vpack.c.b16 %v5305, %v5297
  %v7530 = vpack.c.b16 %v5306, %v5298
  %v7531 = vpack.c.b16 %v5307, %v5299
  %v7532 = vpack.c.b16 %v5308, %v5300
  %v7533 = vpack.c.b16 %v5309, %v5301
  %v7534 = vpack.c.b16 %v5318, %v5310
  %v7535 = vpack.c.b16 %v5319, %v5311
  %v7536 = vpack.c.b16 %v5320, %v5312
  %v7537 = vpack.c.b16 %v5321, %v5313
  %v7538 = vpack.c.b16 %v5322, %v5314
  %v7539 = vpack.c.b16 %v5323, %v5315
  %v7540 = vpack.c.b16 %v5324, %v5316
  %v7541 = vpack.c.b16 %v5325, %v5317
  %v7542 = vpack.c.b16 %v5334, %v5326
  %v7543 = vpack.c.b16 %v5335, %v5327
  %v7544 = vpack.c.b16 %v5336, %v5328
  %v7545 = vpack.c.b16 %v5337, %v5329
  %v7546 = vpack.c.b16 %v5338, %v5330
  %v7547 = vpack.c.b16 %v5339, %v5331
  %v7548 = vpack.c.b16 %v5340, %v5332
  %v7549 = vpack.c.b16 %v5341, %v5333
  %v7550 = vpack.c.b16 %v5350, %v5342
  %v7551 = vpack.c.b16 %v5351, %v5343
  %v7552 = vpack.c.b16 %v5352, %v5344
  %v7553 = vpack.c.b16 %v5353, %v5345
  %v7554 = vpack.c.b16 %v5354, %v5346
  %v7555 = vpack.c.b16 %v5355, %v5347
  %v7556 = vpack.c.b16 %v5356, %v5348
  %v7557 = vpack.c.b16 %v5357, %v5349
  %v7558 = vpack.c.b16 %v5366, %v5358
  %v7559 = vpack.c.b16 %v5367, %v5359
  %v7560 = vpack.c.b16 %v5368, %v5360
  %v7561 = vpack.c.b16 %v5369, %v5361
  %v7562 = vpack.c.b16 %v5370, %v5362
  %v7563 = vpack.c.b16 %v5371, %v5363
  %v7564 = vpack.c.b16 %v5372, %v5364
  %v7565 = vpack.c.b16 %v5373, %v5365
  %v7566 = vpack.c.b16 %v5382, %v5374
  %v7567 = vpack.c.b16 %v5383, %v5375
  %v7568 = vpack.c.b16 %v5384, %v5376
  %v7569 = vpack.c.b16 %v5385, %v5377
  %v7570 = vpack.c.b16 %v5386, %v5378
  %v7571 = vpack.c.b16 %v5387, %v5379
  %v7572 = vpack.c.b16 %v5388, %v5380
  %v7573 = vpack.c.b16 %v5389, %v5381
  %v7574 = vpack.c.b16 %v5398, %v5390
  %v7575 = vpack.c.b16 %v5399, %v5391
  %v7576 = vpack.c.b16 %v5400, %v5392
  %v7577 = vpack.c.b16 %v5401, %v5393
  %v7578 = vpack.c.b16 %v5402, %v5394
  %v7579 = vpack.c.b16 %v5403, %v5395
  %v7580 = vpack.c.b16 %v5404, %v5396
  %v7581 = vpack.c.b16 %v5405, %v5397
  %v7582 = vpack.c.b16 %v5414, %v5406
  %v7583 = vpack.c.b16 %v5415, %v5407
  %v7584 = vpack.c.b16 %v5416, %v5408
  %v7585 = vpack.c.b16 %v5417, %v5409
  %v7586 = vpack.c.b16 %v5418, %v5410
  %v7587 = vpack.c.b16 %v5419, %v5411
  %v7588 = vpack.c.b16 %v5420, %v5412
  %v7589 = vpack.c.b16 %v5421, %v5413
  %v7590 = vpack.c.b16 %v5430, %v5422
  %v7591 = vpack.c.b16 %v5431, %v5423
  %v7592 = vpack.c.b16 %v5432, %v5424
  %v7593 = vpack.c.b16 %v5433, %v5425
  %v7594 = vpack.c.b16 %v5434, %v5426
  %v7595 = vpack.c.b16 %v5435, %v5427
  %v7596 = vpack.c.b16 %v5436, %v5428
  %v7597 = vpack.c.b16 %v5437, %v5429
  %v7598 = vpack.c.b16 %v5446, %v5438
  %v7599 = vpack.c.b16 %v5447, %v5439
  %v7600 = vpack.c.b16 %v5448, %v5440
  %v7601 = vpack.c.b16 %v5449, %v5441
  %v7602 = vpack.c.b16 %v5450, %v5442
  %v7603 = vpack.c.b16 %v5451, %v5443
  %v7604 = vpack.c.b16 %v5452, %v5444
  %v7605 = vpack.c.b16 %v5453, %v5445
  %v7606 = vpack.c.b16 %v5462, %v5454
  %v7607 = vpack.c.b16 %v5463, %v5455
  %v7608 = vpack.c.b16 %v5464, %v5456
  %v7609 = vpack.c.b16 %v5465, %v5457
  %v7610 = vpack.c.b16 %v5466, %v5458
  %v7611 = vpack.c.b16 %v5467, %v5459
  %v7612 = vpack.c.b16 %v5468, %v5460
  %v7613 = vpack.c.b16 %v5469, %v5461
  %v7614 = vpack.c.b16 %v5478, %v5470
  %v7615 = vpack.c.b16 %v5479, %v5471
  %v7616 = vpack.c.b16 %v5480, %v5472
  %v7617 = vpack.c.b16 %v5481, %v5473
  %v7618 = vpack.c.b16 %v5482, %v5474
  %v7619 = vpack.c.b16 %v5483, %v5475
  %v7620 = vpack.c.b16 %v5484, %v5476
  %v7621 = vpack.c.b16 %v5485, %v5477
  %v7622 = vpack.c.b16 %v5494, %v5486
  %v7623 = vpack.c.b16 %v5495, %v5487
  %v7624 = vpack.c.b16 %v5496, %v5488
  %v7625 = vpack.c.b16 %v5497, %v5489
  %v7626 = vpack.c.b16 %v5498, %v5490
  %v7627 = vpack.c.b16 %v5499, %v5491
  %v7628 = vpack.c.b16 %v5500, %v5492
  %v7629 = vpack.c.b16 %v5501, %v5493
  %v7630 = vpack.c.b16 %v5510, %v5502
  %v7631 = vpack.c.b16 %v5511, %v5503
  %v7632 = vpack.c.b16 %v5512, %v5504
  %v7633 = vpack.c.b16 %v5513, %v5505
  %v7634 = vpack.c.b16 %v5514, %v5506
  %v7635 = vpack.c.b16 %v5515, %v5507
  %v7636 = vpack.c.b16 %v5516, %v5508
  %v7637 = vpack.c.b16 %v5517, %v5509
  %v7638 = vpack.c.b16 %v5526, %v5518
  %v7639 = vpack.c.b16 %v5527, %v5519
  %v7640 = vpack.c.b16 %v5528, %v5520
  %v7641 = vpack.c.b16 %v5529, %v5521
  %v7642 = vpack.c.b16 %v5530, %v5522
  %v7643 = vpack.c.b16 %v5531, %v5523
  %v7644 = vpack.c.b16 %v5532, %v5524
  %v7645 = vpack.c.b16 %v5533, %v5525
  %v7646 = vpack.c.b16 %v5542, %v5534
  %v7647 = vpack.c.b16 %v5543, %v5535
  %v7648 = vpack.c.b16 %v5544, %v5536
  %v7649 = vpack.c.b16 %v5545, %v5537
  %v7650 = vpack.c.b16 %v5546, %v5538
  %v7651 = vpack.c.b16 %v5547, %v5539
  %v7652 = vpack.c.b16 %v5548, %v5540
  %v7653 = vpack.c.b16 %v5549, %v5541
  %v7654 = vpack.c.b16 %v5558, %v5550
  %v7655 = vpack.c.b16 %v5559, %v5551
  %v7656 = vpack.c.b16 %v5560, %v5552
  %v7657 = vpack.c.b16 %v5561, %v5553
  %v7658 = vpack.c.b16 %v5562, %v5554
  %v7659 = vpack.c.b16 %v5563, %v5555
  %v7660 = vpack.c.b16 %v5564, %v5556
  %v7661 = vpack.c.b16 %v5565, %v5557
  %v7662 = vpack.c.b16 %v5574, %v5566
  %v7663 = vpack.c.b16 %v5575, %v5567
  %v7664 = vpack.c.b16 %v5576, %v5568
  %v7665 = vpack.c.b16 %v5577, %v5569
  %v7666 = vpack.c.b16 %v5578, %v5570
  %v7667 = vpack.c.b16 %v5579, %v5571
  %v7668 = vpack.c.b16 %v5580, %v5572
  %v7669 = vpack.c.b16 %v5581, %v5573
  %v7670 = vpack.c.b16 %v5590, %v5582
  %v7671 = vpack.c.b16 %v5591, %v5583
  %v7672 = vpack.c.b16 %v5592, %v5584
  %v7673 = vpack.c.b16 %v5593, %v5585
  %v7674 = vpack.c.b16 %v5594, %v5586
  %v7675 = vpack.c.b16 %v5595, %v5587
  %v7676 = vpack.c.b16 %v5596, %v5588
  %v7677 = vpack.c.b16 %v5597, %v5589
  %v7678 = vpack.c.b16 %v5606, %v5598
  %v7679 = vpack.c.b16 %v5607, %v5599
  %v7680 = vpack.c.b16 %v5608, %v5600
  %v7681 = vpack.c.b16 %v5609, %v5601
  %v7682 = vpack.c.b16 %v5610, %v5602
  %v7683 = vpack.c.b16 %v5611, %v5603
  %v7684 = vpack.c.b16 %v5612, %v5604
  %v7685 = vpack.c.b16 %v5613, %v5605
  %v7686 = vpack.c.b16 %v5622, %v5614
  %v7687 = vpack.c.b16 %v5623, %v5615
  %v7688 = vpack.c.b16 %v5624, %v5616
  %v7689 = vpack.c.b16 %v5625, %v5617
  %v7690 = vpack.c.b16 %v5626, %v5618
  %v7691 = vpack.c.b16 %v5627, %v5619
  %v7692 = vpack.c.b16 %v5628, %v5620
  %v7693 = vpack.c.b16 %v5629, %v5621
  %v7694 = vpack.c.b16 %v5638, %v5630
  %v7695 = vpack.c.b16 %v5639, %v5631
  %v7696 = vpack.c.b16 %v5640, %v5632
  %v7697 = vpack.c.b16 %v5641, %v5633
  %v7698 = vpack.c.b16 %v5642, %v5634
  %v7699 = vpack.c.b16 %v5643, %v5635
  %v7700 = vpack.c.b16 %v5644, %v5636
  %v7701 = vpack.c.b16 %v5645, %v5637
  %v7702 = vpack.c.b16 %v5654, %v5646
  %v7703 = vpack.c.b16 %v5655, %v5647
  %v7704 = vpack.c.b16 %v5656, %v5648
  %v7705 = vpack.c.b16 %v5657, %v5649
  %v7706 = vpack.c.b16 %v5658, %v5650
  %v7707 = vpack.c.b16 %v5659, %v5651
  %v7708 = vpack.c.b16 %v5660, %v5652
  %v7709 = vpack.c.b16 %v5661, %v5653
  %v7710 = vpack.c.b16 %v5670, %v5662
  %v7711 = vpack.c.b16 %v5671, %v5663
  %v7712 = vpack.c.b16 %v5672, %v5664
  %v7713 = vpack.c.b16 %v5673, %v5665
  %v7714 = vpack.c.b16 %v5674, %v5666
  %v7715 = vpack.c.b16 %v5675, %v5667
  %v7716 = vpack.c.b16 %v5676, %v5668
  %v7717 = vpack.c.b16 %v5677, %v5669
  %v7718 = vpack.c.b16 %v5686, %v5678
  %v7719 = vpack.c.b16 %v5687, %v5679
  %v7720 = vpack.c.b16 %v5688, %v5680
  %v7721 = vpack.c.b16 %v5689, %v5681
  %v7722 = vpack.c.b16 %v5690, %v5682
  %v7723 = vpack.c.b16 %v5691, %v5683
  %v7724 = vpack.c.b16 %v5692, %v5684
  %v7725 = vpack.c.b16 %v5693, %v5685
  %v7726 = vpack.c.b16 %v5702, %v5694
  %v7727 = vpack.c.b16 %v5703, %v5695
  %v7728 = vpack.c.b16 %v5704, %v5696
  %v7729 = vpack.c.b16 %v5705, %v5697
  %v7730 = vpack.c.b16 %v5706, %v5698
  %v7731 = vpack.c.b16 %v5707, %v5699
  %v7732 = vpack.c.b16 %v5708, %v5700
  %v7733 = vpack.c.b16 %v5709, %v5701
  %v7734 = vpack.c.b16 %v5718, %v5710
  %v7735 = vpack.c.b16 %v5719, %v5711
  %v7736 = vpack.c.b16 %v5720, %v5712
  %v7737 = vpack.c.b16 %v5721, %v5713
  %v7738 = vpack.c.b16 %v5722, %v5714
  %v7739 = vpack.c.b16 %v5723, %v5715
  %v7740 = vpack.c.b16 %v5724, %v5716
  %v7741 = vpack.c.b16 %v5725, %v5717
  %v7742 = vpack.c.b16 %v5734, %v5726
  %v7743 = vpack.c.b16 %v5735, %v5727
  %v7744 = vpack.c.b16 %v5736, %v5728
  %v7745 = vpack.c.b16 %v5737, %v5729
  %v7746 = vpack.c.b16 %v5738, %v5730
  %v7747 = vpack.c.b16 %v5739, %v5731
  %v7748 = vpack.c.b16 %v5740, %v5732
  %v7749 = vpack.c.b16 %v5741, %v5733
  %v7750 = vpack.c.b16 %v5750, %v5742
  %v7751 = vpack.c.b16 %v5751, %v5743
  %v7752 = vpack.c.b16 %v5752, %v5744
  %v7753 = vpack.c.b16 %v5753, %v5745
  %v7754 = vpack.c.b16 %v5754, %v5746
  %v7755 = vpack.c.b16 %v5755, %v5747
  %v7756 = vpack.c.b16 %v5756, %v5748
  %v7757 = vpack.c.b16 %v5757, %v5749
  %v7758 = vpack.c.b16 %v5766, %v5758
  %v7759 = vpack.c.b16 %v5767, %v5759
  %v7760 = vpack.c.b16 %v5768, %v5760
  %v7761 = vpack.c.b16 %v5769, %v5761
  %v7762 = vpack.c.b16 %v5770, %v5762
  %v7763 = vpack.c.b16 %v5771, %v5763
  %v7764 = vpack.c.b16 %v5772, %v5764
  %v7765 = vpack.c.b16 %v5773, %v5765
  %v7766 = vpack.c.b16 %v5782, %v5774
  %v7767 = vpack.c.b16 %v5783, %v5775
  %v7768 = vpack.c.b16 %v5784, %v5776
  %v7769 = vpack.c.b16 %v5785, %v5777
  %v7770 = vpack.c.b16 %v5786, %v5778
  %v7771 = vpack.c.b16 %v5787, %v5779
  %v7772 = vpack.c.b16 %v5788, %v5780
  %v7773 = vpack.c.b16 %v5789, %v5781
  %v7774 = vpack.c.b16 %v5798, %v5790
  %v7775 = vpack.c.b16 %v5799, %v5791
  %v7776 = vpack.c.b16 %v5800, %v5792
  %v7777 = vpack.c.b16 %v5801, %v5793
  %v7778 = vpack.c.b16 %v5802, %v5794
  %v7779 = vpack.c.b16 %v5803, %v5795
  %v7780 = vpack.c.b16 %v5804, %v5796
  %v7781 = vpack.c.b16 %v5805, %v5797
  %v7782 = vpack.c.b16 %v5814, %v5806
  %v7783 = vpack.c.b16 %v5815, %v5807
  %v7784 = vpack.c.b16 %v5816, %v5808
  %v7785 = vpack.c.b16 %v5817, %v5809
  %v7786 = vpack.c.b16 %v5818, %v5810
  %v7787 = vpack.c.b16 %v5819, %v5811
  %v7788 = vpack.c.b16 %v5820, %v5812
  %v7789 = vpack.c.b16 %v5821, %v5813
  %v7790 = vpack.c.b16 %v5830, %v5822
  %v7791 = vpack.c.b16 %v5831, %v5823
  %v7792 = vpack.c.b16 %v5832, %v5824
  %v7793 = vpack.c.b16 %v5833, %v5825
  %v7794 = vpack.c.b16 %v5834, %v5826
  %v7795 = vpack.c.b16 %v5835, %v5827
  %v7796 = vpack.c.b16 %v5836, %v5828
  %v7797 = vpack.c.b16 %v5837, %v5829
  %v7798 = vpack.c.b16 %v5846, %v5838
  %v7799 = vpack.c.b16 %v5847, %v5839
  %v7800 = vpack.c.b16 %v5848, %v5840
  %v7801 = vpack.c.b16 %v5849, %v5841
  %v7802 = vpack.c.b16 %v5850, %v5842
  %v7803 = vpack.c.b16 %v5851, %v5843
  %v7804 = vpack.c.b16 %v5852, %v5844
  %v7805 = vpack.c.b16 %v5853, %v5845
  %v7806 = vpack.c.b16 %v5862, %v5854
  %v7807 = vpack.c.b16 %v5863, %v5855
  %v7808 = vpack.c.b16 %v5864, %v5856
  %v7809 = vpack.c.b16 %v5865, %v5857
  %v7810 = vpack.c.b16 %v5866, %v5858
  %v7811 = vpack.c.b16 %v5867, %v5859
  %v7812 = vpack.c.b16 %v5868, %v5860
  %v7813 = vpack.c.b16 %v5869, %v5861
  %v7814 = vpack.c.b16 %v5878, %v5870
  %v7815 = vpack.c.b16 %v5879, %v5871
  %v7816 = vpack.c.b16 %v5880, %v5872
  %v7817 = vpack.c.b16 %v5881, %v5873
  %v7818 = vpack.c.b16 %v5882, %v5874
  %v7819 = vpack.c.b16 %v5883, %v5875
  %v7820 = vpack.c.b16 %v5884, %v5876
  %v7821 = vpack.c.b16 %v5885, %v5877
  %v7822 = vpack.c.b16 %v5894, %v5886
  %v7823 = vpack.c.b16 %v5895, %v5887
  %v7824 = vpack.c.b16 %v5896, %v5888
  %v7825 = vpack.c.b16 %v5897, %v5889
  %v7826 = vpack.c.b16 %v5898, %v5890
  %v7827 = vpack.c.b16 %v5899, %v5891
  %v7828 = vpack.c.b16 %v5900, %v5892
  %v7829 = vpack.c.b16 %v5901, %v5893
  %v7830 = vpack.c.b16 %v5910, %v5902
  %v7831 = vpack.c.b16 %v5911, %v5903
  %v7832 = vpack.c.b16 %v5912, %v5904
  %v7833 = vpack.c.b16 %v5913, %v5905
  %v7834 = vpack.c.b16 %v5914, %v5906
  %v7835 = vpack.c.b16 %v5915, %v5907
  %v7836 = vpack.c.b16 %v5916, %v5908
  %v7837 = vpack.c.b16 %v5917, %v5909
  %v7838 = vpack.c.b16 %v5926, %v5918
  %v7839 = vpack.c.b16 %v5927, %v5919
  %v7840 = vpack.c.b16 %v5928, %v5920
  %v7841 = vpack.c.b16 %v5929, %v5921
  %v7842 = vpack.c.b16 %v5930, %v5922
  %v7843 = vpack.c.b16 %v5931, %v5923
  %v7844 = vpack.c.b16 %v5932, %v5924
  %v7845 = vpack.c.b16 %v5933, %v5925
  %v7846 = vpack.c.b16 %v5942, %v5934
  %v7847 = vpack.c.b16 %v5943, %v5935
  %v7848 = vpack.c.b16 %v5944, %v5936
  %v7849 = vpack.c.b16 %v5945, %v5937
  %v7850 = vpack.c.b16 %v5946, %v5938
  %v7851 = vpack.c.b16 %v5947, %v5939
  %v7852 = vpack.c.b16 %v5948, %v5940
  %v7853 = vpack.c.b16 %v5949, %v5941
  %v7854 = vpack.c.b16 %v5958, %v5950
  %v7855 = vpack.c.b16 %v5959, %v5951
  %v7856 = vpack.c.b16 %v5960, %v5952
  %v7857 = vpack.c.b16 %v5961, %v5953
  %v7858 = vpack.c.b16 %v5962, %v5954
  %v7859 = vpack.c.b16 %v5963, %v5955
  %v7860 = vpack.c.b16 %v5964, %v5956
  %v7861 = vpack.c.b16 %v5965, %v5957
  %v7862 = vpack.c.b16 %v5974, %v5966
  %v7863 = vpack.c.b16 %v5975, %v5967
  %v7864 = vpack.c.b16 %v5976, %v5968
  %v7865 = vpack.c.b16 %v5977, %v5969
  %v7866 = vpack.c.b16 %v5978, %v5970
  %v7867 = vpack.c.b16 %v5979, %v5971
  %v7868 = vpack.c.b16 %v5980, %v5972
  %v7869 = vpack.c.b16 %v5981, %v5973
  %v7870 = vpack.c.b16 %v5990, %v5982
  %v7871 = vpack.c.b16 %v5991, %v5983
  %v7872 = vpack.c.b16 %v5992, %v5984
  %v7873 = vpack.c.b16 %v5993, %v5985
  %v7874 = vpack.c.b16 %v5994, %v5986
  %v7875 = vpack.c.b16 %v5995, %v5987
  %v7876 = vpack.c.b16 %v5996, %v5988
  %v7877 = vpack.c.b16 %v5997, %v5989
  %v7878 = vpack.c.b16 %v6006, %v5998
  %v7879 = vpack.c.b16 %v6007, %v5999
  %v7880 = vpack.c.b16 %v6008, %v6000
  %v7881 = vpack.c.b16 %v6009, %v6001
  %v7882 = vpack.c.b16 %v6010, %v6002
  %v7883 = vpack.c.b16 %v6011, %v6003
  %v7884 = vpack.c.b16 %v6012, %v6004
  %v7885 = vpack.c.b16 %v6013, %v6005
  %v7886 = vpack.c.b16 %v6022, %v6014
  %v7887 = vpack.c.b16 %v6023, %v6015
  %v7888 = vpack.c.b16 %v6024, %v6016
  %v7889 = vpack.c.b16 %v6025, %v6017
  %v7890 = vpack.c.b16 %v6026, %v6018
  %v7891 = vpack.c.b16 %v6027, %v6019
  %v7892 = vpack.c.b16 %v6028, %v6020
  %v7893 = vpack.c.b16 %v6029, %v6021
  %v7894 = vpack.c.b16 %v6038, %v6030
  %v7895 = vpack.c.b16 %v6039, %v6031
  %v7896 = vpack.c.b16 %v6040, %v6032
  %v7897 = vpack.c.b16 %v6041, %v6033
  %v7898 = vpack.c.b16 %v6042, %v6034
  %v7899 = vpack.c.b16 %v6043, %v6035
  %v7900 = vpack.c.b16 %v6044, %v6036
  %v7901 = vpack.c.b16 %v6045, %v6037
  %v7902 = vpack.c.b16 %v6054, %v6046
  %v7903 = vpack.c.b16 %v6055, %v6047
  %v7904 = vpack.c.b16 %v6056, %v6048
  %v7905 = vpack.c.b16 %v6057, %v6049
  %v7906 = vpack.c.b16 %v6058, %v6050
  %v7907 = vpack.c.b16 %v6059, %v6051
  %v7908 = vpack.c.b16 %v6060, %v6052
  %v7909 = vpack.c.b16 %v6061, %v6053
  %v7910 = vpack.c.b16 %v6070, %v6062
  %v7911 = vpack.c.b16 %v6071, %v6063
  %v7912 = vpack.c.b16 %v6072, %v6064
  %v7913 = vpack.c.b16 %v6073, %v6065
  %v7914 = vpack.c.b16 %v6074, %v6066
  %v7915 = vpack.c.b16 %v6075, %v6067
  %v7916 = vpack.c.b16 %v6076, %v6068
  %v7917 = vpack.c.b16 %v6077, %v6069
  %v7918 = vpack.c.b16 %v6086, %v6078
  %v7919 = vpack.c.b16 %v6087, %v6079
  %v7920 = vpack.c.b16 %v6088, %v6080
  %v7921 = vpack.c.b16 %v6089, %v6081
  %v7922 = vpack.c.b16 %v6090, %v6082
  %v7923 = vpack.c.b16 %v6091, %v6083
  %v7924 = vpack.c.b16 %v6092, %v6084
  %v7925 = vpack.c.b16 %v6093, %v6085
  %v7926 = vpack.c.b16 %v6102, %v6094
  %v7927 = vpack.c.b16 %v6103, %v6095
  %v7928 = vpack.c.b16 %v6104, %v6096
  %v7929 = vpack.c.b16 %v6105, %v6097
  %v7930 = vpack.c.b16 %v6106, %v6098
  %v7931 = vpack.c.b16 %v6107, %v6099
  %v7932 = vpack.c.b16 %v6108, %v6100
  %v7933 = vpack.c.b16 %v6109, %v6101
  %v7934 = vpack.c.b16 %v6118, %v6110
  %v7935 = vpack.c.b16 %v6119, %v6111
  %v7936 = vpack.c.b16 %v6120, %v6112
  %v7937 = vpack.c.b16 %v6121, %v6113
  %v7938 = vpack.c.b16 %v6122, %v6114
  %v7939 = vpack.c.b16 %v6123, %v6115
  %v7940 = vpack.c.b16 %v6124, %v6116
  %v7941 = vpack.c.b16 %v6125, %v6117
  %v7942 = vpack.c.b16 %v6134, %v6126
  %v7943 = vpack.c.b16 %v6135, %v6127
  %v7944 = vpack.c.b16 %v6136, %v6128
  %v7945 = vpack.c.b16 %v6137, %v6129
  %v7946 = vpack.c.b16 %v6138, %v6130
  %v7947 = vpack.c.b16 %v6139, %v6131
  %v7948 = vpack.c.b16 %v6140, %v6132
  %v7949 = vpack.c.b16 %v6141, %v6133
  %v7950 = vpack.c.b16 %v6150, %v6142
  %v7951 = vpack.c.b16 %v6151, %v6143
  %v7952 = vpack.c.b16 %v6152, %v6144
  %v7953 = vpack.c.b16 %v6153, %v6145
  %v7954 = vpack.c.b16 %v6154, %v6146
  %v7955 = vpack.c.b16 %v6155, %v6147
  %v7956 = vpack.c.b16 %v6156, %v6148
  %v7957 = vpack.c.b16 %v6157, %v6149
  %v7958 = vpack.c.b16 %v6166, %v6158
  %v7959 = vpack.c.b16 %v6167, %v6159
  %v7960 = vpack.c.b16 %v6168, %v6160
  %v7961 = vpack.c.b16 %v6169, %v6161
  %v7962 = vpack.c.b16 %v6170, %v6162
  %v7963 = vpack.c.b16 %v6171, %v6163
  %v7964 = vpack.c.b16 %v6172, %v6164
  %v7965 = vpack.c.b16 %v6173, %v6165
  %v7966 = vpack.c.b16 %v6182, %v6174
  %v7967 = vpack.c.b16 %v6183, %v6175
  %v7968 = vpack.c.b16 %v6184, %v6176
  %v7969 = vpack.c.b16 %v6185, %v6177
  %v7970 = vpack.c.b16 %v6186, %v6178
  %v7971 = vpack.c.b16 %v6187, %v6179
  %v7972 = vpack.c.b16 %v6188, %v6180
  %v7973 = vpack.c.b16 %v6189, %v6181
  %v7974 = vpack.c.b16 %v6198, %v6190
  %v7975 = vpack.c.b16 %v6199, %v6191
  %v7976 = vpack.c.b16 %v6200, %v6192
  %v7977 = vpack.c.b16 %v6201, %v6193
  %v7978 = vpack.c.b16 %v6202, %v6194
  %v7979 = vpack.c.b16 %v6203, %v6195
  %v7980 = vpack.c.b16 %v6204, %v6196
  %v7981 = vpack.c.b16 %v6205, %v6197
  %v7982 = vpack.c.b16 %v6214, %v6206
  %v7983 = vpack.c.b16 %v6215, %v6207
  %v7984 = vpack.c.b16 %v6216, %v6208
  %v7985 = vpack.c.b16 %v6217, %v6209
  %v7986 = vpack.c.b16 %v6218, %v6210
  %v7987 = vpack.c.b16 %v6219, %v6211
  %v7988 = vpack.c.b16 %v6220, %v6212
  %v7989 = vpack.c.b16 %v6221, %v6213
  %v7990 = vpack.c.b16 %v6230, %v6222
  %v7991 = vpack.c.b16 %v6231, %v6223
  %v7992 = vpack.c.b16 %v6232, %v6224
  %v7993 = vpack.c.b16 %v6233, %v6225
  %v7994 = vpack.c.b16 %v6234, %v6226
  %v7995 = vpack.c.b16 %v6235, %v6227
  %v7996 = vpack.c.b16 %v6236, %v6228
  %v7997 = vpack.c.b16 %v6237, %v6229
  %v7998 = vpack.c.b16 %v6246, %v6238
  %v7999 = vpack.c.b16 %v6247, %v6239
  %v8000 = vpack.c.b16 %v6248, %v6240
  %v8001 = vpack.c.b16 %v6249, %v6241
  %v8002 = vpack.c.b16 %v6250, %v6242
  %v8003 = vpack.c.b16 %v6251, %v6243
  %v8004 = vpack.c.b16 %v6252, %v6244
  %v8005 = vpack.c.b16 %v6253, %v6245
  %v8006 = vpack.c.b16 %v6262, %v6254
  %v8007 = vpack.c.b16 %v6263, %v6255
  %v8008 = vpack.c.b16 %v6264, %v6256
  %v8009 = vpack.c.b16 %v6265, %v6257
  %v8010 = vpack.c.b16 %v6266, %v6258
  %v8011 = vpack.c.b16 %v6267, %v6259
  %v8012 = vpack.c.b16 %v6268, %v6260
  %v8013 = vpack.c.b16 %v6269, %v6261
  %v8014 = vpack.c.b16 %v6278, %v6270
  %v8015 = vpack.c.b16 %v6279, %v6271
  %v8016 = vpack.c.b16 %v6280, %v6272
  %v8017 = vpack.c.b16 %v6281, %v6273
  %v8018 = vpack.c.b16 %v6282, %v6274
  %v8019 = vpack.c.b16 %v6283, %v6275
  %v8020 = vpack.c.b16 %v6284, %v6276
  %v8021 = vpack.c.b16 %v6285, %v6277
  %v8022 = vpack.c.b16 %v6294, %v6286
  %v8023 = vpack.c.b16 %v6295, %v6287
  %v8024 = vpack.c.b16 %v6296, %v6288
  %v8025 = vpack.c.b16 %v6297, %v6289
  %v8026 = vpack.c.b16 %v6298, %v6290
  %v8027 = vpack.c.b16 %v6299, %v6291
  %v8028 = vpack.c.b16 %v6300, %v6292
  %v8029 = vpack.c.b16 %v6301, %v6293
  %v8030 = vpack.c.b16 %v6310, %v6302
  %v8031 = vpack.c.b16 %v6311, %v6303
  %v8032 = vpack.c.b16 %v6312, %v6304
  %v8033 = vpack.c.b16 %v6313, %v6305
  %v8034 = vpack.c.b16 %v6314, %v6306
  %v8035 = vpack.c.b16 %v6315, %v6307
  %v8036 = vpack.c.b16 %v6316, %v6308
  %v8037 = vpack.c.b16 %v6317, %v6309
  %v8038 = vpack.c.b16 %v6326, %v6318
  %v8039 = vpack.c.b16 %v6327, %v6319
  %v8040 = vpack.c.b16 %v6328, %v6320
  %v8041 = vpack.c.b16 %v6329, %v6321
  %v8042 = vpack.c.b16 %v6330, %v6322
  %v8043 = vpack.c.b16 %v6331, %v6323
  %v8044 = vpack.c.b16 %v6332, %v6324
  %v8045 = vpack.c.b16 %v6333, %v6325
  %v8046 = vpack.c.b16 %v6342, %v6334
  %v8047 = vpack.c.b16 %v6343, %v6335
  %v8048 = vpack.c.b16 %v6344, %v6336
  %v8049 = vpack.c.b16 %v6345, %v6337
  %v8050 = vpack.c.b16 %v6346, %v6338
  %v8051 = vpack.c.b16 %v6347, %v6339
  %v8052 = vpack.c.b16 %v6348, %v6340
  %v8053 = vpack.c.b16 %v6349, %v6341
  %v8054 = vpack.c.b16 %v6358, %v6350
  %v8055 = vpack.c.b16 %v6359, %v6351
  %v8056 = vpack.c.b16 %v6360, %v6352
  %v8057 = vpack.c.b16 %v6361, %v6353
  %v8058 = vpack.c.b16 %v6362, %v6354
  %v8059 = vpack.c.b16 %v6363, %v6355
  %v8060 = vpack.c.b16 %v6364, %v6356
  %v8061 = vpack.c.b16 %v6365, %v6357
  %v8062 = vpack.c.b16 %v6374, %v6366
  %v8063 = vpack.c.b16 %v6375, %v6367
  %v8064 = vpack.c.b16 %v6376, %v6368
  %v8065 = vpack.c.b16 %v6377, %v6369
  %v8066 = vpack.c.b16 %v6378, %v6370
  %v8067 = vpack.c.b16 %v6379, %v6371
  %v8068 = vpack.c.b16 %v6380, %v6372
  %v8069 = vpack.c.b16 %v6381, %v6373
  %v8070 = vpack.c.b16 %v6390, %v6382
  %v8071 = vpack.c.b16 %v6391, %v6383
  %v8072 = vpack.c.b16 %v6392, %v6384
  %v8073 = vpack.c.b16 %v6393, %v6385
  %v8074 = vpack.c.b16 %v6394, %v6386
  %v8075 = vpack.c.b16 %v6395, %v6387
  %v8076 = vpack.c.b16 %v6396, %v6388
  %v8077 = vpack.c.b16 %v6397, %v6389
  %v8078 = vpack.c.b16 %v6406, %v6398
  %v8079 = vpack.c.b16 %v6407, %v6399
  %v8080 = vpack.c.b16 %v6408, %v6400
  %v8081 = vpack.c.b16 %v6409, %v6401
  %v8082 = vpack.c.b16 %v6410, %v6402
  %v8083 = vpack.c.b16 %v6411, %v6403
  %v8084 = vpack.c.b16 %v6412, %v6404
  %v8085 = vpack.c.b16 %v6413, %v6405
  %v8086 = vpack.c.b16 %v6422, %v6414
  %v8087 = vpack.c.b16 %v6423, %v6415
  %v8088 = vpack.c.b16 %v6424, %v6416
  %v8089 = vpack.c.b16 %v6425, %v6417
  %v8090 = vpack.c.b16 %v6426, %v6418
  %v8091 = vpack.c.b16 %v6427, %v6419
  %v8092 = vpack.c.b16 %v6428, %v6420
  %v8093 = vpack.c.b16 %v6429, %v6421
  %v8094 = vpack.c.b16 %v6438, %v6430
  %v8095 = vpack.c.b16 %v6439, %v6431
  %v8096 = vpack.c.b16 %v6440, %v6432
  %v8097 = vpack.c.b16 %v6441, %v6433
  %v8098 = vpack.c.b16 %v6442, %v6434
  %v8099 = vpack.c.b16 %v6443, %v6435
  %v8100 = vpack.c.b16 %v6444, %v6436
  %v8101 = vpack.c.b16 %v6445, %v6437
  %v8102 = vpack.c.b16 %v6454, %v6446
  %v8103 = vpack.c.b16 %v6455, %v6447
  %v8104 = vpack.c.b16 %v6456, %v6448
  %v8105 = vpack.c.b16 %v6457, %v6449
  %v8106 = vpack.c.b16 %v6458, %v6450
  %v8107 = vpack.c.b16 %v6459, %v6451
  %v8108 = vpack.c.b16 %v6460, %v6452
  %v8109 = vpack.c.b16 %v6461, %v6453
  %v8110 = vpack.c.b16 %v6470, %v6462
  %v8111 = vpack.c.b16 %v6471, %v6463
  %v8112 = vpack.c.b16 %v6472, %v6464
  %v8113 = vpack.c.b16 %v6473, %v6465
  %v8114 = vpack.c.b16 %v6474, %v6466
  %v8115 = vpack.c.b16 %v6475, %v6467
  %v8116 = vpack.c.b16 %v6476, %v6468
  %v8117 = vpack.c.b16 %v6477, %v6469
  %v8118 = vpack.c.b16 %v6486, %v6478
  %v8119 = vpack.c.b16 %v6487, %v6479
  %v8120 = vpack.c.b16 %v6488, %v6480
  %v8121 = vpack.c.b16 %v6489, %v6481
  %v8122 = vpack.c.b16 %v6490, %v6482
  %v8123 = vpack.c.b16 %v6491, %v6483
  %v8124 = vpack.c.b16 %v6492, %v6484
  %v8125 = vpack.c.b16 %v6493, %v6485
  %v8126 = vpack.c.b16 %v6502, %v6494
  %v8127 = vpack.c.b16 %v6503, %v6495
  %v8128 = vpack.c.b16 %v6504, %v6496
  %v8129 = vpack.c.b16 %v6505, %v6497
  %v8130 = vpack.c.b16 %v6506, %v6498
  %v8131 = vpack.c.b16 %v6507, %v6499
  %v8132 = vpack.c.b16 %v6508, %v6500
  %v8133 = vpack.c.b16 %v6509, %v6501
  %v8134 = vpack.c.b16 %v6518, %v6510
  %v8135 = vpack.c.b16 %v6519, %v6511
  %v8136 = vpack.c.b16 %v6520, %v6512
  %v8137 = vpack.c.b16 %v6521, %v6513
  %v8138 = vpack.c.b16 %v6522, %v6514
  %v8139 = vpack.c.b16 %v6523, %v6515
  %v8140 = vpack.c.b16 %v6524, %v6516
  %v8141 = vpack.c.b16 %v6525, %v6517
  %v8142 = vpack.c.b16 %v6534, %v6526
  %v8143 = vpack.c.b16 %v6535, %v6527
  %v8144 = vpack.c.b16 %v6536, %v6528
  %v8145 = vpack.c.b16 %v6537, %v6529
  %v8146 = vpack.c.b16 %v6538, %v6530
  %v8147 = vpack.c.b16 %v6539, %v6531
  %v8148 = vpack.c.b16 %v6540, %v6532
  %v8149 = vpack.c.b16 %v6541, %v6533
  %v8150 = vpack.c.b16 %v6550, %v6542
  %v8151 = vpack.c.b16 %v6551, %v6543
  %v8152 = vpack.c.b16 %v6552, %v6544
  %v8153 = vpack.c.b16 %v6553, %v6545
  %v8154 = vpack.c.b16 %v6554, %v6546
  %v8155 = vpack.c.b16 %v6555, %v6547
  %v8156 = vpack.c.b16 %v6556, %v6548
  %v8157 = vpack.c.b16 %v6557, %v6549
  %9758 = vmatprep.subr.bf16.mxu0 %v6559
  %9759 = vmatpush1.bf16.msra.mxu0 %v6558
  %9760 = vmatprep.subr.bf16.mxu0 %v6567
  %9761 = vmatpush1.bf16.msra.mxu0 %v6566
  %9762 = vmatprep.subr.bf16.mxu0 %v6575
  %9763 = vmatpush1.bf16.msra.mxu0 %v6574
  %9764 = vmatprep.subr.bf16.mxu0 %v6583
  %9765 = vmatpush1.bf16.msra.mxu0 %v6582
  %9766 = vmatprep.subr.bf16.mxu0 %v6591
  %9767 = vmatpush1.bf16.msra.mxu0 %v6590
  %9768 = vmatprep.subr.bf16.mxu0 %v6599
  %9769 = vmatpush1.bf16.msra.mxu0 %v6598
  %9770 = vmatprep.subr.bf16.mxu0 %v6607
  %9771 = vmatpush1.bf16.msra.mxu0 %v6606
  %9772 = vmatprep.subr.bf16.mxu0 %v6615
  %9773 = vmatpush1.bf16.msra.mxu0 %v6614
  %9774 = vmatprep.subr.bf16.mxu0 %v6623
  %9775 = vmatpush1.bf16.msra.mxu0 %v6622
  %9776 = vmatprep.subr.bf16.mxu0 %v6631
  %9777 = vmatpush1.bf16.msra.mxu0 %v6630
  %9778 = vmatprep.subr.bf16.mxu0 %v6639
  %9779 = vmatpush1.bf16.msra.mxu0 %v6638
  %9780 = vmatprep.subr.bf16.mxu0 %v6647
  %9781 = vmatpush1.bf16.msra.mxu0 %v6646
  %9782 = vmatprep.subr.bf16.mxu0 %v6655
  %9783 = vmatpush1.bf16.msra.mxu0 %v6654
  %9784 = vmatprep.subr.bf16.mxu0 %v6663
  %9785 = vmatpush1.bf16.msra.mxu0 %v6662
  %9786 = vmatprep.subr.bf16.mxu0 %v6671
  %9787 = vmatpush1.bf16.msra.mxu0 %v6670
  %9788 = vmatprep.subr.bf16.mxu0 %v6679
  %9789 = vmatpush1.bf16.msra.mxu0 %v6678
  %9790 = vmatprep.mubr.bf16.mxu0 %v1709
  %9791 = vmatmul.mubr.bf16.gmra.mrb[0].mxu0 %v1708
  %v9792 = vpop.f32.mrb[0].mxu0
  %v9793 = vadd.f32 %v1633, %v9792
  %v9794 = vpop.f32.mrb[0].mxu0
  %v9795 = vadd.f32 %v1637, %v9794
  %v9796 = vpop.f32.mrb[0].mxu0
  %v9797 = vpop.f32.mrb[0].mxu0
  %9798 = vdwg.mxu0
  %9799 = vmatprep.subr.bf16.mxu0 %v6687
  %9800 = vmatpush1.bf16.msra.mxu0 %v6686
  %9801 = vmatprep.subr.bf16.mxu0 %v6695
  %9802 = vmatpush1.bf16.msra.mxu0 %v6694
  %9803 = vmatprep.subr.bf16.mxu0 %v6703
  %9804 = vmatpush1.bf16.msra.mxu0 %v6702
  %9805 = vmatprep.subr.bf16.mxu0 %v6711
  %9806 = vmatpush1.bf16.msra.mxu0 %v6710
  %9807 = vmatprep.subr.bf16.mxu0 %v6719
  %9808 = vmatpush1.bf16.msra.mxu0 %v6718
  %9809 = vmatprep.subr.bf16.mxu0 %v6727
  %9810 = vmatpush1.bf16.msra.mxu0 %v6726
  %9811 = vmatprep.subr.bf16.mxu0 %v6735
  %9812 = vmatpush1.bf16.msra.mxu0 %v6734
  %9813 = vmatprep.subr.bf16.mxu0 %v6743
  %9814 = vmatpush1.bf16.msra.mxu0 %v6742
  %9815 = vmatprep.subr.bf16.mxu0 %v6751
  %9816 = vmatpush1.bf16.msra.mxu0 %v6750
  %9817 = vmatprep.subr.bf16.mxu0 %v6759
  %9818 = vmatpush1.bf16.msra.mxu0 %v6758
  %9819 = vmatprep.subr.bf16.mxu0 %v6767
  %9820 = vmatpush1.bf16.msra.mxu0 %v6766
  %9821 = vmatprep.subr.bf16.mxu0 %v6775
  %9822 = vmatpush1.bf16.msra.mxu0 %v6774
  %9823 = vmatprep.subr.bf16.mxu0 %v6783
  %9824 = vmatpush1.bf16.msra.mxu0 %v6782
  %9825 = vmatprep.subr.bf16.mxu0 %v6791
  %9826 = vmatpush1.bf16.msra.mxu0 %v6790
  %9827 = vmatprep.subr.bf16.mxu0 %v6799
  %9828 = vmatpush1.bf16.msra.mxu0 %v6798
  %9829 = vmatprep.subr.bf16.mxu0 %v6807
  %9830 = vmatpush1.bf16.msra.mxu0 %v6806
  %9831 = vmatprep.mubr.bf16.mxu0 %v1711
  %9832 = vmatmul.mubr.bf16.gmra.mrb[0].mxu0 %v1710
  %v9833 = vpop.f32.mrb[0].mxu0
  %v9834 = vadd.f32 %v9793, %v9833
  %v9835 = vpop.f32.mrb[0].mxu0
  %v9836 = vadd.f32 %v9795, %v9835
  %v9837 = vpop.f32.mrb[0].mxu0
  %v9838 = vpop.f32.mrb[0].mxu0
  %9839 = vdwg.mxu0
  %9840 = vmatprep.subr.bf16.mxu0 %v6815
  %9841 = vmatpush1.bf16.msra.mxu0 %v6814
  %9842 = vmatprep.subr.bf16.mxu0 %v6823
  %9843 = vmatpush1.bf16.msra.mxu0 %v6822
  %9844 = vmatprep.subr.bf16.mxu0 %v6831
  %9845 = vmatpush1.bf16.msra.mxu0 %v6830
  %9846 = vmatprep.subr.bf16.mxu0 %v6839
  %9847 = vmatpush1.bf16.msra.mxu0 %v6838
  %9848 = vmatprep.subr.bf16.mxu0 %v6847
  %9849 = vmatpush1.bf16.msra.mxu0 %v6846
  %9850 = vmatprep.subr.bf16.mxu0 %v6855
  %9851 = vmatpush1.bf16.msra.mxu0 %v6854
  %9852 = vmatprep.subr.bf16.mxu0 %v6863
  %9853 = vmatpush1.bf16.msra.mxu0 %v6862
  %9854 = vmatprep.subr.bf16.mxu0 %v6871
  %9855 = vmatpush1.bf16.msra.mxu0 %v6870
  %9856 = vmatprep.subr.bf16.mxu0 %v6879
  %9857 = vmatpush1.bf16.msra.mxu0 %v6878
  %9858 = vmatprep.subr.bf16.mxu0 %v6887
  %9859 = vmatpush1.bf16.msra.mxu0 %v6886
  %9860 = vmatprep.subr.bf16.mxu0 %v6895
  %9861 = vmatpush1.bf16.msra.mxu0 %v6894
  %9862 = vmatprep.subr.bf16.mxu0 %v6903
  %9863 = vmatpush1.bf16.msra.mxu0 %v6902
  %9864 = vmatprep.subr.bf16.mxu0 %v6911
  %9865 = vmatpush1.bf16.msra.mxu0 %v6910
  %9866 = vmatprep.subr.bf16.mxu0 %v6919
  %9867 = vmatpush1.bf16.msra.mxu0 %v6918
  %9868 = vmatprep.subr.bf16.mxu0 %v6927
  %9869 = vmatpush1.bf16.msra.mxu0 %v6926
  %9870 = vmatprep.subr.bf16.mxu0 %v6935
  %9871 = vmatpush1.bf16.msra.mxu0 %v6934
  %9872 = vmatprep.mubr.bf16.mxu0 %v1713
  %9873 = vmatmul.mubr.bf16.gmra.mrb[0].mxu0 %v1712
  %v9874 = vpop.f32.mrb[0].mxu0
  %v9875 = vadd.f32 %v9834, %v9874
  %v9876 = vpop.f32.mrb[0].mxu0
  %v9877 = vadd.f32 %v9836, %v9876
  %v9878 = vpop.f32.mrb[0].mxu0
  %v9879 = vpop.f32.mrb[0].mxu0
  %9880 = vdwg.mxu0
  %9881 = vmatprep.subr.bf16.mxu0 %v6943
  %9882 = vmatpush1.bf16.msra.mxu0 %v6942
  %9883 = vmatprep.subr.bf16.mxu0 %v6951
  %9884 = vmatpush1.bf16.msra.mxu0 %v6950
  %9885 = vmatprep.subr.bf16.mxu0 %v6959
  %9886 = vmatpush1.bf16.msra.mxu0 %v6958
  %9887 = vmatprep.subr.bf16.mxu0 %v6967
  %9888 = vmatpush1.bf16.msra.mxu0 %v6966
  %9889 = vmatprep.subr.bf16.mxu0 %v6975
  %9890 = vmatpush1.bf16.msra.mxu0 %v6974
  %9891 = vmatprep.subr.bf16.mxu0 %v6983
  %9892 = vmatpush1.bf16.msra.mxu0 %v6982
  %9893 = vmatprep.subr.bf16.mxu0 %v6991
  %9894 = vmatpush1.bf16.msra.mxu0 %v6990
  %9895 = vmatprep.subr.bf16.mxu0 %v6999
  %9896 = vmatpush1.bf16.msra.mxu0 %v6998
  %9897 = vmatprep.subr.bf16.mxu0 %v7007
  %9898 = vmatpush1.bf16.msra.mxu0 %v7006
  %9899 = vmatprep.subr.bf16.mxu0 %v7015
  %9900 = vmatpush1.bf16.msra.mxu0 %v7014
  %9901 = vmatprep.subr.bf16.mxu0 %v7023
  %9902 = vmatpush1.bf16.msra.mxu0 %v7022
  %9903 = vmatprep.subr.bf16.mxu0 %v7031
  %9904 = vmatpush1.bf16.msra.mxu0 %v7030
  %9905 = vmatprep.subr.bf16.mxu0 %v7039
  %9906 = vmatpush1.bf16.msra.mxu0 %v7038
  %9907 = vmatprep.subr.bf16.mxu0 %v7047
  %9908 = vmatpush1.bf16.msra.mxu0 %v7046
  %9909 = vmatprep.subr.bf16.mxu0 %v7055
  %9910 = vmatpush1.bf16.msra.mxu0 %v7054
  %9911 = vmatprep.subr.bf16.mxu0 %v7063
  %9912 = vmatpush1.bf16.msra.mxu0 %v7062
  %9913 = vmatprep.mubr.bf16.mxu0 %v1715
  %9914 = vmatmul.mubr.bf16.gmra.mrb[0].mxu0 %v1714
  %v9915 = vpop.f32.mrb[0].mxu0
  %v9916 = vadd.f32 %v9875, %v9915
  %v9917 = vpop.f32.mrb[0].mxu0
  %v9918 = vadd.f32 %v9877, %v9917
  %v9919 = vpop.f32.mrb[0].mxu0
  %v9920 = vpop.f32.mrb[0].mxu0
  %9921 = vdwg.mxu0
  %9922 = vmatprep.subr.bf16.mxu0 %v7071
  %9923 = vmatpush1.bf16.msra.mxu0 %v7070
  %9924 = vmatprep.subr.bf16.mxu0 %v7079
  %9925 = vmatpush1.bf16.msra.mxu0 %v7078
  %9926 = vmatprep.subr.bf16.mxu0 %v7087
  %9927 = vmatpush1.bf16.msra.mxu0 %v7086
  %9928 = vmatprep.subr.bf16.mxu0 %v7095
  %9929 = vmatpush1.bf16.msra.mxu0 %v7094
  %9930 = vmatprep.subr.bf16.mxu0 %v7103
  %9931 = vmatpush1.bf16.msra.mxu0 %v7102
  %9932 = vmatprep.subr.bf16.mxu0 %v7111
  %9933 = vmatpush1.bf16.msra.mxu0 %v7110
  %9934 = vmatprep.subr.bf16.mxu0 %v7119
  %9935 = vmatpush1.bf16.msra.mxu0 %v7118
  %9936 = vmatprep.subr.bf16.mxu0 %v7127
  %9937 = vmatpush1.bf16.msra.mxu0 %v7126
  %9938 = vmatprep.subr.bf16.mxu0 %v7135
  %9939 = vmatpush1.bf16.msra.mxu0 %v7134
  %9940 = vmatprep.subr.bf16.mxu0 %v7143
  %9941 = vmatpush1.bf16.msra.mxu0 %v7142
  %9942 = vmatprep.subr.bf16.mxu0 %v7151
  %9943 = vmatpush1.bf16.msra.mxu0 %v7150
  %9944 = vmatprep.subr.bf16.mxu0 %v7159
  %9945 = vmatpush1.bf16.msra.mxu0 %v7158
  %9946 = vmatprep.subr.bf16.mxu0 %v7167
  %9947 = vmatpush1.bf16.msra.mxu0 %v7166
  %9948 = vmatprep.subr.bf16.mxu0 %v7175
  %9949 = vmatpush1.bf16.msra.mxu0 %v7174
  %9950 = vmatprep.subr.bf16.mxu0 %v7183
  %9951 = vmatpush1.bf16.msra.mxu0 %v7182
  %9952 = vmatprep.subr.bf16.mxu0 %v7191
  %9953 = vmatpush1.bf16.msra.mxu0 %v7190
  %9954 = vmatprep.mubr.bf16.mxu0 %v1717
  %9955 = vmatmul.mubr.bf16.gmra.mrb[0].mxu0 %v1716
  %v9956 = vpop.f32.mrb[0].mxu0
  %v9957 = vadd.f32 %v9916, %v9956
  %v9958 = vpop.f32.mrb[0].mxu0
  %v9959 = vadd.f32 %v9918, %v9958
  %v9960 = vpop.f32.mrb[0].mxu0
  %v9961 = vpop.f32.mrb[0].mxu0
  %9962 = vdwg.mxu0
  %9963 = vmatprep.subr.bf16.mxu0 %v7199
  %9964 = vmatpush1.bf16.msra.mxu0 %v7198
  %9965 = vmatprep.subr.bf16.mxu0 %v7207
  %9966 = vmatpush1.bf16.msra.mxu0 %v7206
  %9967 = vmatprep.subr.bf16.mxu0 %v7215
  %9968 = vmatpush1.bf16.msra.mxu0 %v7214
  %9969 = vmatprep.subr.bf16.mxu0 %v7223
  %9970 = vmatpush1.bf16.msra.mxu0 %v7222
  %9971 = vmatprep.subr.bf16.mxu0 %v7231
  %9972 = vmatpush1.bf16.msra.mxu0 %v7230
  %9973 = vmatprep.subr.bf16.mxu0 %v7239
  %9974 = vmatpush1.bf16.msra.mxu0 %v7238
  %9975 = vmatprep.subr.bf16.mxu0 %v7247
  %9976 = vmatpush1.bf16.msra.mxu0 %v7246
  %9977 = vmatprep.subr.bf16.mxu0 %v7255
  %9978 = vmatpush1.bf16.msra.mxu0 %v7254
  %9979 = vmatprep.subr.bf16.mxu0 %v7263
  %9980 = vmatpush1.bf16.msra.mxu0 %v7262
  %9981 = vmatprep.subr.bf16.mxu0 %v7271
  %9982 = vmatpush1.bf16.msra.mxu0 %v7270
  %9983 = vmatprep.subr.bf16.mxu0 %v7279
  %9984 = vmatpush1.bf16.msra.mxu0 %v7278
  %9985 = vmatprep.subr.bf16.mxu0 %v7287
  %9986 = vmatpush1.bf16.msra.mxu0 %v7286
  %9987 = vmatprep.subr.bf16.mxu0 %v7295
  %9988 = vmatpush1.bf16.msra.mxu0 %v7294
  %9989 = vmatprep.subr.bf16.mxu0 %v7303
  %9990 = vmatpush1.bf16.msra.mxu0 %v7302
  %9991 = vmatprep.subr.bf16.mxu0 %v7311
  %9992 = vmatpush1.bf16.msra.mxu0 %v7310
  %9993 = vmatprep.subr.bf16.mxu0 %v7319
  %9994 = vmatpush1.bf16.msra.mxu0 %v7318
  %9995 = vmatprep.mubr.bf16.mxu0 %v1719
  %9996 = vmatmul.mubr.bf16.gmra.mrb[0].mxu0 %v1718
  %v9997 = vpop.f32.mrb[0].mxu0
  %v9998 = vadd.f32 %v9957, %v9997
  %v9999 = vpop.f32.mrb[0].mxu0
  %v10000 = vadd.f32 %v9959, %v9999
  %v10001 = vpop.f32.mrb[0].mxu0
  %v10002 = vpop.f32.mrb[0].mxu0
  %10003 = vdwg.mxu0
  %10004 = vmatprep.subr.bf16.mxu0 %v7327
  %10005 = vmatpush1.bf16.msra.mxu0 %v7326
  %10006 = vmatprep.subr.bf16.mxu0 %v7335
  %10007 = vmatpush1.bf16.msra.mxu0 %v7334
  %10008 = vmatprep.subr.bf16.mxu0 %v7343
  %10009 = vmatpush1.bf16.msra.mxu0 %v7342
  %10010 = vmatprep.subr.bf16.mxu0 %v7351
  %10011 = vmatpush1.bf16.msra.mxu0 %v7350
  %10012 = vmatprep.subr.bf16.mxu0 %v7359
  %10013 = vmatpush1.bf16.msra.mxu0 %v7358
  %10014 = vmatprep.subr.bf16.mxu0 %v7367
  %10015 = vmatpush1.bf16.msra.mxu0 %v7366
  %10016 = vmatprep.subr.bf16.mxu0 %v7375
  %10017 = vmatpush1.bf16.msra.mxu0 %v7374
  %10018 = vmatprep.subr.bf16.mxu0 %v7383
  %10019 = vmatpush1.bf16.msra.mxu0 %v7382
  %10020 = vmatprep.subr.bf16.mxu0 %v7391
  %10021 = vmatpush1.bf16.msra.mxu0 %v7390
  %10022 = vmatprep.subr.bf16.mxu0 %v7399
  %10023 = vmatpush1.bf16.msra.mxu0 %v7398
  %10024 = vmatprep.subr.bf16.mxu0 %v7407
  %10025 = vmatpush1.bf16.msra.mxu0 %v7406
  %10026 = vmatprep.subr.bf16.mxu0 %v7415
  %10027 = vmatpush1.bf16.msra.mxu0 %v7414
  %10028 = vmatprep.subr.bf16.mxu0 %v7423
  %10029 = vmatpush1.bf16.msra.mxu0 %v7422
  %10030 = vmatprep.subr.bf16.mxu0 %v7431
  %10031 = vmatpush1.bf16.msra.mxu0 %v7430
  %10032 = vmatprep.subr.bf16.mxu0 %v7439
  %10033 = vmatpush1.bf16.msra.mxu0 %v7438
  %10034 = vmatprep.subr.bf16.mxu0 %v7447
  %10035 = vmatpush1.bf16.msra.mxu0 %v7446
  %10036 = vmatprep.mubr.bf16.mxu0 %v1721
  %10037 = vmatmul.mubr.bf16.gmra.mrb[0].mxu0 %v1720
  %v10038 = vpop.f32.mrb[0].mxu0
  %v10039 = vadd.f32 %v9998, %v10038
  %v10040 = vpop.f32.mrb[0].mxu0
  %v10041 = vadd.f32 %v10000, %v10040
  %v10042 = vpop.f32.mrb[0].mxu0
  %v10043 = vpop.f32.mrb[0].mxu0
  %10044 = vdwg.mxu0
  %10045 = vmatprep.subr.bf16.mxu0 %v7455
  %10046 = vmatpush1.bf16.msra.mxu0 %v7454
  %10047 = vmatprep.subr.bf16.mxu0 %v7463
  %10048 = vmatpush1.bf16.msra.mxu0 %v7462
  %10049 = vmatprep.subr.bf16.mxu0 %v7471
  %10050 = vmatpush1.bf16.msra.mxu0 %v7470
  %10051 = vmatprep.subr.bf16.mxu0 %v7479
  %10052 = vmatpush1.bf16.msra.mxu0 %v7478
  %10053 = vmatprep.subr.bf16.mxu0 %v7487
  %10054 = vmatpush1.bf16.msra.mxu0 %v7486
  %10055 = vmatprep.subr.bf16.mxu0 %v7495
  %10056 = vmatpush1.bf16.msra.mxu0 %v7494
  %10057 = vmatprep.subr.bf16.mxu0 %v7503
  %10058 = vmatpush1.bf16.msra.mxu0 %v7502
  %10059 = vmatprep.subr.bf16.mxu0 %v7511
  %10060 = vmatpush1.bf16.msra.mxu0 %v7510
  %10061 = vmatprep.subr.bf16.mxu0 %v7519
  %10062 = vmatpush1.bf16.msra.mxu0 %v7518
  %10063 = vmatprep.subr.bf16.mxu0 %v7527
  %10064 = vmatpush1.bf16.msra.mxu0 %v7526
  %10065 = vmatprep.subr.bf16.mxu0 %v7535
  %10066 = vmatpush1.bf16.msra.mxu0 %v7534
  %10067 = vmatprep.subr.bf16.mxu0 %v7543
  %10068 = vmatpush1.bf16.msra.mxu0 %v7542
  %10069 = vmatprep.subr.bf16.mxu0 %v7551
  %10070 = vmatpush1.bf16.msra.mxu0 %v7550
  %10071 = vmatprep.subr.bf16.mxu0 %v7559
  %10072 = vmatpush1.bf16.msra.mxu0 %v7558
  %10073 = vmatprep.subr.bf16.mxu0 %v7567
  %10074 = vmatpush1.bf16.msra.mxu0 %v7566
  %10075 = vmatprep.subr.bf16.mxu0 %v7575
  %10076 = vmatpush1.bf16.msra.mxu0 %v7574
  %10077 = vmatprep.mubr.bf16.mxu0 %v1723
  %10078 = vmatmul.mubr.bf16.gmra.mrb[0].mxu0 %v1722
  %v10079 = vpop.f32.mrb[0].mxu0
  %v10080 = vadd.f32 %v10039, %v10079
  %v10081 = vpop.f32.mrb[0].mxu0
  %v10082 = vadd.f32 %v10041, %v10081
  %v10083 = vpop.f32.mrb[0].mxu0
  %v10084 = vpop.f32.mrb[0].mxu0
  %10085 = vdwg.mxu0
  %10086 = vmatprep.subr.bf16.mxu0 %v7583
  %10087 = vmatpush1.bf16.msra.mxu0 %v7582
  %10088 = vmatprep.subr.bf16.mxu0 %v7591
  %10089 = vmatpush1.bf16.msra.mxu0 %v7590
  %10090 = vmatprep.subr.bf16.mxu0 %v7599
  %10091 = vmatpush1.bf16.msra.mxu0 %v7598
  %10092 = vmatprep.subr.bf16.mxu0 %v7607
  %10093 = vmatpush1.bf16.msra.mxu0 %v7606
  %10094 = vmatprep.subr.bf16.mxu0 %v7615
  %10095 = vmatpush1.bf16.msra.mxu0 %v7614
  %10096 = vmatprep.subr.bf16.mxu0 %v7623
  %10097 = vmatpush1.bf16.msra.mxu0 %v7622
  %10098 = vmatprep.subr.bf16.mxu0 %v7631
  %10099 = vmatpush1.bf16.msra.mxu0 %v7630
  %10100 = vmatprep.subr.bf16.mxu0 %v7639
  %10101 = vmatpush1.bf16.msra.mxu0 %v7638
  %10102 = vmatprep.subr.bf16.mxu0 %v7647
  %10103 = vmatpush1.bf16.msra.mxu0 %v7646
  %10104 = vmatprep.subr.bf16.mxu0 %v7655
  %10105 = vmatpush1.bf16.msra.mxu0 %v7654
  %10106 = vmatprep.subr.bf16.mxu0 %v7663
  %10107 = vmatpush1.bf16.msra.mxu0 %v7662
  %10108 = vmatprep.subr.bf16.mxu0 %v7671
  %10109 = vmatpush1.bf16.msra.mxu0 %v7670
  %10110 = vmatprep.subr.bf16.mxu0 %v7679
  %10111 = vmatpush1.bf16.msra.mxu0 %v7678
  %10112 = vmatprep.subr.bf16.mxu0 %v7687
  %10113 = vmatpush1.bf16.msra.mxu0 %v7686
  %10114 = vmatprep.subr.bf16.mxu0 %v7695
  %10115 = vmatpush1.bf16.msra.mxu0 %v7694
  %10116 = vmatprep.subr.bf16.mxu0 %v7703
  %10117 = vmatpush1.bf16.msra.mxu0 %v7702
  %10118 = vmatprep.mubr.bf16.mxu0 %v1725
  %10119 = vmatmul.mubr.bf16.gmra.mrb[0].mxu0 %v1724
  %v10120 = vpop.f32.mrb[0].mxu0
  %v10121 = vadd.f32 %v10080, %v10120
  %v10122 = vpop.f32.mrb[0].mxu0
  %v10123 = vadd.f32 %v10082, %v10122
  %v10124 = vpop.f32.mrb[0].mxu0
  %v10125 = vpop.f32.mrb[0].mxu0
  %10126 = vdwg.mxu0
  %10127 = vmatprep.subr.bf16.mxu0 %v7711
  %10128 = vmatpush1.bf16.msra.mxu0 %v7710
  %10129 = vmatprep.subr.bf16.mxu0 %v7719
  %10130 = vmatpush1.bf16.msra.mxu0 %v7718
  %10131 = vmatprep.subr.bf16.mxu0 %v7727
  %10132 = vmatpush1.bf16.msra.mxu0 %v7726
  %10133 = vmatprep.subr.bf16.mxu0 %v7735
  %10134 = vmatpush1.bf16.msra.mxu0 %v7734
  %10135 = vmatprep.subr.bf16.mxu0 %v7743
  %10136 = vmatpush1.bf16.msra.mxu0 %v7742
  %10137 = vmatprep.subr.bf16.mxu0 %v7751
  %10138 = vmatpush1.bf16.msra.mxu0 %v7750
  %10139 = vmatprep.subr.bf16.mxu0 %v7759
  %10140 = vmatpush1.bf16.msra.mxu0 %v7758
  %10141 = vmatprep.subr.bf16.mxu0 %v7767
  %10142 = vmatpush1.bf16.msra.mxu0 %v7766
  %10143 = vmatprep.subr.bf16.mxu0 %v7775
  %10144 = vmatpush1.bf16.msra.mxu0 %v7774
  %10145 = vmatprep.subr.bf16.mxu0 %v7783
  %10146 = vmatpush1.bf16.msra.mxu0 %v7782
  %10147 = vmatprep.subr.bf16.mxu0 %v7791
  %10148 = vmatpush1.bf16.msra.mxu0 %v7790
  %10149 = vmatprep.subr.bf16.mxu0 %v7799
  %10150 = vmatpush1.bf16.msra.mxu0 %v7798
  %10151 = vmatprep.subr.bf16.mxu0 %v7807
  %10152 = vmatpush1.bf16.msra.mxu0 %v7806
  %10153 = vmatprep.subr.bf16.mxu0 %v7815
  %10154 = vmatpush1.bf16.msra.mxu0 %v7814
  %10155 = vmatprep.subr.bf16.mxu0 %v7823
  %10156 = vmatpush1.bf16.msra.mxu0 %v7822
  %10157 = vmatprep.subr.bf16.mxu0 %v7831
  %10158 = vmatpush1.bf16.msra.mxu0 %v7830
  %10159 = vmatprep.mubr.bf16.mxu0 %v1727
  %10160 = vmatmul.mubr.bf16.gmra.mrb[0].mxu0 %v1726
  %v10161 = vpop.f32.mrb[0].mxu0
  %v10162 = vadd.f32 %v10121, %v10161
  %v10163 = vpop.f32.mrb[0].mxu0
  %v10164 = vadd.f32 %v10123, %v10163
  %v10165 = vpop.f32.mrb[0].mxu0
  %v10166 = vpop.f32.mrb[0].mxu0
  %10167 = vdwg.mxu0
  %10168 = vmatprep.subr.bf16.mxu0 %v7839
  %10169 = vmatpush1.bf16.msra.mxu0 %v7838
  %10170 = vmatprep.subr.bf16.mxu0 %v7847
  %10171 = vmatpush1.bf16.msra.mxu0 %v7846
  %10172 = vmatprep.subr.bf16.mxu0 %v7855
  %10173 = vmatpush1.bf16.msra.mxu0 %v7854
  %10174 = vmatprep.subr.bf16.mxu0 %v7863
  %10175 = vmatpush1.bf16.msra.mxu0 %v7862
  %10176 = vmatprep.subr.bf16.mxu0 %v7871
  %10177 = vmatpush1.bf16.msra.mxu0 %v7870
  %10178 = vmatprep.subr.bf16.mxu0 %v7879
  %10179 = vmatpush1.bf16.msra.mxu0 %v7878
  %10180 = vmatprep.subr.bf16.mxu0 %v7887
  %10181 = vmatpush1.bf16.msra.mxu0 %v7886
  %10182 = vmatprep.subr.bf16.mxu0 %v7895
  %10183 = vmatpush1.bf16.msra.mxu0 %v7894
  %10184 = vmatprep.subr.bf16.mxu0 %v7903
  %10185 = vmatpush1.bf16.msra.mxu0 %v7902
  %10186 = vmatprep.subr.bf16.mxu0 %v7911
  %10187 = vmatpush1.bf16.msra.mxu0 %v7910
  %10188 = vmatprep.subr.bf16.mxu0 %v7919
  %10189 = vmatpush1.bf16.msra.mxu0 %v7918
  %10190 = vmatprep.subr.bf16.mxu0 %v7927
  %10191 = vmatpush1.bf16.msra.mxu0 %v7926
  %10192 = vmatprep.subr.bf16.mxu0 %v7935
  %10193 = vmatpush1.bf16.msra.mxu0 %v7934
  %10194 = vmatprep.subr.bf16.mxu0 %v7943
  %10195 = vmatpush1.bf16.msra.mxu0 %v7942
  %10196 = vmatprep.subr.bf16.mxu0 %v7951
  %10197 = vmatpush1.bf16.msra.mxu0 %v7950
  %10198 = vmatprep.subr.bf16.mxu0 %v7959
  %10199 = vmatpush1.bf16.msra.mxu0 %v7958
  %10200 = vmatprep.mubr.bf16.mxu0 %v1729
  %10201 = vmatmul.mubr.bf16.gmra.mrb[0].mxu0 %v1728
  %v10202 = vpop.f32.mrb[0].mxu0
  %v10203 = vadd.f32 %v10162, %v10202
  %v10204 = vpop.f32.mrb[0].mxu0
  %v10205 = vadd.f32 %v10164, %v10204
  %v10206 = vpop.f32.mrb[0].mxu0
  %v10207 = vpop.f32.mrb[0].mxu0
  %10208 = vdwg.mxu0
  %10209 = vmatprep.subr.bf16.mxu0 %v7967
  %10210 = vmatpush1.bf16.msra.mxu0 %v7966
  %10211 = vmatprep.subr.bf16.mxu0 %v7975
  %10212 = vmatpush1.bf16.msra.mxu0 %v7974
  %10213 = vmatprep.subr.bf16.mxu0 %v7983
  %10214 = vmatpush1.bf16.msra.mxu0 %v7982
  %10215 = vmatprep.subr.bf16.mxu0 %v7991
  %10216 = vmatpush1.bf16.msra.mxu0 %v7990
  %10217 = vmatprep.subr.bf16.mxu0 %v7999
  %10218 = vmatpush1.bf16.msra.mxu0 %v7998
  %10219 = vmatprep.subr.bf16.mxu0 %v8007
  %10220 = vmatpush1.bf16.msra.mxu0 %v8006
  %10221 = vmatprep.subr.bf16.mxu0 %v8015
  %10222 = vmatpush1.bf16.msra.mxu0 %v8014
  %10223 = vmatprep.subr.bf16.mxu0 %v8023
  %10224 = vmatpush1.bf16.msra.mxu0 %v8022
  %10225 = vmatprep.subr.bf16.mxu0 %v8031
  %10226 = vmatpush1.bf16.msra.mxu0 %v8030
  %10227 = vmatprep.subr.bf16.mxu0 %v8039
  %10228 = vmatpush1.bf16.msra.mxu0 %v8038
  %10229 = vmatprep.subr.bf16.mxu0 %v8047
  %10230 = vmatpush1.bf16.msra.mxu0 %v8046
  %10231 = vmatprep.subr.bf16.mxu0 %v8055
  %10232 = vmatpush1.bf16.msra.mxu0 %v8054
  %10233 = vmatprep.subr.bf16.mxu0 %v8063
  %10234 = vmatpush1.bf16.msra.mxu0 %v8062
  %10235 = vmatprep.subr.bf16.mxu0 %v8071
  %10236 = vmatpush1.bf16.msra.mxu0 %v8070
  %10237 = vmatprep.subr.bf16.mxu0 %v8079
  %10238 = vmatpush1.bf16.msra.mxu0 %v8078
  %10239 = vmatprep.subr.bf16.mxu0 %v8087
  %10240 = vmatpush1.bf16.msra.mxu0 %v8086
  %10241 = vmatprep.mubr.bf16.mxu0 %v1731
  %10242 = vmatmul.mubr.bf16.gmra.mrb[0].mxu0 %v1730
  %v10243 = vpop.f32.mrb[0].mxu0
  %v10244 = vadd.f32 %v10203, %v10243
  %v10245 = vpop.f32.mrb[0].mxu0
  %v10246 = vadd.f32 %v10205, %v10245
  %v10247 = vpop.f32.mrb[0].mxu0
  %v10248 = vpop.f32.mrb[0].mxu0
  %10249 = vdwg.mxu0
  %10250 = vmatprep.subr.bf16.mxu0 %v8095
  %10251 = vmatpush1.bf16.msra.mxu0 %v8094
  %10252 = vmatprep.subr.bf16.mxu0 %v8103
  %10253 = vmatpush1.bf16.msra.mxu0 %v8102
  %10254 = vmatprep.subr.bf16.mxu0 %v8111
  %10255 = vmatpush1.bf16.msra.mxu0 %v8110
  %10256 = vmatprep.subr.bf16.mxu0 %v8119
  %10257 = vmatpush1.bf16.msra.mxu0 %v8118
  %10258 = vmatprep.subr.bf16.mxu0 %v8127
  %10259 = vmatpush1.bf16.msra.mxu0 %v8126
  %10260 = vmatprep.subr.bf16.mxu0 %v8135
  %10261 = vmatpush1.bf16.msra.mxu0 %v8134
  %10262 = vmatprep.subr.bf16.mxu0 %v8143
  %10263 = vmatpush1.bf16.msra.mxu0 %v8142
  %10264 = vmatprep.subr.bf16.mxu0 %v8151
  %10265 = vmatpush1.bf16.msra.mxu0 %v8150
  %10266 = vmatprep.subr.bf16.mxu0 0
  %10267 = vmatpush1.bf16.msra.mxu0 0
  %10268 = vmatprep.subr.bf16.mxu0 0
  %10269 = vmatpush1.bf16.msra.mxu0 0
  %10270 = vmatprep.subr.bf16.mxu0 0
  %10271 = vmatpush1.bf16.msra.mxu0 0
  %10272 = vmatprep.subr.bf16.mxu0 0
  %10273 = vmatpush1.bf16.msra.mxu0 0
  %10274 = vmatprep.subr.bf16.mxu0 0
  %10275 = vmatpush1.bf16.msra.mxu0 0
  %10276 = vmatprep.subr.bf16.mxu0 0
  %10277 = vmatpush1.bf16.msra.mxu0 0
  %10278 = vmatprep.subr.bf16.mxu0 0
  %10279 = vmatpush1.bf16.msra.mxu0 0
  %10280 = vmatprep.subr.bf16.mxu0 0
  %10281 = vmatpush1.bf16.msra.mxu0 0
  %10282 = vmatprep.mubr.bf16.mxu0 0
  %10283 = vmatmul.mubr.bf16.gmra.mrb[0].mxu0 %v1732
  %v10284 = vpop.f32.mrb[0].mxu0
  %v10285 = vadd.f32 %v10244, %v10284
  %v10286 = vpop.f32.mrb[0].mxu0
  %v10287 = vadd.f32 %v10246, %v10286
  %v10288 = vpop.f32.mrb[0].mxu0
  %v10289 = vpop.f32.mrb[0].mxu0
  %10290 = vdwg.mxu0
  %10291 = vmatprep.subr.bf16.mxu0 %v6561
  %10292 = vmatpush1.bf16.msra.mxu0 %v6560
  %10293 = vmatprep.subr.bf16.mxu0 %v6569
  %10294 = vmatpush1.bf16.msra.mxu0 %v6568
  %10295 = vmatprep.subr.bf16.mxu0 %v6577
  %10296 = vmatpush1.bf16.msra.mxu0 %v6576
  %10297 = vmatprep.subr.bf16.mxu0 %v6585
  %10298 = vmatpush1.bf16.msra.mxu0 %v6584
  %10299 = vmatprep.subr.bf16.mxu0 %v6593
  %10300 = vmatpush1.bf16.msra.mxu0 %v6592
  %10301 = vmatprep.subr.bf16.mxu0 %v6601
  %10302 = vmatpush1.bf16.msra.mxu0 %v6600
  %10303 = vmatprep.subr.bf16.mxu0 %v6609
  %10304 = vmatpush1.bf16.msra.mxu0 %v6608
  %10305 = vmatprep.subr.bf16.mxu0 %v6617
  %10306 = vmatpush1.bf16.msra.mxu0 %v6616
  %10307 = vmatprep.subr.bf16.mxu0 %v6625
  %10308 = vmatpush1.bf16.msra.mxu0 %v6624
  %10309 = vmatprep.subr.bf16.mxu0 %v6633
  %10310 = vmatpush1.bf16.msra.mxu0 %v6632
  %10311 = vmatprep.subr.bf16.mxu0 %v6641
  %10312 = vmatpush1.bf16.msra.mxu0 %v6640
  %10313 = vmatprep.subr.bf16.mxu0 %v6649
  %10314 = vmatpush1.bf16.msra.mxu0 %v6648
  %10315 = vmatprep.subr.bf16.mxu0 %v6657
  %10316 = vmatpush1.bf16.msra.mxu0 %v6656
  %10317 = vmatprep.subr.bf16.mxu0 %v6665
  %10318 = vmatpush1.bf16.msra.mxu0 %v6664
  %10319 = vmatprep.subr.bf16.mxu0 %v6673
  %10320 = vmatpush1.bf16.msra.mxu0 %v6672
  %10321 = vmatprep.subr.bf16.mxu0 %v6681
  %10322 = vmatpush1.bf16.msra.mxu0 %v6680
  %10323 = vmatprep.mubr.bf16.mxu0 %v1709
  %10324 = vmatmul.mubr.bf16.gmra.mrb[0].mxu0 %v1708
  %v10325 = vpop.f32.mrb[0].mxu0
  %v10326 = vadd.f32 %v1641, %v10325
  %v10327 = vpop.f32.mrb[0].mxu0
  %v10328 = vadd.f32 %v1645, %v10327
  %v10329 = vpop.f32.mrb[0].mxu0
  %v10330 = vpop.f32.mrb[0].mxu0
  %10331 = vdwg.mxu0
  %10332 = vmatprep.subr.bf16.mxu0 %v6689
  %10333 = vmatpush1.bf16.msra.mxu0 %v6688
  %10334 = vmatprep.subr.bf16.mxu0 %v6697
  %10335 = vmatpush1.bf16.msra.mxu0 %v6696
  %10336 = vmatprep.subr.bf16.mxu0 %v6705
  %10337 = vmatpush1.bf16.msra.mxu0 %v6704
  %10338 = vmatprep.subr.bf16.mxu0 %v6713
  %10339 = vmatpush1.bf16.msra.mxu0 %v6712
  %10340 = vmatprep.subr.bf16.mxu0 %v6721
  %10341 = vmatpush1.bf16.msra.mxu0 %v6720
  %10342 = vmatprep.subr.bf16.mxu0 %v6729
  %10343 = vmatpush1.bf16.msra.mxu0 %v6728
  %10344 = vmatprep.subr.bf16.mxu0 %v6737
  %10345 = vmatpush1.bf16.msra.mxu0 %v6736
  %10346 = vmatprep.subr.bf16.mxu0 %v6745
  %10347 = vmatpush1.bf16.msra.mxu0 %v6744
  %10348 = vmatprep.subr.bf16.mxu0 %v6753
  %10349 = vmatpush1.bf16.msra.mxu0 %v6752
  %10350 = vmatprep.subr.bf16.mxu0 %v6761
  %10351 = vmatpush1.bf16.msra.mxu0 %v6760
  %10352 = vmatprep.subr.bf16.mxu0 %v6769
  %10353 = vmatpush1.bf16.msra.mxu0 %v6768
  %10354 = vmatprep.subr.bf16.mxu0 %v6777
  %10355 = vmatpush1.bf16.msra.mxu0 %v6776
  %10356 = vmatprep.subr.bf16.mxu0 %v6785
  %10357 = vmatpush1.bf16.msra.mxu0 %v6784
  %10358 = vmatprep.subr.bf16.mxu0 %v6793
  %10359 = vmatpush1.bf16.msra.mxu0 %v6792
  %10360 = vmatprep.subr.bf16.mxu0 %v6801
  %10361 = vmatpush1.bf16.msra.mxu0 %v6800
  %10362 = vmatprep.subr.bf16.mxu0 %v6809
  %10363 = vmatpush1.bf16.msra.mxu0 %v6808
  %10364 = vmatprep.mubr.bf16.mxu0 %v1711
  %10365 = vmatmul.mubr.bf16.gmra.mrb[0].mxu0 %v1710
  %v10366 = vpop.f32.mrb[0].mxu0
  %v10367 = vadd.f32 %v10326, %v10366
  %v10368 = vpop.f32.mrb[0].mxu0
  %v10369 = vadd.f32 %v10328, %v10368
  %v10370 = vpop.f32.mrb[0].mxu0
  %v10371 = vpop.f32.mrb[0].mxu0
  %10372 = vdwg.mxu0
  %10373 = vmatprep.subr.bf16.mxu0 %v6817
  %10374 = vmatpush1.bf16.msra.mxu0 %v6816
  %10375 = vmatprep.subr.bf16.mxu0 %v6825
  %10376 = vmatpush1.bf16.msra.mxu0 %v6824
  %10377 = vmatprep.subr.bf16.mxu0 %v6833
  %10378 = vmatpush1.bf16.msra.mxu0 %v6832
  %10379 = vmatprep.subr.bf16.mxu0 %v6841
  %10380 = vmatpush1.bf16.msra.mxu0 %v6840
  %10381 = vmatprep.subr.bf16.mxu0 %v6849
  %10382 = vmatpush1.bf16.msra.mxu0 %v6848
  %10383 = vmatprep.subr.bf16.mxu0 %v6857
  %10384 = vmatpush1.bf16.msra.mxu0 %v6856
  %10385 = vmatprep.subr.bf16.mxu0 %v6865
  %10386 = vmatpush1.bf16.msra.mxu0 %v6864
  %10387 = vmatprep.subr.bf16.mxu0 %v6873
  %10388 = vmatpush1.bf16.msra.mxu0 %v6872
  %10389 = vmatprep.subr.bf16.mxu0 %v6881
  %10390 = vmatpush1.bf16.msra.mxu0 %v6880
  %10391 = vmatprep.subr.bf16.mxu0 %v6889
  %10392 = vmatpush1.bf16.msra.mxu0 %v6888
  %10393 = vmatprep.subr.bf16.mxu0 %v6897
  %10394 = vmatpush1.bf16.msra.mxu0 %v6896
  %10395 = vmatprep.subr.bf16.mxu0 %v6905
  %10396 = vmatpush1.bf16.msra.mxu0 %v6904
  %10397 = vmatprep.subr.bf16.mxu0 %v6913
  %10398 = vmatpush1.bf16.msra.mxu0 %v6912
  %10399 = vmatprep.subr.bf16.mxu0 %v6921
  %10400 = vmatpush1.bf16.msra.mxu0 %v6920
  %10401 = vmatprep.subr.bf16.mxu0 %v6929
  %10402 = vmatpush1.bf16.msra.mxu0 %v6928
  %10403 = vmatprep.subr.bf16.mxu0 %v6937
  %10404 = vmatpush1.bf16.msra.mxu0 %v6936
  %10405 = vmatprep.mubr.bf16.mxu0 %v1713
  %10406 = vmatmul.mubr.bf16.gmra.mrb[0].mxu0 %v1712
  %v10407 = vpop.f32.mrb[0].mxu0
  %v10408 = vadd.f32 %v10367, %v10407
  %v10409 = vpop.f32.mrb[0].mxu0
  %v10410 = vadd.f32 %v10369, %v10409
  %v10411 = vpop.f32.mrb[0].mxu0
  %v10412 = vpop.f32.mrb[0].mxu0
  %10413 = vdwg.mxu0
  %10414 = vmatprep.subr.bf16.mxu0 %v6945
  %10415 = vmatpush1.bf16.msra.mxu0 %v6944
  %10416 = vmatprep.subr.bf16.mxu0 %v6953
  %10417 = vmatpush1.bf16.msra.mxu0 %v6952
  %10418 = vmatprep.subr.bf16.mxu0 %v6961
  %10419 = vmatpush1.bf16.msra.mxu0 %v6960
  %10420 = vmatprep.subr.bf16.mxu0 %v6969
  %10421 = vmatpush1.bf16.msra.mxu0 %v6968
  %10422 = vmatprep.subr.bf16.mxu0 %v6977
  %10423 = vmatpush1.bf16.msra.mxu0 %v6976
  %10424 = vmatprep.subr.bf16.mxu0 %v6985
  %10425 = vmatpush1.bf16.msra.mxu0 %v6984
  %10426 = vmatprep.subr.bf16.mxu0 %v6993
  %10427 = vmatpush1.bf16.msra.mxu0 %v6992
  %10428 = vmatprep.subr.bf16.mxu0 %v7001
  %10429 = vmatpush1.bf16.msra.mxu0 %v7000
  %10430 = vmatprep.subr.bf16.mxu0 %v7009
  %10431 = vmatpush1.bf16.msra.mxu0 %v7008
  %10432 = vmatprep.subr.bf16.mxu0 %v7017
  %10433 = vmatpush1.bf16.msra.mxu0 %v7016
  %10434 = vmatprep.subr.bf16.mxu0 %v7025
  %10435 = vmatpush1.bf16.msra.mxu0 %v7024
  %10436 = vmatprep.subr.bf16.mxu0 %v7033
  %10437 = vmatpush1.bf16.msra.mxu0 %v7032
  %10438 = vmatprep.subr.bf16.mxu0 %v7041
  %10439 = vmatpush1.bf16.msra.mxu0 %v7040
  %10440 = vmatprep.subr.bf16.mxu0 %v7049
  %10441 = vmatpush1.bf16.msra.mxu0 %v7048
  %10442 = vmatprep.subr.bf16.mxu0 %v7057
  %10443 = vmatpush1.bf16.msra.mxu0 %v7056
  %10444 = vmatprep.subr.bf16.mxu0 %v7065
  %10445 = vmatpush1.bf16.msra.mxu0 %v7064
  %10446 = vmatprep.mubr.bf16.mxu0 %v1715
  %10447 = vmatmul.mubr.bf16.gmra.mrb[0].mxu0 %v1714
  %v10448 = vpop.f32.mrb[0].mxu0
  %v10449 = vadd.f32 %v10408, %v10448
  %v10450 = vpop.f32.mrb[0].mxu0
  %v10451 = vadd.f32 %v10410, %v10450
  %v10452 = vpop.f32.mrb[0].mxu0
  %v10453 = vpop.f32.mrb[0].mxu0
  %10454 = vdwg.mxu0
  %10455 = vmatprep.subr.bf16.mxu0 %v7073
  %10456 = vmatpush1.bf16.msra.mxu0 %v7072
  %10457 = vmatprep.subr.bf16.mxu0 %v7081
  %10458 = vmatpush1.bf16.msra.mxu0 %v7080
  %10459 = vmatprep.subr.bf16.mxu0 %v7089
  %10460 = vmatpush1.bf16.msra.mxu0 %v7088
  %10461 = vmatprep.subr.bf16.mxu0 %v7097
  %10462 = vmatpush1.bf16.msra.mxu0 %v7096
  %10463 = vmatprep.subr.bf16.mxu0 %v7105
  %10464 = vmatpush1.bf16.msra.mxu0 %v7104
  %10465 = vmatprep.subr.bf16.mxu0 %v7113
  %10466 = vmatpush1.bf16.msra.mxu0 %v7112
  %10467 = vmatprep.subr.bf16.mxu0 %v7121
  %10468 = vmatpush1.bf16.msra.mxu0 %v7120
  %10469 = vmatprep.subr.bf16.mxu0 %v7129
  %10470 = vmatpush1.bf16.msra.mxu0 %v7128
  %10471 = vmatprep.subr.bf16.mxu0 %v7137
  %10472 = vmatpush1.bf16.msra.mxu0 %v7136
  %10473 = vmatprep.subr.bf16.mxu0 %v7145
  %10474 = vmatpush1.bf16.msra.mxu0 %v7144
  %10475 = vmatprep.subr.bf16.mxu0 %v7153
  %10476 = vmatpush1.bf16.msra.mxu0 %v7152
  %10477 = vmatprep.subr.bf16.mxu0 %v7161
  %10478 = vmatpush1.bf16.msra.mxu0 %v7160
  %10479 = vmatprep.subr.bf16.mxu0 %v7169
  %10480 = vmatpush1.bf16.msra.mxu0 %v7168
  %10481 = vmatprep.subr.bf16.mxu0 %v7177
  %10482 = vmatpush1.bf16.msra.mxu0 %v7176
  %10483 = vmatprep.subr.bf16.mxu0 %v7185
  %10484 = vmatpush1.bf16.msra.mxu0 %v7184
  %10485 = vmatprep.subr.bf16.mxu0 %v7193
  %10486 = vmatpush1.bf16.msra.mxu0 %v7192
  %10487 = vmatprep.mubr.bf16.mxu0 %v1717
  %10488 = vmatmul.mubr.bf16.gmra.mrb[0].mxu0 %v1716
  %v10489 = vpop.f32.mrb[0].mxu0
  %v10490 = vadd.f32 %v10449, %v10489
  %v10491 = vpop.f32.mrb[0].mxu0
  %v10492 = vadd.f32 %v10451, %v10491
  %v10493 = vpop.f32.mrb[0].mxu0
  %v10494 = vpop.f32.mrb[0].mxu0
  %10495 = vdwg.mxu0
  %10496 = vmatprep.subr.bf16.mxu0 %v7201
  %10497 = vmatpush1.bf16.msra.mxu0 %v7200
  %10498 = vmatprep.subr.bf16.mxu0 %v7209
  %10499 = vmatpush1.bf16.msra.mxu0 %v7208
  %10500 = vmatprep.subr.bf16.mxu0 %v7217
  %10501 = vmatpush1.bf16.msra.mxu0 %v7216
  %10502 = vmatprep.subr.bf16.mxu0 %v7225
  %10503 = vmatpush1.bf16.msra.mxu0 %v7224
  %10504 = vmatprep.subr.bf16.mxu0 %v7233
  %10505 = vmatpush1.bf16.msra.mxu0 %v7232
  %10506 = vmatprep.subr.bf16.mxu0 %v7241
  %10507 = vmatpush1.bf16.msra.mxu0 %v7240
  %10508 = vmatprep.subr.bf16.mxu0 %v7249
  %10509 = vmatpush1.bf16.msra.mxu0 %v7248
  %10510 = vmatprep.subr.bf16.mxu0 %v7257
  %10511 = vmatpush1.bf16.msra.mxu0 %v7256
  %10512 = vmatprep.subr.bf16.mxu0 %v7265
  %10513 = vmatpush1.bf16.msra.mxu0 %v7264
  %10514 = vmatprep.subr.bf16.mxu0 %v7273
  %10515 = vmatpush1.bf16.msra.mxu0 %v7272
  %10516 = vmatprep.subr.bf16.mxu0 %v7281
  %10517 = vmatpush1.bf16.msra.mxu0 %v7280
  %10518 = vmatprep.subr.bf16.mxu0 %v7289
  %10519 = vmatpush1.bf16.msra.mxu0 %v7288
  %10520 = vmatprep.subr.bf16.mxu0 %v7297
  %10521 = vmatpush1.bf16.msra.mxu0 %v7296
  %10522 = vmatprep.subr.bf16.mxu0 %v7305
  %10523 = vmatpush1.bf16.msra.mxu0 %v7304
  %10524 = vmatprep.subr.bf16.mxu0 %v7313
  %10525 = vmatpush1.bf16.msra.mxu0 %v7312
  %10526 = vmatprep.subr.bf16.mxu0 %v7321
  %10527 = vmatpush1.bf16.msra.mxu0 %v7320
  %10528 = vmatprep.mubr.bf16.mxu0 %v1719
  %10529 = vmatmul.mubr.bf16.gmra.mrb[0].mxu0 %v1718
  %v10530 = vpop.f32.mrb[0].mxu0
  %v10531 = vadd.f32 %v10490, %v10530
  %v10532 = vpop.f32.mrb[0].mxu0
  %v10533 = vadd.f32 %v10492, %v10532
  %v10534 = vpop.f32.mrb[0].mxu0
  %v10535 = vpop.f32.mrb[0].mxu0
  %10536 = vdwg.mxu0
  %10537 = vmatprep.subr.bf16.mxu0 %v7329
  %10538 = vmatpush1.bf16.msra.mxu0 %v7328
  %10539 = vmatprep.subr.bf16.mxu0 %v7337
  %10540 = vmatpush1.bf16.msra.mxu0 %v7336
  %10541 = vmatprep.subr.bf16.mxu0 %v7345
  %10542 = vmatpush1.bf16.msra.mxu0 %v7344
  %10543 = vmatprep.subr.bf16.mxu0 %v7353
  %10544 = vmatpush1.bf16.msra.mxu0 %v7352
  %10545 = vmatprep.subr.bf16.mxu0 %v7361
  %10546 = vmatpush1.bf16.msra.mxu0 %v7360
  %10547 = vmatprep.subr.bf16.mxu0 %v7369
  %10548 = vmatpush1.bf16.msra.mxu0 %v7368
  %10549 = vmatprep.subr.bf16.mxu0 %v7377
  %10550 = vmatpush1.bf16.msra.mxu0 %v7376
  %10551 = vmatprep.subr.bf16.mxu0 %v7385
  %10552 = vmatpush1.bf16.msra.mxu0 %v7384
  %10553 = vmatprep.subr.bf16.mxu0 %v7393
  %10554 = vmatpush1.bf16.msra.mxu0 %v7392
  %10555 = vmatprep.subr.bf16.mxu0 %v7401
  %10556 = vmatpush1.bf16.msra.mxu0 %v7400
  %10557 = vmatprep.subr.bf16.mxu0 %v7409
  %10558 = vmatpush1.bf16.msra.mxu0 %v7408
  %10559 = vmatprep.subr.bf16.mxu0 %v7417
  %10560 = vmatpush1.bf16.msra.mxu0 %v7416
  %10561 = vmatprep.subr.bf16.mxu0 %v7425
  %10562 = vmatpush1.bf16.msra.mxu0 %v7424
  %10563 = vmatprep.subr.bf16.mxu0 %v7433
  %10564 = vmatpush1.bf16.msra.mxu0 %v7432
  %10565 = vmatprep.subr.bf16.mxu0 %v7441
  %10566 = vmatpush1.bf16.msra.mxu0 %v7440
  %10567 = vmatprep.subr.bf16.mxu0 %v7449
  %10568 = vmatpush1.bf16.msra.mxu0 %v7448
  %10569 = vmatprep.mubr.bf16.mxu0 %v1721
  %10570 = vmatmul.mubr.bf16.gmra.mrb[0].mxu0 %v1720
  %v10571 = vpop.f32.mrb[0].mxu0
  %v10572 = vadd.f32 %v10531, %v10571
  %v10573 = vpop.f32.mrb[0].mxu0
  %v10574 = vadd.f32 %v10533, %v10573
  %v10575 = vpop.f32.mrb[0].mxu0
  %v10576 = vpop.f32.mrb[0].mxu0
  %10577 = vdwg.mxu0
  %10578 = vmatprep.subr.bf16.mxu0 %v7457
  %10579 = vmatpush1.bf16.msra.mxu0 %v7456
  %10580 = vmatprep.subr.bf16.mxu0 %v7465
  %10581 = vmatpush1.bf16.msra.mxu0 %v7464
  %10582 = vmatprep.subr.bf16.mxu0 %v7473
  %10583 = vmatpush1.bf16.msra.mxu0 %v7472
  %10584 = vmatprep.subr.bf16.mxu0 %v7481
  %10585 = vmatpush1.bf16.msra.mxu0 %v7480
  %10586 = vmatprep.subr.bf16.mxu0 %v7489
  %10587 = vmatpush1.bf16.msra.mxu0 %v7488
  %10588 = vmatprep.subr.bf16.mxu0 %v7497
  %10589 = vmatpush1.bf16.msra.mxu0 %v7496
  %10590 = vmatprep.subr.bf16.mxu0 %v7505
  %10591 = vmatpush1.bf16.msra.mxu0 %v7504
  %10592 = vmatprep.subr.bf16.mxu0 %v7513
  %10593 = vmatpush1.bf16.msra.mxu0 %v7512
  %10594 = vmatprep.subr.bf16.mxu0 %v7521
  %10595 = vmatpush1.bf16.msra.mxu0 %v7520
  %10596 = vmatprep.subr.bf16.mxu0 %v7529
  %10597 = vmatpush1.bf16.msra.mxu0 %v7528
  %10598 = vmatprep.subr.bf16.mxu0 %v7537
  %10599 = vmatpush1.bf16.msra.mxu0 %v7536
  %10600 = vmatprep.subr.bf16.mxu0 %v7545
  %10601 = vmatpush1.bf16.msra.mxu0 %v7544
  %10602 = vmatprep.subr.bf16.mxu0 %v7553
  %10603 = vmatpush1.bf16.msra.mxu0 %v7552
  %10604 = vmatprep.subr.bf16.mxu0 %v7561
  %10605 = vmatpush1.bf16.msra.mxu0 %v7560
  %10606 = vmatprep.subr.bf16.mxu0 %v7569
  %10607 = vmatpush1.bf16.msra.mxu0 %v7568
  %10608 = vmatprep.subr.bf16.mxu0 %v7577
  %10609 = vmatpush1.bf16.msra.mxu0 %v7576
  %10610 = vmatprep.mubr.bf16.mxu0 %v1723
  %10611 = vmatmul.mubr.bf16.gmra.mrb[0].mxu0 %v1722
  %v10612 = vpop.f32.mrb[0].mxu0
  %v10613 = vadd.f32 %v10572, %v10612
  %v10614 = vpop.f32.mrb[0].mxu0
  %v10615 = vadd.f32 %v10574, %v10614
  %v10616 = vpop.f32.mrb[0].mxu0
  %v10617 = vpop.f32.mrb[0].mxu0
  %10618 = vdwg.mxu0
  %10619 = vmatprep.subr.bf16.mxu0 %v7585
  %10620 = vmatpush1.bf16.msra.mxu0 %v7584
  %10621 = vmatprep.subr.bf16.mxu0 %v7593
  %10622 = vmatpush1.bf16.msra.mxu0 %v7592
  %10623 = vmatprep.subr.bf16.mxu0 %v7601
  %10624 = vmatpush1.bf16.msra.mxu0 %v7600
  %10625 = vmatprep.subr.bf16.mxu0 %v7609
  %10626 = vmatpush1.bf16.msra.mxu0 %v7608
  %10627 = vmatprep.subr.bf16.mxu0 %v7617
  %10628 = vmatpush1.bf16.msra.mxu0 %v7616
  %10629 = vmatprep.subr.bf16.mxu0 %v7625
  %10630 = vmatpush1.bf16.msra.mxu0 %v7624
  %10631 = vmatprep.subr.bf16.mxu0 %v7633
  %10632 = vmatpush1.bf16.msra.mxu0 %v7632
  %10633 = vmatprep.subr.bf16.mxu0 %v7641
  %10634 = vmatpush1.bf16.msra.mxu0 %v7640
  %10635 = vmatprep.subr.bf16.mxu0 %v7649
  %10636 = vmatpush1.bf16.msra.mxu0 %v7648
  %10637 = vmatprep.subr.bf16.mxu0 %v7657
  %10638 = vmatpush1.bf16.msra.mxu0 %v7656
  %10639 = vmatprep.subr.bf16.mxu0 %v7665
  %10640 = vmatpush1.bf16.msra.mxu0 %v7664
  %10641 = vmatprep.subr.bf16.mxu0 %v7673
  %10642 = vmatpush1.bf16.msra.mxu0 %v7672
  %10643 = vmatprep.subr.bf16.mxu0 %v7681
  %10644 = vmatpush1.bf16.msra.mxu0 %v7680
  %10645 = vmatprep.subr.bf16.mxu0 %v7689
  %10646 = vmatpush1.bf16.msra.mxu0 %v7688
  %10647 = vmatprep.subr.bf16.mxu0 %v7697
  %10648 = vmatpush1.bf16.msra.mxu0 %v7696
  %10649 = vmatprep.subr.bf16.mxu0 %v7705
  %10650 = vmatpush1.bf16.msra.mxu0 %v7704
  %10651 = vmatprep.mubr.bf16.mxu0 %v1725
  %10652 = vmatmul.mubr.bf16.gmra.mrb[0].mxu0 %v1724
  %v10653 = vpop.f32.mrb[0].mxu0
  %v10654 = vadd.f32 %v10613, %v10653
  %v10655 = vpop.f32.mrb[0].mxu0
  %v10656 = vadd.f32 %v10615, %v10655
  %v10657 = vpop.f32.mrb[0].mxu0
  %v10658 = vpop.f32.mrb[0].mxu0
  %10659 = vdwg.mxu0
  %10660 = vmatprep.subr.bf16.mxu0 %v7713
  %10661 = vmatpush1.bf16.msra.mxu0 %v7712
  %10662 = vmatprep.subr.bf16.mxu0 %v7721
  %10663 = vmatpush1.bf16.msra.mxu0 %v7720
  %10664 = vmatprep.subr.bf16.mxu0 %v7729
  %10665 = vmatpush1.bf16.msra.mxu0 %v7728
  %10666 = vmatprep.subr.bf16.mxu0 %v7737
  %10667 = vmatpush1.bf16.msra.mxu0 %v7736
  %10668 = vmatprep.subr.bf16.mxu0 %v7745
  %10669 = vmatpush1.bf16.msra.mxu0 %v7744
  %10670 = vmatprep.subr.bf16.mxu0 %v7753
  %10671 = vmatpush1.bf16.msra.mxu0 %v7752
  %10672 = vmatprep.subr.bf16.mxu0 %v7761
  %10673 = vmatpush1.bf16.msra.mxu0 %v7760
  %10674 = vmatprep.subr.bf16.mxu0 %v7769
  %10675 = vmatpush1.bf16.msra.mxu0 %v7768
  %10676 = vmatprep.subr.bf16.mxu0 %v7777
  %10677 = vmatpush1.bf16.msra.mxu0 %v7776
  %10678 = vmatprep.subr.bf16.mxu0 %v7785
  %10679 = vmatpush1.bf16.msra.mxu0 %v7784
  %10680 = vmatprep.subr.bf16.mxu0 %v7793
  %10681 = vmatpush1.bf16.msra.mxu0 %v7792
  %10682 = vmatprep.subr.bf16.mxu0 %v7801
  %10683 = vmatpush1.bf16.msra.mxu0 %v7800
  %10684 = vmatprep.subr.bf16.mxu0 %v7809
  %10685 = vmatpush1.bf16.msra.mxu0 %v7808
  %10686 = vmatprep.subr.bf16.mxu0 %v7817
  %10687 = vmatpush1.bf16.msra.mxu0 %v7816
  %10688 = vmatprep.subr.bf16.mxu0 %v7825
  %10689 = vmatpush1.bf16.msra.mxu0 %v7824
  %10690 = vmatprep.subr.bf16.mxu0 %v7833
  %10691 = vmatpush1.bf16.msra.mxu0 %v7832
  %10692 = vmatprep.mubr.bf16.mxu0 %v1727
  %10693 = vmatmul.mubr.bf16.gmra.mrb[0].mxu0 %v1726
  %v10694 = vpop.f32.mrb[0].mxu0
  %v10695 = vadd.f32 %v10654, %v10694
  %v10696 = vpop.f32.mrb[0].mxu0
  %v10697 = vadd.f32 %v10656, %v10696
  %v10698 = vpop.f32.mrb[0].mxu0
  %v10699 = vpop.f32.mrb[0].mxu0
  %10700 = vdwg.mxu0
  %10701 = vmatprep.subr.bf16.mxu0 %v7841
  %10702 = vmatpush1.bf16.msra.mxu0 %v7840
  %10703 = vmatprep.subr.bf16.mxu0 %v7849
  %10704 = vmatpush1.bf16.msra.mxu0 %v7848
  %10705 = vmatprep.subr.bf16.mxu0 %v7857
  %10706 = vmatpush1.bf16.msra.mxu0 %v7856
  %10707 = vmatprep.subr.bf16.mxu0 %v7865
  %10708 = vmatpush1.bf16.msra.mxu0 %v7864
  %10709 = vmatprep.subr.bf16.mxu0 %v7873
  %10710 = vmatpush1.bf16.msra.mxu0 %v7872
  %10711 = vmatprep.subr.bf16.mxu0 %v7881
  %10712 = vmatpush1.bf16.msra.mxu0 %v7880
  %10713 = vmatprep.subr.bf16.mxu0 %v7889
  %10714 = vmatpush1.bf16.msra.mxu0 %v7888
  %10715 = vmatprep.subr.bf16.mxu0 %v7897
  %10716 = vmatpush1.bf16.msra.mxu0 %v7896
  %10717 = vmatprep.subr.bf16.mxu0 %v7905
  %10718 = vmatpush1.bf16.msra.mxu0 %v7904
  %10719 = vmatprep.subr.bf16.mxu0 %v7913
  %10720 = vmatpush1.bf16.msra.mxu0 %v7912
  %10721 = vmatprep.subr.bf16.mxu0 %v7921
  %10722 = vmatpush1.bf16.msra.mxu0 %v7920
  %10723 = vmatprep.subr.bf16.mxu0 %v7929
  %10724 = vmatpush1.bf16.msra.mxu0 %v7928
  %10725 = vmatprep.subr.bf16.mxu0 %v7937
  %10726 = vmatpush1.bf16.msra.mxu0 %v7936
  %10727 = vmatprep.subr.bf16.mxu0 %v7945
  %10728 = vmatpush1.bf16.msra.mxu0 %v7944
  %10729 = vmatprep.subr.bf16.mxu0 %v7953
  %10730 = vmatpush1.bf16.msra.mxu0 %v7952
  %10731 = vmatprep.subr.bf16.mxu0 %v7961
  %10732 = vmatpush1.bf16.msra.mxu0 %v7960
  %10733 = vmatprep.mubr.bf16.mxu0 %v1729
  %10734 = vmatmul.mubr.bf16.gmra.mrb[0].mxu0 %v1728
  %v10735 = vpop.f32.mrb[0].mxu0
  %v10736 = vadd.f32 %v10695, %v10735
  %v10737 = vpop.f32.mrb[0].mxu0
  %v10738 = vadd.f32 %v10697, %v10737
  %v10739 = vpop.f32.mrb[0].mxu0
  %v10740 = vpop.f32.mrb[0].mxu0
  %10741 = vdwg.mxu0
  %10742 = vmatprep.subr.bf16.mxu0 %v7969
  %10743 = vmatpush1.bf16.msra.mxu0 %v7968
  %10744 = vmatprep.subr.bf16.mxu0 %v7977
  %10745 = vmatpush1.bf16.msra.mxu0 %v7976
  %10746 = vmatprep.subr.bf16.mxu0 %v7985
  %10747 = vmatpush1.bf16.msra.mxu0 %v7984
  %10748 = vmatprep.subr.bf16.mxu0 %v7993
  %10749 = vmatpush1.bf16.msra.mxu0 %v7992
  %10750 = vmatprep.subr.bf16.mxu0 %v8001
  %10751 = vmatpush1.bf16.msra.mxu0 %v8000
  %10752 = vmatprep.subr.bf16.mxu0 %v8009
  %10753 = vmatpush1.bf16.msra.mxu0 %v8008
  %10754 = vmatprep.subr.bf16.mxu0 %v8017
  %10755 = vmatpush1.bf16.msra.mxu0 %v8016
  %10756 = vmatprep.subr.bf16.mxu0 %v8025
  %10757 = vmatpush1.bf16.msra.mxu0 %v8024
  %10758 = vmatprep.subr.bf16.mxu0 %v8033
  %10759 = vmatpush1.bf16.msra.mxu0 %v8032
  %10760 = vmatprep.subr.bf16.mxu0 %v8041
  %10761 = vmatpush1.bf16.msra.mxu0 %v8040
  %10762 = vmatprep.subr.bf16.mxu0 %v8049
  %10763 = vmatpush1.bf16.msra.mxu0 %v8048
  %10764 = vmatprep.subr.bf16.mxu0 %v8057
  %10765 = vmatpush1.bf16.msra.mxu0 %v8056
  %10766 = vmatprep.subr.bf16.mxu0 %v8065
  %10767 = vmatpush1.bf16.msra.mxu0 %v8064
  %10768 = vmatprep.subr.bf16.mxu0 %v8073
  %10769 = vmatpush1.bf16.msra.mxu0 %v8072
  %10770 = vmatprep.subr.bf16.mxu0 %v8081
  %10771 = vmatpush1.bf16.msra.mxu0 %v8080
  %10772 = vmatprep.subr.bf16.mxu0 %v8089
  %10773 = vmatpush1.bf16.msra.mxu0 %v8088
  %10774 = vmatprep.mubr.bf16.mxu0 %v1731
  %10775 = vmatmul.mubr.bf16.gmra.mrb[0].mxu0 %v1730
  %v10776 = vpop.f32.mrb[0].mxu0
  %v10777 = vadd.f32 %v10736, %v10776
  %v10778 = vpop.f32.mrb[0].mxu0
  %v10779 = vadd.f32 %v10738, %v10778
  %v10780 = vpop.f32.mrb[0].mxu0
  %v10781 = vpop.f32.mrb[0].mxu0
  %10782 = vdwg.mxu0
  %10783 = vmatprep.subr.bf16.mxu0 %v8097
  %10784 = vmatpush1.bf16.msra.mxu0 %v8096
  %10785 = vmatprep.subr.bf16.mxu0 %v8105
  %10786 = vmatpush1.bf16.msra.mxu0 %v8104
  %10787 = vmatprep.subr.bf16.mxu0 %v8113
  %10788 = vmatpush1.bf16.msra.mxu0 %v8112
  %10789 = vmatprep.subr.bf16.mxu0 %v8121
  %10790 = vmatpush1.bf16.msra.mxu0 %v8120
  %10791 = vmatprep.subr.bf16.mxu0 %v8129
  %10792 = vmatpush1.bf16.msra.mxu0 %v8128
  %10793 = vmatprep.subr.bf16.mxu0 %v8137
  %10794 = vmatpush1.bf16.msra.mxu0 %v8136
  %10795 = vmatprep.subr.bf16.mxu0 %v8145
  %10796 = vmatpush1.bf16.msra.mxu0 %v8144
  %10797 = vmatprep.subr.bf16.mxu0 %v8153
  %10798 = vmatpush1.bf16.msra.mxu0 %v8152
  %10799 = vmatprep.subr.bf16.mxu0 0
  %10800 = vmatpush1.bf16.msra.mxu0 0
  %10801 = vmatprep.subr.bf16.mxu0 0
  %10802 = vmatpush1.bf16.msra.mxu0 0
  %10803 = vmatprep.subr.bf16.mxu0 0
  %10804 = vmatpush1.bf16.msra.mxu0 0
  %10805 = vmatprep.subr.bf16.mxu0 0
  %10806 = vmatpush1.bf16.msra.mxu0 0
  %10807 = vmatprep.subr.bf16.mxu0 0
  %10808 = vmatpush1.bf16.msra.mxu0 0
  %10809 = vmatprep.subr.bf16.mxu0 0
  %10810 = vmatpush1.bf16.msra.mxu0 0
  %10811 = vmatprep.subr.bf16.mxu0 0
  %10812 = vmatpush1.bf16.msra.mxu0 0
  %10813 = vmatprep.subr.bf16.mxu0 0
  %10814 = vmatpush1.bf16.msra.mxu0 0
  %10815 = vmatprep.mubr.bf16.mxu0 0
  %10816 = vmatmul.mubr.bf16.gmra.mrb[0].mxu0 %v1732
  %v10817 = vpop.f32.mrb[0].mxu0
  %v10818 = vadd.f32 %v10777, %v10817
  %v10819 = vpop.f32.mrb[0].mxu0
  %v10820 = vadd.f32 %v10779, %v10819
  %v10821 = vpop.f32.mrb[0].mxu0
  %v10822 = vpop.f32.mrb[0].mxu0
  %10823 = vdwg.mxu0
  %10824 = vmatprep.subr.bf16.mxu0 %v6563
  %10825 = vmatpush1.bf16.msra.mxu0 %v6562
  %10826 = vmatprep.subr.bf16.mxu0 %v6571
  %10827 = vmatpush1.bf16.msra.mxu0 %v6570
  %10828 = vmatprep.subr.bf16.mxu0 %v6579
  %10829 = vmatpush1.bf16.msra.mxu0 %v6578
  %10830 = vmatprep.subr.bf16.mxu0 %v6587
  %10831 = vmatpush1.bf16.msra.mxu0 %v6586
  %10832 = vmatprep.subr.bf16.mxu0 %v6595
  %10833 = vmatpush1.bf16.msra.mxu0 %v6594
  %10834 = vmatprep.subr.bf16.mxu0 %v6603
  %10835 = vmatpush1.bf16.msra.mxu0 %v6602
  %10836 = vmatprep.subr.bf16.mxu0 %v6611
  %10837 = vmatpush1.bf16.msra.mxu0 %v6610
  %10838 = vmatprep.subr.bf16.mxu0 %v6619
  %10839 = vmatpush1.bf16.msra.mxu0 %v6618
  %10840 = vmatprep.subr.bf16.mxu0 %v6627
  %10841 = vmatpush1.bf16.msra.mxu0 %v6626
  %10842 = vmatprep.subr.bf16.mxu0 %v6635
  %10843 = vmatpush1.bf16.msra.mxu0 %v6634
  %10844 = vmatprep.subr.bf16.mxu0 %v6643
  %10845 = vmatpush1.bf16.msra.mxu0 %v6642
  %10846 = vmatprep.subr.bf16.mxu0 %v6651
  %10847 = vmatpush1.bf16.msra.mxu0 %v6650
  %10848 = vmatprep.subr.bf16.mxu0 %v6659
  %10849 = vmatpush1.bf16.msra.mxu0 %v6658
  %10850 = vmatprep.subr.bf16.mxu0 %v6667
  %10851 = vmatpush1.bf16.msra.mxu0 %v6666
  %10852 = vmatprep.subr.bf16.mxu0 %v6675
  %10853 = vmatpush1.bf16.msra.mxu0 %v6674
  %10854 = vmatprep.subr.bf16.mxu0 %v6683
  %10855 = vmatpush1.bf16.msra.mxu0 %v6682
  %10856 = vmatprep.mubr.bf16.mxu0 %v1709
  %10857 = vmatmul.mubr.bf16.gmra.mrb[0].mxu0 %v1708
  %v10858 = vpop.f32.mrb[0].mxu0
  %v10859 = vadd.f32 %v1649, %v10858
  %v10860 = vpop.f32.mrb[0].mxu0
  %v10861 = vadd.f32 %v1653, %v10860
  %v10862 = vpop.f32.mrb[0].mxu0
  %v10863 = vpop.f32.mrb[0].mxu0
  %10864 = vdwg.mxu0
  %10865 = vmatprep.subr.bf16.mxu0 %v6691
  %10866 = vmatpush1.bf16.msra.mxu0 %v6690
  %10867 = vmatprep.subr.bf16.mxu0 %v6699
  %10868 = vmatpush1.bf16.msra.mxu0 %v6698
  %10869 = vmatprep.subr.bf16.mxu0 %v6707
  %10870 = vmatpush1.bf16.msra.mxu0 %v6706
  %10871 = vmatprep.subr.bf16.mxu0 %v6715
  %10872 = vmatpush1.bf16.msra.mxu0 %v6714
  %10873 = vmatprep.subr.bf16.mxu0 %v6723
  %10874 = vmatpush1.bf16.msra.mxu0 %v6722
  %10875 = vmatprep.subr.bf16.mxu0 %v6731
  %10876 = vmatpush1.bf16.msra.mxu0 %v6730
  %10877 = vmatprep.subr.bf16.mxu0 %v6739
  %10878 = vmatpush1.bf16.msra.mxu0 %v6738
  %10879 = vmatprep.subr.bf16.mxu0 %v6747
  %10880 = vmatpush1.bf16.msra.mxu0 %v6746
  %10881 = vmatprep.subr.bf16.mxu0 %v6755
  %10882 = vmatpush1.bf16.msra.mxu0 %v6754
  %10883 = vmatprep.subr.bf16.mxu0 %v6763
  %10884 = vmatpush1.bf16.msra.mxu0 %v6762
  %10885 = vmatprep.subr.bf16.mxu0 %v6771
  %10886 = vmatpush1.bf16.msra.mxu0 %v6770
  %10887 = vmatprep.subr.bf16.mxu0 %v6779
  %10888 = vmatpush1.bf16.msra.mxu0 %v6778
  %10889 = vmatprep.subr.bf16.mxu0 %v6787
  %10890 = vmatpush1.bf16.msra.mxu0 %v6786
  %10891 = vmatprep.subr.bf16.mxu0 %v6795
  %10892 = vmatpush1.bf16.msra.mxu0 %v6794
  %10893 = vmatprep.subr.bf16.mxu0 %v6803
  %10894 = vmatpush1.bf16.msra.mxu0 %v6802
  %10895 = vmatprep.subr.bf16.mxu0 %v6811
  %10896 = vmatpush1.bf16.msra.mxu0 %v6810
  %10897 = vmatprep.mubr.bf16.mxu0 %v1711
  %10898 = vmatmul.mubr.bf16.gmra.mrb[0].mxu0 %v1710
  %v10899 = vpop.f32.mrb[0].mxu0
  %v10900 = vadd.f32 %v10859, %v10899
  %v10901 = vpop.f32.mrb[0].mxu0
  %v10902 = vadd.f32 %v10861, %v10901
  %v10903 = vpop.f32.mrb[0].mxu0
  %v10904 = vpop.f32.mrb[0].mxu0
  %10905 = vdwg.mxu0
  %10906 = vmatprep.subr.bf16.mxu0 %v6819
  %10907 = vmatpush1.bf16.msra.mxu0 %v6818
  %10908 = vmatprep.subr.bf16.mxu0 %v6827
  %10909 = vmatpush1.bf16.msra.mxu0 %v6826
  %10910 = vmatprep.subr.bf16.mxu0 %v6835
  %10911 = vmatpush1.bf16.msra.mxu0 %v6834
  %10912 = vmatprep.subr.bf16.mxu0 %v6843
  %10913 = vmatpush1.bf16.msra.mxu0 %v6842
  %10914 = vmatprep.subr.bf16.mxu0 %v6851
  %10915 = vmatpush1.bf16.msra.mxu0 %v6850
  %10916 = vmatprep.subr.bf16.mxu0 %v6859
  %10917 = vmatpush1.bf16.msra.mxu0 %v6858
  %10918 = vmatprep.subr.bf16.mxu0 %v6867
  %10919 = vmatpush1.bf16.msra.mxu0 %v6866
  %10920 = vmatprep.subr.bf16.mxu0 %v6875
  %10921 = vmatpush1.bf16.msra.mxu0 %v6874
  %10922 = vmatprep.subr.bf16.mxu0 %v6883
  %10923 = vmatpush1.bf16.msra.mxu0 %v6882
  %10924 = vmatprep.subr.bf16.mxu0 %v6891
  %10925 = vmatpush1.bf16.msra.mxu0 %v6890
  %10926 = vmatprep.subr.bf16.mxu0 %v6899
  %10927 = vmatpush1.bf16.msra.mxu0 %v6898
  %10928 = vmatprep.subr.bf16.mxu0 %v6907
  %10929 = vmatpush1.bf16.msra.mxu0 %v6906
  %10930 = vmatprep.subr.bf16.mxu0 %v6915
  %10931 = vmatpush1.bf16.msra.mxu0 %v6914
  %10932 = vmatprep.subr.bf16.mxu0 %v6923
  %10933 = vmatpush1.bf16.msra.mxu0 %v6922
  %10934 = vmatprep.subr.bf16.mxu0 %v6931
  %10935 = vmatpush1.bf16.msra.mxu0 %v6930
  %10936 = vmatprep.subr.bf16.mxu0 %v6939
  %10937 = vmatpush1.bf16.msra.mxu0 %v6938
  %10938 = vmatprep.mubr.bf16.mxu0 %v1713
  %10939 = vmatmul.mubr.bf16.gmra.mrb[0].mxu0 %v1712
  %v10940 = vpop.f32.mrb[0].mxu0
  %v10941 = vadd.f32 %v10900, %v10940
  %v10942 = vpop.f32.mrb[0].mxu0
  %v10943 = vadd.f32 %v10902, %v10942
  %v10944 = vpop.f32.mrb[0].mxu0
  %v10945 = vpop.f32.mrb[0].mxu0
  %10946 = vdwg.mxu0
  %10947 = vmatprep.subr.bf16.mxu0 %v6947
  %10948 = vmatpush1.bf16.msra.mxu0 %v6946
  %10949 = vmatprep.subr.bf16.mxu0 %v6955
  %10950 = vmatpush1.bf16.msra.mxu0 %v6954
  %10951 = vmatprep.subr.bf16.mxu0 %v6963
  %10952 = vmatpush1.bf16.msra.mxu0 %v6962
  %10953 = vmatprep.subr.bf16.mxu0 %v6971
  %10954 = vmatpush1.bf16.msra.mxu0 %v6970
  %10955 = vmatprep.subr.bf16.mxu0 %v6979
  %10956 = vmatpush1.bf16.msra.mxu0 %v6978
  %10957 = vmatprep.subr.bf16.mxu0 %v6987
  %10958 = vmatpush1.bf16.msra.mxu0 %v6986
  %10959 = vmatprep.subr.bf16.mxu0 %v6995
  %10960 = vmatpush1.bf16.msra.mxu0 %v6994
  %10961 = vmatprep.subr.bf16.mxu0 %v7003
  %10962 = vmatpush1.bf16.msra.mxu0 %v7002
  %10963 = vmatprep.subr.bf16.mxu0 %v7011
  %10964 = vmatpush1.bf16.msra.mxu0 %v7010
  %10965 = vmatprep.subr.bf16.mxu0 %v7019
  %10966 = vmatpush1.bf16.msra.mxu0 %v7018
  %10967 = vmatprep.subr.bf16.mxu0 %v7027
  %10968 = vmatpush1.bf16.msra.mxu0 %v7026
  %10969 = vmatprep.subr.bf16.mxu0 %v7035
  %10970 = vmatpush1.bf16.msra.mxu0 %v7034
  %10971 = vmatprep.subr.bf16.mxu0 %v7043
  %10972 = vmatpush1.bf16.msra.mxu0 %v7042
  %10973 = vmatprep.subr.bf16.mxu0 %v7051
  %10974 = vmatpush1.bf16.msra.mxu0 %v7050
  %10975 = vmatprep.subr.bf16.mxu0 %v7059
  %10976 = vmatpush1.bf16.msra.mxu0 %v7058
  %10977 = vmatprep.subr.bf16.mxu0 %v7067
  %10978 = vmatpush1.bf16.msra.mxu0 %v7066
  %10979 = vmatprep.mubr.bf16.mxu0 %v1715
  %10980 = vmatmul.mubr.bf16.gmra.mrb[0].mxu0 %v1714
  %v10981 = vpop.f32.mrb[0].mxu0
  %v10982 = vadd.f32 %v10941, %v10981
  %v10983 = vpop.f32.mrb[0].mxu0
  %v10984 = vadd.f32 %v10943, %v10983
  %v10985 = vpop.f32.mrb[0].mxu0
  %v10986 = vpop.f32.mrb[0].mxu0
  %10987 = vdwg.mxu0
  %10988 = vmatprep.subr.bf16.mxu0 %v7075
  %10989 = vmatpush1.bf16.msra.mxu0 %v7074
  %10990 = vmatprep.subr.bf16.mxu0 %v7083
  %10991 = vmatpush1.bf16.msra.mxu0 %v7082
  %10992 = vmatprep.subr.bf16.mxu0 %v7091
  %10993 = vmatpush1.bf16.msra.mxu0 %v7090
  %10994 = vmatprep.subr.bf16.mxu0 %v7099
  %10995 = vmatpush1.bf16.msra.mxu0 %v7098
  %10996 = vmatprep.subr.bf16.mxu0 %v7107
  %10997 = vmatpush1.bf16.msra.mxu0 %v7106
  %10998 = vmatprep.subr.bf16.mxu0 %v7115
  %10999 = vmatpush1.bf16.msra.mxu0 %v7114
  %11000 = vmatprep.subr.bf16.mxu0 %v7123
  %11001 = vmatpush1.bf16.msra.mxu0 %v7122
  %11002 = vmatprep.subr.bf16.mxu0 %v7131
  %11003 = vmatpush1.bf16.msra.mxu0 %v7130
  %11004 = vmatprep.subr.bf16.mxu0 %v7139
  %11005 = vmatpush1.bf16.msra.mxu0 %v7138
  %11006 = vmatprep.subr.bf16.mxu0 %v7147
  %11007 = vmatpush1.bf16.msra.mxu0 %v7146
  %11008 = vmatprep.subr.bf16.mxu0 %v7155
  %11009 = vmatpush1.bf16.msra.mxu0 %v7154
  %11010 = vmatprep.subr.bf16.mxu0 %v7163
  %11011 = vmatpush1.bf16.msra.mxu0 %v7162
  %11012 = vmatprep.subr.bf16.mxu0 %v7171
  %11013 = vmatpush1.bf16.msra.mxu0 %v7170
  %11014 = vmatprep.subr.bf16.mxu0 %v7179
  %11015 = vmatpush1.bf16.msra.mxu0 %v7178
  %11016 = vmatprep.subr.bf16.mxu0 %v7187
  %11017 = vmatpush1.bf16.msra.mxu0 %v7186
  %11018 = vmatprep.subr.bf16.mxu0 %v7195
  %11019 = vmatpush1.bf16.msra.mxu0 %v7194
  %11020 = vmatprep.mubr.bf16.mxu0 %v1717
  %11021 = vmatmul.mubr.bf16.gmra.mrb[0].mxu0 %v1716
  %v11022 = vpop.f32.mrb[0].mxu0
  %v11023 = vadd.f32 %v10982, %v11022
  %v11024 = vpop.f32.mrb[0].mxu0
  %v11025 = vadd.f32 %v10984, %v11024
  %v11026 = vpop.f32.mrb[0].mxu0
  %v11027 = vpop.f32.mrb[0].mxu0
  %11028 = vdwg.mxu0
  %11029 = vmatprep.subr.bf16.mxu0 %v7203
  %11030 = vmatpush1.bf16.msra.mxu0 %v7202
  %11031 = vmatprep.subr.bf16.mxu0 %v7211
  %11032 = vmatpush1.bf16.msra.mxu0 %v7210
  %11033 = vmatprep.subr.bf16.mxu0 %v7219
  %11034 = vmatpush1.bf16.msra.mxu0 %v7218
  %11035 = vmatprep.subr.bf16.mxu0 %v7227
  %11036 = vmatpush1.bf16.msra.mxu0 %v7226
  %11037 = vmatprep.subr.bf16.mxu0 %v7235
  %11038 = vmatpush1.bf16.msra.mxu0 %v7234
  %11039 = vmatprep.subr.bf16.mxu0 %v7243
  %11040 = vmatpush1.bf16.msra.mxu0 %v7242
  %11041 = vmatprep.subr.bf16.mxu0 %v7251
  %11042 = vmatpush1.bf16.msra.mxu0 %v7250
  %11043 = vmatprep.subr.bf16.mxu0 %v7259
  %11044 = vmatpush1.bf16.msra.mxu0 %v7258
  %11045 = vmatprep.subr.bf16.mxu0 %v7267
  %11046 = vmatpush1.bf16.msra.mxu0 %v7266
  %11047 = vmatprep.subr.bf16.mxu0 %v7275
  %11048 = vmatpush1.bf16.msra.mxu0 %v7274
  %11049 = vmatprep.subr.bf16.mxu0 %v7283
  %11050 = vmatpush1.bf16.msra.mxu0 %v7282
  %11051 = vmatprep.subr.bf16.mxu0 %v7291
  %11052 = vmatpush1.bf16.msra.mxu0 %v7290
  %11053 = vmatprep.subr.bf16.mxu0 %v7299
  %11054 = vmatpush1.bf16.msra.mxu0 %v7298
  %11055 = vmatprep.subr.bf16.mxu0 %v7307
  %11056 = vmatpush1.bf16.msra.mxu0 %v7306
  %11057 = vmatprep.subr.bf16.mxu0 %v7315
  %11058 = vmatpush1.bf16.msra.mxu0 %v7314
  %11059 = vmatprep.subr.bf16.mxu0 %v7323
  %11060 = vmatpush1.bf16.msra.mxu0 %v7322
  %11061 = vmatprep.mubr.bf16.mxu0 %v1719
  %11062 = vmatmul.mubr.bf16.gmra.mrb[0].mxu0 %v1718
  %v11063 = vpop.f32.mrb[0].mxu0
  %v11064 = vadd.f32 %v11023, %v11063
  %v11065 = vpop.f32.mrb[0].mxu0
  %v11066 = vadd.f32 %v11025, %v11065
  %v11067 = vpop.f32.mrb[0].mxu0
  %v11068 = vpop.f32.mrb[0].mxu0
  %11069 = vdwg.mxu0
  %11070 = vmatprep.subr.bf16.mxu0 %v7331
  %11071 = vmatpush1.bf16.msra.mxu0 %v7330
  %11072 = vmatprep.subr.bf16.mxu0 %v7339
  %11073 = vmatpush1.bf16.msra.mxu0 %v7338
  %11074 = vmatprep.subr.bf16.mxu0 %v7347
  %11075 = vmatpush1.bf16.msra.mxu0 %v7346
  %11076 = vmatprep.subr.bf16.mxu0 %v7355
  %11077 = vmatpush1.bf16.msra.mxu0 %v7354
  %11078 = vmatprep.subr.bf16.mxu0 %v7363
  %11079 = vmatpush1.bf16.msra.mxu0 %v7362
  %11080 = vmatprep.subr.bf16.mxu0 %v7371
  %11081 = vmatpush1.bf16.msra.mxu0 %v7370
  %11082 = vmatprep.subr.bf16.mxu0 %v7379
  %11083 = vmatpush1.bf16.msra.mxu0 %v7378
  %11084 = vmatprep.subr.bf16.mxu0 %v7387
  %11085 = vmatpush1.bf16.msra.mxu0 %v7386
  %11086 = vmatprep.subr.bf16.mxu0 %v7395
  %11087 = vmatpush1.bf16.msra.mxu0 %v7394
  %11088 = vmatprep.subr.bf16.mxu0 %v7403
  %11089 = vmatpush1.bf16.msra.mxu0 %v7402
  %11090 = vmatprep.subr.bf16.mxu0 %v7411
  %11091 = vmatpush1.bf16.msra.mxu0 %v7410
  %11092 = vmatprep.subr.bf16.mxu0 %v7419
  %11093 = vmatpush1.bf16.msra.mxu0 %v7418
  %11094 = vmatprep.subr.bf16.mxu0 %v7427
  %11095 = vmatpush1.bf16.msra.mxu0 %v7426
  %11096 = vmatprep.subr.bf16.mxu0 %v7435
  %11097 = vmatpush1.bf16.msra.mxu0 %v7434
  %11098 = vmatprep.subr.bf16.mxu0 %v7443
  %11099 = vmatpush1.bf16.msra.mxu0 %v7442
  %11100 = vmatprep.subr.bf16.mxu0 %v7451
  %11101 = vmatpush1.bf16.msra.mxu0 %v7450
  %11102 = vmatprep.mubr.bf16.mxu0 %v1721
  %11103 = vmatmul.mubr.bf16.gmra.mrb[0].mxu0 %v1720
  %v11104 = vpop.f32.mrb[0].mxu0
  %v11105 = vadd.f32 %v11064, %v11104
  %v11106 = vpop.f32.mrb[0].mxu0
  %v11107 = vadd.f32 %v11066, %v11106
  %v11108 = vpop.f32.mrb[0].mxu0
  %v11109 = vpop.f32.mrb[0].mxu0
  %11110 = vdwg.mxu0
  %11111 = vmatprep.subr.bf16.mxu0 %v7459
  %11112 = vmatpush1.bf16.msra.mxu0 %v7458
  %11113 = vmatprep.subr.bf16.mxu0 %v7467
  %11114 = vmatpush1.bf16.msra.mxu0 %v7466
  %11115 = vmatprep.subr.bf16.mxu0 %v7475
  %11116 = vmatpush1.bf16.msra.mxu0 %v7474
  %11117 = vmatprep.subr.bf16.mxu0 %v7483
  %11118 = vmatpush1.bf16.msra.mxu0 %v7482
  %11119 = vmatprep.subr.bf16.mxu0 %v7491
  %11120 = vmatpush1.bf16.msra.mxu0 %v7490
  %11121 = vmatprep.subr.bf16.mxu0 %v7499
  %11122 = vmatpush1.bf16.msra.mxu0 %v7498
  %11123 = vmatprep.subr.bf16.mxu0 %v7507
  %11124 = vmatpush1.bf16.msra.mxu0 %v7506
  %11125 = vmatprep.subr.bf16.mxu0 %v7515
  %11126 = vmatpush1.bf16.msra.mxu0 %v7514
  %11127 = vmatprep.subr.bf16.mxu0 %v7523
  %11128 = vmatpush1.bf16.msra.mxu0 %v7522
  %11129 = vmatprep.subr.bf16.mxu0 %v7531
  %11130 = vmatpush1.bf16.msra.mxu0 %v7530
  %11131 = vmatprep.subr.bf16.mxu0 %v7539
  %11132 = vmatpush1.bf16.msra.mxu0 %v7538
  %11133 = vmatprep.subr.bf16.mxu0 %v7547
  %11134 = vmatpush1.bf16.msra.mxu0 %v7546
  %11135 = vmatprep.subr.bf16.mxu0 %v7555
  %11136 = vmatpush1.bf16.msra.mxu0 %v7554
  %11137 = vmatprep.subr.bf16.mxu0 %v7563
  %11138 = vmatpush1.bf16.msra.mxu0 %v7562
  %11139 = vmatprep.subr.bf16.mxu0 %v7571
  %11140 = vmatpush1.bf16.msra.mxu0 %v7570
  %11141 = vmatprep.subr.bf16.mxu0 %v7579
  %11142 = vmatpush1.bf16.msra.mxu0 %v7578
  %11143 = vmatprep.mubr.bf16.mxu0 %v1723
  %11144 = vmatmul.mubr.bf16.gmra.mrb[0].mxu0 %v1722
  %v11145 = vpop.f32.mrb[0].mxu0
  %v11146 = vadd.f32 %v11105, %v11145
  %v11147 = vpop.f32.mrb[0].mxu0
  %v11148 = vadd.f32 %v11107, %v11147
  %v11149 = vpop.f32.mrb[0].mxu0
  %v11150 = vpop.f32.mrb[0].mxu0
  %11151 = vdwg.mxu0
  %11152 = vmatprep.subr.bf16.mxu0 %v7587
  %11153 = vmatpush1.bf16.msra.mxu0 %v7586
  %11154 = vmatprep.subr.bf16.mxu0 %v7595
  %11155 = vmatpush1.bf16.msra.mxu0 %v7594
  %11156 = vmatprep.subr.bf16.mxu0 %v7603
  %11157 = vmatpush1.bf16.msra.mxu0 %v7602
  %11158 = vmatprep.subr.bf16.mxu0 %v7611
  %11159 = vmatpush1.bf16.msra.mxu0 %v7610
  %11160 = vmatprep.subr.bf16.mxu0 %v7619
  %11161 = vmatpush1.bf16.msra.mxu0 %v7618
  %11162 = vmatprep.subr.bf16.mxu0 %v7627
  %11163 = vmatpush1.bf16.msra.mxu0 %v7626
  %11164 = vmatprep.subr.bf16.mxu0 %v7635
  %11165 = vmatpush1.bf16.msra.mxu0 %v7634
  %11166 = vmatprep.subr.bf16.mxu0 %v7643
  %11167 = vmatpush1.bf16.msra.mxu0 %v7642
  %11168 = vmatprep.subr.bf16.mxu0 %v7651
  %11169 = vmatpush1.bf16.msra.mxu0 %v7650
  %11170 = vmatprep.subr.bf16.mxu0 %v7659
  %11171 = vmatpush1.bf16.msra.mxu0 %v7658
  %11172 = vmatprep.subr.bf16.mxu0 %v7667
  %11173 = vmatpush1.bf16.msra.mxu0 %v7666
  %11174 = vmatprep.subr.bf16.mxu0 %v7675
  %11175 = vmatpush1.bf16.msra.mxu0 %v7674
  %11176 = vmatprep.subr.bf16.mxu0 %v7683
  %11177 = vmatpush1.bf16.msra.mxu0 %v7682
  %11178 = vmatprep.subr.bf16.mxu0 %v7691
  %11179 = vmatpush1.bf16.msra.mxu0 %v7690
  %11180 = vmatprep.subr.bf16.mxu0 %v7699
  %11181 = vmatpush1.bf16.msra.mxu0 %v7698
  %11182 = vmatprep.subr.bf16.mxu0 %v7707
  %11183 = vmatpush1.bf16.msra.mxu0 %v7706
  %11184 = vmatprep.mubr.bf16.mxu0 %v1725
  %11185 = vmatmul.mubr.bf16.gmra.mrb[0].mxu0 %v1724
  %v11186 = vpop.f32.mrb[0].mxu0
  %v11187 = vadd.f32 %v11146, %v11186
  %v11188 = vpop.f32.mrb[0].mxu0
  %v11189 = vadd.f32 %v11148, %v11188
  %v11190 = vpop.f32.mrb[0].mxu0
  %v11191 = vpop.f32.mrb[0].mxu0
  %11192 = vdwg.mxu0
  %11193 = vmatprep.subr.bf16.mxu0 %v7715
  %11194 = vmatpush1.bf16.msra.mxu0 %v7714
  %11195 = vmatprep.subr.bf16.mxu0 %v7723
  %11196 = vmatpush1.bf16.msra.mxu0 %v7722
  %11197 = vmatprep.subr.bf16.mxu0 %v7731
  %11198 = vmatpush1.bf16.msra.mxu0 %v7730
  %11199 = vmatprep.subr.bf16.mxu0 %v7739
  %11200 = vmatpush1.bf16.msra.mxu0 %v7738
  %11201 = vmatprep.subr.bf16.mxu0 %v7747
  %11202 = vmatpush1.bf16.msra.mxu0 %v7746
  %11203 = vmatprep.subr.bf16.mxu0 %v7755
  %11204 = vmatpush1.bf16.msra.mxu0 %v7754
  %11205 = vmatprep.subr.bf16.mxu0 %v7763
  %11206 = vmatpush1.bf16.msra.mxu0 %v7762
  %11207 = vmatprep.subr.bf16.mxu0 %v7771
  %11208 = vmatpush1.bf16.msra.mxu0 %v7770
  %11209 = vmatprep.subr.bf16.mxu0 %v7779
  %11210 = vmatpush1.bf16.msra.mxu0 %v7778
  %11211 = vmatprep.subr.bf16.mxu0 %v7787
  %11212 = vmatpush1.bf16.msra.mxu0 %v7786
  %11213 = vmatprep.subr.bf16.mxu0 %v7795
  %11214 = vmatpush1.bf16.msra.mxu0 %v7794
  %11215 = vmatprep.subr.bf16.mxu0 %v7803
  %11216 = vmatpush1.bf16.msra.mxu0 %v7802
  %11217 = vmatprep.subr.bf16.mxu0 %v7811
  %11218 = vmatpush1.bf16.msra.mxu0 %v7810
  %11219 = vmatprep.subr.bf16.mxu0 %v7819
  %11220 = vmatpush1.bf16.msra.mxu0 %v7818
  %11221 = vmatprep.subr.bf16.mxu0 %v7827
  %11222 = vmatpush1.bf16.msra.mxu0 %v7826
  %11223 = vmatprep.subr.bf16.mxu0 %v7835
  %11224 = vmatpush1.bf16.msra.mxu0 %v7834
  %11225 = vmatprep.mubr.bf16.mxu0 %v1727
  %11226 = vmatmul.mubr.bf16.gmra.mrb[0].mxu0 %v1726
  %v11227 = vpop.f32.mrb[0].mxu0
  %v11228 = vadd.f32 %v11187, %v11227
  %v11229 = vpop.f32.mrb[0].mxu0
  %v11230 = vadd.f32 %v11189, %v11229
  %v11231 = vpop.f32.mrb[0].mxu0
  %v11232 = vpop.f32.mrb[0].mxu0
  %11233 = vdwg.mxu0
  %11234 = vmatprep.subr.bf16.mxu0 %v7843
  %11235 = vmatpush1.bf16.msra.mxu0 %v7842
  %11236 = vmatprep.subr.bf16.mxu0 %v7851
  %11237 = vmatpush1.bf16.msra.mxu0 %v7850
  %11238 = vmatprep.subr.bf16.mxu0 %v7859
  %11239 = vmatpush1.bf16.msra.mxu0 %v7858
  %11240 = vmatprep.subr.bf16.mxu0 %v7867
  %11241 = vmatpush1.bf16.msra.mxu0 %v7866
  %11242 = vmatprep.subr.bf16.mxu0 %v7875
  %11243 = vmatpush1.bf16.msra.mxu0 %v7874
  %11244 = vmatprep.subr.bf16.mxu0 %v7883
  %11245 = vmatpush1.bf16.msra.mxu0 %v7882
  %11246 = vmatprep.subr.bf16.mxu0 %v7891
  %11247 = vmatpush1.bf16.msra.mxu0 %v7890
  %11248 = vmatprep.subr.bf16.mxu0 %v7899
  %11249 = vmatpush1.bf16.msra.mxu0 %v7898
  %11250 = vmatprep.subr.bf16.mxu0 %v7907
  %11251 = vmatpush1.bf16.msra.mxu0 %v7906
  %11252 = vmatprep.subr.bf16.mxu0 %v7915
  %11253 = vmatpush1.bf16.msra.mxu0 %v7914
  %11254 = vmatprep.subr.bf16.mxu0 %v7923
  %11255 = vmatpush1.bf16.msra.mxu0 %v7922
  %11256 = vmatprep.subr.bf16.mxu0 %v7931
  %11257 = vmatpush1.bf16.msra.mxu0 %v7930
  %11258 = vmatprep.subr.bf16.mxu0 %v7939
  %11259 = vmatpush1.bf16.msra.mxu0 %v7938
  %11260 = vmatprep.subr.bf16.mxu0 %v7947
  %11261 = vmatpush1.bf16.msra.mxu0 %v7946
  %11262 = vmatprep.subr.bf16.mxu0 %v7955
  %11263 = vmatpush1.bf16.msra.mxu0 %v7954
  %11264 = vmatprep.subr.bf16.mxu0 %v7963
  %11265 = vmatpush1.bf16.msra.mxu0 %v7962
  %11266 = vmatprep.mubr.bf16.mxu0 %v1729
  %11267 = vmatmul.mubr.bf16.gmra.mrb[0].mxu0 %v1728
  %v11268 = vpop.f32.mrb[0].mxu0
  %v11269 = vadd.f32 %v11228, %v11268
  %v11270 = vpop.f32.mrb[0].mxu0
  %v11271 = vadd.f32 %v11230, %v11270
  %v11272 = vpop.f32.mrb[0].mxu0
  %v11273 = vpop.f32.mrb[0].mxu0
  %11274 = vdwg.mxu0
  %11275 = vmatprep.subr.bf16.mxu0 %v7971
  %11276 = vmatpush1.bf16.msra.mxu0 %v7970
  %11277 = vmatprep.subr.bf16.mxu0 %v7979
  %11278 = vmatpush1.bf16.msra.mxu0 %v7978
  %11279 = vmatprep.subr.bf16.mxu0 %v7987
  %11280 = vmatpush1.bf16.msra.mxu0 %v7986
  %11281 = vmatprep.subr.bf16.mxu0 %v7995
  %11282 = vmatpush1.bf16.msra.mxu0 %v7994
  %11283 = vmatprep.subr.bf16.mxu0 %v8003
  %11284 = vmatpush1.bf16.msra.mxu0 %v8002
  %11285 = vmatprep.subr.bf16.mxu0 %v8011
  %11286 = vmatpush1.bf16.msra.mxu0 %v8010
  %11287 = vmatprep.subr.bf16.mxu0 %v8019
  %11288 = vmatpush1.bf16.msra.mxu0 %v8018
  %11289 = vmatprep.subr.bf16.mxu0 %v8027
  %11290 = vmatpush1.bf16.msra.mxu0 %v8026
  %11291 = vmatprep.subr.bf16.mxu0 %v8035
  %11292 = vmatpush1.bf16.msra.mxu0 %v8034
  %11293 = vmatprep.subr.bf16.mxu0 %v8043
  %11294 = vmatpush1.bf16.msra.mxu0 %v8042
  %11295 = vmatprep.subr.bf16.mxu0 %v8051
  %11296 = vmatpush1.bf16.msra.mxu0 %v8050
  %11297 = vmatprep.subr.bf16.mxu0 %v8059
  %11298 = vmatpush1.bf16.msra.mxu0 %v8058
  %11299 = vmatprep.subr.bf16.mxu0 %v8067
  %11300 = vmatpush1.bf16.msra.mxu0 %v8066
  %11301 = vmatprep.subr.bf16.mxu0 %v8075
  %11302 = vmatpush1.bf16.msra.mxu0 %v8074
  %11303 = vmatprep.subr.bf16.mxu0 %v8083
  %11304 = vmatpush1.bf16.msra.mxu0 %v8082
  %11305 = vmatprep.subr.bf16.mxu0 %v8091
  %11306 = vmatpush1.bf16.msra.mxu0 %v8090
  %11307 = vmatprep.mubr.bf16.mxu0 %v1731
  %11308 = vmatmul.mubr.bf16.gmra.mrb[0].mxu0 %v1730
  %v11309 = vpop.f32.mrb[0].mxu0
  %v11310 = vadd.f32 %v11269, %v11309
  %v11311 = vpop.f32.mrb[0].mxu0
  %v11312 = vadd.f32 %v11271, %v11311
  %v11313 = vpop.f32.mrb[0].mxu0
  %v11314 = vpop.f32.mrb[0].mxu0
  %11315 = vdwg.mxu0
  %11316 = vmatprep.subr.bf16.mxu0 %v8099
  %11317 = vmatpush1.bf16.msra.mxu0 %v8098
  %11318 = vmatprep.subr.bf16.mxu0 %v8107
  %11319 = vmatpush1.bf16.msra.mxu0 %v8106
  %11320 = vmatprep.subr.bf16.mxu0 %v8115
  %11321 = vmatpush1.bf16.msra.mxu0 %v8114
  %11322 = vmatprep.subr.bf16.mxu0 %v8123
  %11323 = vmatpush1.bf16.msra.mxu0 %v8122
  %11324 = vmatprep.subr.bf16.mxu0 %v8131
  %11325 = vmatpush1.bf16.msra.mxu0 %v8130
  %11326 = vmatprep.subr.bf16.mxu0 %v8139
  %11327 = vmatpush1.bf16.msra.mxu0 %v8138
  %11328 = vmatprep.subr.bf16.mxu0 %v8147
  %11329 = vmatpush1.bf16.msra.mxu0 %v8146
  %11330 = vmatprep.subr.bf16.mxu0 %v8155
  %11331 = vmatpush1.bf16.msra.mxu0 %v8154
  %11332 = vmatprep.subr.bf16.mxu0 0
  %11333 = vmatpush1.bf16.msra.mxu0 0
  %11334 = vmatprep.subr.bf16.mxu0 0
  %11335 = vmatpush1.bf16.msra.mxu0 0
  %11336 = vmatprep.subr.bf16.mxu0 0
  %11337 = vmatpush1.bf16.msra.mxu0 0
  %11338 = vmatprep.subr.bf16.mxu0 0
  %11339 = vmatpush1.bf16.msra.mxu0 0
  %11340 = vmatprep.subr.bf16.mxu0 0
  %11341 = vmatpush1.bf16.msra.mxu0 0
  %11342 = vmatprep.subr.bf16.mxu0 0
  %11343 = vmatpush1.bf16.msra.mxu0 0
  %11344 = vmatprep.subr.bf16.mxu0 0
  %11345 = vmatpush1.bf16.msra.mxu0 0
  %11346 = vmatprep.subr.bf16.mxu0 0
  %11347 = vmatpush1.bf16.msra.mxu0 0
  %11348 = vmatprep.mubr.bf16.mxu0 0
  %11349 = vmatmul.mubr.bf16.gmra.mrb[0].mxu0 %v1732
  %v11350 = vpop.f32.mrb[0].mxu0
  %v11351 = vadd.f32 %v11310, %v11350
  %v11352 = vpop.f32.mrb[0].mxu0
  %v11353 = vadd.f32 %v11312, %v11352
  %v11354 = vpop.f32.mrb[0].mxu0
  %v11355 = vpop.f32.mrb[0].mxu0
  %11356 = vdwg.mxu0
  %11357 = vmatprep.subr.bf16.mxu0 %v6565
  %11358 = vmatpush1.bf16.msra.mxu0 %v6564
  %11359 = vmatprep.subr.bf16.mxu0 %v6573
  %11360 = vmatpush1.bf16.msra.mxu0 %v6572
  %11361 = vmatprep.subr.bf16.mxu0 %v6581
  %11362 = vmatpush1.bf16.msra.mxu0 %v6580
  %11363 = vmatprep.subr.bf16.mxu0 %v6589
  %11364 = vmatpush1.bf16.msra.mxu0 %v6588
  %11365 = vmatprep.subr.bf16.mxu0 %v6597
  %11366 = vmatpush1.bf16.msra.mxu0 %v6596
  %11367 = vmatprep.subr.bf16.mxu0 %v6605
  %11368 = vmatpush1.bf16.msra.mxu0 %v6604
  %11369 = vmatprep.subr.bf16.mxu0 %v6613
  %11370 = vmatpush1.bf16.msra.mxu0 %v6612
  %11371 = vmatprep.subr.bf16.mxu0 %v6621
  %11372 = vmatpush1.bf16.msra.mxu0 %v6620
  %11373 = vmatprep.subr.bf16.mxu0 %v6629
  %11374 = vmatpush1.bf16.msra.mxu0 %v6628
  %11375 = vmatprep.subr.bf16.mxu0 %v6637
  %11376 = vmatpush1.bf16.msra.mxu0 %v6636
  %11377 = vmatprep.subr.bf16.mxu0 %v6645
  %11378 = vmatpush1.bf16.msra.mxu0 %v6644
  %11379 = vmatprep.subr.bf16.mxu0 %v6653
  %11380 = vmatpush1.bf16.msra.mxu0 %v6652
  %11381 = vmatprep.subr.bf16.mxu0 %v6661
  %11382 = vmatpush1.bf16.msra.mxu0 %v6660
  %11383 = vmatprep.subr.bf16.mxu0 %v6669
  %11384 = vmatpush1.bf16.msra.mxu0 %v6668
  %11385 = vmatprep.subr.bf16.mxu0 %v6677
  %11386 = vmatpush1.bf16.msra.mxu0 %v6676
  %11387 = vmatprep.subr.bf16.mxu0 %v6685
  %11388 = vmatpush1.bf16.msra.mxu0 %v6684
  %11389 = vmatprep.mubr.bf16.mxu0 %v1709
  %11390 = vmatmul.mubr.bf16.gmra.mrb[0].mxu0 %v1708
  %v11391 = vpop.f32.mrb[0].mxu0
  %v11392 = vadd.f32 %v1657, %v11391
  %v11393 = vpop.f32.mrb[0].mxu0
  %v11394 = vadd.f32 %v1661, %v11393
  %v11395 = vpop.f32.mrb[0].mxu0
  %v11396 = vpop.f32.mrb[0].mxu0
  %11397 = vdwg.mxu0
  %11398 = vmatprep.subr.bf16.mxu0 %v6693
  %11399 = vmatpush1.bf16.msra.mxu0 %v6692
  %11400 = vmatprep.subr.bf16.mxu0 %v6701
  %11401 = vmatpush1.bf16.msra.mxu0 %v6700
  %11402 = vmatprep.subr.bf16.mxu0 %v6709
  %11403 = vmatpush1.bf16.msra.mxu0 %v6708
  %11404 = vmatprep.subr.bf16.mxu0 %v6717
  %11405 = vmatpush1.bf16.msra.mxu0 %v6716
  %11406 = vmatprep.subr.bf16.mxu0 %v6725
  %11407 = vmatpush1.bf16.msra.mxu0 %v6724
  %11408 = vmatprep.subr.bf16.mxu0 %v6733
  %11409 = vmatpush1.bf16.msra.mxu0 %v6732
  %11410 = vmatprep.subr.bf16.mxu0 %v6741
  %11411 = vmatpush1.bf16.msra.mxu0 %v6740
  %11412 = vmatprep.subr.bf16.mxu0 %v6749
  %11413 = vmatpush1.bf16.msra.mxu0 %v6748
  %11414 = vmatprep.subr.bf16.mxu0 %v6757
  %11415 = vmatpush1.bf16.msra.mxu0 %v6756
  %11416 = vmatprep.subr.bf16.mxu0 %v6765
  %11417 = vmatpush1.bf16.msra.mxu0 %v6764
  %11418 = vmatprep.subr.bf16.mxu0 %v6773
  %11419 = vmatpush1.bf16.msra.mxu0 %v6772
  %11420 = vmatprep.subr.bf16.mxu0 %v6781
  %11421 = vmatpush1.bf16.msra.mxu0 %v6780
  %11422 = vmatprep.subr.bf16.mxu0 %v6789
  %11423 = vmatpush1.bf16.msra.mxu0 %v6788
  %11424 = vmatprep.subr.bf16.mxu0 %v6797
  %11425 = vmatpush1.bf16.msra.mxu0 %v6796
  %11426 = vmatprep.subr.bf16.mxu0 %v6805
  %11427 = vmatpush1.bf16.msra.mxu0 %v6804
  %11428 = vmatprep.subr.bf16.mxu0 %v6813
  %11429 = vmatpush1.bf16.msra.mxu0 %v6812
  %11430 = vmatprep.mubr.bf16.mxu0 %v1711
  %11431 = vmatmul.mubr.bf16.gmra.mrb[0].mxu0 %v1710
  %v11432 = vpop.f32.mrb[0].mxu0
  %v11433 = vadd.f32 %v11392, %v11432
  %v11434 = vpop.f32.mrb[0].mxu0
  %v11435 = vadd.f32 %v11394, %v11434
  %v11436 = vpop.f32.mrb[0].mxu0
  %v11437 = vpop.f32.mrb[0].mxu0
  %11438 = vdwg.mxu0
  %11439 = vmatprep.subr.bf16.mxu0 %v6821
  %11440 = vmatpush1.bf16.msra.mxu0 %v6820
  %11441 = vmatprep.subr.bf16.mxu0 %v6829
  %11442 = vmatpush1.bf16.msra.mxu0 %v6828
  %11443 = vmatprep.subr.bf16.mxu0 %v6837
  %11444 = vmatpush1.bf16.msra.mxu0 %v6836
  %11445 = vmatprep.subr.bf16.mxu0 %v6845
  %11446 = vmatpush1.bf16.msra.mxu0 %v6844
  %11447 = vmatprep.subr.bf16.mxu0 %v6853
  %11448 = vmatpush1.bf16.msra.mxu0 %v6852
  %11449 = vmatprep.subr.bf16.mxu0 %v6861
  %11450 = vmatpush1.bf16.msra.mxu0 %v6860
  %11451 = vmatprep.subr.bf16.mxu0 %v6869
  %11452 = vmatpush1.bf16.msra.mxu0 %v6868
  %11453 = vmatprep.subr.bf16.mxu0 %v6877
  %11454 = vmatpush1.bf16.msra.mxu0 %v6876
  %11455 = vmatprep.subr.bf16.mxu0 %v6885
  %11456 = vmatpush1.bf16.msra.mxu0 %v6884
  %11457 = vmatprep.subr.bf16.mxu0 %v6893
  %11458 = vmatpush1.bf16.msra.mxu0 %v6892
  %11459 = vmatprep.subr.bf16.mxu0 %v6901
  %11460 = vmatpush1.bf16.msra.mxu0 %v6900
  %11461 = vmatprep.subr.bf16.mxu0 %v6909
  %11462 = vmatpush1.bf16.msra.mxu0 %v6908
  %11463 = vmatprep.subr.bf16.mxu0 %v6917
  %11464 = vmatpush1.bf16.msra.mxu0 %v6916
  %11465 = vmatprep.subr.bf16.mxu0 %v6925
  %11466 = vmatpush1.bf16.msra.mxu0 %v6924
  %11467 = vmatprep.subr.bf16.mxu0 %v6933
  %11468 = vmatpush1.bf16.msra.mxu0 %v6932
  %11469 = vmatprep.subr.bf16.mxu0 %v6941
  %11470 = vmatpush1.bf16.msra.mxu0 %v6940
  %11471 = vmatprep.mubr.bf16.mxu0 %v1713
  %11472 = vmatmul.mubr.bf16.gmra.mrb[0].mxu0 %v1712
  %v11473 = vpop.f32.mrb[0].mxu0
  %v11474 = vadd.f32 %v11433, %v11473
  %v11475 = vpop.f32.mrb[0].mxu0
  %v11476 = vadd.f32 %v11435, %v11475
  %v11477 = vpop.f32.mrb[0].mxu0
  %v11478 = vpop.f32.mrb[0].mxu0
  %11479 = vdwg.mxu0
  %11480 = vmatprep.subr.bf16.mxu0 %v6949
  %11481 = vmatpush1.bf16.msra.mxu0 %v6948
  %11482 = vmatprep.subr.bf16.mxu0 %v6957
  %11483 = vmatpush1.bf16.msra.mxu0 %v6956
  %11484 = vmatprep.subr.bf16.mxu0 %v6965
  %11485 = vmatpush1.bf16.msra.mxu0 %v6964
  %11486 = vmatprep.subr.bf16.mxu0 %v6973
  %11487 = vmatpush1.bf16.msra.mxu0 %v6972
  %11488 = vmatprep.subr.bf16.mxu0 %v6981
  %11489 = vmatpush1.bf16.msra.mxu0 %v6980
  %11490 = vmatprep.subr.bf16.mxu0 %v6989
  %11491 = vmatpush1.bf16.msra.mxu0 %v6988
  %11492 = vmatprep.subr.bf16.mxu0 %v6997
  %11493 = vmatpush1.bf16.msra.mxu0 %v6996
  %11494 = vmatprep.subr.bf16.mxu0 %v7005
  %11495 = vmatpush1.bf16.msra.mxu0 %v7004
  %11496 = vmatprep.subr.bf16.mxu0 %v7013
  %11497 = vmatpush1.bf16.msra.mxu0 %v7012
  %11498 = vmatprep.subr.bf16.mxu0 %v7021
  %11499 = vmatpush1.bf16.msra.mxu0 %v7020
  %11500 = vmatprep.subr.bf16.mxu0 %v7029
  %11501 = vmatpush1.bf16.msra.mxu0 %v7028
  %11502 = vmatprep.subr.bf16.mxu0 %v7037
  %11503 = vmatpush1.bf16.msra.mxu0 %v7036
  %11504 = vmatprep.subr.bf16.mxu0 %v7045
  %11505 = vmatpush1.bf16.msra.mxu0 %v7044
  %11506 = vmatprep.subr.bf16.mxu0 %v7053
  %11507 = vmatpush1.bf16.msra.mxu0 %v7052
  %11508 = vmatprep.subr.bf16.mxu0 %v7061
  %11509 = vmatpush1.bf16.msra.mxu0 %v7060
  %11510 = vmatprep.subr.bf16.mxu0 %v7069
  %11511 = vmatpush1.bf16.msra.mxu0 %v7068
  %11512 = vmatprep.mubr.bf16.mxu0 %v1715
  %11513 = vmatmul.mubr.bf16.gmra.mrb[0].mxu0 %v1714
  %v11514 = vpop.f32.mrb[0].mxu0
  %v11515 = vadd.f32 %v11474, %v11514
  %v11516 = vpop.f32.mrb[0].mxu0
  %v11517 = vadd.f32 %v11476, %v11516
  %v11518 = vpop.f32.mrb[0].mxu0
  %v11519 = vpop.f32.mrb[0].mxu0
  %11520 = vdwg.mxu0
  %11521 = vmatprep.subr.bf16.mxu0 %v7077
  %11522 = vmatpush1.bf16.msra.mxu0 %v7076
  %11523 = vmatprep.subr.bf16.mxu0 %v7085
  %11524 = vmatpush1.bf16.msra.mxu0 %v7084
  %11525 = vmatprep.subr.bf16.mxu0 %v7093
  %11526 = vmatpush1.bf16.msra.mxu0 %v7092
  %11527 = vmatprep.subr.bf16.mxu0 %v7101
  %11528 = vmatpush1.bf16.msra.mxu0 %v7100
  %11529 = vmatprep.subr.bf16.mxu0 %v7109
  %11530 = vmatpush1.bf16.msra.mxu0 %v7108
  %11531 = vmatprep.subr.bf16.mxu0 %v7117
  %11532 = vmatpush1.bf16.msra.mxu0 %v7116
  %11533 = vmatprep.subr.bf16.mxu0 %v7125
  %11534 = vmatpush1.bf16.msra.mxu0 %v7124
  %11535 = vmatprep.subr.bf16.mxu0 %v7133
  %11536 = vmatpush1.bf16.msra.mxu0 %v7132
  %11537 = vmatprep.subr.bf16.mxu0 %v7141
  %11538 = vmatpush1.bf16.msra.mxu0 %v7140
  %11539 = vmatprep.subr.bf16.mxu0 %v7149
  %11540 = vmatpush1.bf16.msra.mxu0 %v7148
  %11541 = vmatprep.subr.bf16.mxu0 %v7157
  %11542 = vmatpush1.bf16.msra.mxu0 %v7156
  %11543 = vmatprep.subr.bf16.mxu0 %v7165
  %11544 = vmatpush1.bf16.msra.mxu0 %v7164
  %11545 = vmatprep.subr.bf16.mxu0 %v7173
  %11546 = vmatpush1.bf16.msra.mxu0 %v7172
  %11547 = vmatprep.subr.bf16.mxu0 %v7181
  %11548 = vmatpush1.bf16.msra.mxu0 %v7180
  %11549 = vmatprep.subr.bf16.mxu0 %v7189
  %11550 = vmatpush1.bf16.msra.mxu0 %v7188
  %11551 = vmatprep.subr.bf16.mxu0 %v7197
  %11552 = vmatpush1.bf16.msra.mxu0 %v7196
  %11553 = vmatprep.mubr.bf16.mxu0 %v1717
  %11554 = vmatmul.mubr.bf16.gmra.mrb[0].mxu0 %v1716
  %v11555 = vpop.f32.mrb[0].mxu0
  %v11556 = vadd.f32 %v11515, %v11555
  %v11557 = vpop.f32.mrb[0].mxu0
  %v11558 = vadd.f32 %v11517, %v11557
  %v11559 = vpop.f32.mrb[0].mxu0
  %v11560 = vpop.f32.mrb[0].mxu0
  %11561 = vdwg.mxu0
  %11562 = vmatprep.subr.bf16.mxu0 %v7205
  %11563 = vmatpush1.bf16.msra.mxu0 %v7204
  %11564 = vmatprep.subr.bf16.mxu0 %v7213
  %11565 = vmatpush1.bf16.msra.mxu0 %v7212
  %11566 = vmatprep.subr.bf16.mxu0 %v7221
  %11567 = vmatpush1.bf16.msra.mxu0 %v7220
  %11568 = vmatprep.subr.bf16.mxu0 %v7229
  %11569 = vmatpush1.bf16.msra.mxu0 %v7228
  %11570 = vmatprep.subr.bf16.mxu0 %v7237
  %11571 = vmatpush1.bf16.msra.mxu0 %v7236
  %11572 = vmatprep.subr.bf16.mxu0 %v7245
  %11573 = vmatpush1.bf16.msra.mxu0 %v7244
  %11574 = vmatprep.subr.bf16.mxu0 %v7253
  %11575 = vmatpush1.bf16.msra.mxu0 %v7252
  %11576 = vmatprep.subr.bf16.mxu0 %v7261
  %11577 = vmatpush1.bf16.msra.mxu0 %v7260
  %11578 = vmatprep.subr.bf16.mxu0 %v7269
  %11579 = vmatpush1.bf16.msra.mxu0 %v7268
  %11580 = vmatprep.subr.bf16.mxu0 %v7277
  %11581 = vmatpush1.bf16.msra.mxu0 %v7276
  %11582 = vmatprep.subr.bf16.mxu0 %v7285
  %11583 = vmatpush1.bf16.msra.mxu0 %v7284
  %11584 = vmatprep.subr.bf16.mxu0 %v7293
  %11585 = vmatpush1.bf16.msra.mxu0 %v7292
  %11586 = vmatprep.subr.bf16.mxu0 %v7301
  %11587 = vmatpush1.bf16.msra.mxu0 %v7300
  %11588 = vmatprep.subr.bf16.mxu0 %v7309
  %11589 = vmatpush1.bf16.msra.mxu0 %v7308
  %11590 = vmatprep.subr.bf16.mxu0 %v7317
  %11591 = vmatpush1.bf16.msra.mxu0 %v7316
  %11592 = vmatprep.subr.bf16.mxu0 %v7325
  %11593 = vmatpush1.bf16.msra.mxu0 %v7324
  %11594 = vmatprep.mubr.bf16.mxu0 %v1719
  %11595 = vmatmul.mubr.bf16.gmra.mrb[0].mxu0 %v1718
  %v11596 = vpop.f32.mrb[0].mxu0
  %v11597 = vadd.f32 %v11556, %v11596
  %v11598 = vpop.f32.mrb[0].mxu0
  %v11599 = vadd.f32 %v11558, %v11598
  %v11600 = vpop.f32.mrb[0].mxu0
  %v11601 = vpop.f32.mrb[0].mxu0
  %11602 = vdwg.mxu0
  %11603 = vmatprep.subr.bf16.mxu0 %v7333
  %11604 = vmatpush1.bf16.msra.mxu0 %v7332
  %11605 = vmatprep.subr.bf16.mxu0 %v7341
  %11606 = vmatpush1.bf16.msra.mxu0 %v7340
  %11607 = vmatprep.subr.bf16.mxu0 %v7349
  %11608 = vmatpush1.bf16.msra.mxu0 %v7348
  %11609 = vmatprep.subr.bf16.mxu0 %v7357
  %11610 = vmatpush1.bf16.msra.mxu0 %v7356
  %11611 = vmatprep.subr.bf16.mxu0 %v7365
  %11612 = vmatpush1.bf16.msra.mxu0 %v7364
  %11613 = vmatprep.subr.bf16.mxu0 %v7373
  %11614 = vmatpush1.bf16.msra.mxu0 %v7372
  %11615 = vmatprep.subr.bf16.mxu0 %v7381
  %11616 = vmatpush1.bf16.msra.mxu0 %v7380
  %11617 = vmatprep.subr.bf16.mxu0 %v7389
  %11618 = vmatpush1.bf16.msra.mxu0 %v7388
  %11619 = vmatprep.subr.bf16.mxu0 %v7397
  %11620 = vmatpush1.bf16.msra.mxu0 %v7396
  %11621 = vmatprep.subr.bf16.mxu0 %v7405
  %11622 = vmatpush1.bf16.msra.mxu0 %v7404
  %11623 = vmatprep.subr.bf16.mxu0 %v7413
  %11624 = vmatpush1.bf16.msra.mxu0 %v7412
  %11625 = vmatprep.subr.bf16.mxu0 %v7421
  %11626 = vmatpush1.bf16.msra.mxu0 %v7420
  %11627 = vmatprep.subr.bf16.mxu0 %v7429
  %11628 = vmatpush1.bf16.msra.mxu0 %v7428
  %11629 = vmatprep.subr.bf16.mxu0 %v7437
  %11630 = vmatpush1.bf16.msra.mxu0 %v7436
  %11631 = vmatprep.subr.bf16.mxu0 %v7445
  %11632 = vmatpush1.bf16.msra.mxu0 %v7444
  %11633 = vmatprep.subr.bf16.mxu0 %v7453
  %11634 = vmatpush1.bf16.msra.mxu0 %v7452
  %11635 = vmatprep.mubr.bf16.mxu0 %v1721
  %11636 = vmatmul.mubr.bf16.gmra.mrb[0].mxu0 %v1720
  %v11637 = vpop.f32.mrb[0].mxu0
  %v11638 = vadd.f32 %v11597, %v11637
  %v11639 = vpop.f32.mrb[0].mxu0
  %v11640 = vadd.f32 %v11599, %v11639
  %v11641 = vpop.f32.mrb[0].mxu0
  %v11642 = vpop.f32.mrb[0].mxu0
  %11643 = vdwg.mxu0
  %11644 = vmatprep.subr.bf16.mxu0 %v7461
  %11645 = vmatpush1.bf16.msra.mxu0 %v7460
  %11646 = vmatprep.subr.bf16.mxu0 %v7469
  %11647 = vmatpush1.bf16.msra.mxu0 %v7468
  %11648 = vmatprep.subr.bf16.mxu0 %v7477
  %11649 = vmatpush1.bf16.msra.mxu0 %v7476
  %11650 = vmatprep.subr.bf16.mxu0 %v7485
  %11651 = vmatpush1.bf16.msra.mxu0 %v7484
  %11652 = vmatprep.subr.bf16.mxu0 %v7493
  %11653 = vmatpush1.bf16.msra.mxu0 %v7492
  %11654 = vmatprep.subr.bf16.mxu0 %v7501
  %11655 = vmatpush1.bf16.msra.mxu0 %v7500
  %11656 = vmatprep.subr.bf16.mxu0 %v7509
  %11657 = vmatpush1.bf16.msra.mxu0 %v7508
  %11658 = vmatprep.subr.bf16.mxu0 %v7517
  %11659 = vmatpush1.bf16.msra.mxu0 %v7516
  %11660 = vmatprep.subr.bf16.mxu0 %v7525
  %11661 = vmatpush1.bf16.msra.mxu0 %v7524
  %11662 = vmatprep.subr.bf16.mxu0 %v7533
  %11663 = vmatpush1.bf16.msra.mxu0 %v7532
  %11664 = vmatprep.subr.bf16.mxu0 %v7541
  %11665 = vmatpush1.bf16.msra.mxu0 %v7540
  %11666 = vmatprep.subr.bf16.mxu0 %v7549
  %11667 = vmatpush1.bf16.msra.mxu0 %v7548
  %11668 = vmatprep.subr.bf16.mxu0 %v7557
  %11669 = vmatpush1.bf16.msra.mxu0 %v7556
  %11670 = vmatprep.subr.bf16.mxu0 %v7565
  %11671 = vmatpush1.bf16.msra.mxu0 %v7564
  %11672 = vmatprep.subr.bf16.mxu0 %v7573
  %11673 = vmatpush1.bf16.msra.mxu0 %v7572
  %11674 = vmatprep.subr.bf16.mxu0 %v7581
  %11675 = vmatpush1.bf16.msra.mxu0 %v7580
  %11676 = vmatprep.mubr.bf16.mxu0 %v1723
  %11677 = vmatmul.mubr.bf16.gmra.mrb[0].mxu0 %v1722
  %v11678 = vpop.f32.mrb[0].mxu0
  %v11679 = vadd.f32 %v11638, %v11678
  %v11680 = vpop.f32.mrb[0].mxu0
  %v11681 = vadd.f32 %v11640, %v11680
  %v11682 = vpop.f32.mrb[0].mxu0
  %v11683 = vpop.f32.mrb[0].mxu0
  %11684 = vdwg.mxu0
  %11685 = vmatprep.subr.bf16.mxu0 %v7589
  %11686 = vmatpush1.bf16.msra.mxu0 %v7588
  %11687 = vmatprep.subr.bf16.mxu0 %v7597
  %11688 = vmatpush1.bf16.msra.mxu0 %v7596
  %11689 = vmatprep.subr.bf16.mxu0 %v7605
  %11690 = vmatpush1.bf16.msra.mxu0 %v7604
  %11691 = vmatprep.subr.bf16.mxu0 %v7613
  %11692 = vmatpush1.bf16.msra.mxu0 %v7612
  %11693 = vmatprep.subr.bf16.mxu0 %v7621
  %11694 = vmatpush1.bf16.msra.mxu0 %v7620
  %11695 = vmatprep.subr.bf16.mxu0 %v7629
  %11696 = vmatpush1.bf16.msra.mxu0 %v7628
  %11697 = vmatprep.subr.bf16.mxu0 %v7637
  %11698 = vmatpush1.bf16.msra.mxu0 %v7636
  %11699 = vmatprep.subr.bf16.mxu0 %v7645
  %11700 = vmatpush1.bf16.msra.mxu0 %v7644
  %11701 = vmatprep.subr.bf16.mxu0 %v7653
  %11702 = vmatpush1.bf16.msra.mxu0 %v7652
  %11703 = vmatprep.subr.bf16.mxu0 %v7661
  %11704 = vmatpush1.bf16.msra.mxu0 %v7660
  %11705 = vmatprep.subr.bf16.mxu0 %v7669
  %11706 = vmatpush1.bf16.msra.mxu0 %v7668
  %11707 = vmatprep.subr.bf16.mxu0 %v7677
  %11708 = vmatpush1.bf16.msra.mxu0 %v7676
  %11709 = vmatprep.subr.bf16.mxu0 %v7685
  %11710 = vmatpush1.bf16.msra.mxu0 %v7684
  %11711 = vmatprep.subr.bf16.mxu0 %v7693
  %11712 = vmatpush1.bf16.msra.mxu0 %v7692
  %11713 = vmatprep.subr.bf16.mxu0 %v7701
  %11714 = vmatpush1.bf16.msra.mxu0 %v7700
  %11715 = vmatprep.subr.bf16.mxu0 %v7709
  %11716 = vmatpush1.bf16.msra.mxu0 %v7708
  %11717 = vmatprep.mubr.bf16.mxu0 %v1725
  %11718 = vmatmul.mubr.bf16.gmra.mrb[0].mxu0 %v1724
  %v11719 = vpop.f32.mrb[0].mxu0
  %v11720 = vadd.f32 %v11679, %v11719
  %v11721 = vpop.f32.mrb[0].mxu0
  %v11722 = vadd.f32 %v11681, %v11721
  %v11723 = vpop.f32.mrb[0].mxu0
  %v11724 = vpop.f32.mrb[0].mxu0
  %11725 = vdwg.mxu0
  %11726 = vmatprep.subr.bf16.mxu0 %v7717
  %11727 = vmatpush1.bf16.msra.mxu0 %v7716
  %11728 = vmatprep.subr.bf16.mxu0 %v7725
  %11729 = vmatpush1.bf16.msra.mxu0 %v7724
  %11730 = vmatprep.subr.bf16.mxu0 %v7733
  %11731 = vmatpush1.bf16.msra.mxu0 %v7732
  %11732 = vmatprep.subr.bf16.mxu0 %v7741
  %11733 = vmatpush1.bf16.msra.mxu0 %v7740
  %11734 = vmatprep.subr.bf16.mxu0 %v7749
  %11735 = vmatpush1.bf16.msra.mxu0 %v7748
  %11736 = vmatprep.subr.bf16.mxu0 %v7757
  %11737 = vmatpush1.bf16.msra.mxu0 %v7756
  %11738 = vmatprep.subr.bf16.mxu0 %v7765
  %11739 = vmatpush1.bf16.msra.mxu0 %v7764
  %11740 = vmatprep.subr.bf16.mxu0 %v7773
  %11741 = vmatpush1.bf16.msra.mxu0 %v7772
  %11742 = vmatprep.subr.bf16.mxu0 %v7781
  %11743 = vmatpush1.bf16.msra.mxu0 %v7780
  %11744 = vmatprep.subr.bf16.mxu0 %v7789
  %11745 = vmatpush1.bf16.msra.mxu0 %v7788
  %11746 = vmatprep.subr.bf16.mxu0 %v7797
  %11747 = vmatpush1.bf16.msra.mxu0 %v7796
  %11748 = vmatprep.subr.bf16.mxu0 %v7805
  %11749 = vmatpush1.bf16.msra.mxu0 %v7804
  %11750 = vmatprep.subr.bf16.mxu0 %v7813
  %11751 = vmatpush1.bf16.msra.mxu0 %v7812
  %11752 = vmatprep.subr.bf16.mxu0 %v7821
  %11753 = vmatpush1.bf16.msra.mxu0 %v7820
  %11754 = vmatprep.subr.bf16.mxu0 %v7829
  %11755 = vmatpush1.bf16.msra.mxu0 %v7828
  %11756 = vmatprep.subr.bf16.mxu0 %v7837
  %11757 = vmatpush1.bf16.msra.mxu0 %v7836
  %11758 = vmatprep.mubr.bf16.mxu0 %v1727
  %11759 = vmatmul.mubr.bf16.gmra.mrb[0].mxu0 %v1726
  %v11760 = vpop.f32.mrb[0].mxu0
  %v11761 = vadd.f32 %v11720, %v11760
  %v11762 = vpop.f32.mrb[0].mxu0
  %v11763 = vadd.f32 %v11722, %v11762
  %v11764 = vpop.f32.mrb[0].mxu0
  %v11765 = vpop.f32.mrb[0].mxu0
  %11766 = vdwg.mxu0
  %11767 = vmatprep.subr.bf16.mxu0 %v7845
  %11768 = vmatpush1.bf16.msra.mxu0 %v7844
  %11769 = vmatprep.subr.bf16.mxu0 %v7853
  %11770 = vmatpush1.bf16.msra.mxu0 %v7852
  %11771 = vmatprep.subr.bf16.mxu0 %v7861
  %11772 = vmatpush1.bf16.msra.mxu0 %v7860
  %11773 = vmatprep.subr.bf16.mxu0 %v7869
  %11774 = vmatpush1.bf16.msra.mxu0 %v7868
  %11775 = vmatprep.subr.bf16.mxu0 %v7877
  %11776 = vmatpush1.bf16.msra.mxu0 %v7876
  %11777 = vmatprep.subr.bf16.mxu0 %v7885
  %11778 = vmatpush1.bf16.msra.mxu0 %v7884
  %11779 = vmatprep.subr.bf16.mxu0 %v7893
  %11780 = vmatpush1.bf16.msra.mxu0 %v7892
  %11781 = vmatprep.subr.bf16.mxu0 %v7901
  %11782 = vmatpush1.bf16.msra.mxu0 %v7900
  %11783 = vmatprep.subr.bf16.mxu0 %v7909
  %11784 = vmatpush1.bf16.msra.mxu0 %v7908
  %11785 = vmatprep.subr.bf16.mxu0 %v7917
  %11786 = vmatpush1.bf16.msra.mxu0 %v7916
  %11787 = vmatprep.subr.bf16.mxu0 %v7925
  %11788 = vmatpush1.bf16.msra.mxu0 %v7924
  %11789 = vmatprep.subr.bf16.mxu0 %v7933
  %11790 = vmatpush1.bf16.msra.mxu0 %v7932
  %11791 = vmatprep.subr.bf16.mxu0 %v7941
  %11792 = vmatpush1.bf16.msra.mxu0 %v7940
  %11793 = vmatprep.subr.bf16.mxu0 %v7949
  %11794 = vmatpush1.bf16.msra.mxu0 %v7948
  %11795 = vmatprep.subr.bf16.mxu0 %v7957
  %11796 = vmatpush1.bf16.msra.mxu0 %v7956
  %11797 = vmatprep.subr.bf16.mxu0 %v7965
  %11798 = vmatpush1.bf16.msra.mxu0 %v7964
  %11799 = vmatprep.mubr.bf16.mxu0 %v1729
  %11800 = vmatmul.mubr.bf16.gmra.mrb[0].mxu0 %v1728
  %v11801 = vpop.f32.mrb[0].mxu0
  %v11802 = vadd.f32 %v11761, %v11801
  %v11803 = vpop.f32.mrb[0].mxu0
  %v11804 = vadd.f32 %v11763, %v11803
  %v11805 = vpop.f32.mrb[0].mxu0
  %v11806 = vpop.f32.mrb[0].mxu0
  %11807 = vdwg.mxu0
  %11808 = vmatprep.subr.bf16.mxu0 %v7973
  %11809 = vmatpush1.bf16.msra.mxu0 %v7972
  %11810 = vmatprep.subr.bf16.mxu0 %v7981
  %11811 = vmatpush1.bf16.msra.mxu0 %v7980
  %11812 = vmatprep.subr.bf16.mxu0 %v7989
  %11813 = vmatpush1.bf16.msra.mxu0 %v7988
  %11814 = vmatprep.subr.bf16.mxu0 %v7997
  %11815 = vmatpush1.bf16.msra.mxu0 %v7996
  %11816 = vmatprep.subr.bf16.mxu0 %v8005
  %11817 = vmatpush1.bf16.msra.mxu0 %v8004
  %11818 = vmatprep.subr.bf16.mxu0 %v8013
  %11819 = vmatpush1.bf16.msra.mxu0 %v8012
  %11820 = vmatprep.subr.bf16.mxu0 %v8021
  %11821 = vmatpush1.bf16.msra.mxu0 %v8020
  %11822 = vmatprep.subr.bf16.mxu0 %v8029
  %11823 = vmatpush1.bf16.msra.mxu0 %v8028
  %11824 = vmatprep.subr.bf16.mxu0 %v8037
  %11825 = vmatpush1.bf16.msra.mxu0 %v8036
  %11826 = vmatprep.subr.bf16.mxu0 %v8045
  %11827 = vmatpush1.bf16.msra.mxu0 %v8044
  %11828 = vmatprep.subr.bf16.mxu0 %v8053
  %11829 = vmatpush1.bf16.msra.mxu0 %v8052
  %11830 = vmatprep.subr.bf16.mxu0 %v8061
  %11831 = vmatpush1.bf16.msra.mxu0 %v8060
  %11832 = vmatprep.subr.bf16.mxu0 %v8069
  %11833 = vmatpush1.bf16.msra.mxu0 %v8068
  %11834 = vmatprep.subr.bf16.mxu0 %v8077
  %11835 = vmatpush1.bf16.msra.mxu0 %v8076
  %11836 = vmatprep.subr.bf16.mxu0 %v8085
  %11837 = vmatpush1.bf16.msra.mxu0 %v8084
  %11838 = vmatprep.subr.bf16.mxu0 %v8093
  %11839 = vmatpush1.bf16.msra.mxu0 %v8092
  %11840 = vmatprep.mubr.bf16.mxu0 %v1731
  %11841 = vmatmul.mubr.bf16.gmra.mrb[0].mxu0 %v1730
  %v11842 = vpop.f32.mrb[0].mxu0
  %v11843 = vadd.f32 %v11802, %v11842
  %v11844 = vpop.f32.mrb[0].mxu0
  %v11845 = vadd.f32 %v11804, %v11844
  %v11846 = vpop.f32.mrb[0].mxu0
  %v11847 = vpop.f32.mrb[0].mxu0
  %11848 = vdwg.mxu0
  %11849 = vmatprep.subr.bf16.mxu0 %v8101
  %11850 = vmatpush1.bf16.msra.mxu0 %v8100
  %11851 = vmatprep.subr.bf16.mxu0 %v8109
  %11852 = vmatpush1.bf16.msra.mxu0 %v8108
  %11853 = vmatprep.subr.bf16.mxu0 %v8117
  %11854 = vmatpush1.bf16.msra.mxu0 %v8116
  %11855 = vmatprep.subr.bf16.mxu0 %v8125
  %11856 = vmatpush1.bf16.msra.mxu0 %v8124
  %11857 = vmatprep.subr.bf16.mxu0 %v8133
  %11858 = vmatpush1.bf16.msra.mxu0 %v8132
  %11859 = vmatprep.subr.bf16.mxu0 %v8141
  %11860 = vmatpush1.bf16.msra.mxu0 %v8140
  %11861 = vmatprep.subr.bf16.mxu0 %v8149
  %11862 = vmatpush1.bf16.msra.mxu0 %v8148
  %11863 = vmatprep.subr.bf16.mxu0 %v8157
  %11864 = vmatpush1.bf16.msra.mxu0 %v8156
  %11865 = vmatprep.subr.bf16.mxu0 0
  %11866 = vmatpush1.bf16.msra.mxu0 0
  %11867 = vmatprep.subr.bf16.mxu0 0
  %11868 = vmatpush1.bf16.msra.mxu0 0
  %11869 = vmatprep.subr.bf16.mxu0 0
  %11870 = vmatpush1.bf16.msra.mxu0 0
  %11871 = vmatprep.subr.bf16.mxu0 0
  %11872 = vmatpush1.bf16.msra.mxu0 0
  %11873 = vmatprep.subr.bf16.mxu0 0
  %11874 = vmatpush1.bf16.msra.mxu0 0
  %11875 = vmatprep.subr.bf16.mxu0 0
  %11876 = vmatpush1.bf16.msra.mxu0 0
  %11877 = vmatprep.subr.bf16.mxu0 0
  %11878 = vmatpush1.bf16.msra.mxu0 0
  %11879 = vmatprep.subr.bf16.mxu0 0
  %11880 = vmatpush1.bf16.msra.mxu0 0
  %11881 = vmatprep.mubr.bf16.mxu0 0
  %11882 = vmatmul.mubr.bf16.gmra.mrb[0].mxu0 %v1732
  %v11883 = vpop.f32.mrb[0].mxu0
  %v11884 = vadd.f32 %v11843, %v11883
  %v11885 = vpop.f32.mrb[0].mxu0
  %v11886 = vadd.f32 %v11845, %v11885
  %v11887 = vpop.f32.mrb[0].mxu0
  %v11888 = vpop.f32.mrb[0].mxu0
  %11889 = vdwg.mxu0
  %v11890 = vmax.f32 %v10285, 0.0
  %v11891 = vmax.f32 %v10287, 0.0
  %v11892 = vmax.f32 %v10818, 0.0
  %v11893 = vmax.f32 %v10820, 0.0
  %v11894 = vmax.f32 %v11351, 0.0
  %v11895 = vmax.f32 %v11353, 0.0
  %v11896 = vmax.f32 %v11884, 0.0
  %v11897 = vmax.f32 %v11886, 0.0
  %v11898 = vpack.c.bf16 %v11890, %v11890
  %v11899 = vpack.c.bf16 %v11891, %v11891
  %v11900 = vpack.c.bf16 %v11892, %v11892
  %v11901 = vpack.c.bf16 %v11893, %v11893
  %v11902 = vpack.c.bf16 %v11894, %v11894
  %v11903 = vpack.c.bf16 %v11895, %v11895
  %v11904 = vpack.c.bf16 %v11896, %v11896
  %v11905 = vpack.c.bf16 %v11897, %v11897
  %v11914 = vunpack.c.l.b16 %v11898
  %v11915 = vunpack.c.l.b16 %v11899
  %v11916 = vunpack.c.l.b16 %v11900
  %v11917 = vunpack.c.l.b16 %v11901
  %v11918 = vunpack.c.l.b16 %v11902
  %v11919 = vunpack.c.l.b16 %v11903
  %v11920 = vunpack.c.l.b16 %v11904
  %v11921 = vunpack.c.l.b16 %v11905
  %v11922 = vpack.c.b16 %v11915, %v11914
  %v11923 = vpack.c.b16 %v11917, %v11916
  %v11924 = vpack.c.b16 %v11919, %v11918
  %v11925 = vpack.c.b16 %v11921, %v11920
  %11930 = vst [vmem:[%s3] sm:$0xff] %v11922
  %11931 = vst [vmem:[%s3 + $0x8] sm:$0xff] %v11923
  %11932 = vst [vmem:[%s3 + $0x10] sm:$0xff] %v11924
  %11933 = vst [vmem:[%s3 + $0x18] sm:$0xff] %v11925
  // Predicated region
  $region14: #{network_forward.8} parent=0 // pred_check
    _
  $region15: #{network_forward.8} parent=0 // pred_check_branch
    %11935 = sbr.rel (0) target = $region17
  $region16: #{network_forward.8} parent=0 // pred_region
    _
  $region17: #{network_forward.8} parent=0 // pred_fallthru
    _
  // Predicated region
  $region18: #{network_forward.8} parent=0 // pred_check
    _
  $region19: #{network_forward.8} parent=0 // pred_check_branch
    %11937 = sbr.rel (0) target = $region21
  $region20: #{network_forward.8} parent=0 // pred_region
    _
  $region21: #{network_forward.8} parent=0 // pred_fallthru
    _

</llo_original>
